<compile_context>
chip_gen: v5e
topology: v5e:2x2
jax: 0.10.0
libtpu: 0.0.40
codegen_flags: <defaults>
</compile_context>

<pallas_src>
from functools import partial

import jax
import jax.numpy as jnp
from jax.experimental import pallas as pl
from jax.experimental.pallas import tpu as pltpu


# ----------------------------- Pallas kernel ---------------------------------

def _basic_block_kernel(x_ref, w1_ref, w2_ref, b1_ref, b2_ref, mask_ref,
                        out_ref, lhs_ref, y1_ref, *, wp):
    # x_ref:    (Rp, Cp)       flattened spatially-padded image (compute dtype)
    # w1_ref:   (9*Cp, Cp)     conv1 taps stacked along K, BN1 scale folded
    # w2_ref:   (9*Cp, Cp)     conv2 taps stacked along K, BN2 scale folded
    # b1_ref:   (1, Cp) f32    folded BN1 bias
    # b2_ref:   (1, Cp) f32    folded BN2 bias
    # mask_ref: (Sp, 1) f32    1 on valid extended-grid rows, 0 on garbage rows
    # out_ref:  (Sp, Cp)       extended-grid output (wrapper drops garbage cols)
    # lhs_ref:  (Sp, 9*Cp)     VMEM scratch: im2col LHS, shared by both convs
    # y1_ref:   (Rp, Cp)       VMEM scratch: conv1 activation in padded-flat form
    span = lhs_ref.shape[0]
    cp = y1_ref.shape[-1]
    cdt = lhs_ref.dtype

    # The region of y1 outside the per-step store window is halo / padding and
    # is never rewritten -> zero it once (scratch persists across the grid).
    @pl.when(pl.program_id(0) == 0)
    def _():
        y1_ref[...] = jnp.zeros(y1_ref.shape, cdt)

    # ---- conv1 (+ folded BN1): im2col build, then ONE long-K matmul ----------
    for t in range(9):
        kh, kw = divmod(t, 3)
        off = kh * wp + kw                       # tap (kh, kw) = pure row offset
        lhs_ref[:, t * cp:(t + 1) * cp] = x_ref[off:off + span, :]

    acc1 = jnp.dot(lhs_ref[...], w1_ref[...], preferred_element_type=jnp.float32)
    # bias + ReLU in f32; the mask zeroes the garbage columns so they become
    # exactly the (left/right) zero halo of the staged conv1 activation.
    y1 = jnp.maximum(acc1 + b1_ref[...], 0.0) * mask_ref[...]
    y1_ref[wp + 1:wp + 1 + span, :] = y1.astype(cdt)

    # ---- conv2 (+ folded BN2) + residual + ReLU ------------------------------
    for t in range(9):
        kh, kw = divmod(t, 3)
        off = kh * wp + kw
        lhs_ref[:, t * cp:(t + 1) * cp] = y1_ref[off:off + span, :]

    acc2 = jnp.dot(lhs_ref[...], w2_ref[...], preferred_element_type=jnp.float32)
    # Residual: plain f32 add of the centre tap of x (padded lanes of x are 0).
    # TODO(synk): in bf16 mode the skip connection is bf16-rounded, whereas
    # PyTorch keeps the residual in fp32.
    acc2 = acc2 + b2_ref[...] + x_ref[wp + 1:wp + 1 + span, :].astype(jnp.float32)
    out_ref[...] = jnp.maximum(acc2, 0.0).astype(out_ref.dtype)


# ------------------------------- JAX glue -------------------------------------

def _round_up(x, m):
    return (x + m - 1) // m * m


def _fold_bn(gamma, beta, running_mean, running_var, eps=1e-5):
    scale = gamma / jnp.sqrt(running_var + eps)
    bias = beta - running_mean * scale
    return scale, bias


def _conv_w_to_mat(w_oihw, scale, cin_pad, cout_pad, dtype):
    """(Cout, Cin, 3, 3) -> (9*cin_pad, cout_pad), BN scale folded into Cout."""
    cout, cin, _, _ = w_oihw.shape
    wt = jnp.transpose(w_oihw, (2, 3, 1, 0)).reshape(9, cin, cout)  # (tap, ci, co)
    wt = wt * scale[None, None, :]
    wt = jnp.pad(wt, ((0, 0), (0, cin_pad - cin), (0, cout_pad - cout)))
    return wt.reshape(9 * cin_pad, cout_pad).astype(dtype)


def basic_block_forward(x_nchw, params, *, compute_dtype=jnp.bfloat16,
                        out_dtype=None, eps=1e-5):
    """BasicBlock forward (stride=1, downsample=None) on NCHW input."""
    n, c, h, w = x_nchw.shape
    assert params["w1"].shape == (c, c, 3, 3) and params["w2"].shape == (c, c, 3, 3), (
        "only stride=1 / no-downsample BasicBlock (inplanes == planes) is supported")
    out_dtype = x_nchw.dtype if out_dtype is None else out_dtype

    wp = w + 2                                  # padded image width
    cp = _round_up(c, 128)                      # channels padded to 128 lanes
    span = h * wp                               # extended-grid output rows
    span_p = _round_up(span, 8)                 # pad M to full sublanes
    rp = _round_up((h + 2) * wp + (span_p - span) + 2, 8)   # flat rows + tap slack

    s1, b1 = _fold_bn(*params["bn1"], eps=eps)
    s2, b2 = _fold_bn(*params["bn2"], eps=eps)

    w1_mat = _conv_w_to_mat(params["w1"], s1, cp, cp, compute_dtype)
    w2_mat = _conv_w_to_mat(params["w2"], s2, cp, cp, compute_dtype)
    b1_p = jnp.pad(b1, (0, cp - c)).reshape(1, cp).astype(jnp.float32)
    b2_p = jnp.pad(b2, (0, cp - c)).reshape(1, cp).astype(jnp.float32)

    # Valid-row mask on the extended (H, W+2) grid: garbage columns / M padding
    # are zeroed so they form the conv1-activation halo inside the kernel.
    mm = jnp.arange(span_p)
    mask = ((mm < span) & ((mm % wp) < w)).astype(jnp.float32).reshape(span_p, 1)

    # NCHW -> NHWC, 1-px spatial halo, channel pad to Cp, flatten rows, row slack.
    x_nhwc = jnp.transpose(x_nchw, (0, 2, 3, 1))
    x_pad = jnp.pad(x_nhwc, ((0, 0), (1, 1), (1, 1), (0, cp - c)))
    x_flat = x_pad.reshape(n, (h + 2) * wp, cp)
    x_flat = jnp.pad(x_flat, ((0, 0), (0, rp - (h + 2) * wp), (0, 0)))
    x_flat = x_flat.astype(compute_dtype)

    # VMEM budget derived from actual buffer sizes, capped vs physical VMEM.
    csz = jnp.dtype(compute_dtype).itemsize
    osz = jnp.dtype(out_dtype).itemsize
    vmem_need = (2 * rp * cp * csz              # x block (double buffered)
                 + 2 * span_p * cp * osz        # out block (double buffered)
                 + 2 * 2 * 9 * cp * cp * csz    # w1, w2 (worst case double buffered)
                 + span_p * 9 * cp * csz        # im2col scratch
                 + rp * cp * csz                # y1 scratch
                 + 2 * span_p * cp * 4          # f32 matmul results
                 + span_p * 4 + 4 * cp * 4)     # mask + biases
    try:
        vmem_phys = int(pltpu.get_tpu_info().vmem_capacity_bytes)
    except Exception:
        vmem_phys = 64 * 1024 * 1024
    vmem_limit = min(max(int(vmem_need * 1.5), 32 * 1024 * 1024),
                     vmem_phys * 3 // 4)

    out_ext = pl.pallas_call(
        partial(_basic_block_kernel, wp=wp),
        out_shape=jax.ShapeDtypeStruct((n, span_p, cp), out_dtype),
        grid=(n,),
        in_specs=[
            pl.BlockSpec((None, rp, cp), lambda i: (i, 0, 0)),
            pl.BlockSpec((9 * cp, cp), lambda i: (0, 0)),
            pl.BlockSpec((9 * cp, cp), lambda i: (0, 0)),
            pl.BlockSpec((1, cp), lambda i: (0, 0)),
            pl.BlockSpec((1, cp), lambda i: (0, 0)),
            pl.BlockSpec((span_p, 1), lambda i: (0, 0)),
        ],
        out_specs=pl.BlockSpec((None, span_p, cp), lambda i: (i, 0, 0)),
        scratch_shapes=[pltpu.VMEM((span_p, 9 * cp), compute_dtype),
                        pltpu.VMEM((rp, cp), compute_dtype)],
        compiler_params=pltpu.CompilerParams(
            dimension_semantics=("parallel",),
            vmem_limit_bytes=vmem_limit,
        ),
    )(x_flat, w1_mat, w2_mat, b1_p, b2_p, mask)

    # Drop the M padding, the 2 garbage columns and the padded lanes; NHWC->NCHW.
    # TODO(synk): a multi-block pipeline should keep the lane-padded NHWC (or
    # the extended layout) in bf16 between blocks to avoid this extra XLA pass.
    out = out_ext[:, :span, :].reshape(n, h, wp, cp)[:, :, :w, :c]
    return jnp.transpose(out, (0, 3, 1, 2))


# ------------------------------ Reference -------------------------------------

def _ref_conv3x3(x_nchw, w_oihw):
    return jax.lax.conv_general_dilated(
        x_nchw, w_oihw, window_strides=(1, 1), padding=((1, 1), (1, 1)),
        dimension_numbers=("NCHW", "OIHW", "NCHW"))


def _ref_bn(x_nchw, bn, eps=1e-5):
    gamma, beta, mean, var = bn
    inv = gamma / jnp.sqrt(var + eps)
    return x_nchw * inv[None, :, None, None] + (beta - mean * inv)[None, :, None, None]


def reference_forward(x, params):
    out = _ref_conv3x3(x, params["w1"])
    out = _ref_bn(out, params["bn1"])
    out = jnp.maximum(out, 0.0)
    out = _ref_conv3x3(out, params["w2"])
    out = _ref_bn(out, params["bn2"])
    out = out + x
    return jnp.maximum(out, 0.0)


# -------------------------------- Main -----------------------------------------

if __name__ == "__main__":
    N, C, H, W = 2, 4, 16, 16          # inplanes = planes = 4, stride = 1
    key = jax.random.PRNGKey(0)
    keys = jax.random.split(key, 9)

    params = {
        "w1": jax.random.normal(keys[0], (C, C, 3, 3), jnp.float32) * 0.1,
        "w2": jax.random.normal(keys[1], (C, C, 3, 3), jnp.float32) * 0.1,
        "bn1": (
            jax.random.uniform(keys[2], (C,), jnp.float32, 0.5, 1.5),   # gamma
            jax.random.normal(keys[3], (C,), jnp.float32) * 0.1,        # beta
            jax.random.normal(keys[4], (C,), jnp.float32) * 0.1,        # running_mean
            jax.random.uniform(keys[5], (C,), jnp.float32, 0.5, 1.5),   # running_var
        ),
        "bn2": (
            jax.random.uniform(keys[6], (C,), jnp.float32, 0.5, 1.5),
            jax.random.normal(keys[7], (C,), jnp.float32) * 0.1,
            jax.random.normal(keys[8], (C,), jnp.float32) * 0.1,
            jax.random.uniform(keys[2], (C,), jnp.float32, 0.5, 1.5),
        ),
    }

    x = jax.random.normal(jax.random.PRNGKey(42), (N, C, H, W), jnp.float32)

    ref = jax.block_until_ready(reference_forward(x, params))

    # f32 operand path (tight tolerance vs reference).
    out_f32 = jax.block_until_ready(
        basic_block_forward(x, params, compute_dtype=jnp.float32))
    assert out_f32.shape == (N, C, H, W)
    assert jnp.allclose(out_f32, ref, rtol=1e-4, atol=1e-4), (
        f"f32 max err {jnp.max(jnp.abs(out_f32 - ref))}")

    # Default bf16 MXU-operand path (recommended on v5e/v6e/v7x); relaxed tol.
    out_bf16 = jax.block_until_ready(basic_block_forward(x, params))
    assert out_bf16.shape == (N, C, H, W)
    assert jnp.allclose(out_bf16, ref, rtol=5e-2, atol=5e-2), (
        f"bf16 max err {jnp.max(jnp.abs(out_bf16 - ref))}")

    print("KERNEL_OK")
</pallas_src>

<mosaic_0001>
module attributes {stable_mosaic.version = 11 : i64} {
  func.func @_basic_block_kernel(%arg0: i32, %arg1: memref<1x328x128xf32, #tpu.memory_space<vmem>>, %arg2: memref<1152x128xf32, #tpu.memory_space<vmem>>, %arg3: memref<1152x128xf32, #tpu.memory_space<vmem>>, %arg4: memref<1x128xf32, #tpu.memory_space<vmem>>, %arg5: memref<1x128xf32, #tpu.memory_space<vmem>>, %arg6: memref<288x1xf32, #tpu.memory_space<vmem>>, %arg7: memref<1x288x128xf32, #tpu.memory_space<vmem>>, %arg8: memref<288x1152xf32, #tpu.memory_space<vmem>>, %arg9: memref<328x128xf32, #tpu.memory_space<vmem>>) attributes {dimension_semantics = [#tpu.dimension_semantics<parallel>], iteration_bounds = array<i64: 2>, scalar_prefetch = 0 : i64, scratch_operands = 2 : i64, tpu.core_type = #tpu.core_type<tc>, window_params = [{transform_indices = @transform_0, window_bounds = array<i64: 1, 328, 128>}, {pipeline_mode = #tpu.pipeline_mode<synchronous>, transform_indices = @transform_1, window_bounds = array<i64: 1152, 128>}, {pipeline_mode = #tpu.pipeline_mode<synchronous>, transform_indices = @transform_2, window_bounds = array<i64: 1152, 128>}, {pipeline_mode = #tpu.pipeline_mode<synchronous>, transform_indices = @transform_3, window_bounds = array<i64: 1, 128>}, {pipeline_mode = #tpu.pipeline_mode<synchronous>, transform_indices = @transform_4, window_bounds = array<i64: 1, 128>}, {pipeline_mode = #tpu.pipeline_mode<synchronous>, transform_indices = @transform_5, window_bounds = array<i64: 288, 1>}, {transform_indices = @transform_6, window_bounds = array<i64: 1, 288, 128>}]} {
    %c0_i32 = arith.constant 0 : i32
    %0 = arith.cmpi eq, %arg0, %c0_i32 : i32
    %1 = arith.extui %0 : i1 to i32
    %c0_i32_0 = arith.constant 0 : i32
    %2 = arith.cmpi ne, %1, %c0_i32_0 : i32
    scf.if %2 {
      %cst_90 = arith.constant 0.000000e+00 : f32
      %74 = vector.broadcast %cst_90 : f32 to vector<328x128xf32>
      %c0_91 = arith.constant 0 : index
      %c0_92 = arith.constant 0 : index
      %75 = vector.load %arg9[%c0_91, %c0_92] : memref<328x128xf32, #tpu.memory_space<vmem>>, vector<328x128xf32>
      tpu.vector_store %arg9[%c0_91, %c0_92], %74 {strides = array<i32>} : memref<328x128xf32, #tpu.memory_space<vmem>>, vector<328x128xf32>,
    } else {
    }
    %c0 = arith.constant 0 : index
    %c0_1 = arith.constant 0 : index
    %c0_2 = arith.constant 0 : index
    %3 = vector.load %arg1[%c0, %c0_1, %c0_2] : memref<1x328x128xf32, #tpu.memory_space<vmem>>, vector<1x288x128xf32>
    %4 = vector.shape_cast %3 : vector<1x288x128xf32> to vector<288x128xf32>
    %c0_3 = arith.constant 0 : index
    %c0_4 = arith.constant 0 : index
    %5 = vector.load %arg8[%c0_3, %c0_4] : memref<288x1152xf32, #tpu.memory_space<vmem>>, vector<288x128xf32>
    tpu.vector_store %arg8[%c0_3, %c0_4], %4 {strides = array<i32>} : memref<288x1152xf32, #tpu.memory_space<vmem>>, vector<288x128xf32>,
    %c0_5 = arith.constant 0 : index
    %c1 = arith.constant 1 : index
    %c0_6 = arith.constant 0 : index
    %6 = vector.load %arg1[%c0_5, %c1, %c0_6] : memref<1x328x128xf32, #tpu.memory_space<vmem>>, vector<1x288x128xf32>
    %7 = vector.shape_cast %6 : vector<1x288x128xf32> to vector<288x128xf32>
    %c0_7 = arith.constant 0 : index
    %c128 = arith.constant 128 : index
    %8 = vector.load %arg8[%c0_7, %c128] : memref<288x1152xf32, #tpu.memory_space<vmem>>, vector<288x128xf32>
    tpu.vector_store %arg8[%c0_7, %c128], %7 {strides = array<i32>} : memref<288x1152xf32, #tpu.memory_space<vmem>>, vector<288x128xf32>,
    %c0_8 = arith.constant 0 : index
    %c2 = arith.constant 2 : index
    %c0_9 = arith.constant 0 : index
    %9 = vector.load %arg1[%c0_8, %c2, %c0_9] : memref<1x328x128xf32, #tpu.memory_space<vmem>>, vector<1x288x128xf32>
    %10 = vector.shape_cast %9 : vector<1x288x128xf32> to vector<288x128xf32>
    %c0_10 = arith.constant 0 : index
    %c256 = arith.constant 256 : index
    %11 = vector.load %arg8[%c0_10, %c256] : memref<288x1152xf32, #tpu.memory_space<vmem>>, vector<288x128xf32>
    tpu.vector_store %arg8[%c0_10, %c256], %10 {strides = array<i32>} : memref<288x1152xf32, #tpu.memory_space<vmem>>, vector<288x128xf32>,
    %c0_11 = arith.constant 0 : index
    %c18 = arith.constant 18 : index
    %c0_12 = arith.constant 0 : index
    %12 = vector.load %arg1[%c0_11, %c18, %c0_12] : memref<1x328x128xf32, #tpu.memory_space<vmem>>, vector<1x288x128xf32>
    %13 = vector.shape_cast %12 : vector<1x288x128xf32> to vector<288x128xf32>
    %c0_13 = arith.constant 0 : index
    %c384 = arith.constant 384 : index
    %14 = vector.load %arg8[%c0_13, %c384] : memref<288x1152xf32, #tpu.memory_space<vmem>>, vector<288x128xf32>
    tpu.vector_store %arg8[%c0_13, %c384], %13 {strides = array<i32>} : memref<288x1152xf32, #tpu.memory_space<vmem>>, vector<288x128xf32>,
    %c0_14 = arith.constant 0 : index
    %c19 = arith.constant 19 : index
    %c0_15 = arith.constant 0 : index
    %15 = vector.load %arg1[%c0_14, %c19, %c0_15] : memref<1x328x128xf32, #tpu.memory_space<vmem>>, vector<1x288x128xf32>
    %16 = vector.shape_cast %15 : vector<1x288x128xf32> to vector<288x128xf32>
    %c0_16 = arith.constant 0 : index
    %c512 = arith.constant 512 : index
    %17 = vector.load %arg8[%c0_16, %c512] : memref<288x1152xf32, #tpu.memory_space<vmem>>, vector<288x128xf32>
    tpu.vector_store %arg8[%c0_16, %c512], %16 {strides = array<i32>} : memref<288x1152xf32, #tpu.memory_space<vmem>>, vector<288x128xf32>,
    %c0_17 = arith.constant 0 : index
    %c20 = arith.constant 20 : index
    %c0_18 = arith.constant 0 : index
    %18 = vector.load %arg1[%c0_17, %c20, %c0_18] : memref<1x328x128xf32, #tpu.memory_space<vmem>>, vector<1x288x128xf32>
    %19 = vector.shape_cast %18 : vector<1x288x128xf32> to vector<288x128xf32>
    %c0_19 = arith.constant 0 : index
    %c640 = arith.constant 640 : index
    %20 = vector.load %arg8[%c0_19, %c640] : memref<288x1152xf32, #tpu.memory_space<vmem>>, vector<288x128xf32>
    tpu.vector_store %arg8[%c0_19, %c640], %19 {strides = array<i32>} : memref<288x1152xf32, #tpu.memory_space<vmem>>, vector<288x128xf32>,
    %c0_20 = arith.constant 0 : index
    %c36 = arith.constant 36 : index
    %c0_21 = arith.constant 0 : index
    %21 = vector.load %arg1[%c0_20, %c36, %c0_21] : memref<1x328x128xf32, #tpu.memory_space<vmem>>, vector<1x288x128xf32>
    %22 = vector.shape_cast %21 : vector<1x288x128xf32> to vector<288x128xf32>
    %c0_22 = arith.constant 0 : index
    %c768 = arith.constant 768 : index
    %23 = vector.load %arg8[%c0_22, %c768] : memref<288x1152xf32, #tpu.memory_space<vmem>>, vector<288x128xf32>
    tpu.vector_store %arg8[%c0_22, %c768], %22 {strides = array<i32>} : memref<288x1152xf32, #tpu.memory_space<vmem>>, vector<288x128xf32>,
    %c0_23 = arith.constant 0 : index
    %c37 = arith.constant 37 : index
    %c0_24 = arith.constant 0 : index
    %24 = vector.load %arg1[%c0_23, %c37, %c0_24] : memref<1x328x128xf32, #tpu.memory_space<vmem>>, vector<1x288x128xf32>
    %25 = vector.shape_cast %24 : vector<1x288x128xf32> to vector<288x128xf32>
    %c0_25 = arith.constant 0 : index
    %c896 = arith.constant 896 : index
    %26 = vector.load %arg8[%c0_25, %c896] : memref<288x1152xf32, #tpu.memory_space<vmem>>, vector<288x128xf32>
    tpu.vector_store %arg8[%c0_25, %c896], %25 {strides = array<i32>} : memref<288x1152xf32, #tpu.memory_space<vmem>>, vector<288x128xf32>,
    %c0_26 = arith.constant 0 : index
    %c38 = arith.constant 38 : index
    %c0_27 = arith.constant 0 : index
    %27 = vector.load %arg1[%c0_26, %c38, %c0_27] : memref<1x328x128xf32, #tpu.memory_space<vmem>>, vector<1x288x128xf32>
    %28 = vector.shape_cast %27 : vector<1x288x128xf32> to vector<288x128xf32>
    %c0_28 = arith.constant 0 : index
    %c1024 = arith.constant 1024 : index
    %29 = vector.load %arg8[%c0_28, %c1024] : memref<288x1152xf32, #tpu.memory_space<vmem>>, vector<288x128xf32>
    tpu.vector_store %arg8[%c0_28, %c1024], %28 {strides = array<i32>} : memref<288x1152xf32, #tpu.memory_space<vmem>>, vector<288x128xf32>,
    %c0_29 = arith.constant 0 : index
    %c0_30 = arith.constant 0 : index
    %30 = vector.load %arg8[%c0_29, %c0_30] : memref<288x1152xf32, #tpu.memory_space<vmem>>, vector<288x1152xf32>
    %c0_31 = arith.constant 0 : index
    %c0_32 = arith.constant 0 : index
    %31 = vector.load %arg2[%c0_31, %c0_32] : memref<1152x128xf32, #tpu.memory_space<vmem>>, vector<1152x128xf32>
    %cst = arith.constant dense<0.000000e+00> : vector<288x128xf32>
    %32 = tpu.matmul %30, %31, %cst {dimension_numbers = #tpu.dot_dimension_numbers<[1], [0], [0], [1], [0, 0, 1, 1], [], []>} : vector<288x1152xf32>, vector<1152x128xf32>, vector<288x128xf32> -> vector<288x128xf32>
    %c0_33 = arith.constant 0 : index
    %c0_34 = arith.constant 0 : index
    %33 = vector.load %arg4[%c0_33, %c0_34] : memref<1x128xf32, #tpu.memory_space<vmem>>, vector<1x128xf32>
    %34 = vector.broadcast %33 : vector<1x128xf32> to vector<288x128xf32>
    %35 = arith.addf %32, %34 : vector<288x128xf32>
    %cst_35 = arith.constant 0.000000e+00 : f32
    %36 = vector.broadcast %cst_35 : f32 to vector<288x128xf32>
    %37 = arith.maximumf %35, %36 : vector<288x128xf32>
    %c0_36 = arith.constant 0 : index
    %c0_37 = arith.constant 0 : index
    %38 = vector.load %arg6[%c0_36, %c0_37] : memref<288x1xf32, #tpu.memory_space<vmem>>, vector<288x1xf32>
    %39 = vector.broadcast %38 : vector<288x1xf32> to vector<288x128xf32>
    %40 = arith.mulf %37, %39 : vector<288x128xf32>
    %c19_38 = arith.constant 19 : index
    %c0_39 = arith.constant 0 : index
    %41 = vector.load %arg9[%c19_38, %c0_39] : memref<328x128xf32, #tpu.memory_space<vmem>>, vector<288x128xf32>
    tpu.vector_store %arg9[%c19_38, %c0_39], %40 {strides = array<i32>} : memref<328x128xf32, #tpu.memory_space<vmem>>, vector<288x128xf32>,
    %c0_40 = arith.constant 0 : index
    %c0_41 = arith.constant 0 : index
    %42 = vector.load %arg9[%c0_40, %c0_41] : memref<328x128xf32, #tpu.memory_space<vmem>>, vector<288x128xf32>
    %c0_42 = arith.constant 0 : index
    %c0_43 = arith.constant 0 : index
    %43 = vector.load %arg8[%c0_42, %c0_43] : memref<288x1152xf32, #tpu.memory_space<vmem>>, vector<288x128xf32>
    tpu.vector_store %arg8[%c0_42, %c0_43], %42 {strides = array<i32>} : memref<288x1152xf32, #tpu.memory_space<vmem>>, vector<288x128xf32>,
    %c1_44 = arith.constant 1 : index
    %c0_45 = arith.constant 0 : index
    %44 = vector.load %arg9[%c1_44, %c0_45] : memref<328x128xf32, #tpu.memory_space<vmem>>, vector<288x128xf32>
    %c0_46 = arith.constant 0 : index
    %c128_47 = arith.constant 128 : index
    %45 = vector.load %arg8[%c0_46, %c128_47] : memref<288x1152xf32, #tpu.memory_space<vmem>>, vector<288x128xf32>
    tpu.vector_store %arg8[%c0_46, %c128_47], %44 {strides = array<i32>} : memref<288x1152xf32, #tpu.memory_space<vmem>>, vector<288x128xf32>,
    %c2_48 = arith.constant 2 : index
    %c0_49 = arith.constant 0 : index
    %46 = vector.load %arg9[%c2_48, %c0_49] : memref<328x128xf32, #tpu.memory_space<vmem>>, vector<288x128xf32>
    %c0_50 = arith.constant 0 : index
    %c256_51 = arith.constant 256 : index
    %47 = vector.load %arg8[%c0_50, %c256_51] : memref<288x1152xf32, #tpu.memory_space<vmem>>, vector<288x128xf32>
    tpu.vector_store %arg8[%c0_50, %c256_51], %46 {strides = array<i32>} : memref<288x1152xf32, #tpu.memory_space<vmem>>, vector<288x128xf32>,
    %c18_52 = arith.constant 18 : index
    %c0_53 = arith.constant 0 : index
    %48 = vector.load %arg9[%c18_52, %c0_53] : memref<328x128xf32, #tpu.memory_space<vmem>>, vector<288x128xf32>
    %c0_54 = arith.constant 0 : index
    %c384_55 = arith.constant 384 : index
    %49 = vector.load %arg8[%c0_54, %c384_55] : memref<288x1152xf32, #tpu.memory_space<vmem>>, vector<288x128xf32>
    tpu.vector_store %arg8[%c0_54, %c384_55], %48 {strides = array<i32>} : memref<288x1152xf32, #tpu.memory_space<vmem>>, vector<288x128xf32>,
    %c19_56 = arith.constant 19 : index
    %c0_57 = arith.constant 0 : index
    %50 = vector.load %arg9[%c19_56, %c0_57] : memref<328x128xf32, #tpu.memory_space<vmem>>, vector<288x128xf32>
    %c0_58 = arith.constant 0 : index
    %c512_59 = arith.constant 512 : index
    %51 = vector.load %arg8[%c0_58, %c512_59] : memref<288x1152xf32, #tpu.memory_space<vmem>>, vector<288x128xf32>
    tpu.vector_store %arg8[%c0_58, %c512_59], %50 {strides = array<i32>} : memref<288x1152xf32, #tpu.memory_space<vmem>>, vector<288x128xf32>,
    %c20_60 = arith.constant 20 : index
    %c0_61 = arith.constant 0 : index
    %52 = vector.load %arg9[%c20_60, %c0_61] : memref<328x128xf32, #tpu.memory_space<vmem>>, vector<288x128xf32>
    %c0_62 = arith.constant 0 : index
    %c640_63 = arith.constant 640 : index
    %53 = vector.load %arg8[%c0_62, %c640_63] : memref<288x1152xf32, #tpu.memory_space<vmem>>, vector<288x128xf32>
    tpu.vector_store %arg8[%c0_62, %c640_63], %52 {strides = array<i32>} : memref<288x1152xf32, #tpu.memory_space<vmem>>, vector<288x128xf32>,
    %c36_64 = arith.constant 36 : index
    %c0_65 = arith.constant 0 : index
    %54 = vector.load %arg9[%c36_64, %c0_65] : memref<328x128xf32, #tpu.memory_space<vmem>>, vector<288x128xf32>
    %c0_66 = arith.constant 0 : index
    %c768_67 = arith.constant 768 : index
    %55 = vector.load %arg8[%c0_66, %c768_67] : memref<288x1152xf32, #tpu.memory_space<vmem>>, vector<288x128xf32>
    tpu.vector_store %arg8[%c0_66, %c768_67], %54 {strides = array<i32>} : memref<288x1152xf32, #tpu.memory_space<vmem>>, vector<288x128xf32>,
    %c37_68 = arith.constant 37 : index
    %c0_69 = arith.constant 0 : index
    %56 = vector.load %arg9[%c37_68, %c0_69] : memref<328x128xf32, #tpu.memory_space<vmem>>, vector<288x128xf32>
    %c0_70 = arith.constant 0 : index
    %c896_71 = arith.constant 896 : index
    %57 = vector.load %arg8[%c0_70, %c896_71] : memref<288x1152xf32, #tpu.memory_space<vmem>>, vector<288x128xf32>
    tpu.vector_store %arg8[%c0_70, %c896_71], %56 {strides = array<i32>} : memref<288x1152xf32, #tpu.memory_space<vmem>>, vector<288x128xf32>,
    %c38_72 = arith.constant 38 : index
    %c0_73 = arith.constant 0 : index
    %58 = vector.load %arg9[%c38_72, %c0_73] : memref<328x128xf32, #tpu.memory_space<vmem>>, vector<288x128xf32>
    %c0_74 = arith.constant 0 : index
    %c1024_75 = arith.constant 1024 : index
    %59 = vector.load %arg8[%c0_74, %c1024_75] : memref<288x1152xf32, #tpu.memory_space<vmem>>, vector<288x128xf32>
    tpu.vector_store %arg8[%c0_74, %c1024_75], %58 {strides = array<i32>} : memref<288x1152xf32, #tpu.memory_space<vmem>>, vector<288x128xf32>,
    %c0_76 = arith.constant 0 : index
    %c0_77 = arith.constant 0 : index
    %60 = vector.load %arg8[%c0_76, %c0_77] : memref<288x1152xf32, #tpu.memory_space<vmem>>, vector<288x1152xf32>
    %c0_78 = arith.constant 0 : index
    %c0_79 = arith.constant 0 : index
    %61 = vector.load %arg3[%c0_78, %c0_79] : memref<1152x128xf32, #tpu.memory_space<vmem>>, vector<1152x128xf32>
    %cst_80 = arith.constant dense<0.000000e+00> : vector<288x128xf32>
    %62 = tpu.matmul %60, %61, %cst_80 {dimension_numbers = #tpu.dot_dimension_numbers<[1], [0], [0], [1], [0, 0, 1, 1], [], []>} : vector<288x1152xf32>, vector<1152x128xf32>, vector<288x128xf32> -> vector<288x128xf32>
    %c0_81 = arith.constant 0 : index
    %c0_82 = arith.constant 0 : index
    %63 = vector.load %arg5[%c0_81, %c0_82] : memref<1x128xf32, #tpu.memory_space<vmem>>, vector<1x128xf32>
    %64 = vector.broadcast %63 : vector<1x128xf32> to vector<288x128xf32>
    %65 = arith.addf %62, %64 : vector<288x128xf32>
    %c0_83 = arith.constant 0 : index
    %c19_84 = arith.constant 19 : index
    %c0_85 = arith.constant 0 : index
    %66 = vector.load %arg1[%c0_83, %c19_84, %c0_85] : memref<1x328x128xf32, #tpu.memory_space<vmem>>, vector<1x288x128xf32>
    %67 = vector.shape_cast %66 : vector<1x288x128xf32> to vector<288x128xf32>
    %68 = arith.addf %65, %67 : vector<288x128xf32>
    %cst_86 = arith.constant 0.000000e+00 : f32
    %69 = vector.broadcast %cst_86 : f32 to vector<288x128xf32>
    %70 = arith.maximumf %68, %69 : vector<288x128xf32>
    %c0_87 = arith.constant 0 : index
    %c0_88 = arith.constant 0 : index
    %c0_89 = arith.constant 0 : index
    %71 = vector.load %arg7[%c0_87, %c0_88, %c0_89] : memref<1x288x128xf32, #tpu.memory_space<vmem>>, vector<1x288x128xf32>
    %72 = vector.shape_cast %71 : vector<1x288x128xf32> to vector<288x128xf32>
    %73 = vector.shape_cast %70 : vector<288x128xf32> to vector<1x288x128xf32>
    tpu.vector_store %arg7[%c0_87, %c0_88, %c0_89], %73 {strides = array<i32>} : memref<1x288x128xf32, #tpu.memory_space<vmem>>, vector<1x288x128xf32>,
    return
  }
  func.func @transform_0(%arg0: i32) -> (i32, i32, i32) {
    %c0_i32 = arith.constant 0 : i32
    %c0_i32_0 = arith.constant 0 : i32
    %c0_i32_1 = arith.constant 0 : i32
    return %arg0, %c0_i32, %c0_i32_0 : i32, i32, i32
  }
  func.func @transform_1(%arg0: i32) -> (i32, i32) {
    %c0_i32 = arith.constant 0 : i32
    %c0_i32_0 = arith.constant 0 : i32
    %c0_i32_1 = arith.constant 0 : i32
    return %c0_i32, %c0_i32_0 : i32, i32
  }
  func.func @transform_2(%arg0: i32) -> (i32, i32) {
    %c0_i32 = arith.constant 0 : i32
    %c0_i32_0 = arith.constant 0 : i32
    %c0_i32_1 = arith.constant 0 : i32
    return %c0_i32, %c0_i32_0 : i32, i32
  }
  func.func @transform_3(%arg0: i32) -> (i32, i32) {
    %c0_i32 = arith.constant 0 : i32
    %c0_i32_0 = arith.constant 0 : i32
    %c0_i32_1 = arith.constant 0 : i32
    return %c0_i32, %c0_i32_0 : i32, i32
  }
  func.func @transform_4(%arg0: i32) -> (i32, i32) {
    %c0_i32 = arith.constant 0 : i32
    %c0_i32_0 = arith.constant 0 : i32
    %c0_i32_1 = arith.constant 0 : i32
    return %c0_i32, %c0_i32_0 : i32, i32
  }
  func.func @transform_5(%arg0: i32) -> (i32, i32) {
    %c0_i32 = arith.constant 0 : i32
    %c0_i32_0 = arith.constant 0 : i32
    %c0_i32_1 = arith.constant 0 : i32
    return %c0_i32, %c0_i32_0 : i32, i32
  }
  func.func @transform_6(%arg0: i32) -> (i32, i32, i32) {
    %c0_i32 = arith.constant 0 : i32
    %c0_i32_0 = arith.constant 0 : i32
    %c0_i32_1 = arith.constant 0 : i32
    return %arg0, %c0_i32, %c0_i32_0 : i32, i32, i32
  }
}

</mosaic_0001>

<llo_original>
// kernel: tpu_custom_call.1
$region0: #{tpu_custom_call.1}
  #allocation0 [shape = 'u32[]', space=smem, size = 0x4, offset = 0x4, fixed_abs, tag = 'smem constant byte address 0x4 - core index']
  #allocation1 [shape = 'u32[72,128]{1,0:T(1,128)}', space=vmem, size = 0x9000, scoped, tag = 'internal scratch']
  #allocation2 [shape = 'f32[288,1152]{1,0:T(8,128)}', space=vmem, size = 0x144000, scoped, tag = 'scratch operand']
  #allocation3 [shape = 'f32[328,128]{1,0:T(8,128)}', space=vmem, size = 0x29000, scoped, tag = 'scratch operand']
  %s0 = inlined_call_operand.hbm [shape: f32[2,328,128], index: 0, kind: input, shape index: {}]
  %s1 = inlined_call_operand.hbm [shape: f32[1152,128], index: 1, kind: input, shape index: {}]
  %s2 = inlined_call_operand.hbm [shape: f32[1152,128], index: 2, kind: input, shape index: {}]
  %s3 = inlined_call_operand.vmem [shape: f32[1,128], index: 3, kind: input, shape index: {}]
  %s4 = inlined_call_operand.vmem [shape: f32[1,128], index: 4, kind: input, shape index: {}]
  %s5 = inlined_call_operand.vmem [shape: f32[288,1], index: 5, kind: input, shape index: {}]
  %s6 = inlined_call_operand.hbm [shape: f32[2,288,128], index: 6, kind: output, shape index: {}]
  %s7 = sld [smem:[#allocation0]]
  $region73: #{tpu_custom_call.1} parent=0
    _
  %s9 = ssub.s32 1, %s7
  %s10 = scalar_select 0, %s9, %s7
  $region1: #{tpu_custom_call.1} parent=0
    #allocation4 [shape = 'u8[335872]{0}', space=vmem, size = 0x52000, scoped, tag = 'input window, operand 0']
    #allocation5 [shape = 's32[2]{0}', space=sflag, size = 0x8, scoped, tag = 'scoped memory for tpu_custom_call.1']
    #allocation6 [shape = 's32[2]{0}', space=sflag, size = 0x8, scoped, tag = 'scoped memory for tpu_custom_call.1']
    #allocation7 [shape = 'u8[589824]{0}', space=vmem, size = 0x90000, scoped, tag = 'input window, operand 1, single buffered']
    #allocation8 [shape = 's32[1]{0}', space=sflag, size = 0x4, scoped, tag = 'scoped memory for tpu_custom_call.1']
    #allocation9 [shape = 'u8[589824]{0}', space=vmem, size = 0x90000, scoped, tag = 'input window, operand 2, single buffered']
    #allocation10 [shape = 'u8[294912]{0}', space=vmem, size = 0x48000, scoped, tag = 'output window, operand 0']
    %11 = vsyncpa [#allocation5], 0
    %s12 = scalar_lea.sflag [#allocation5], 1
    %13 = vsyncpa %s12, 0
    %14 = vsyncpa [#allocation8], 0
    %15 = vsyncpa [#allocation6], 0
    %s16 = scalar_lea.sflag [#allocation6], 1
    %17 = vsyncpa %s16, 0
    loop: start=0, step=1, limit=4
    $region2: #{tpu_custom_call.1} parent=1 // loop_pre_header
      _
    $region3: #{tpu_custom_call.1} parent=1 // loop_header
      %s19 = sphi 0, %s23
      %p20 = scmp.ge.s32.totalorder %s19, 4
      %s29 = sphi 0, %s31
      %s32 = sphi 0, %s29
      %s33 = sphi 0, %s32
      %s49 = sphi 0, %s33
      %s53 = sphi 0, %s53
      %s55 = sphi 0, %s53
      %s56 = sphi 0, %s55
      %s70 = sphi 0, %s56
      %s74 = sphi 0, %s74
      %s76 = sphi 0, %s74
      %s77 = sphi 0, %s76
      %s91 = sphi 0, %s77
      %s95 = sphi 0, %s95
      %s97 = sphi 0, %s95
      %s98 = sphi 0, %s97
      %s112 = sphi 0, %s98
      %s116 = sphi 0, %s116
      %s118 = sphi 0, %s116
      %s119 = sphi 0, %s118
      %s133 = sphi 0, %s119
      %s137 = sphi 0, %s137
      %s139 = sphi 0, %s137
      %s140 = sphi 0, %s139
      %s154 = sphi 0, %s140
      %s160 = sphi 0, %s162
      %s163 = sphi 0, %s160
      %s164 = sphi 0, %s163
      %s180 = sphi 0, %s164
    $region4: #{tpu_custom_call.1} parent=1 // loop_header_branch
      %22 = sbr.rel (%p20) target = $region8
    $region5: #{tpu_custom_call.1} parent=1 // loop_body
      %s24 = ssub.s32 %s19, 1
      %s25 = ssub.s32 %s19, 2
      %s26 = sadd.s32 %s19, 1
      %s27 = ssub.s32 %s19, %s26
      %p28 = scmp.eq.s32.totalorder %s27, 0
      %s30 = sadd.s32 %s29, 1
      %s31 = scalar_select %p28, %s29, %s30
      %p34 = pneg %p28
      %p35 = scmp.eq.s32.totalorder %s19, 1
      %p36 = por %p34, %p35
      %p37 = scmp.ne.s32.totalorder %s29, %s32
      %p38 = scmp.eq.s32.totalorder %s19, 0
      %p39 = por %p37, %p38
      %p40 = scmp.ne.s32.totalorder %s29, %s32
      %p41 = scmp.eq.s32.totalorder %s24, 1
      %p42 = por %p40, %p41
      %p43 = scmp.ne.s32.totalorder %s32, %s33
      %p44 = scmp.eq.s32.totalorder %s24, 0
      %p45 = por %p43, %p44
      %p46 = scmp.ne.s32.totalorder %s32, %s33
      %p47 = scmp.eq.s32.totalorder %s25, 1
      %p48 = por %p46, %p47
      %p50 = scmp.ne.s32.totalorder %s33, %s49
      %p51 = scmp.eq.s32.totalorder %s25, 0
      %p52 = por %p50, %p51
      %s54 = sadd.s32 %s53, 1
      %p57 = scmp.eq.s32.totalorder %s19, 1
      %p58 = scmp.ne.s32.totalorder %s53, %s55
      %p59 = scmp.eq.s32.totalorder %s19, 0
      %p60 = por %p58, %p59
      %p61 = scmp.ne.s32.totalorder %s53, %s55
      %p62 = scmp.eq.s32.totalorder %s24, 1
      %p63 = por %p61, %p62
      %p64 = scmp.ne.s32.totalorder %s55, %s56
      %p65 = scmp.eq.s32.totalorder %s24, 0
      %p66 = por %p64, %p65
      %p67 = scmp.ne.s32.totalorder %s55, %s56
      %p68 = scmp.eq.s32.totalorder %s25, 1
      %p69 = por %p67, %p68
      %p71 = scmp.ne.s32.totalorder %s56, %s70
      %p72 = scmp.eq.s32.totalorder %s25, 0
      %p73 = por %p71, %p72
      %s75 = sadd.s32 %s74, 1
      %p78 = scmp.eq.s32.totalorder %s19, 1
      %p79 = scmp.ne.s32.totalorder %s74, %s76
      %p80 = scmp.eq.s32.totalorder %s19, 0
      %p81 = por %p79, %p80
      %p82 = scmp.ne.s32.totalorder %s74, %s76
      %p83 = scmp.eq.s32.totalorder %s24, 1
      %p84 = por %p82, %p83
      %p85 = scmp.ne.s32.totalorder %s76, %s77
      %p86 = scmp.eq.s32.totalorder %s24, 0
      %p87 = por %p85, %p86
      %p88 = scmp.ne.s32.totalorder %s76, %s77
      %p89 = scmp.eq.s32.totalorder %s25, 1
      %p90 = por %p88, %p89
      %p92 = scmp.ne.s32.totalorder %s77, %s91
      %p93 = scmp.eq.s32.totalorder %s25, 0
      %p94 = por %p92, %p93
      %s96 = sadd.s32 %s95, 1
      %p99 = scmp.eq.s32.totalorder %s19, 1
      %p100 = scmp.ne.s32.totalorder %s95, %s97
      %p101 = scmp.eq.s32.totalorder %s19, 0
      %p102 = por %p100, %p101
      %p103 = scmp.ne.s32.totalorder %s95, %s97
      %p104 = scmp.eq.s32.totalorder %s24, 1
      %p105 = por %p103, %p104
      %p106 = scmp.ne.s32.totalorder %s97, %s98
      %p107 = scmp.eq.s32.totalorder %s24, 0
      %p108 = por %p106, %p107
      %p109 = scmp.ne.s32.totalorder %s97, %s98
      %p110 = scmp.eq.s32.totalorder %s25, 1
      %p111 = por %p109, %p110
      %p113 = scmp.ne.s32.totalorder %s98, %s112
      %p114 = scmp.eq.s32.totalorder %s25, 0
      %p115 = por %p113, %p114
      %s117 = sadd.s32 %s116, 1
      %p120 = scmp.eq.s32.totalorder %s19, 1
      %p121 = scmp.ne.s32.totalorder %s116, %s118
      %p122 = scmp.eq.s32.totalorder %s19, 0
      %p123 = por %p121, %p122
      %p124 = scmp.ne.s32.totalorder %s116, %s118
      %p125 = scmp.eq.s32.totalorder %s24, 1
      %p126 = por %p124, %p125
      %p127 = scmp.ne.s32.totalorder %s118, %s119
      %p128 = scmp.eq.s32.totalorder %s24, 0
      %p129 = por %p127, %p128
      %p130 = scmp.ne.s32.totalorder %s118, %s119
      %p131 = scmp.eq.s32.totalorder %s25, 1
      %p132 = por %p130, %p131
      %p134 = scmp.ne.s32.totalorder %s119, %s133
      %p135 = scmp.eq.s32.totalorder %s25, 0
      %p136 = por %p134, %p135
      %s138 = sadd.s32 %s137, 1
      %p141 = scmp.eq.s32.totalorder %s19, 1
      %p142 = scmp.ne.s32.totalorder %s137, %s139
      %p143 = scmp.eq.s32.totalorder %s19, 0
      %p144 = por %p142, %p143
      %p145 = scmp.ne.s32.totalorder %s137, %s139
      %p146 = scmp.eq.s32.totalorder %s24, 1
      %p147 = por %p145, %p146
      %p148 = scmp.ne.s32.totalorder %s139, %s140
      %p149 = scmp.eq.s32.totalorder %s24, 0
      %p150 = por %p148, %p149
      %p151 = scmp.ne.s32.totalorder %s139, %s140
      %p152 = scmp.eq.s32.totalorder %s25, 1
      %p153 = por %p151, %p152
      %p155 = scmp.ne.s32.totalorder %s140, %s154
      %p156 = scmp.eq.s32.totalorder %s25, 0
      %p157 = por %p155, %p156
      %s158 = ssub.s32 %s19, %s26
      %p159 = scmp.eq.s32.totalorder %s158, 0
      %s161 = sadd.s32 %s160, 1
      %s162 = scalar_select %p159, %s160, %s161
      %p165 = pneg %p159
      %p166 = scmp.eq.s32.totalorder %s19, 1
      %p167 = por %p165, %p166
      %p168 = scmp.ne.s32.totalorder %s160, %s163
      %p169 = scmp.eq.s32.totalorder %s19, 0
      %p170 = por %p168, %p169
      %p171 = scmp.ne.s32.totalorder %s160, %s163
      %p172 = scmp.eq.s32.totalorder %s24, 1
      %p173 = por %p171, %p172
      %p174 = scmp.ne.s32.totalorder %s163, %s164
      %p175 = scmp.eq.s32.totalorder %s24, 0
      %p176 = por %p174, %p175
      %p177 = scmp.ne.s32.totalorder %s163, %s164
      %p178 = scmp.eq.s32.totalorder %s25, 1
      %p179 = por %p177, %p178
      %p181 = scmp.ne.s32.totalorder %s164, %s180
      %p182 = scmp.eq.s32.totalorder %s25, 0
      %p183 = por %p181, %p182
      %p184 = scmp.le.s32.totalorder 1, %s19
      %p185 = scmp.lt.s32.totalorder %s19, 3
      %p186 = pnand %p184, %p185
      %p187 = pneg %p186
      // Predicated region
      $region9: #{tpu_custom_call.1} parent=5 // pred_check
        _
      $region10: #{tpu_custom_call.1} parent=5 // pred_check_branch
        %189 = sbr.rel (%p186) target = $region12
      $region11: #{tpu_custom_call.1} parent=5 // pred_region
        %s190 = ssub.s32 %s19, 1
        // Predicated region
        $region13: #{tpu_custom_call.1} parent=11 // pred_check
          %p191 = pneg %p66
        $region14: #{tpu_custom_call.1} parent=11 // pred_check_branch
          %193 = sbr.rel (%p191) target = $region16
        $region15: #{tpu_custom_call.1} parent=11 // pred_region
          %195 = vsyncadd [#allocation8], 0
          %s196 = sshll.u32 %s1, 4
          %s197 = int_to_ptr.hbm [resolvable:$true] %s196
          %s198 = sshll.u32 [#allocation7], 4
          %s199 = int_to_ptr.vmem [resolvable:$true] %s198
          %204 = dma.hbm_to_vmem [thread:$0]  %s197, 18432, %s199, [#allocation8], 128, 128, 8
        $region16: #{tpu_custom_call.1} parent=11 // pred_fallthru
          _
        // Predicated region
        $region17: #{tpu_custom_call.1} parent=11 // pred_check
          %p205 = pneg %p87
        $region18: #{tpu_custom_call.1} parent=11 // pred_check_branch
          %207 = sbr.rel (%p205) target = $region20
        $region19: #{tpu_custom_call.1} parent=11 // pred_region
          %209 = vsyncadd [#allocation8], 0
          %s210 = sshll.u32 %s2, 4
          %s211 = int_to_ptr.hbm [resolvable:$true] %s210
          %s212 = sshll.u32 [#allocation9], 4
          %s213 = int_to_ptr.vmem [resolvable:$true] %s212
          %218 = dma.hbm_to_vmem [thread:$0]  %s211, 18432, %s213, [#allocation8], 128, 128, 8
        $region20: #{tpu_custom_call.1} parent=11 // pred_fallthru
          _
        // Predicated region
        $region21: #{tpu_custom_call.1} parent=11 // pred_check
          %p219 = pneg %p108
        $region22: #{tpu_custom_call.1} parent=11 // pred_check_branch
          %221 = sbr.rel (%p219) target = $region24
        $region23: #{tpu_custom_call.1} parent=11 // pred_region
          _
        $region24: #{tpu_custom_call.1} parent=11 // pred_fallthru
          _
        // Predicated region
        $region25: #{tpu_custom_call.1} parent=11 // pred_check
          %p222 = pneg %p129
        $region26: #{tpu_custom_call.1} parent=11 // pred_check_branch
          %224 = sbr.rel (%p222) target = $region28
        $region27: #{tpu_custom_call.1} parent=11 // pred_region
          _
        $region28: #{tpu_custom_call.1} parent=11 // pred_fallthru
          _
        // Predicated region
        $region29: #{tpu_custom_call.1} parent=11 // pred_check
          %p225 = pneg %p150
        $region30: #{tpu_custom_call.1} parent=11 // pred_check_branch
          %227 = sbr.rel (%p225) target = $region32
        $region31: #{tpu_custom_call.1} parent=11 // pred_region
          _
        $region32: #{tpu_custom_call.1} parent=11 // pred_fallthru
          _
      $region12: #{tpu_custom_call.1} parent=5 // pred_fallthru
        _
      %p228 = scmp.lt.s32.totalorder %s19, 2
      // Predicated region
      $region33: #{tpu_custom_call.1} parent=5 // pred_check
        %p229 = pneg %p228
      $region34: #{tpu_custom_call.1} parent=5 // pred_check_branch
        %231 = sbr.rel (%p229) target = $region36
      $region35: #{tpu_custom_call.1} parent=5 // pred_region
        // Predicated region
        $region37: #{tpu_custom_call.1} parent=35 // pred_check
          %p232 = pneg %p39
        $region38: #{tpu_custom_call.1} parent=35 // pred_check_branch
          %234 = sbr.rel (%p232) target = $region40
        $region39: #{tpu_custom_call.1} parent=35 // pred_region
          %s235 = sand.u32 %s29, 1
          %s236 = scalar_lea.sflag [#allocation5], %s235
          %s237 = sand.u32 %s29, 1
          %s238 = smul.addr %s237, 328
          %s239 = scalar_lea.vmem [#allocation4], %s238
          %241 = vsyncadd %s236, 0
          %s242 = smul.addr %s19, 41
          %s243 = smul.addr %s242, 8
          %s244 = scalar_lea.hbm %s0, %s243
          %s245 = sshll.u32 %s244, 4
          %s246 = int_to_ptr.hbm [resolvable:$true] %s245
          %s247 = sshll.u32 %s239, 4
          %s248 = int_to_ptr.vmem [resolvable:$true] %s247
          %253 = dma.hbm_to_vmem [thread:$0]  %s246, 5248, %s248, %s236, 128, 128, 8
        $region40: #{tpu_custom_call.1} parent=35 // pred_fallthru
          _
      $region36: #{tpu_custom_call.1} parent=5 // pred_fallthru
        _
      %p254 = scmp.le.s32.totalorder 1, %s19
      %p255 = scmp.lt.s32.totalorder %s19, 3
      %p256 = pnand %p254, %p255
      %p257 = pneg %p256
      // Predicated region
      $region41: #{tpu_custom_call.1} parent=5 // pred_check
        _
      $region42: #{tpu_custom_call.1} parent=5 // pred_check_branch
        %259 = sbr.rel (%p256) target = $region44
      $region43: #{tpu_custom_call.1} parent=5 // pred_region
        %s260 = ssub.s32 %s19, 1
        %s261 = sand.u32 %s32, 1
        %s262 = scalar_lea.sflag [#allocation5], %s261
        %s263 = sand.u32 %s32, 1
        %s264 = smul.addr %s263, 328
        %s265 = scalar_lea.vmem [#allocation4], %s264
        // Predicated region
        $region45: #{tpu_custom_call.1} parent=43 // pred_check
          %p266 = pneg %p45
        $region46: #{tpu_custom_call.1} parent=43 // pred_check_branch
          %268 = sbr.rel (%p266) target = $region48
        $region47: #{tpu_custom_call.1} parent=43 // pred_region
          %270 = dma.done %s262, 5248
        $region48: #{tpu_custom_call.1} parent=43 // pred_fallthru
          _
        // Predicated region
        $region49: #{tpu_custom_call.1} parent=43 // pred_check
          %p271 = pneg %p66
        $region50: #{tpu_custom_call.1} parent=43 // pred_check_branch
          %273 = sbr.rel (%p271) target = $region52
        $region51: #{tpu_custom_call.1} parent=43 // pred_region
          %275 = dma.done [#allocation8], 18432
        $region52: #{tpu_custom_call.1} parent=43 // pred_fallthru
          _
        // Predicated region
        $region53: #{tpu_custom_call.1} parent=43 // pred_check
          %p276 = pneg %p87
        $region54: #{tpu_custom_call.1} parent=43 // pred_check_branch
          %278 = sbr.rel (%p276) target = $region56
        $region55: #{tpu_custom_call.1} parent=43 // pred_region
          %280 = dma.done [#allocation8], 18432
        $region56: #{tpu_custom_call.1} parent=43 // pred_fallthru
          _
        %s281 = sand.u32 %s32, 1
        %s282 = scalar_lea.sflag [#allocation5], %s281
        %s283 = sand.u32 %s32, 1
        %s284 = smul.addr %s283, 328
        %s285 = scalar_lea.vmem [#allocation4], %s284
        %p286 = pneg %p45
        %p287 = pneg %p42
        %p288 = pneg %p66
        %p289 = pneg %p63
        %p290 = pneg %p87
        %p291 = pneg %p84
        %p292 = pneg %p108
        %p293 = pneg %p105
        %p294 = pneg %p129
        %p295 = pneg %p126
        %p296 = pneg %p150
        %p297 = pneg %p147
        %p298 = pneg %p176
        %p299 = pneg %p173
        %s300 = sand.u32 %s163, 1
        %s301 = scalar_lea.sflag [#allocation6], %s300
        %s302 = sand.u32 %s163, 1
        %s303 = smul.addr %s302, 288
        %s304 = scalar_lea.vmem [#allocation10], %s303
        %p305 = scmp.eq.s32.totalorder %s24, 0
        // Predicated region
        $region57: #{tpu_custom_call.1} parent=43 // pred_check
          %p306 = pneg %p305
        $region58: #{tpu_custom_call.1} parent=43 // pred_check_branch
          %308 = sbr.rel (%p306) target = $region60
        $region59: #{tpu_custom_call.1} parent=43 // pred_region
          %309 = vst [vmem:[#allocation3] sm:$0xff] 0.0
          %310 = vst [vmem:[#allocation3 + $0x8] sm:$0xff] 0.0
          %311 = vst [vmem:[#allocation3 + $0x10] sm:$0xff] 0.0
          %312 = vst [vmem:[#allocation3 + $0x18] sm:$0xff] 0.0
          %313 = vst [vmem:[#allocation3 + $0x20] sm:$0xff] 0.0
          %314 = vst [vmem:[#allocation3 + $0x28] sm:$0xff] 0.0
          %315 = vst [vmem:[#allocation3 + $0x30] sm:$0xff] 0.0
          %316 = vst [vmem:[#allocation3 + $0x38] sm:$0xff] 0.0
          %317 = vst [vmem:[#allocation3 + $0x40] sm:$0xff] 0.0
          %318 = vst [vmem:[#allocation3 + $0x48] sm:$0xff] 0.0
          %319 = vst [vmem:[#allocation3 + $0x50] sm:$0xff] 0.0
          %320 = vst [vmem:[#allocation3 + $0x58] sm:$0xff] 0.0
          %321 = vst [vmem:[#allocation3 + $0x60] sm:$0xff] 0.0
          %322 = vst [vmem:[#allocation3 + $0x68] sm:$0xff] 0.0
          %323 = vst [vmem:[#allocation3 + $0x70] sm:$0xff] 0.0
          %324 = vst [vmem:[#allocation3 + $0x78] sm:$0xff] 0.0
          %325 = vst [vmem:[#allocation3 + $0x80] sm:$0xff] 0.0
          %326 = vst [vmem:[#allocation3 + $0x88] sm:$0xff] 0.0
          %327 = vst [vmem:[#allocation3 + $0x90] sm:$0xff] 0.0
          %328 = vst [vmem:[#allocation3 + $0x98] sm:$0xff] 0.0
          %329 = vst [vmem:[#allocation3 + $0xa0] sm:$0xff] 0.0
          %330 = vst [vmem:[#allocation3 + $0xa8] sm:$0xff] 0.0
          %331 = vst [vmem:[#allocation3 + $0xb0] sm:$0xff] 0.0
          %332 = vst [vmem:[#allocation3 + $0xb8] sm:$0xff] 0.0
          %333 = vst [vmem:[#allocation3 + $0xc0] sm:$0xff] 0.0
          %334 = vst [vmem:[#allocation3 + $0xc8] sm:$0xff] 0.0
          %335 = vst [vmem:[#allocation3 + $0xd0] sm:$0xff] 0.0
          %336 = vst [vmem:[#allocation3 + $0xd8] sm:$0xff] 0.0
          %337 = vst [vmem:[#allocation3 + $0xe0] sm:$0xff] 0.0
          %338 = vst [vmem:[#allocation3 + $0xe8] sm:$0xff] 0.0
          %339 = vst [vmem:[#allocation3 + $0xf0] sm:$0xff] 0.0
          %340 = vst [vmem:[#allocation3 + $0xf8] sm:$0xff] 0.0
          %341 = vst [vmem:[#allocation3 + $0x100] sm:$0xff] 0.0
          %342 = vst [vmem:[#allocation3 + $0x108] sm:$0xff] 0.0
          %343 = vst [vmem:[#allocation3 + $0x110] sm:$0xff] 0.0
          %344 = vst [vmem:[#allocation3 + $0x118] sm:$0xff] 0.0
          %345 = vst [vmem:[#allocation3 + $0x120] sm:$0xff] 0.0
          %346 = vst [vmem:[#allocation3 + $0x128] sm:$0xff] 0.0
          %347 = vst [vmem:[#allocation3 + $0x130] sm:$0xff] 0.0
          %348 = vst [vmem:[#allocation3 + $0x138] sm:$0xff] 0.0
          %349 = vst [vmem:[#allocation3 + $0x140] sm:$0xff] 0.0
        $region60: #{tpu_custom_call.1} parent=43 // pred_fallthru
          _
        %v350 = vld [vmem:[%s265] sm:$0xff]
        %v351 = vld [vmem:[%s265 + $0x8] sm:$0xff]
        %v352 = vld [vmem:[%s265 + $0x10] sm:$0xff]
        %v353 = vld [vmem:[%s265 + $0x18] sm:$0xff]
        %v354 = vld [vmem:[%s265 + $0x20] sm:$0xff]
        %v355 = vld [vmem:[%s265 + $0x28] sm:$0xff]
        %v356 = vld [vmem:[%s265 + $0x30] sm:$0xff]
        %v357 = vld [vmem:[%s265 + $0x38] sm:$0xff]
        %v358 = vld [vmem:[%s265 + $0x40] sm:$0xff]
        %v359 = vld [vmem:[%s265 + $0x48] sm:$0xff]
        %v360 = vld [vmem:[%s265 + $0x50] sm:$0xff]
        %v361 = vld [vmem:[%s265 + $0x58] sm:$0xff]
        %v362 = vld [vmem:[%s265 + $0x60] sm:$0xff]
        %v363 = vld [vmem:[%s265 + $0x68] sm:$0xff]
        %v364 = vld [vmem:[%s265 + $0x70] sm:$0xff]
        %v365 = vld [vmem:[%s265 + $0x78] sm:$0xff]
        %v366 = vld [vmem:[%s265 + $0x80] sm:$0xff]
        %v367 = vld [vmem:[%s265 + $0x88] sm:$0xff]
        %v368 = vld [vmem:[%s265 + $0x90] sm:$0xff]
        %v369 = vld [vmem:[%s265 + $0x98] sm:$0xff]
        %v370 = vld [vmem:[%s265 + $0xa0] sm:$0xff]
        %v371 = vld [vmem:[%s265 + $0xa8] sm:$0xff]
        %v372 = vld [vmem:[%s265 + $0xb0] sm:$0xff]
        %v373 = vld [vmem:[%s265 + $0xb8] sm:$0xff]
        %v374 = vld [vmem:[%s265 + $0xc0] sm:$0xff]
        %v375 = vld [vmem:[%s265 + $0xc8] sm:$0xff]
        %v376 = vld [vmem:[%s265 + $0xd0] sm:$0xff]
        %v377 = vld [vmem:[%s265 + $0xd8] sm:$0xff]
        %v378 = vld [vmem:[%s265 + $0xe0] sm:$0xff]
        %v379 = vld [vmem:[%s265 + $0xe8] sm:$0xff]
        %v380 = vld [vmem:[%s265 + $0xf0] sm:$0xff]
        %v381 = vld [vmem:[%s265 + $0xf8] sm:$0xff]
        %v382 = vld [vmem:[%s265 + $0x100] sm:$0xff]
        %v383 = vld [vmem:[%s265 + $0x108] sm:$0xff]
        %v384 = vld [vmem:[%s265 + $0x110] sm:$0xff]
        %v385 = vld [vmem:[%s265 + $0x118] sm:$0xff]
        %386 = vst [vmem:[#allocation2] sm:$0xff] %v350
        %387 = vst [vmem:[#allocation2 + $0x48] sm:$0xff] %v351
        %388 = vst [vmem:[#allocation2 + $0x90] sm:$0xff] %v352
        %389 = vst [vmem:[#allocation2 + $0xd8] sm:$0xff] %v353
        %390 = vst [vmem:[#allocation2 + $0x120] sm:$0xff] %v354
        %391 = vst [vmem:[#allocation2 + $0x168] sm:$0xff] %v355
        %392 = vst [vmem:[#allocation2 + $0x1b0] sm:$0xff] %v356
        %393 = vst [vmem:[#allocation2 + $0x1f8] sm:$0xff] %v357
        %394 = vst [vmem:[#allocation2 + $0x240] sm:$0xff] %v358
        %395 = vst [vmem:[#allocation2 + $0x288] sm:$0xff] %v359
        %396 = vst [vmem:[#allocation2 + $0x2d0] sm:$0xff] %v360
        %397 = vst [vmem:[#allocation2 + $0x318] sm:$0xff] %v361
        %398 = vst [vmem:[#allocation2 + $0x360] sm:$0xff] %v362
        %399 = vst [vmem:[#allocation2 + $0x3a8] sm:$0xff] %v363
        %400 = vst [vmem:[#allocation2 + $0x3f0] sm:$0xff] %v364
        %401 = vst [vmem:[#allocation2 + $0x438] sm:$0xff] %v365
        %402 = vst [vmem:[#allocation2 + $0x480] sm:$0xff] %v366
        %403 = vst [vmem:[#allocation2 + $0x4c8] sm:$0xff] %v367
        %404 = vst [vmem:[#allocation2 + $0x510] sm:$0xff] %v368
        %405 = vst [vmem:[#allocation2 + $0x558] sm:$0xff] %v369
        %406 = vst [vmem:[#allocation2 + $0x5a0] sm:$0xff] %v370
        %407 = vst [vmem:[#allocation2 + $0x5e8] sm:$0xff] %v371
        %408 = vst [vmem:[#allocation2 + $0x630] sm:$0xff] %v372
        %409 = vst [vmem:[#allocation2 + $0x678] sm:$0xff] %v373
        %410 = vst [vmem:[#allocation2 + $0x6c0] sm:$0xff] %v374
        %411 = vst [vmem:[#allocation2 + $0x708] sm:$0xff] %v375
        %412 = vst [vmem:[#allocation2 + $0x750] sm:$0xff] %v376
        %413 = vst [vmem:[#allocation2 + $0x798] sm:$0xff] %v377
        %414 = vst [vmem:[#allocation2 + $0x7e0] sm:$0xff] %v378
        %415 = vst [vmem:[#allocation2 + $0x828] sm:$0xff] %v379
        %416 = vst [vmem:[#allocation2 + $0x870] sm:$0xff] %v380
        %417 = vst [vmem:[#allocation2 + $0x8b8] sm:$0xff] %v381
        %418 = vst [vmem:[#allocation2 + $0x900] sm:$0xff] %v382
        %419 = vst [vmem:[#allocation2 + $0x948] sm:$0xff] %v383
        %420 = vst [vmem:[#allocation2 + $0x990] sm:$0xff] %v384
        %421 = vst [vmem:[#allocation2 + $0x9d8] sm:$0xff] %v385
        %v422 = vld [vmem:[%s265 + $0x1] sm:$0xff]
        %v423 = vld [vmem:[%s265 + $0x9] sm:$0xff]
        %v424 = vld [vmem:[%s265 + $0x11] sm:$0xff]
        %v425 = vld [vmem:[%s265 + $0x19] sm:$0xff]
        %v426 = vld [vmem:[%s265 + $0x21] sm:$0xff]
        %v427 = vld [vmem:[%s265 + $0x29] sm:$0xff]
        %v428 = vld [vmem:[%s265 + $0x31] sm:$0xff]
        %v429 = vld [vmem:[%s265 + $0x39] sm:$0xff]
        %v430 = vld [vmem:[%s265 + $0x41] sm:$0xff]
        %v431 = vld [vmem:[%s265 + $0x49] sm:$0xff]
        %v432 = vld [vmem:[%s265 + $0x51] sm:$0xff]
        %v433 = vld [vmem:[%s265 + $0x59] sm:$0xff]
        %v434 = vld [vmem:[%s265 + $0x61] sm:$0xff]
        %v435 = vld [vmem:[%s265 + $0x69] sm:$0xff]
        %v436 = vld [vmem:[%s265 + $0x71] sm:$0xff]
        %v437 = vld [vmem:[%s265 + $0x79] sm:$0xff]
        %v438 = vld [vmem:[%s265 + $0x81] sm:$0xff]
        %v439 = vld [vmem:[%s265 + $0x89] sm:$0xff]
        %v440 = vld [vmem:[%s265 + $0x91] sm:$0xff]
        %v441 = vld [vmem:[%s265 + $0x99] sm:$0xff]
        %v442 = vld [vmem:[%s265 + $0xa1] sm:$0xff]
        %v443 = vld [vmem:[%s265 + $0xa9] sm:$0xff]
        %v444 = vld [vmem:[%s265 + $0xb1] sm:$0xff]
        %v445 = vld [vmem:[%s265 + $0xb9] sm:$0xff]
        %v446 = vld [vmem:[%s265 + $0xc1] sm:$0xff]
        %v447 = vld [vmem:[%s265 + $0xc9] sm:$0xff]
        %v448 = vld [vmem:[%s265 + $0xd1] sm:$0xff]
        %v449 = vld [vmem:[%s265 + $0xd9] sm:$0xff]
        %v450 = vld [vmem:[%s265 + $0xe1] sm:$0xff]
        %v451 = vld [vmem:[%s265 + $0xe9] sm:$0xff]
        %v452 = vld [vmem:[%s265 + $0xf1] sm:$0xff]
        %v453 = vld [vmem:[%s265 + $0xf9] sm:$0xff]
        %v454 = vld [vmem:[%s265 + $0x101] sm:$0xff]
        %v455 = vld [vmem:[%s265 + $0x109] sm:$0xff]
        %v456 = vld [vmem:[%s265 + $0x111] sm:$0xff]
        %v457 = vld [vmem:[%s265 + $0x119] sm:$0xff]
        %458 = vst [vmem:[#allocation2 + $0x8] sm:$0xff] %v422
        %459 = vst [vmem:[#allocation2 + $0x50] sm:$0xff] %v423
        %460 = vst [vmem:[#allocation2 + $0x98] sm:$0xff] %v424
        %461 = vst [vmem:[#allocation2 + $0xe0] sm:$0xff] %v425
        %462 = vst [vmem:[#allocation2 + $0x128] sm:$0xff] %v426
        %463 = vst [vmem:[#allocation2 + $0x170] sm:$0xff] %v427
        %464 = vst [vmem:[#allocation2 + $0x1b8] sm:$0xff] %v428
        %465 = vst [vmem:[#allocation2 + $0x200] sm:$0xff] %v429
        %466 = vst [vmem:[#allocation2 + $0x248] sm:$0xff] %v430
        %467 = vst [vmem:[#allocation2 + $0x290] sm:$0xff] %v431
        %468 = vst [vmem:[#allocation2 + $0x2d8] sm:$0xff] %v432
        %469 = vst [vmem:[#allocation2 + $0x320] sm:$0xff] %v433
        %470 = vst [vmem:[#allocation2 + $0x368] sm:$0xff] %v434
        %471 = vst [vmem:[#allocation2 + $0x3b0] sm:$0xff] %v435
        %472 = vst [vmem:[#allocation2 + $0x3f8] sm:$0xff] %v436
        %473 = vst [vmem:[#allocation2 + $0x440] sm:$0xff] %v437
        %474 = vst [vmem:[#allocation2 + $0x488] sm:$0xff] %v438
        %475 = vst [vmem:[#allocation2 + $0x4d0] sm:$0xff] %v439
        %476 = vst [vmem:[#allocation2 + $0x518] sm:$0xff] %v440
        %477 = vst [vmem:[#allocation2 + $0x560] sm:$0xff] %v441
        %478 = vst [vmem:[#allocation2 + $0x5a8] sm:$0xff] %v442
        %479 = vst [vmem:[#allocation2 + $0x5f0] sm:$0xff] %v443
        %480 = vst [vmem:[#allocation2 + $0x638] sm:$0xff] %v444
        %481 = vst [vmem:[#allocation2 + $0x680] sm:$0xff] %v445
        %482 = vst [vmem:[#allocation2 + $0x6c8] sm:$0xff] %v446
        %483 = vst [vmem:[#allocation2 + $0x710] sm:$0xff] %v447
        %484 = vst [vmem:[#allocation2 + $0x758] sm:$0xff] %v448
        %485 = vst [vmem:[#allocation2 + $0x7a0] sm:$0xff] %v449
        %486 = vst [vmem:[#allocation2 + $0x7e8] sm:$0xff] %v450
        %487 = vst [vmem:[#allocation2 + $0x830] sm:$0xff] %v451
        %488 = vst [vmem:[#allocation2 + $0x878] sm:$0xff] %v452
        %489 = vst [vmem:[#allocation2 + $0x8c0] sm:$0xff] %v453
        %490 = vst [vmem:[#allocation2 + $0x908] sm:$0xff] %v454
        %491 = vst [vmem:[#allocation2 + $0x950] sm:$0xff] %v455
        %492 = vst [vmem:[#allocation2 + $0x998] sm:$0xff] %v456
        %493 = vst [vmem:[#allocation2 + $0x9e0] sm:$0xff] %v457
        %v494 = vld [vmem:[%s265 + $0x2] sm:$0xff]
        %v495 = vld [vmem:[%s265 + $0xa] sm:$0xff]
        %v496 = vld [vmem:[%s265 + $0x12] sm:$0xff]
        %v497 = vld [vmem:[%s265 + $0x1a] sm:$0xff]
        %v498 = vld [vmem:[%s265 + $0x22] sm:$0xff]
        %v499 = vld [vmem:[%s265 + $0x2a] sm:$0xff]
        %v500 = vld [vmem:[%s265 + $0x32] sm:$0xff]
        %v501 = vld [vmem:[%s265 + $0x3a] sm:$0xff]
        %v502 = vld [vmem:[%s265 + $0x42] sm:$0xff]
        %v503 = vld [vmem:[%s265 + $0x4a] sm:$0xff]
        %v504 = vld [vmem:[%s265 + $0x52] sm:$0xff]
        %v505 = vld [vmem:[%s265 + $0x5a] sm:$0xff]
        %v506 = vld [vmem:[%s265 + $0x62] sm:$0xff]
        %v507 = vld [vmem:[%s265 + $0x6a] sm:$0xff]
        %v508 = vld [vmem:[%s265 + $0x72] sm:$0xff]
        %v509 = vld [vmem:[%s265 + $0x7a] sm:$0xff]
        %v510 = vld [vmem:[%s265 + $0x82] sm:$0xff]
        %v511 = vld [vmem:[%s265 + $0x8a] sm:$0xff]
        %v512 = vld [vmem:[%s265 + $0x92] sm:$0xff]
        %v513 = vld [vmem:[%s265 + $0x9a] sm:$0xff]
        %v514 = vld [vmem:[%s265 + $0xa2] sm:$0xff]
        %v515 = vld [vmem:[%s265 + $0xaa] sm:$0xff]
        %v516 = vld [vmem:[%s265 + $0xb2] sm:$0xff]
        %v517 = vld [vmem:[%s265 + $0xba] sm:$0xff]
        %v518 = vld [vmem:[%s265 + $0xc2] sm:$0xff]
        %v519 = vld [vmem:[%s265 + $0xca] sm:$0xff]
        %v520 = vld [vmem:[%s265 + $0xd2] sm:$0xff]
        %v521 = vld [vmem:[%s265 + $0xda] sm:$0xff]
        %v522 = vld [vmem:[%s265 + $0xe2] sm:$0xff]
        %v523 = vld [vmem:[%s265 + $0xea] sm:$0xff]
        %v524 = vld [vmem:[%s265 + $0xf2] sm:$0xff]
        %v525 = vld [vmem:[%s265 + $0xfa] sm:$0xff]
        %v526 = vld [vmem:[%s265 + $0x102] sm:$0xff]
        %v527 = vld [vmem:[%s265 + $0x10a] sm:$0xff]
        %v528 = vld [vmem:[%s265 + $0x112] sm:$0xff]
        %v529 = vld [vmem:[%s265 + $0x11a] sm:$0xff]
        %530 = vst [vmem:[#allocation2 + $0x10] sm:$0xff] %v494
        %531 = vst [vmem:[#allocation2 + $0x58] sm:$0xff] %v495
        %532 = vst [vmem:[#allocation2 + $0xa0] sm:$0xff] %v496
        %533 = vst [vmem:[#allocation2 + $0xe8] sm:$0xff] %v497
        %534 = vst [vmem:[#allocation2 + $0x130] sm:$0xff] %v498
        %535 = vst [vmem:[#allocation2 + $0x178] sm:$0xff] %v499
        %536 = vst [vmem:[#allocation2 + $0x1c0] sm:$0xff] %v500
        %537 = vst [vmem:[#allocation2 + $0x208] sm:$0xff] %v501
        %538 = vst [vmem:[#allocation2 + $0x250] sm:$0xff] %v502
        %539 = vst [vmem:[#allocation2 + $0x298] sm:$0xff] %v503
        %540 = vst [vmem:[#allocation2 + $0x2e0] sm:$0xff] %v504
        %541 = vst [vmem:[#allocation2 + $0x328] sm:$0xff] %v505
        %542 = vst [vmem:[#allocation2 + $0x370] sm:$0xff] %v506
        %543 = vst [vmem:[#allocation2 + $0x3b8] sm:$0xff] %v507
        %544 = vst [vmem:[#allocation2 + $0x400] sm:$0xff] %v508
        %545 = vst [vmem:[#allocation2 + $0x448] sm:$0xff] %v509
        %546 = vst [vmem:[#allocation2 + $0x490] sm:$0xff] %v510
        %547 = vst [vmem:[#allocation2 + $0x4d8] sm:$0xff] %v511
        %548 = vst [vmem:[#allocation2 + $0x520] sm:$0xff] %v512
        %549 = vst [vmem:[#allocation2 + $0x568] sm:$0xff] %v513
        %550 = vst [vmem:[#allocation2 + $0x5b0] sm:$0xff] %v514
        %551 = vst [vmem:[#allocation2 + $0x5f8] sm:$0xff] %v515
        %552 = vst [vmem:[#allocation2 + $0x640] sm:$0xff] %v516
        %553 = vst [vmem:[#allocation2 + $0x688] sm:$0xff] %v517
        %554 = vst [vmem:[#allocation2 + $0x6d0] sm:$0xff] %v518
        %555 = vst [vmem:[#allocation2 + $0x718] sm:$0xff] %v519
        %556 = vst [vmem:[#allocation2 + $0x760] sm:$0xff] %v520
        %557 = vst [vmem:[#allocation2 + $0x7a8] sm:$0xff] %v521
        %558 = vst [vmem:[#allocation2 + $0x7f0] sm:$0xff] %v522
        %559 = vst [vmem:[#allocation2 + $0x838] sm:$0xff] %v523
        %560 = vst [vmem:[#allocation2 + $0x880] sm:$0xff] %v524
        %561 = vst [vmem:[#allocation2 + $0x8c8] sm:$0xff] %v525
        %562 = vst [vmem:[#allocation2 + $0x910] sm:$0xff] %v526
        %563 = vst [vmem:[#allocation2 + $0x958] sm:$0xff] %v527
        %564 = vst [vmem:[#allocation2 + $0x9a0] sm:$0xff] %v528
        %565 = vst [vmem:[#allocation2 + $0x9e8] sm:$0xff] %v529
        %v566 = vld [vmem:[%s265 + $0x12] sm:$0xff]
        %v567 = vld [vmem:[%s265 + $0x1a] sm:$0xff]
        %v568 = vld [vmem:[%s265 + $0x22] sm:$0xff]
        %v569 = vld [vmem:[%s265 + $0x2a] sm:$0xff]
        %v570 = vld [vmem:[%s265 + $0x32] sm:$0xff]
        %v571 = vld [vmem:[%s265 + $0x3a] sm:$0xff]
        %v572 = vld [vmem:[%s265 + $0x42] sm:$0xff]
        %v573 = vld [vmem:[%s265 + $0x4a] sm:$0xff]
        %v574 = vld [vmem:[%s265 + $0x52] sm:$0xff]
        %v575 = vld [vmem:[%s265 + $0x5a] sm:$0xff]
        %v576 = vld [vmem:[%s265 + $0x62] sm:$0xff]
        %v577 = vld [vmem:[%s265 + $0x6a] sm:$0xff]
        %v578 = vld [vmem:[%s265 + $0x72] sm:$0xff]
        %v579 = vld [vmem:[%s265 + $0x7a] sm:$0xff]
        %v580 = vld [vmem:[%s265 + $0x82] sm:$0xff]
        %v581 = vld [vmem:[%s265 + $0x8a] sm:$0xff]
        %v582 = vld [vmem:[%s265 + $0x92] sm:$0xff]
        %v583 = vld [vmem:[%s265 + $0x9a] sm:$0xff]
        %v584 = vld [vmem:[%s265 + $0xa2] sm:$0xff]
        %v585 = vld [vmem:[%s265 + $0xaa] sm:$0xff]
        %v586 = vld [vmem:[%s265 + $0xb2] sm:$0xff]
        %v587 = vld [vmem:[%s265 + $0xba] sm:$0xff]
        %v588 = vld [vmem:[%s265 + $0xc2] sm:$0xff]
        %v589 = vld [vmem:[%s265 + $0xca] sm:$0xff]
        %v590 = vld [vmem:[%s265 + $0xd2] sm:$0xff]
        %v591 = vld [vmem:[%s265 + $0xda] sm:$0xff]
        %v592 = vld [vmem:[%s265 + $0xe2] sm:$0xff]
        %v593 = vld [vmem:[%s265 + $0xea] sm:$0xff]
        %v594 = vld [vmem:[%s265 + $0xf2] sm:$0xff]
        %v595 = vld [vmem:[%s265 + $0xfa] sm:$0xff]
        %v596 = vld [vmem:[%s265 + $0x102] sm:$0xff]
        %v597 = vld [vmem:[%s265 + $0x10a] sm:$0xff]
        %v598 = vld [vmem:[%s265 + $0x112] sm:$0xff]
        %v599 = vld [vmem:[%s265 + $0x11a] sm:$0xff]
        %v600 = vld [vmem:[%s265 + $0x122] sm:$0xff]
        %v601 = vld [vmem:[%s265 + $0x12a] sm:$0xff]
        %602 = vst [vmem:[#allocation2 + $0x18] sm:$0xff] %v566
        %603 = vst [vmem:[#allocation2 + $0x60] sm:$0xff] %v567
        %604 = vst [vmem:[#allocation2 + $0xa8] sm:$0xff] %v568
        %605 = vst [vmem:[#allocation2 + $0xf0] sm:$0xff] %v569
        %606 = vst [vmem:[#allocation2 + $0x138] sm:$0xff] %v570
        %607 = vst [vmem:[#allocation2 + $0x180] sm:$0xff] %v571
        %608 = vst [vmem:[#allocation2 + $0x1c8] sm:$0xff] %v572
        %609 = vst [vmem:[#allocation2 + $0x210] sm:$0xff] %v573
        %610 = vst [vmem:[#allocation2 + $0x258] sm:$0xff] %v574
        %611 = vst [vmem:[#allocation2 + $0x2a0] sm:$0xff] %v575
        %612 = vst [vmem:[#allocation2 + $0x2e8] sm:$0xff] %v576
        %613 = vst [vmem:[#allocation2 + $0x330] sm:$0xff] %v577
        %614 = vst [vmem:[#allocation2 + $0x378] sm:$0xff] %v578
        %615 = vst [vmem:[#allocation2 + $0x3c0] sm:$0xff] %v579
        %616 = vst [vmem:[#allocation2 + $0x408] sm:$0xff] %v580
        %617 = vst [vmem:[#allocation2 + $0x450] sm:$0xff] %v581
        %618 = vst [vmem:[#allocation2 + $0x498] sm:$0xff] %v582
        %619 = vst [vmem:[#allocation2 + $0x4e0] sm:$0xff] %v583
        %620 = vst [vmem:[#allocation2 + $0x528] sm:$0xff] %v584
        %621 = vst [vmem:[#allocation2 + $0x570] sm:$0xff] %v585
        %622 = vst [vmem:[#allocation2 + $0x5b8] sm:$0xff] %v586
        %623 = vst [vmem:[#allocation2 + $0x600] sm:$0xff] %v587
        %624 = vst [vmem:[#allocation2 + $0x648] sm:$0xff] %v588
        %625 = vst [vmem:[#allocation2 + $0x690] sm:$0xff] %v589
        %626 = vst [vmem:[#allocation2 + $0x6d8] sm:$0xff] %v590
        %627 = vst [vmem:[#allocation2 + $0x720] sm:$0xff] %v591
        %628 = vst [vmem:[#allocation2 + $0x768] sm:$0xff] %v592
        %629 = vst [vmem:[#allocation2 + $0x7b0] sm:$0xff] %v593
        %630 = vst [vmem:[#allocation2 + $0x7f8] sm:$0xff] %v594
        %631 = vst [vmem:[#allocation2 + $0x840] sm:$0xff] %v595
        %632 = vst [vmem:[#allocation2 + $0x888] sm:$0xff] %v596
        %633 = vst [vmem:[#allocation2 + $0x8d0] sm:$0xff] %v597
        %634 = vst [vmem:[#allocation2 + $0x918] sm:$0xff] %v598
        %635 = vst [vmem:[#allocation2 + $0x960] sm:$0xff] %v599
        %636 = vst [vmem:[#allocation2 + $0x9a8] sm:$0xff] %v600
        %637 = vst [vmem:[#allocation2 + $0x9f0] sm:$0xff] %v601
        %v638 = vld [vmem:[%s265 + $0x13] sm:$0xff]
        %v639 = vld [vmem:[%s265 + $0x1b] sm:$0xff]
        %v640 = vld [vmem:[%s265 + $0x23] sm:$0xff]
        %v641 = vld [vmem:[%s265 + $0x2b] sm:$0xff]
        %v642 = vld [vmem:[%s265 + $0x33] sm:$0xff]
        %v643 = vld [vmem:[%s265 + $0x3b] sm:$0xff]
        %v644 = vld [vmem:[%s265 + $0x43] sm:$0xff]
        %v645 = vld [vmem:[%s265 + $0x4b] sm:$0xff]
        %v646 = vld [vmem:[%s265 + $0x53] sm:$0xff]
        %v647 = vld [vmem:[%s265 + $0x5b] sm:$0xff]
        %v648 = vld [vmem:[%s265 + $0x63] sm:$0xff]
        %v649 = vld [vmem:[%s265 + $0x6b] sm:$0xff]
        %v650 = vld [vmem:[%s265 + $0x73] sm:$0xff]
        %v651 = vld [vmem:[%s265 + $0x7b] sm:$0xff]
        %v652 = vld [vmem:[%s265 + $0x83] sm:$0xff]
        %v653 = vld [vmem:[%s265 + $0x8b] sm:$0xff]
        %v654 = vld [vmem:[%s265 + $0x93] sm:$0xff]
        %v655 = vld [vmem:[%s265 + $0x9b] sm:$0xff]
        %v656 = vld [vmem:[%s265 + $0xa3] sm:$0xff]
        %v657 = vld [vmem:[%s265 + $0xab] sm:$0xff]
        %v658 = vld [vmem:[%s265 + $0xb3] sm:$0xff]
        %v659 = vld [vmem:[%s265 + $0xbb] sm:$0xff]
        %v660 = vld [vmem:[%s265 + $0xc3] sm:$0xff]
        %v661 = vld [vmem:[%s265 + $0xcb] sm:$0xff]
        %v662 = vld [vmem:[%s265 + $0xd3] sm:$0xff]
        %v663 = vld [vmem:[%s265 + $0xdb] sm:$0xff]
        %v664 = vld [vmem:[%s265 + $0xe3] sm:$0xff]
        %v665 = vld [vmem:[%s265 + $0xeb] sm:$0xff]
        %v666 = vld [vmem:[%s265 + $0xf3] sm:$0xff]
        %v667 = vld [vmem:[%s265 + $0xfb] sm:$0xff]
        %v668 = vld [vmem:[%s265 + $0x103] sm:$0xff]
        %v669 = vld [vmem:[%s265 + $0x10b] sm:$0xff]
        %v670 = vld [vmem:[%s265 + $0x113] sm:$0xff]
        %v671 = vld [vmem:[%s265 + $0x11b] sm:$0xff]
        %v672 = vld [vmem:[%s265 + $0x123] sm:$0xff]
        %v673 = vld [vmem:[%s265 + $0x12b] sm:$0xff]
        %674 = vst [vmem:[#allocation2 + $0x20] sm:$0xff] %v638
        %675 = vst [vmem:[#allocation2 + $0x68] sm:$0xff] %v639
        %676 = vst [vmem:[#allocation2 + $0xb0] sm:$0xff] %v640
        %677 = vst [vmem:[#allocation2 + $0xf8] sm:$0xff] %v641
        %678 = vst [vmem:[#allocation2 + $0x140] sm:$0xff] %v642
        %679 = vst [vmem:[#allocation2 + $0x188] sm:$0xff] %v643
        %680 = vst [vmem:[#allocation2 + $0x1d0] sm:$0xff] %v644
        %681 = vst [vmem:[#allocation2 + $0x218] sm:$0xff] %v645
        %682 = vst [vmem:[#allocation2 + $0x260] sm:$0xff] %v646
        %683 = vst [vmem:[#allocation2 + $0x2a8] sm:$0xff] %v647
        %684 = vst [vmem:[#allocation2 + $0x2f0] sm:$0xff] %v648
        %685 = vst [vmem:[#allocation2 + $0x338] sm:$0xff] %v649
        %686 = vst [vmem:[#allocation2 + $0x380] sm:$0xff] %v650
        %687 = vst [vmem:[#allocation2 + $0x3c8] sm:$0xff] %v651
        %688 = vst [vmem:[#allocation2 + $0x410] sm:$0xff] %v652
        %689 = vst [vmem:[#allocation2 + $0x458] sm:$0xff] %v653
        %690 = vst [vmem:[#allocation2 + $0x4a0] sm:$0xff] %v654
        %691 = vst [vmem:[#allocation2 + $0x4e8] sm:$0xff] %v655
        %692 = vst [vmem:[#allocation2 + $0x530] sm:$0xff] %v656
        %693 = vst [vmem:[#allocation2 + $0x578] sm:$0xff] %v657
        %694 = vst [vmem:[#allocation2 + $0x5c0] sm:$0xff] %v658
        %695 = vst [vmem:[#allocation2 + $0x608] sm:$0xff] %v659
        %696 = vst [vmem:[#allocation2 + $0x650] sm:$0xff] %v660
        %697 = vst [vmem:[#allocation2 + $0x698] sm:$0xff] %v661
        %698 = vst [vmem:[#allocation2 + $0x6e0] sm:$0xff] %v662
        %699 = vst [vmem:[#allocation2 + $0x728] sm:$0xff] %v663
        %700 = vst [vmem:[#allocation2 + $0x770] sm:$0xff] %v664
        %701 = vst [vmem:[#allocation2 + $0x7b8] sm:$0xff] %v665
        %702 = vst [vmem:[#allocation2 + $0x800] sm:$0xff] %v666
        %703 = vst [vmem:[#allocation2 + $0x848] sm:$0xff] %v667
        %704 = vst [vmem:[#allocation2 + $0x890] sm:$0xff] %v668
        %705 = vst [vmem:[#allocation2 + $0x8d8] sm:$0xff] %v669
        %706 = vst [vmem:[#allocation2 + $0x920] sm:$0xff] %v670
        %707 = vst [vmem:[#allocation2 + $0x968] sm:$0xff] %v671
        %708 = vst [vmem:[#allocation2 + $0x9b0] sm:$0xff] %v672
        %709 = vst [vmem:[#allocation2 + $0x9f8] sm:$0xff] %v673
        %v710 = vld [vmem:[%s265 + $0x14] sm:$0xff]
        %v711 = vld [vmem:[%s265 + $0x1c] sm:$0xff]
        %v712 = vld [vmem:[%s265 + $0x24] sm:$0xff]
        %v713 = vld [vmem:[%s265 + $0x2c] sm:$0xff]
        %v714 = vld [vmem:[%s265 + $0x34] sm:$0xff]
        %v715 = vld [vmem:[%s265 + $0x3c] sm:$0xff]
        %v716 = vld [vmem:[%s265 + $0x44] sm:$0xff]
        %v717 = vld [vmem:[%s265 + $0x4c] sm:$0xff]
        %v718 = vld [vmem:[%s265 + $0x54] sm:$0xff]
        %v719 = vld [vmem:[%s265 + $0x5c] sm:$0xff]
        %v720 = vld [vmem:[%s265 + $0x64] sm:$0xff]
        %v721 = vld [vmem:[%s265 + $0x6c] sm:$0xff]
        %v722 = vld [vmem:[%s265 + $0x74] sm:$0xff]
        %v723 = vld [vmem:[%s265 + $0x7c] sm:$0xff]
        %v724 = vld [vmem:[%s265 + $0x84] sm:$0xff]
        %v725 = vld [vmem:[%s265 + $0x8c] sm:$0xff]
        %v726 = vld [vmem:[%s265 + $0x94] sm:$0xff]
        %v727 = vld [vmem:[%s265 + $0x9c] sm:$0xff]
        %v728 = vld [vmem:[%s265 + $0xa4] sm:$0xff]
        %v729 = vld [vmem:[%s265 + $0xac] sm:$0xff]
        %v730 = vld [vmem:[%s265 + $0xb4] sm:$0xff]
        %v731 = vld [vmem:[%s265 + $0xbc] sm:$0xff]
        %v732 = vld [vmem:[%s265 + $0xc4] sm:$0xff]
        %v733 = vld [vmem:[%s265 + $0xcc] sm:$0xff]
        %v734 = vld [vmem:[%s265 + $0xd4] sm:$0xff]
        %v735 = vld [vmem:[%s265 + $0xdc] sm:$0xff]
        %v736 = vld [vmem:[%s265 + $0xe4] sm:$0xff]
        %v737 = vld [vmem:[%s265 + $0xec] sm:$0xff]
        %v738 = vld [vmem:[%s265 + $0xf4] sm:$0xff]
        %v739 = vld [vmem:[%s265 + $0xfc] sm:$0xff]
        %v740 = vld [vmem:[%s265 + $0x104] sm:$0xff]
        %v741 = vld [vmem:[%s265 + $0x10c] sm:$0xff]
        %v742 = vld [vmem:[%s265 + $0x114] sm:$0xff]
        %v743 = vld [vmem:[%s265 + $0x11c] sm:$0xff]
        %v744 = vld [vmem:[%s265 + $0x124] sm:$0xff]
        %v745 = vld [vmem:[%s265 + $0x12c] sm:$0xff]
        %746 = vst [vmem:[#allocation2 + $0x28] sm:$0xff] %v710
        %747 = vst [vmem:[#allocation2 + $0x70] sm:$0xff] %v711
        %748 = vst [vmem:[#allocation2 + $0xb8] sm:$0xff] %v712
        %749 = vst [vmem:[#allocation2 + $0x100] sm:$0xff] %v713
        %750 = vst [vmem:[#allocation2 + $0x148] sm:$0xff] %v714
        %751 = vst [vmem:[#allocation2 + $0x190] sm:$0xff] %v715
        %752 = vst [vmem:[#allocation2 + $0x1d8] sm:$0xff] %v716
        %753 = vst [vmem:[#allocation2 + $0x220] sm:$0xff] %v717
        %754 = vst [vmem:[#allocation2 + $0x268] sm:$0xff] %v718
        %755 = vst [vmem:[#allocation2 + $0x2b0] sm:$0xff] %v719
        %756 = vst [vmem:[#allocation2 + $0x2f8] sm:$0xff] %v720
        %757 = vst [vmem:[#allocation2 + $0x340] sm:$0xff] %v721
        %758 = vst [vmem:[#allocation2 + $0x388] sm:$0xff] %v722
        %759 = vst [vmem:[#allocation2 + $0x3d0] sm:$0xff] %v723
        %760 = vst [vmem:[#allocation2 + $0x418] sm:$0xff] %v724
        %761 = vst [vmem:[#allocation2 + $0x460] sm:$0xff] %v725
        %762 = vst [vmem:[#allocation2 + $0x4a8] sm:$0xff] %v726
        %763 = vst [vmem:[#allocation2 + $0x4f0] sm:$0xff] %v727
        %764 = vst [vmem:[#allocation2 + $0x538] sm:$0xff] %v728
        %765 = vst [vmem:[#allocation2 + $0x580] sm:$0xff] %v729
        %766 = vst [vmem:[#allocation2 + $0x5c8] sm:$0xff] %v730
        %767 = vst [vmem:[#allocation2 + $0x610] sm:$0xff] %v731
        %768 = vst [vmem:[#allocation2 + $0x658] sm:$0xff] %v732
        %769 = vst [vmem:[#allocation2 + $0x6a0] sm:$0xff] %v733
        %770 = vst [vmem:[#allocation2 + $0x6e8] sm:$0xff] %v734
        %771 = vst [vmem:[#allocation2 + $0x730] sm:$0xff] %v735
        %772 = vst [vmem:[#allocation2 + $0x778] sm:$0xff] %v736
        %773 = vst [vmem:[#allocation2 + $0x7c0] sm:$0xff] %v737
        %774 = vst [vmem:[#allocation2 + $0x808] sm:$0xff] %v738
        %775 = vst [vmem:[#allocation2 + $0x850] sm:$0xff] %v739
        %776 = vst [vmem:[#allocation2 + $0x898] sm:$0xff] %v740
        %777 = vst [vmem:[#allocation2 + $0x8e0] sm:$0xff] %v741
        %778 = vst [vmem:[#allocation2 + $0x928] sm:$0xff] %v742
        %779 = vst [vmem:[#allocation2 + $0x970] sm:$0xff] %v743
        %780 = vst [vmem:[#allocation2 + $0x9b8] sm:$0xff] %v744
        %781 = vst [vmem:[#allocation2 + $0xa00] sm:$0xff] %v745
        %v782 = vld [vmem:[%s265 + $0x24] sm:$0xff]
        %v783 = vld [vmem:[%s265 + $0x2c] sm:$0xff]
        %v784 = vld [vmem:[%s265 + $0x34] sm:$0xff]
        %v785 = vld [vmem:[%s265 + $0x3c] sm:$0xff]
        %v786 = vld [vmem:[%s265 + $0x44] sm:$0xff]
        %v787 = vld [vmem:[%s265 + $0x4c] sm:$0xff]
        %v788 = vld [vmem:[%s265 + $0x54] sm:$0xff]
        %v789 = vld [vmem:[%s265 + $0x5c] sm:$0xff]
        %v790 = vld [vmem:[%s265 + $0x64] sm:$0xff]
        %v791 = vld [vmem:[%s265 + $0x6c] sm:$0xff]
        %v792 = vld [vmem:[%s265 + $0x74] sm:$0xff]
        %v793 = vld [vmem:[%s265 + $0x7c] sm:$0xff]
        %v794 = vld [vmem:[%s265 + $0x84] sm:$0xff]
        %v795 = vld [vmem:[%s265 + $0x8c] sm:$0xff]
        %v796 = vld [vmem:[%s265 + $0x94] sm:$0xff]
        %v797 = vld [vmem:[%s265 + $0x9c] sm:$0xff]
        %v798 = vld [vmem:[%s265 + $0xa4] sm:$0xff]
        %v799 = vld [vmem:[%s265 + $0xac] sm:$0xff]
        %v800 = vld [vmem:[%s265 + $0xb4] sm:$0xff]
        %v801 = vld [vmem:[%s265 + $0xbc] sm:$0xff]
        %v802 = vld [vmem:[%s265 + $0xc4] sm:$0xff]
        %v803 = vld [vmem:[%s265 + $0xcc] sm:$0xff]
        %v804 = vld [vmem:[%s265 + $0xd4] sm:$0xff]
        %v805 = vld [vmem:[%s265 + $0xdc] sm:$0xff]
        %v806 = vld [vmem:[%s265 + $0xe4] sm:$0xff]
        %v807 = vld [vmem:[%s265 + $0xec] sm:$0xff]
        %v808 = vld [vmem:[%s265 + $0xf4] sm:$0xff]
        %v809 = vld [vmem:[%s265 + $0xfc] sm:$0xff]
        %v810 = vld [vmem:[%s265 + $0x104] sm:$0xff]
        %v811 = vld [vmem:[%s265 + $0x10c] sm:$0xff]
        %v812 = vld [vmem:[%s265 + $0x114] sm:$0xff]
        %v813 = vld [vmem:[%s265 + $0x11c] sm:$0xff]
        %v814 = vld [vmem:[%s265 + $0x124] sm:$0xff]
        %v815 = vld [vmem:[%s265 + $0x12c] sm:$0xff]
        %v816 = vld [vmem:[%s265 + $0x134] sm:$0xff]
        %v817 = vld [vmem:[%s265 + $0x13c] sm:$0xff]
        %818 = vst [vmem:[#allocation2 + $0x30] sm:$0xff] %v782
        %819 = vst [vmem:[#allocation2 + $0x78] sm:$0xff] %v783
        %820 = vst [vmem:[#allocation2 + $0xc0] sm:$0xff] %v784
        %821 = vst [vmem:[#allocation2 + $0x108] sm:$0xff] %v785
        %822 = vst [vmem:[#allocation2 + $0x150] sm:$0xff] %v786
        %823 = vst [vmem:[#allocation2 + $0x198] sm:$0xff] %v787
        %824 = vst [vmem:[#allocation2 + $0x1e0] sm:$0xff] %v788
        %825 = vst [vmem:[#allocation2 + $0x228] sm:$0xff] %v789
        %826 = vst [vmem:[#allocation2 + $0x270] sm:$0xff] %v790
        %827 = vst [vmem:[#allocation2 + $0x2b8] sm:$0xff] %v791
        %828 = vst [vmem:[#allocation2 + $0x300] sm:$0xff] %v792
        %829 = vst [vmem:[#allocation2 + $0x348] sm:$0xff] %v793
        %830 = vst [vmem:[#allocation2 + $0x390] sm:$0xff] %v794
        %831 = vst [vmem:[#allocation2 + $0x3d8] sm:$0xff] %v795
        %832 = vst [vmem:[#allocation2 + $0x420] sm:$0xff] %v796
        %833 = vst [vmem:[#allocation2 + $0x468] sm:$0xff] %v797
        %834 = vst [vmem:[#allocation2 + $0x4b0] sm:$0xff] %v798
        %835 = vst [vmem:[#allocation2 + $0x4f8] sm:$0xff] %v799
        %836 = vst [vmem:[#allocation2 + $0x540] sm:$0xff] %v800
        %837 = vst [vmem:[#allocation2 + $0x588] sm:$0xff] %v801
        %838 = vst [vmem:[#allocation2 + $0x5d0] sm:$0xff] %v802
        %839 = vst [vmem:[#allocation2 + $0x618] sm:$0xff] %v803
        %840 = vst [vmem:[#allocation2 + $0x660] sm:$0xff] %v804
        %841 = vst [vmem:[#allocation2 + $0x6a8] sm:$0xff] %v805
        %842 = vst [vmem:[#allocation2 + $0x6f0] sm:$0xff] %v806
        %843 = vst [vmem:[#allocation2 + $0x738] sm:$0xff] %v807
        %844 = vst [vmem:[#allocation2 + $0x780] sm:$0xff] %v808
        %845 = vst [vmem:[#allocation2 + $0x7c8] sm:$0xff] %v809
        %846 = vst [vmem:[#allocation2 + $0x810] sm:$0xff] %v810
        %847 = vst [vmem:[#allocation2 + $0x858] sm:$0xff] %v811
        %848 = vst [vmem:[#allocation2 + $0x8a0] sm:$0xff] %v812
        %849 = vst [vmem:[#allocation2 + $0x8e8] sm:$0xff] %v813
        %850 = vst [vmem:[#allocation2 + $0x930] sm:$0xff] %v814
        %851 = vst [vmem:[#allocation2 + $0x978] sm:$0xff] %v815
        %852 = vst [vmem:[#allocation2 + $0x9c0] sm:$0xff] %v816
        %853 = vst [vmem:[#allocation2 + $0xa08] sm:$0xff] %v817
        %v854 = vld [vmem:[%s265 + $0x25] sm:$0xff]
        %v855 = vld [vmem:[%s265 + $0x2d] sm:$0xff]
        %v856 = vld [vmem:[%s265 + $0x35] sm:$0xff]
        %v857 = vld [vmem:[%s265 + $0x3d] sm:$0xff]
        %v858 = vld [vmem:[%s265 + $0x45] sm:$0xff]
        %v859 = vld [vmem:[%s265 + $0x4d] sm:$0xff]
        %v860 = vld [vmem:[%s265 + $0x55] sm:$0xff]
        %v861 = vld [vmem:[%s265 + $0x5d] sm:$0xff]
        %v862 = vld [vmem:[%s265 + $0x65] sm:$0xff]
        %v863 = vld [vmem:[%s265 + $0x6d] sm:$0xff]
        %v864 = vld [vmem:[%s265 + $0x75] sm:$0xff]
        %v865 = vld [vmem:[%s265 + $0x7d] sm:$0xff]
        %v866 = vld [vmem:[%s265 + $0x85] sm:$0xff]
        %v867 = vld [vmem:[%s265 + $0x8d] sm:$0xff]
        %v868 = vld [vmem:[%s265 + $0x95] sm:$0xff]
        %v869 = vld [vmem:[%s265 + $0x9d] sm:$0xff]
        %v870 = vld [vmem:[%s265 + $0xa5] sm:$0xff]
        %v871 = vld [vmem:[%s265 + $0xad] sm:$0xff]
        %v872 = vld [vmem:[%s265 + $0xb5] sm:$0xff]
        %v873 = vld [vmem:[%s265 + $0xbd] sm:$0xff]
        %v874 = vld [vmem:[%s265 + $0xc5] sm:$0xff]
        %v875 = vld [vmem:[%s265 + $0xcd] sm:$0xff]
        %v876 = vld [vmem:[%s265 + $0xd5] sm:$0xff]
        %v877 = vld [vmem:[%s265 + $0xdd] sm:$0xff]
        %v878 = vld [vmem:[%s265 + $0xe5] sm:$0xff]
        %v879 = vld [vmem:[%s265 + $0xed] sm:$0xff]
        %v880 = vld [vmem:[%s265 + $0xf5] sm:$0xff]
        %v881 = vld [vmem:[%s265 + $0xfd] sm:$0xff]
        %v882 = vld [vmem:[%s265 + $0x105] sm:$0xff]
        %v883 = vld [vmem:[%s265 + $0x10d] sm:$0xff]
        %v884 = vld [vmem:[%s265 + $0x115] sm:$0xff]
        %v885 = vld [vmem:[%s265 + $0x11d] sm:$0xff]
        %v886 = vld [vmem:[%s265 + $0x125] sm:$0xff]
        %v887 = vld [vmem:[%s265 + $0x12d] sm:$0xff]
        %v888 = vld [vmem:[%s265 + $0x135] sm:$0xff]
        %v889 = vld [vmem:[%s265 + $0x13d] sm:$0xff]
        %890 = vst [vmem:[#allocation2 + $0x38] sm:$0xff] %v854
        %891 = vst [vmem:[#allocation2 + $0x80] sm:$0xff] %v855
        %892 = vst [vmem:[#allocation2 + $0xc8] sm:$0xff] %v856
        %893 = vst [vmem:[#allocation2 + $0x110] sm:$0xff] %v857
        %894 = vst [vmem:[#allocation2 + $0x158] sm:$0xff] %v858
        %895 = vst [vmem:[#allocation2 + $0x1a0] sm:$0xff] %v859
        %896 = vst [vmem:[#allocation2 + $0x1e8] sm:$0xff] %v860
        %897 = vst [vmem:[#allocation2 + $0x230] sm:$0xff] %v861
        %898 = vst [vmem:[#allocation2 + $0x278] sm:$0xff] %v862
        %899 = vst [vmem:[#allocation2 + $0x2c0] sm:$0xff] %v863
        %900 = vst [vmem:[#allocation2 + $0x308] sm:$0xff] %v864
        %901 = vst [vmem:[#allocation2 + $0x350] sm:$0xff] %v865
        %902 = vst [vmem:[#allocation2 + $0x398] sm:$0xff] %v866
        %903 = vst [vmem:[#allocation2 + $0x3e0] sm:$0xff] %v867
        %904 = vst [vmem:[#allocation2 + $0x428] sm:$0xff] %v868
        %905 = vst [vmem:[#allocation2 + $0x470] sm:$0xff] %v869
        %906 = vst [vmem:[#allocation2 + $0x4b8] sm:$0xff] %v870
        %907 = vst [vmem:[#allocation2 + $0x500] sm:$0xff] %v871
        %908 = vst [vmem:[#allocation2 + $0x548] sm:$0xff] %v872
        %909 = vst [vmem:[#allocation2 + $0x590] sm:$0xff] %v873
        %910 = vst [vmem:[#allocation2 + $0x5d8] sm:$0xff] %v874
        %911 = vst [vmem:[#allocation2 + $0x620] sm:$0xff] %v875
        %912 = vst [vmem:[#allocation2 + $0x668] sm:$0xff] %v876
        %913 = vst [vmem:[#allocation2 + $0x6b0] sm:$0xff] %v877
        %914 = vst [vmem:[#allocation2 + $0x6f8] sm:$0xff] %v878
        %915 = vst [vmem:[#allocation2 + $0x740] sm:$0xff] %v879
        %916 = vst [vmem:[#allocation2 + $0x788] sm:$0xff] %v880
        %917 = vst [vmem:[#allocation2 + $0x7d0] sm:$0xff] %v881
        %918 = vst [vmem:[#allocation2 + $0x818] sm:$0xff] %v882
        %919 = vst [vmem:[#allocation2 + $0x860] sm:$0xff] %v883
        %920 = vst [vmem:[#allocation2 + $0x8a8] sm:$0xff] %v884
        %921 = vst [vmem:[#allocation2 + $0x8f0] sm:$0xff] %v885
        %922 = vst [vmem:[#allocation2 + $0x938] sm:$0xff] %v886
        %923 = vst [vmem:[#allocation2 + $0x980] sm:$0xff] %v887
        %924 = vst [vmem:[#allocation2 + $0x9c8] sm:$0xff] %v888
        %925 = vst [vmem:[#allocation2 + $0xa10] sm:$0xff] %v889
        %v926 = vld [vmem:[%s265 + $0x26] sm:$0xff]
        %v927 = vld [vmem:[%s265 + $0x2e] sm:$0xff]
        %v928 = vld [vmem:[%s265 + $0x36] sm:$0xff]
        %v929 = vld [vmem:[%s265 + $0x3e] sm:$0xff]
        %v930 = vld [vmem:[%s265 + $0x46] sm:$0xff]
        %v931 = vld [vmem:[%s265 + $0x4e] sm:$0xff]
        %v932 = vld [vmem:[%s265 + $0x56] sm:$0xff]
        %v933 = vld [vmem:[%s265 + $0x5e] sm:$0xff]
        %v934 = vld [vmem:[%s265 + $0x66] sm:$0xff]
        %v935 = vld [vmem:[%s265 + $0x6e] sm:$0xff]
        %v936 = vld [vmem:[%s265 + $0x76] sm:$0xff]
        %v937 = vld [vmem:[%s265 + $0x7e] sm:$0xff]
        %v938 = vld [vmem:[%s265 + $0x86] sm:$0xff]
        %v939 = vld [vmem:[%s265 + $0x8e] sm:$0xff]
        %v940 = vld [vmem:[%s265 + $0x96] sm:$0xff]
        %v941 = vld [vmem:[%s265 + $0x9e] sm:$0xff]
        %v942 = vld [vmem:[%s265 + $0xa6] sm:$0xff]
        %v943 = vld [vmem:[%s265 + $0xae] sm:$0xff]
        %v944 = vld [vmem:[%s265 + $0xb6] sm:$0xff]
        %v945 = vld [vmem:[%s265 + $0xbe] sm:$0xff]
        %v946 = vld [vmem:[%s265 + $0xc6] sm:$0xff]
        %v947 = vld [vmem:[%s265 + $0xce] sm:$0xff]
        %v948 = vld [vmem:[%s265 + $0xd6] sm:$0xff]
        %v949 = vld [vmem:[%s265 + $0xde] sm:$0xff]
        %v950 = vld [vmem:[%s265 + $0xe6] sm:$0xff]
        %v951 = vld [vmem:[%s265 + $0xee] sm:$0xff]
        %v952 = vld [vmem:[%s265 + $0xf6] sm:$0xff]
        %v953 = vld [vmem:[%s265 + $0xfe] sm:$0xff]
        %v954 = vld [vmem:[%s265 + $0x106] sm:$0xff]
        %v955 = vld [vmem:[%s265 + $0x10e] sm:$0xff]
        %v956 = vld [vmem:[%s265 + $0x116] sm:$0xff]
        %v957 = vld [vmem:[%s265 + $0x11e] sm:$0xff]
        %v958 = vld [vmem:[%s265 + $0x126] sm:$0xff]
        %v959 = vld [vmem:[%s265 + $0x12e] sm:$0xff]
        %v960 = vld [vmem:[%s265 + $0x136] sm:$0xff]
        %v961 = vld [vmem:[%s265 + $0x13e] sm:$0xff]
        %962 = vst [vmem:[#allocation2 + $0x40] sm:$0xff] %v926
        %963 = vst [vmem:[#allocation2 + $0x88] sm:$0xff] %v927
        %964 = vst [vmem:[#allocation2 + $0xd0] sm:$0xff] %v928
        %965 = vst [vmem:[#allocation2 + $0x118] sm:$0xff] %v929
        %966 = vst [vmem:[#allocation2 + $0x160] sm:$0xff] %v930
        %967 = vst [vmem:[#allocation2 + $0x1a8] sm:$0xff] %v931
        %968 = vst [vmem:[#allocation2 + $0x1f0] sm:$0xff] %v932
        %969 = vst [vmem:[#allocation2 + $0x238] sm:$0xff] %v933
        %970 = vst [vmem:[#allocation2 + $0x280] sm:$0xff] %v934
        %971 = vst [vmem:[#allocation2 + $0x2c8] sm:$0xff] %v935
        %972 = vst [vmem:[#allocation2 + $0x310] sm:$0xff] %v936
        %973 = vst [vmem:[#allocation2 + $0x358] sm:$0xff] %v937
        %974 = vst [vmem:[#allocation2 + $0x3a0] sm:$0xff] %v938
        %975 = vst [vmem:[#allocation2 + $0x3e8] sm:$0xff] %v939
        %976 = vst [vmem:[#allocation2 + $0x430] sm:$0xff] %v940
        %977 = vst [vmem:[#allocation2 + $0x478] sm:$0xff] %v941
        %978 = vst [vmem:[#allocation2 + $0x4c0] sm:$0xff] %v942
        %979 = vst [vmem:[#allocation2 + $0x508] sm:$0xff] %v943
        %980 = vst [vmem:[#allocation2 + $0x550] sm:$0xff] %v944
        %981 = vst [vmem:[#allocation2 + $0x598] sm:$0xff] %v945
        %982 = vst [vmem:[#allocation2 + $0x5e0] sm:$0xff] %v946
        %983 = vst [vmem:[#allocation2 + $0x628] sm:$0xff] %v947
        %984 = vst [vmem:[#allocation2 + $0x670] sm:$0xff] %v948
        %985 = vst [vmem:[#allocation2 + $0x6b8] sm:$0xff] %v949
        %986 = vst [vmem:[#allocation2 + $0x700] sm:$0xff] %v950
        %987 = vst [vmem:[#allocation2 + $0x748] sm:$0xff] %v951
        %988 = vst [vmem:[#allocation2 + $0x790] sm:$0xff] %v952
        %989 = vst [vmem:[#allocation2 + $0x7d8] sm:$0xff] %v953
        %990 = vst [vmem:[#allocation2 + $0x820] sm:$0xff] %v954
        %991 = vst [vmem:[#allocation2 + $0x868] sm:$0xff] %v955
        %992 = vst [vmem:[#allocation2 + $0x8b0] sm:$0xff] %v956
        %993 = vst [vmem:[#allocation2 + $0x8f8] sm:$0xff] %v957
        %994 = vst [vmem:[#allocation2 + $0x940] sm:$0xff] %v958
        %995 = vst [vmem:[#allocation2 + $0x988] sm:$0xff] %v959
        %996 = vst [vmem:[#allocation2 + $0x9d0] sm:$0xff] %v960
        %997 = vst [vmem:[#allocation2 + $0xa18] sm:$0xff] %v961
        %v998 = vld [vmem:[#allocation2] sm:$0xff]
        %v999 = vld [vmem:[#allocation2 + $0x8] sm:$0xff]
        %v1000 = vld [vmem:[#allocation2 + $0x10] sm:$0xff]
        %v1001 = vld [vmem:[#allocation2 + $0x18] sm:$0xff]
        %v1002 = vld [vmem:[#allocation2 + $0x20] sm:$0xff]
        %v1003 = vld [vmem:[#allocation2 + $0x28] sm:$0xff]
        %v1004 = vld [vmem:[#allocation2 + $0x30] sm:$0xff]
        %v1005 = vld [vmem:[#allocation2 + $0x38] sm:$0xff]
        %v1006 = vld [vmem:[#allocation2 + $0x40] sm:$0xff]
        %v1007 = vld [vmem:[#allocation2 + $0x48] sm:$0xff]
        %v1008 = vld [vmem:[#allocation2 + $0x50] sm:$0xff]
        %v1009 = vld [vmem:[#allocation2 + $0x58] sm:$0xff]
        %v1010 = vld [vmem:[#allocation2 + $0x60] sm:$0xff]
        %v1011 = vld [vmem:[#allocation2 + $0x68] sm:$0xff]
        %v1012 = vld [vmem:[#allocation2 + $0x70] sm:$0xff]
        %v1013 = vld [vmem:[#allocation2 + $0x78] sm:$0xff]
        %v1014 = vld [vmem:[#allocation2 + $0x80] sm:$0xff]
        %v1015 = vld [vmem:[#allocation2 + $0x88] sm:$0xff]
        %v1016 = vld [vmem:[#allocation2 + $0x90] sm:$0xff]
        %v1017 = vld [vmem:[#allocation2 + $0x98] sm:$0xff]
        %v1018 = vld [vmem:[#allocation2 + $0xa0] sm:$0xff]
        %v1019 = vld [vmem:[#allocation2 + $0xa8] sm:$0xff]
        %v1020 = vld [vmem:[#allocation2 + $0xb0] sm:$0xff]
        %v1021 = vld [vmem:[#allocation2 + $0xb8] sm:$0xff]
        %v1022 = vld [vmem:[#allocation2 + $0xc0] sm:$0xff]
        %v1023 = vld [vmem:[#allocation2 + $0xc8] sm:$0xff]
        %v1024 = vld [vmem:[#allocation2 + $0xd0] sm:$0xff]
        %v1025 = vld [vmem:[#allocation2 + $0xd8] sm:$0xff]
        %v1026 = vld [vmem:[#allocation2 + $0xe0] sm:$0xff]
        %v1027 = vld [vmem:[#allocation2 + $0xe8] sm:$0xff]
        %v1028 = vld [vmem:[#allocation2 + $0xf0] sm:$0xff]
        %v1029 = vld [vmem:[#allocation2 + $0xf8] sm:$0xff]
        %v1030 = vld [vmem:[#allocation2 + $0x100] sm:$0xff]
        %v1031 = vld [vmem:[#allocation2 + $0x108] sm:$0xff]
        %v1032 = vld [vmem:[#allocation2 + $0x110] sm:$0xff]
        %v1033 = vld [vmem:[#allocation2 + $0x118] sm:$0xff]
        %v1034 = vld [vmem:[#allocation2 + $0x120] sm:$0xff]
        %v1035 = vld [vmem:[#allocation2 + $0x128] sm:$0xff]
        %v1036 = vld [vmem:[#allocation2 + $0x130] sm:$0xff]
        %v1037 = vld [vmem:[#allocation2 + $0x138] sm:$0xff]
        %v1038 = vld [vmem:[#allocation2 + $0x140] sm:$0xff]
        %v1039 = vld [vmem:[#allocation2 + $0x148] sm:$0xff]
        %v1040 = vld [vmem:[#allocation2 + $0x150] sm:$0xff]
        %v1041 = vld [vmem:[#allocation2 + $0x158] sm:$0xff]
        %v1042 = vld [vmem:[#allocation2 + $0x160] sm:$0xff]
        %v1043 = vld [vmem:[#allocation2 + $0x168] sm:$0xff]
        %v1044 = vld [vmem:[#allocation2 + $0x170] sm:$0xff]
        %v1045 = vld [vmem:[#allocation2 + $0x178] sm:$0xff]
        %v1046 = vld [vmem:[#allocation2 + $0x180] sm:$0xff]
        %v1047 = vld [vmem:[#allocation2 + $0x188] sm:$0xff]
        %v1048 = vld [vmem:[#allocation2 + $0x190] sm:$0xff]
        %v1049 = vld [vmem:[#allocation2 + $0x198] sm:$0xff]
        %v1050 = vld [vmem:[#allocation2 + $0x1a0] sm:$0xff]
        %v1051 = vld [vmem:[#allocation2 + $0x1a8] sm:$0xff]
        %v1052 = vld [vmem:[#allocation2 + $0x1b0] sm:$0xff]
        %v1053 = vld [vmem:[#allocation2 + $0x1b8] sm:$0xff]
        %v1054 = vld [vmem:[#allocation2 + $0x1c0] sm:$0xff]
        %v1055 = vld [vmem:[#allocation2 + $0x1c8] sm:$0xff]
        %v1056 = vld [vmem:[#allocation2 + $0x1d0] sm:$0xff]
        %v1057 = vld [vmem:[#allocation2 + $0x1d8] sm:$0xff]
        %v1058 = vld [vmem:[#allocation2 + $0x1e0] sm:$0xff]
        %v1059 = vld [vmem:[#allocation2 + $0x1e8] sm:$0xff]
        %v1060 = vld [vmem:[#allocation2 + $0x1f0] sm:$0xff]
        %v1061 = vld [vmem:[#allocation2 + $0x1f8] sm:$0xff]
        %v1062 = vld [vmem:[#allocation2 + $0x200] sm:$0xff]
        %v1063 = vld [vmem:[#allocation2 + $0x208] sm:$0xff]
        %v1064 = vld [vmem:[#allocation2 + $0x210] sm:$0xff]
        %v1065 = vld [vmem:[#allocation2 + $0x218] sm:$0xff]
        %v1066 = vld [vmem:[#allocation2 + $0x220] sm:$0xff]
        %v1067 = vld [vmem:[#allocation2 + $0x228] sm:$0xff]
        %v1068 = vld [vmem:[#allocation2 + $0x230] sm:$0xff]
        %v1069 = vld [vmem:[#allocation2 + $0x238] sm:$0xff]
        %v1070 = vld [vmem:[#allocation2 + $0x240] sm:$0xff]
        %v1071 = vld [vmem:[#allocation2 + $0x248] sm:$0xff]
        %v1072 = vld [vmem:[#allocation2 + $0x250] sm:$0xff]
        %v1073 = vld [vmem:[#allocation2 + $0x258] sm:$0xff]
        %v1074 = vld [vmem:[#allocation2 + $0x260] sm:$0xff]
        %v1075 = vld [vmem:[#allocation2 + $0x268] sm:$0xff]
        %v1076 = vld [vmem:[#allocation2 + $0x270] sm:$0xff]
        %v1077 = vld [vmem:[#allocation2 + $0x278] sm:$0xff]
        %v1078 = vld [vmem:[#allocation2 + $0x280] sm:$0xff]
        %v1079 = vld [vmem:[#allocation2 + $0x288] sm:$0xff]
        %v1080 = vld [vmem:[#allocation2 + $0x290] sm:$0xff]
        %v1081 = vld [vmem:[#allocation2 + $0x298] sm:$0xff]
        %v1082 = vld [vmem:[#allocation2 + $0x2a0] sm:$0xff]
        %v1083 = vld [vmem:[#allocation2 + $0x2a8] sm:$0xff]
        %v1084 = vld [vmem:[#allocation2 + $0x2b0] sm:$0xff]
        %v1085 = vld [vmem:[#allocation2 + $0x2b8] sm:$0xff]
        %v1086 = vld [vmem:[#allocation2 + $0x2c0] sm:$0xff]
        %v1087 = vld [vmem:[#allocation2 + $0x2c8] sm:$0xff]
        %v1088 = vld [vmem:[#allocation2 + $0x2d0] sm:$0xff]
        %v1089 = vld [vmem:[#allocation2 + $0x2d8] sm:$0xff]
        %v1090 = vld [vmem:[#allocation2 + $0x2e0] sm:$0xff]
        %v1091 = vld [vmem:[#allocation2 + $0x2e8] sm:$0xff]
        %v1092 = vld [vmem:[#allocation2 + $0x2f0] sm:$0xff]
        %v1093 = vld [vmem:[#allocation2 + $0x2f8] sm:$0xff]
        %v1094 = vld [vmem:[#allocation2 + $0x300] sm:$0xff]
        %v1095 = vld [vmem:[#allocation2 + $0x308] sm:$0xff]
        %v1096 = vld [vmem:[#allocation2 + $0x310] sm:$0xff]
        %v1097 = vld [vmem:[#allocation2 + $0x318] sm:$0xff]
        %v1098 = vld [vmem:[#allocation2 + $0x320] sm:$0xff]
        %v1099 = vld [vmem:[#allocation2 + $0x328] sm:$0xff]
        %v1100 = vld [vmem:[#allocation2 + $0x330] sm:$0xff]
        %v1101 = vld [vmem:[#allocation2 + $0x338] sm:$0xff]
        %v1102 = vld [vmem:[#allocation2 + $0x340] sm:$0xff]
        %v1103 = vld [vmem:[#allocation2 + $0x348] sm:$0xff]
        %v1104 = vld [vmem:[#allocation2 + $0x350] sm:$0xff]
        %v1105 = vld [vmem:[#allocation2 + $0x358] sm:$0xff]
        %v1106 = vld [vmem:[#allocation2 + $0x360] sm:$0xff]
        %v1107 = vld [vmem:[#allocation2 + $0x368] sm:$0xff]
        %v1108 = vld [vmem:[#allocation2 + $0x370] sm:$0xff]
        %v1109 = vld [vmem:[#allocation2 + $0x378] sm:$0xff]
        %v1110 = vld [vmem:[#allocation2 + $0x380] sm:$0xff]
        %v1111 = vld [vmem:[#allocation2 + $0x388] sm:$0xff]
        %v1112 = vld [vmem:[#allocation2 + $0x390] sm:$0xff]
        %v1113 = vld [vmem:[#allocation2 + $0x398] sm:$0xff]
        %v1114 = vld [vmem:[#allocation2 + $0x3a0] sm:$0xff]
        %v1115 = vld [vmem:[#allocation2 + $0x3a8] sm:$0xff]
        %v1116 = vld [vmem:[#allocation2 + $0x3b0] sm:$0xff]
        %v1117 = vld [vmem:[#allocation2 + $0x3b8] sm:$0xff]
        %v1118 = vld [vmem:[#allocation2 + $0x3c0] sm:$0xff]
        %v1119 = vld [vmem:[#allocation2 + $0x3c8] sm:$0xff]
        %v1120 = vld [vmem:[#allocation2 + $0x3d0] sm:$0xff]
        %v1121 = vld [vmem:[#allocation2 + $0x3d8] sm:$0xff]
        %v1122 = vld [vmem:[#allocation2 + $0x3e0] sm:$0xff]
        %v1123 = vld [vmem:[#allocation2 + $0x3e8] sm:$0xff]
        %v1124 = vld [vmem:[#allocation2 + $0x3f0] sm:$0xff]
        %v1125 = vld [vmem:[#allocation2 + $0x3f8] sm:$0xff]
        %v1126 = vld [vmem:[#allocation2 + $0x400] sm:$0xff]
        %v1127 = vld [vmem:[#allocation2 + $0x408] sm:$0xff]
        %v1128 = vld [vmem:[#allocation2 + $0x410] sm:$0xff]
        %v1129 = vld [vmem:[#allocation2 + $0x418] sm:$0xff]
        %v1130 = vld [vmem:[#allocation2 + $0x420] sm:$0xff]
        %v1131 = vld [vmem:[#allocation2 + $0x428] sm:$0xff]
        %v1132 = vld [vmem:[#allocation2 + $0x430] sm:$0xff]
        %v1133 = vld [vmem:[#allocation2 + $0x438] sm:$0xff]
        %v1134 = vld [vmem:[#allocation2 + $0x440] sm:$0xff]
        %v1135 = vld [vmem:[#allocation2 + $0x448] sm:$0xff]
        %v1136 = vld [vmem:[#allocation2 + $0x450] sm:$0xff]
        %v1137 = vld [vmem:[#allocation2 + $0x458] sm:$0xff]
        %v1138 = vld [vmem:[#allocation2 + $0x460] sm:$0xff]
        %v1139 = vld [vmem:[#allocation2 + $0x468] sm:$0xff]
        %v1140 = vld [vmem:[#allocation2 + $0x470] sm:$0xff]
        %v1141 = vld [vmem:[#allocation2 + $0x478] sm:$0xff]
        %v1142 = vld [vmem:[#allocation2 + $0x480] sm:$0xff]
        %v1143 = vld [vmem:[#allocation2 + $0x488] sm:$0xff]
        %v1144 = vld [vmem:[#allocation2 + $0x490] sm:$0xff]
        %v1145 = vld [vmem:[#allocation2 + $0x498] sm:$0xff]
        %v1146 = vld [vmem:[#allocation2 + $0x4a0] sm:$0xff]
        %v1147 = vld [vmem:[#allocation2 + $0x4a8] sm:$0xff]
        %v1148 = vld [vmem:[#allocation2 + $0x4b0] sm:$0xff]
        %v1149 = vld [vmem:[#allocation2 + $0x4b8] sm:$0xff]
        %v1150 = vld [vmem:[#allocation2 + $0x4c0] sm:$0xff]
        %v1151 = vld [vmem:[#allocation2 + $0x4c8] sm:$0xff]
        %v1152 = vld [vmem:[#allocation2 + $0x4d0] sm:$0xff]
        %v1153 = vld [vmem:[#allocation2 + $0x4d8] sm:$0xff]
        %v1154 = vld [vmem:[#allocation2 + $0x4e0] sm:$0xff]
        %v1155 = vld [vmem:[#allocation2 + $0x4e8] sm:$0xff]
        %v1156 = vld [vmem:[#allocation2 + $0x4f0] sm:$0xff]
        %v1157 = vld [vmem:[#allocation2 + $0x4f8] sm:$0xff]
        %v1158 = vld [vmem:[#allocation2 + $0x500] sm:$0xff]
        %v1159 = vld [vmem:[#allocation2 + $0x508] sm:$0xff]
        %v1160 = vld [vmem:[#allocation2 + $0x510] sm:$0xff]
        %v1161 = vld [vmem:[#allocation2 + $0x518] sm:$0xff]
        %v1162 = vld [vmem:[#allocation2 + $0x520] sm:$0xff]
        %v1163 = vld [vmem:[#allocation2 + $0x528] sm:$0xff]
        %v1164 = vld [vmem:[#allocation2 + $0x530] sm:$0xff]
        %v1165 = vld [vmem:[#allocation2 + $0x538] sm:$0xff]
        %v1166 = vld [vmem:[#allocation2 + $0x540] sm:$0xff]
        %v1167 = vld [vmem:[#allocation2 + $0x548] sm:$0xff]
        %v1168 = vld [vmem:[#allocation2 + $0x550] sm:$0xff]
        %v1169 = vld [vmem:[#allocation2 + $0x558] sm:$0xff]
        %v1170 = vld [vmem:[#allocation2 + $0x560] sm:$0xff]
        %v1171 = vld [vmem:[#allocation2 + $0x568] sm:$0xff]
        %v1172 = vld [vmem:[#allocation2 + $0x570] sm:$0xff]
        %v1173 = vld [vmem:[#allocation2 + $0x578] sm:$0xff]
        %v1174 = vld [vmem:[#allocation2 + $0x580] sm:$0xff]
        %v1175 = vld [vmem:[#allocation2 + $0x588] sm:$0xff]
        %v1176 = vld [vmem:[#allocation2 + $0x590] sm:$0xff]
        %v1177 = vld [vmem:[#allocation2 + $0x598] sm:$0xff]
        %v1178 = vld [vmem:[#allocation2 + $0x5a0] sm:$0xff]
        %v1179 = vld [vmem:[#allocation2 + $0x5a8] sm:$0xff]
        %v1180 = vld [vmem:[#allocation2 + $0x5b0] sm:$0xff]
        %v1181 = vld [vmem:[#allocation2 + $0x5b8] sm:$0xff]
        %v1182 = vld [vmem:[#allocation2 + $0x5c0] sm:$0xff]
        %v1183 = vld [vmem:[#allocation2 + $0x5c8] sm:$0xff]
        %v1184 = vld [vmem:[#allocation2 + $0x5d0] sm:$0xff]
        %v1185 = vld [vmem:[#allocation2 + $0x5d8] sm:$0xff]
        %v1186 = vld [vmem:[#allocation2 + $0x5e0] sm:$0xff]
        %v1187 = vld [vmem:[#allocation2 + $0x5e8] sm:$0xff]
        %v1188 = vld [vmem:[#allocation2 + $0x5f0] sm:$0xff]
        %v1189 = vld [vmem:[#allocation2 + $0x5f8] sm:$0xff]
        %v1190 = vld [vmem:[#allocation2 + $0x600] sm:$0xff]
        %v1191 = vld [vmem:[#allocation2 + $0x608] sm:$0xff]
        %v1192 = vld [vmem:[#allocation2 + $0x610] sm:$0xff]
        %v1193 = vld [vmem:[#allocation2 + $0x618] sm:$0xff]
        %v1194 = vld [vmem:[#allocation2 + $0x620] sm:$0xff]
        %v1195 = vld [vmem:[#allocation2 + $0x628] sm:$0xff]
        %v1196 = vld [vmem:[#allocation2 + $0x630] sm:$0xff]
        %v1197 = vld [vmem:[#allocation2 + $0x638] sm:$0xff]
        %v1198 = vld [vmem:[#allocation2 + $0x640] sm:$0xff]
        %v1199 = vld [vmem:[#allocation2 + $0x648] sm:$0xff]
        %v1200 = vld [vmem:[#allocation2 + $0x650] sm:$0xff]
        %v1201 = vld [vmem:[#allocation2 + $0x658] sm:$0xff]
        %v1202 = vld [vmem:[#allocation2 + $0x660] sm:$0xff]
        %v1203 = vld [vmem:[#allocation2 + $0x668] sm:$0xff]
        %v1204 = vld [vmem:[#allocation2 + $0x670] sm:$0xff]
        %v1205 = vld [vmem:[#allocation2 + $0x678] sm:$0xff]
        %v1206 = vld [vmem:[#allocation2 + $0x680] sm:$0xff]
        %v1207 = vld [vmem:[#allocation2 + $0x688] sm:$0xff]
        %v1208 = vld [vmem:[#allocation2 + $0x690] sm:$0xff]
        %v1209 = vld [vmem:[#allocation2 + $0x698] sm:$0xff]
        %v1210 = vld [vmem:[#allocation2 + $0x6a0] sm:$0xff]
        %v1211 = vld [vmem:[#allocation2 + $0x6a8] sm:$0xff]
        %v1212 = vld [vmem:[#allocation2 + $0x6b0] sm:$0xff]
        %v1213 = vld [vmem:[#allocation2 + $0x6b8] sm:$0xff]
        %v1214 = vld [vmem:[#allocation2 + $0x6c0] sm:$0xff]
        %v1215 = vld [vmem:[#allocation2 + $0x6c8] sm:$0xff]
        %v1216 = vld [vmem:[#allocation2 + $0x6d0] sm:$0xff]
        %v1217 = vld [vmem:[#allocation2 + $0x6d8] sm:$0xff]
        %v1218 = vld [vmem:[#allocation2 + $0x6e0] sm:$0xff]
        %v1219 = vld [vmem:[#allocation2 + $0x6e8] sm:$0xff]
        %v1220 = vld [vmem:[#allocation2 + $0x6f0] sm:$0xff]
        %v1221 = vld [vmem:[#allocation2 + $0x6f8] sm:$0xff]
        %v1222 = vld [vmem:[#allocation2 + $0x700] sm:$0xff]
        %v1223 = vld [vmem:[#allocation2 + $0x708] sm:$0xff]
        %v1224 = vld [vmem:[#allocation2 + $0x710] sm:$0xff]
        %v1225 = vld [vmem:[#allocation2 + $0x718] sm:$0xff]
        %v1226 = vld [vmem:[#allocation2 + $0x720] sm:$0xff]
        %v1227 = vld [vmem:[#allocation2 + $0x728] sm:$0xff]
        %v1228 = vld [vmem:[#allocation2 + $0x730] sm:$0xff]
        %v1229 = vld [vmem:[#allocation2 + $0x738] sm:$0xff]
        %v1230 = vld [vmem:[#allocation2 + $0x740] sm:$0xff]
        %v1231 = vld [vmem:[#allocation2 + $0x748] sm:$0xff]
        %v1232 = vld [vmem:[#allocation2 + $0x750] sm:$0xff]
        %v1233 = vld [vmem:[#allocation2 + $0x758] sm:$0xff]
        %v1234 = vld [vmem:[#allocation2 + $0x760] sm:$0xff]
        %v1235 = vld [vmem:[#allocation2 + $0x768] sm:$0xff]
        %v1236 = vld [vmem:[#allocation2 + $0x770] sm:$0xff]
        %v1237 = vld [vmem:[#allocation2 + $0x778] sm:$0xff]
        %v1238 = vld [vmem:[#allocation2 + $0x780] sm:$0xff]
        %v1239 = vld [vmem:[#allocation2 + $0x788] sm:$0xff]
        %v1240 = vld [vmem:[#allocation2 + $0x790] sm:$0xff]
        %v1241 = vld [vmem:[#allocation2 + $0x798] sm:$0xff]
        %v1242 = vld [vmem:[#allocation2 + $0x7a0] sm:$0xff]
        %v1243 = vld [vmem:[#allocation2 + $0x7a8] sm:$0xff]
        %v1244 = vld [vmem:[#allocation2 + $0x7b0] sm:$0xff]
        %v1245 = vld [vmem:[#allocation2 + $0x7b8] sm:$0xff]
        %v1246 = vld [vmem:[#allocation2 + $0x7c0] sm:$0xff]
        %v1247 = vld [vmem:[#allocation2 + $0x7c8] sm:$0xff]
        %v1248 = vld [vmem:[#allocation2 + $0x7d0] sm:$0xff]
        %v1249 = vld [vmem:[#allocation2 + $0x7d8] sm:$0xff]
        %v1250 = vld [vmem:[#allocation2 + $0x7e0] sm:$0xff]
        %v1251 = vld [vmem:[#allocation2 + $0x7e8] sm:$0xff]
        %v1252 = vld [vmem:[#allocation2 + $0x7f0] sm:$0xff]
        %v1253 = vld [vmem:[#allocation2 + $0x7f8] sm:$0xff]
        %v1254 = vld [vmem:[#allocation2 + $0x800] sm:$0xff]
        %v1255 = vld [vmem:[#allocation2 + $0x808] sm:$0xff]
        %v1256 = vld [vmem:[#allocation2 + $0x810] sm:$0xff]
        %v1257 = vld [vmem:[#allocation2 + $0x818] sm:$0xff]
        %v1258 = vld [vmem:[#allocation2 + $0x820] sm:$0xff]
        %v1259 = vld [vmem:[#allocation2 + $0x828] sm:$0xff]
        %v1260 = vld [vmem:[#allocation2 + $0x830] sm:$0xff]
        %v1261 = vld [vmem:[#allocation2 + $0x838] sm:$0xff]
        %v1262 = vld [vmem:[#allocation2 + $0x840] sm:$0xff]
        %v1263 = vld [vmem:[#allocation2 + $0x848] sm:$0xff]
        %v1264 = vld [vmem:[#allocation2 + $0x850] sm:$0xff]
        %v1265 = vld [vmem:[#allocation2 + $0x858] sm:$0xff]
        %v1266 = vld [vmem:[#allocation2 + $0x860] sm:$0xff]
        %v1267 = vld [vmem:[#allocation2 + $0x868] sm:$0xff]
        %v1268 = vld [vmem:[#allocation2 + $0x870] sm:$0xff]
        %v1269 = vld [vmem:[#allocation2 + $0x878] sm:$0xff]
        %v1270 = vld [vmem:[#allocation2 + $0x880] sm:$0xff]
        %v1271 = vld [vmem:[#allocation2 + $0x888] sm:$0xff]
        %v1272 = vld [vmem:[#allocation2 + $0x890] sm:$0xff]
        %v1273 = vld [vmem:[#allocation2 + $0x898] sm:$0xff]
        %v1274 = vld [vmem:[#allocation2 + $0x8a0] sm:$0xff]
        %v1275 = vld [vmem:[#allocation2 + $0x8a8] sm:$0xff]
        %v1276 = vld [vmem:[#allocation2 + $0x8b0] sm:$0xff]
        %v1277 = vld [vmem:[#allocation2 + $0x8b8] sm:$0xff]
        %v1278 = vld [vmem:[#allocation2 + $0x8c0] sm:$0xff]
        %v1279 = vld [vmem:[#allocation2 + $0x8c8] sm:$0xff]
        %v1280 = vld [vmem:[#allocation2 + $0x8d0] sm:$0xff]
        %v1281 = vld [vmem:[#allocation2 + $0x8d8] sm:$0xff]
        %v1282 = vld [vmem:[#allocation2 + $0x8e0] sm:$0xff]
        %v1283 = vld [vmem:[#allocation2 + $0x8e8] sm:$0xff]
        %v1284 = vld [vmem:[#allocation2 + $0x8f0] sm:$0xff]
        %v1285 = vld [vmem:[#allocation2 + $0x8f8] sm:$0xff]
        %v1286 = vld [vmem:[#allocation2 + $0x900] sm:$0xff]
        %v1287 = vld [vmem:[#allocation2 + $0x908] sm:$0xff]
        %v1288 = vld [vmem:[#allocation2 + $0x910] sm:$0xff]
        %v1289 = vld [vmem:[#allocation2 + $0x918] sm:$0xff]
        %v1290 = vld [vmem:[#allocation2 + $0x920] sm:$0xff]
        %v1291 = vld [vmem:[#allocation2 + $0x928] sm:$0xff]
        %v1292 = vld [vmem:[#allocation2 + $0x930] sm:$0xff]
        %v1293 = vld [vmem:[#allocation2 + $0x938] sm:$0xff]
        %v1294 = vld [vmem:[#allocation2 + $0x940] sm:$0xff]
        %v1295 = vld [vmem:[#allocation2 + $0x948] sm:$0xff]
        %v1296 = vld [vmem:[#allocation2 + $0x950] sm:$0xff]
        %v1297 = vld [vmem:[#allocation2 + $0x958] sm:$0xff]
        %v1298 = vld [vmem:[#allocation2 + $0x960] sm:$0xff]
        %v1299 = vld [vmem:[#allocation2 + $0x968] sm:$0xff]
        %v1300 = vld [vmem:[#allocation2 + $0x970] sm:$0xff]
        %v1301 = vld [vmem:[#allocation2 + $0x978] sm:$0xff]
        %v1302 = vld [vmem:[#allocation2 + $0x980] sm:$0xff]
        %v1303 = vld [vmem:[#allocation2 + $0x988] sm:$0xff]
        %v1304 = vld [vmem:[#allocation2 + $0x990] sm:$0xff]
        %v1305 = vld [vmem:[#allocation2 + $0x998] sm:$0xff]
        %v1306 = vld [vmem:[#allocation2 + $0x9a0] sm:$0xff]
        %v1307 = vld [vmem:[#allocation2 + $0x9a8] sm:$0xff]
        %v1308 = vld [vmem:[#allocation2 + $0x9b0] sm:$0xff]
        %v1309 = vld [vmem:[#allocation2 + $0x9b8] sm:$0xff]
        %v1310 = vld [vmem:[#allocation2 + $0x9c0] sm:$0xff]
        %v1311 = vld [vmem:[#allocation2 + $0x9c8] sm:$0xff]
        %v1312 = vld [vmem:[#allocation2 + $0x9d0] sm:$0xff]
        %v1313 = vld [vmem:[#allocation2 + $0x9d8] sm:$0xff]
        %v1314 = vld [vmem:[#allocation2 + $0x9e0] sm:$0xff]
        %v1315 = vld [vmem:[#allocation2 + $0x9e8] sm:$0xff]
        %v1316 = vld [vmem:[#allocation2 + $0x9f0] sm:$0xff]
        %v1317 = vld [vmem:[#allocation2 + $0x9f8] sm:$0xff]
        %v1318 = vld [vmem:[#allocation2 + $0xa00] sm:$0xff]
        %v1319 = vld [vmem:[#allocation2 + $0xa08] sm:$0xff]
        %v1320 = vld [vmem:[#allocation2 + $0xa10] sm:$0xff]
        %v1321 = vld [vmem:[#allocation2 + $0xa18] sm:$0xff]
        %v1322 = vld [vmem:[#allocation7] sm:$0xff]
        %v1323 = vld [vmem:[#allocation7 + $0x8] sm:$0xff]
        %v1324 = vld [vmem:[#allocation7 + $0x10] sm:$0xff]
        %v1325 = vld [vmem:[#allocation7 + $0x18] sm:$0xff]
        %v1326 = vld [vmem:[#allocation7 + $0x20] sm:$0xff]
        %v1327 = vld [vmem:[#allocation7 + $0x28] sm:$0xff]
        %v1328 = vld [vmem:[#allocation7 + $0x30] sm:$0xff]
        %v1329 = vld [vmem:[#allocation7 + $0x38] sm:$0xff]
        %v1330 = vld [vmem:[#allocation7 + $0x40] sm:$0xff]
        %v1331 = vld [vmem:[#allocation7 + $0x48] sm:$0xff]
        %v1332 = vld [vmem:[#allocation7 + $0x50] sm:$0xff]
        %v1333 = vld [vmem:[#allocation7 + $0x58] sm:$0xff]
        %v1334 = vld [vmem:[#allocation7 + $0x60] sm:$0xff]
        %v1335 = vld [vmem:[#allocation7 + $0x68] sm:$0xff]
        %v1336 = vld [vmem:[#allocation7 + $0x70] sm:$0xff]
        %v1337 = vld [vmem:[#allocation7 + $0x78] sm:$0xff]
        %v1338 = vld [vmem:[#allocation7 + $0x80] sm:$0xff]
        %v1339 = vld [vmem:[#allocation7 + $0x88] sm:$0xff]
        %v1340 = vld [vmem:[#allocation7 + $0x90] sm:$0xff]
        %v1341 = vld [vmem:[#allocation7 + $0x98] sm:$0xff]
        %v1342 = vld [vmem:[#allocation7 + $0xa0] sm:$0xff]
        %v1343 = vld [vmem:[#allocation7 + $0xa8] sm:$0xff]
        %v1344 = vld [vmem:[#allocation7 + $0xb0] sm:$0xff]
        %v1345 = vld [vmem:[#allocation7 + $0xb8] sm:$0xff]
        %v1346 = vld [vmem:[#allocation7 + $0xc0] sm:$0xff]
        %v1347 = vld [vmem:[#allocation7 + $0xc8] sm:$0xff]
        %v1348 = vld [vmem:[#allocation7 + $0xd0] sm:$0xff]
        %v1349 = vld [vmem:[#allocation7 + $0xd8] sm:$0xff]
        %v1350 = vld [vmem:[#allocation7 + $0xe0] sm:$0xff]
        %v1351 = vld [vmem:[#allocation7 + $0xe8] sm:$0xff]
        %v1352 = vld [vmem:[#allocation7 + $0xf0] sm:$0xff]
        %v1353 = vld [vmem:[#allocation7 + $0xf8] sm:$0xff]
        %v1354 = vld [vmem:[#allocation7 + $0x100] sm:$0xff]
        %v1355 = vld [vmem:[#allocation7 + $0x108] sm:$0xff]
        %v1356 = vld [vmem:[#allocation7 + $0x110] sm:$0xff]
        %v1357 = vld [vmem:[#allocation7 + $0x118] sm:$0xff]
        %v1358 = vld [vmem:[#allocation7 + $0x120] sm:$0xff]
        %v1359 = vld [vmem:[#allocation7 + $0x128] sm:$0xff]
        %v1360 = vld [vmem:[#allocation7 + $0x130] sm:$0xff]
        %v1361 = vld [vmem:[#allocation7 + $0x138] sm:$0xff]
        %v1362 = vld [vmem:[#allocation7 + $0x140] sm:$0xff]
        %v1363 = vld [vmem:[#allocation7 + $0x148] sm:$0xff]
        %v1364 = vld [vmem:[#allocation7 + $0x150] sm:$0xff]
        %v1365 = vld [vmem:[#allocation7 + $0x158] sm:$0xff]
        %v1366 = vld [vmem:[#allocation7 + $0x160] sm:$0xff]
        %v1367 = vld [vmem:[#allocation7 + $0x168] sm:$0xff]
        %v1368 = vld [vmem:[#allocation7 + $0x170] sm:$0xff]
        %v1369 = vld [vmem:[#allocation7 + $0x178] sm:$0xff]
        %v1370 = vld [vmem:[#allocation7 + $0x180] sm:$0xff]
        %v1371 = vld [vmem:[#allocation7 + $0x188] sm:$0xff]
        %v1372 = vld [vmem:[#allocation7 + $0x190] sm:$0xff]
        %v1373 = vld [vmem:[#allocation7 + $0x198] sm:$0xff]
        %v1374 = vld [vmem:[#allocation7 + $0x1a0] sm:$0xff]
        %v1375 = vld [vmem:[#allocation7 + $0x1a8] sm:$0xff]
        %v1376 = vld [vmem:[#allocation7 + $0x1b0] sm:$0xff]
        %v1377 = vld [vmem:[#allocation7 + $0x1b8] sm:$0xff]
        %v1378 = vld [vmem:[#allocation7 + $0x1c0] sm:$0xff]
        %v1379 = vld [vmem:[#allocation7 + $0x1c8] sm:$0xff]
        %v1380 = vld [vmem:[#allocation7 + $0x1d0] sm:$0xff]
        %v1381 = vld [vmem:[#allocation7 + $0x1d8] sm:$0xff]
        %v1382 = vld [vmem:[#allocation7 + $0x1e0] sm:$0xff]
        %v1383 = vld [vmem:[#allocation7 + $0x1e8] sm:$0xff]
        %v1384 = vld [vmem:[#allocation7 + $0x1f0] sm:$0xff]
        %v1385 = vld [vmem:[#allocation7 + $0x1f8] sm:$0xff]
        %v1386 = vld [vmem:[#allocation7 + $0x200] sm:$0xff]
        %v1387 = vld [vmem:[#allocation7 + $0x208] sm:$0xff]
        %v1388 = vld [vmem:[#allocation7 + $0x210] sm:$0xff]
        %v1389 = vld [vmem:[#allocation7 + $0x218] sm:$0xff]
        %v1390 = vld [vmem:[#allocation7 + $0x220] sm:$0xff]
        %v1391 = vld [vmem:[#allocation7 + $0x228] sm:$0xff]
        %v1392 = vld [vmem:[#allocation7 + $0x230] sm:$0xff]
        %v1393 = vld [vmem:[#allocation7 + $0x238] sm:$0xff]
        %v1394 = vld [vmem:[#allocation7 + $0x240] sm:$0xff]
        %v1395 = vld [vmem:[#allocation7 + $0x248] sm:$0xff]
        %v1396 = vld [vmem:[#allocation7 + $0x250] sm:$0xff]
        %v1397 = vld [vmem:[#allocation7 + $0x258] sm:$0xff]
        %v1398 = vld [vmem:[#allocation7 + $0x260] sm:$0xff]
        %v1399 = vld [vmem:[#allocation7 + $0x268] sm:$0xff]
        %v1400 = vld [vmem:[#allocation7 + $0x270] sm:$0xff]
        %v1401 = vld [vmem:[#allocation7 + $0x278] sm:$0xff]
        %v1402 = vld [vmem:[#allocation7 + $0x280] sm:$0xff]
        %v1403 = vld [vmem:[#allocation7 + $0x288] sm:$0xff]
        %v1404 = vld [vmem:[#allocation7 + $0x290] sm:$0xff]
        %v1405 = vld [vmem:[#allocation7 + $0x298] sm:$0xff]
        %v1406 = vld [vmem:[#allocation7 + $0x2a0] sm:$0xff]
        %v1407 = vld [vmem:[#allocation7 + $0x2a8] sm:$0xff]
        %v1408 = vld [vmem:[#allocation7 + $0x2b0] sm:$0xff]
        %v1409 = vld [vmem:[#allocation7 + $0x2b8] sm:$0xff]
        %v1410 = vld [vmem:[#allocation7 + $0x2c0] sm:$0xff]
        %v1411 = vld [vmem:[#allocation7 + $0x2c8] sm:$0xff]
        %v1412 = vld [vmem:[#allocation7 + $0x2d0] sm:$0xff]
        %v1413 = vld [vmem:[#allocation7 + $0x2d8] sm:$0xff]
        %v1414 = vld [vmem:[#allocation7 + $0x2e0] sm:$0xff]
        %v1415 = vld [vmem:[#allocation7 + $0x2e8] sm:$0xff]
        %v1416 = vld [vmem:[#allocation7 + $0x2f0] sm:$0xff]
        %v1417 = vld [vmem:[#allocation7 + $0x2f8] sm:$0xff]
        %v1418 = vld [vmem:[#allocation7 + $0x300] sm:$0xff]
        %v1419 = vld [vmem:[#allocation7 + $0x308] sm:$0xff]
        %v1420 = vld [vmem:[#allocation7 + $0x310] sm:$0xff]
        %v1421 = vld [vmem:[#allocation7 + $0x318] sm:$0xff]
        %v1422 = vld [vmem:[#allocation7 + $0x320] sm:$0xff]
        %v1423 = vld [vmem:[#allocation7 + $0x328] sm:$0xff]
        %v1424 = vld [vmem:[#allocation7 + $0x330] sm:$0xff]
        %v1425 = vld [vmem:[#allocation7 + $0x338] sm:$0xff]
        %v1426 = vld [vmem:[#allocation7 + $0x340] sm:$0xff]
        %v1427 = vld [vmem:[#allocation7 + $0x348] sm:$0xff]
        %v1428 = vld [vmem:[#allocation7 + $0x350] sm:$0xff]
        %v1429 = vld [vmem:[#allocation7 + $0x358] sm:$0xff]
        %v1430 = vld [vmem:[#allocation7 + $0x360] sm:$0xff]
        %v1431 = vld [vmem:[#allocation7 + $0x368] sm:$0xff]
        %v1432 = vld [vmem:[#allocation7 + $0x370] sm:$0xff]
        %v1433 = vld [vmem:[#allocation7 + $0x378] sm:$0xff]
        %v1434 = vld [vmem:[#allocation7 + $0x380] sm:$0xff]
        %v1435 = vld [vmem:[#allocation7 + $0x388] sm:$0xff]
        %v1436 = vld [vmem:[#allocation7 + $0x390] sm:$0xff]
        %v1437 = vld [vmem:[#allocation7 + $0x398] sm:$0xff]
        %v1438 = vld [vmem:[#allocation7 + $0x3a0] sm:$0xff]
        %v1439 = vld [vmem:[#allocation7 + $0x3a8] sm:$0xff]
        %v1440 = vld [vmem:[#allocation7 + $0x3b0] sm:$0xff]
        %v1441 = vld [vmem:[#allocation7 + $0x3b8] sm:$0xff]
        %v1442 = vld [vmem:[#allocation7 + $0x3c0] sm:$0xff]
        %v1443 = vld [vmem:[#allocation7 + $0x3c8] sm:$0xff]
        %v1444 = vld [vmem:[#allocation7 + $0x3d0] sm:$0xff]
        %v1445 = vld [vmem:[#allocation7 + $0x3d8] sm:$0xff]
        %v1446 = vld [vmem:[#allocation7 + $0x3e0] sm:$0xff]
        %v1447 = vld [vmem:[#allocation7 + $0x3e8] sm:$0xff]
        %v1448 = vld [vmem:[#allocation7 + $0x3f0] sm:$0xff]
        %v1449 = vld [vmem:[#allocation7 + $0x3f8] sm:$0xff]
        %v1450 = vld [vmem:[#allocation7 + $0x400] sm:$0xff]
        %v1451 = vld [vmem:[#allocation7 + $0x408] sm:$0xff]
        %v1452 = vld [vmem:[#allocation7 + $0x410] sm:$0xff]
        %v1453 = vld [vmem:[#allocation7 + $0x418] sm:$0xff]
        %v1454 = vld [vmem:[#allocation7 + $0x420] sm:$0xff]
        %v1455 = vld [vmem:[#allocation7 + $0x428] sm:$0xff]
        %v1456 = vld [vmem:[#allocation7 + $0x430] sm:$0xff]
        %v1457 = vld [vmem:[#allocation7 + $0x438] sm:$0xff]
        %v1458 = vld [vmem:[#allocation7 + $0x440] sm:$0xff]
        %v1459 = vld [vmem:[#allocation7 + $0x448] sm:$0xff]
        %v1460 = vld [vmem:[#allocation7 + $0x450] sm:$0xff]
        %v1461 = vld [vmem:[#allocation7 + $0x458] sm:$0xff]
        %v1462 = vld [vmem:[#allocation7 + $0x460] sm:$0xff]
        %v1463 = vld [vmem:[#allocation7 + $0x468] sm:$0xff]
        %v1464 = vld [vmem:[#allocation7 + $0x470] sm:$0xff]
        %v1465 = vld [vmem:[#allocation7 + $0x478] sm:$0xff]
        %v1466 = vld [vmem:[%s3] sm:$0x1]
        %v1468 = vperm.slane %v1466, 0
        %1470 = vmatpush.msra.mxu0 %v1337
        %1471 = vmatpush.msra.mxu0 %v1336
        %1472 = vmatpush.msra.mxu0 %v1335
        %1473 = vmatpush.msra.mxu0 %v1334
        %1474 = vmatpush.msra.mxu0 %v1333
        %1475 = vmatpush.msra.mxu0 %v1332
        %1476 = vmatpush.msra.mxu0 %v1331
        %1477 = vmatpush.msra.mxu0 %v1330
        %1478 = vmatpush.msra.mxu0 %v1329
        %1479 = vmatpush.msra.mxu0 %v1328
        %1480 = vmatpush.msra.mxu0 %v1327
        %1481 = vmatpush.msra.mxu0 %v1326
        %1482 = vmatpush.msra.mxu0 %v1325
        %1483 = vmatpush.msra.mxu0 %v1324
        %1484 = vmatpush.msra.mxu0 %v1323
        %1485 = vmatpush.msra.mxu0 %v1322
        %1486 = vmatmul.f32.gmra.mxu0 %v998
        %v1487 = vpop.f32.mrf.mxu0
        %v1488 = vadd.f32 %v1468, %v1487
        %1489 = vmatmul.f32.gmra.mxu0 %v1007
        %v1490 = vpop.f32.mrf.mxu0
        %v1491 = vadd.f32 %v1468, %v1490
        %1492 = vmatmul.f32.gmra.mxu0 %v1016
        %v1493 = vpop.f32.mrf.mxu0
        %v1494 = vadd.f32 %v1468, %v1493
        %1495 = vmatmul.f32.gmra.mxu0 %v1025
        %v1496 = vpop.f32.mrf.mxu0
        %v1497 = vadd.f32 %v1468, %v1496
        %1498 = vmatmul.f32.gmra.mxu0 %v1034
        %v1499 = vpop.f32.mrf.mxu0
        %v1500 = vadd.f32 %v1468, %v1499
        %1501 = vmatmul.f32.gmra.mxu0 %v1043
        %v1502 = vpop.f32.mrf.mxu0
        %v1503 = vadd.f32 %v1468, %v1502
        %1504 = vmatmul.f32.gmra.mxu0 %v1052
        %v1505 = vpop.f32.mrf.mxu0
        %v1506 = vadd.f32 %v1468, %v1505
        %1507 = vmatmul.f32.gmra.mxu0 %v1061
        %v1508 = vpop.f32.mrf.mxu0
        %v1509 = vadd.f32 %v1468, %v1508
        %1510 = vmatmul.f32.gmra.mxu0 %v1070
        %v1511 = vpop.f32.mrf.mxu0
        %v1512 = vadd.f32 %v1468, %v1511
        %1513 = vmatmul.f32.gmra.mxu0 %v1079
        %v1514 = vpop.f32.mrf.mxu0
        %v1515 = vadd.f32 %v1468, %v1514
        %1516 = vmatmul.f32.gmra.mxu0 %v1088
        %v1517 = vpop.f32.mrf.mxu0
        %v1518 = vadd.f32 %v1468, %v1517
        %1519 = vmatmul.f32.gmra.mxu0 %v1097
        %v1520 = vpop.f32.mrf.mxu0
        %v1521 = vadd.f32 %v1468, %v1520
        %1522 = vmatmul.f32.gmra.mxu0 %v1106
        %v1523 = vpop.f32.mrf.mxu0
        %v1524 = vadd.f32 %v1468, %v1523
        %1525 = vmatmul.f32.gmra.mxu0 %v1115
        %v1526 = vpop.f32.mrf.mxu0
        %v1527 = vadd.f32 %v1468, %v1526
        %1528 = vmatmul.f32.gmra.mxu0 %v1124
        %v1529 = vpop.f32.mrf.mxu0
        %v1530 = vadd.f32 %v1468, %v1529
        %1531 = vmatmul.f32.gmra.mxu0 %v1133
        %v1532 = vpop.f32.mrf.mxu0
        %v1533 = vadd.f32 %v1468, %v1532
        %1534 = vmatmul.f32.gmra.mxu0 %v1142
        %v1535 = vpop.f32.mrf.mxu0
        %v1536 = vadd.f32 %v1468, %v1535
        %1537 = vmatmul.f32.gmra.mxu0 %v1151
        %v1538 = vpop.f32.mrf.mxu0
        %v1539 = vadd.f32 %v1468, %v1538
        %1540 = vmatmul.f32.gmra.mxu0 %v1160
        %v1541 = vpop.f32.mrf.mxu0
        %v1542 = vadd.f32 %v1468, %v1541
        %1543 = vmatmul.f32.gmra.mxu0 %v1169
        %v1544 = vpop.f32.mrf.mxu0
        %v1545 = vadd.f32 %v1468, %v1544
        %1546 = vmatmul.f32.gmra.mxu0 %v1178
        %v1547 = vpop.f32.mrf.mxu0
        %v1548 = vadd.f32 %v1468, %v1547
        %1549 = vmatmul.f32.gmra.mxu0 %v1187
        %v1550 = vpop.f32.mrf.mxu0
        %v1551 = vadd.f32 %v1468, %v1550
        %1552 = vmatmul.f32.gmra.mxu0 %v1196
        %v1553 = vpop.f32.mrf.mxu0
        %v1554 = vadd.f32 %v1468, %v1553
        %1555 = vmatmul.f32.gmra.mxu0 %v1205
        %v1556 = vpop.f32.mrf.mxu0
        %v1557 = vadd.f32 %v1468, %v1556
        %1558 = vmatmul.f32.gmra.mxu0 %v1214
        %v1559 = vpop.f32.mrf.mxu0
        %v1560 = vadd.f32 %v1468, %v1559
        %1561 = vmatmul.f32.gmra.mxu0 %v1223
        %v1562 = vpop.f32.mrf.mxu0
        %v1563 = vadd.f32 %v1468, %v1562
        %1564 = vmatmul.f32.gmra.mxu0 %v1232
        %v1565 = vpop.f32.mrf.mxu0
        %v1566 = vadd.f32 %v1468, %v1565
        %1567 = vmatmul.f32.gmra.mxu0 %v1241
        %v1568 = vpop.f32.mrf.mxu0
        %v1569 = vadd.f32 %v1468, %v1568
        %1570 = vmatmul.f32.gmra.mxu0 %v1250
        %v1571 = vpop.f32.mrf.mxu0
        %v1572 = vadd.f32 %v1468, %v1571
        %1573 = vmatmul.f32.gmra.mxu0 %v1259
        %v1574 = vpop.f32.mrf.mxu0
        %v1575 = vadd.f32 %v1468, %v1574
        %1576 = vmatmul.f32.gmra.mxu0 %v1268
        %v1577 = vpop.f32.mrf.mxu0
        %v1578 = vadd.f32 %v1468, %v1577
        %1579 = vmatmul.f32.gmra.mxu0 %v1277
        %v1580 = vpop.f32.mrf.mxu0
        %v1581 = vadd.f32 %v1468, %v1580
        %1582 = vmatmul.f32.gmra.mxu0 %v1286
        %v1583 = vpop.f32.mrf.mxu0
        %v1584 = vadd.f32 %v1468, %v1583
        %1585 = vmatmul.f32.gmra.mxu0 %v1295
        %v1586 = vpop.f32.mrf.mxu0
        %v1587 = vadd.f32 %v1468, %v1586
        %1588 = vmatmul.f32.gmra.mxu0 %v1304
        %v1589 = vpop.f32.mrf.mxu0
        %v1590 = vadd.f32 %v1468, %v1589
        %1591 = vmatmul.f32.gmra.mxu0 %v1313
        %v1592 = vpop.f32.mrf.mxu0
        %v1593 = vadd.f32 %v1468, %v1592
        %1594 = vdwg.mxu0
        %1595 = vmatpush.msra.mxu0 %v1353
        %1596 = vmatpush.msra.mxu0 %v1352
        %1597 = vmatpush.msra.mxu0 %v1351
        %1598 = vmatpush.msra.mxu0 %v1350
        %1599 = vmatpush.msra.mxu0 %v1349
        %1600 = vmatpush.msra.mxu0 %v1348
        %1601 = vmatpush.msra.mxu0 %v1347
        %1602 = vmatpush.msra.mxu0 %v1346
        %1603 = vmatpush.msra.mxu0 %v1345
        %1604 = vmatpush.msra.mxu0 %v1344
        %1605 = vmatpush.msra.mxu0 %v1343
        %1606 = vmatpush.msra.mxu0 %v1342
        %1607 = vmatpush.msra.mxu0 %v1341
        %1608 = vmatpush.msra.mxu0 %v1340
        %1609 = vmatpush.msra.mxu0 %v1339
        %1610 = vmatpush.msra.mxu0 %v1338
        %1611 = vmatmul.f32.gmra.mxu0 %v999
        %v1612 = vpop.f32.mrf.mxu0
        %v1613 = vadd.f32 %v1488, %v1612
        %1614 = vmatmul.f32.gmra.mxu0 %v1008
        %v1615 = vpop.f32.mrf.mxu0
        %v1616 = vadd.f32 %v1491, %v1615
        %1617 = vmatmul.f32.gmra.mxu0 %v1017
        %v1618 = vpop.f32.mrf.mxu0
        %v1619 = vadd.f32 %v1494, %v1618
        %1620 = vmatmul.f32.gmra.mxu0 %v1026
        %v1621 = vpop.f32.mrf.mxu0
        %v1622 = vadd.f32 %v1497, %v1621
        %1623 = vmatmul.f32.gmra.mxu0 %v1035
        %v1624 = vpop.f32.mrf.mxu0
        %v1625 = vadd.f32 %v1500, %v1624
        %1626 = vmatmul.f32.gmra.mxu0 %v1044
        %v1627 = vpop.f32.mrf.mxu0
        %v1628 = vadd.f32 %v1503, %v1627
        %1629 = vmatmul.f32.gmra.mxu0 %v1053
        %v1630 = vpop.f32.mrf.mxu0
        %v1631 = vadd.f32 %v1506, %v1630
        %1632 = vmatmul.f32.gmra.mxu0 %v1062
        %v1633 = vpop.f32.mrf.mxu0
        %v1634 = vadd.f32 %v1509, %v1633
        %1635 = vmatmul.f32.gmra.mxu0 %v1071
        %v1636 = vpop.f32.mrf.mxu0
        %v1637 = vadd.f32 %v1512, %v1636
        %1638 = vmatmul.f32.gmra.mxu0 %v1080
        %v1639 = vpop.f32.mrf.mxu0
        %v1640 = vadd.f32 %v1515, %v1639
        %1641 = vmatmul.f32.gmra.mxu0 %v1089
        %v1642 = vpop.f32.mrf.mxu0
        %v1643 = vadd.f32 %v1518, %v1642
        %1644 = vmatmul.f32.gmra.mxu0 %v1098
        %v1645 = vpop.f32.mrf.mxu0
        %v1646 = vadd.f32 %v1521, %v1645
        %1647 = vmatmul.f32.gmra.mxu0 %v1107
        %v1648 = vpop.f32.mrf.mxu0
        %v1649 = vadd.f32 %v1524, %v1648
        %1650 = vmatmul.f32.gmra.mxu0 %v1116
        %v1651 = vpop.f32.mrf.mxu0
        %v1652 = vadd.f32 %v1527, %v1651
        %1653 = vmatmul.f32.gmra.mxu0 %v1125
        %v1654 = vpop.f32.mrf.mxu0
        %v1655 = vadd.f32 %v1530, %v1654
        %1656 = vmatmul.f32.gmra.mxu0 %v1134
        %v1657 = vpop.f32.mrf.mxu0
        %v1658 = vadd.f32 %v1533, %v1657
        %1659 = vmatmul.f32.gmra.mxu0 %v1143
        %v1660 = vpop.f32.mrf.mxu0
        %v1661 = vadd.f32 %v1536, %v1660
        %1662 = vmatmul.f32.gmra.mxu0 %v1152
        %v1663 = vpop.f32.mrf.mxu0
        %v1664 = vadd.f32 %v1539, %v1663
        %1665 = vmatmul.f32.gmra.mxu0 %v1161
        %v1666 = vpop.f32.mrf.mxu0
        %v1667 = vadd.f32 %v1542, %v1666
        %1668 = vmatmul.f32.gmra.mxu0 %v1170
        %v1669 = vpop.f32.mrf.mxu0
        %v1670 = vadd.f32 %v1545, %v1669
        %1671 = vmatmul.f32.gmra.mxu0 %v1179
        %v1672 = vpop.f32.mrf.mxu0
        %v1673 = vadd.f32 %v1548, %v1672
        %1674 = vmatmul.f32.gmra.mxu0 %v1188
        %v1675 = vpop.f32.mrf.mxu0
        %v1676 = vadd.f32 %v1551, %v1675
        %1677 = vmatmul.f32.gmra.mxu0 %v1197
        %v1678 = vpop.f32.mrf.mxu0
        %v1679 = vadd.f32 %v1554, %v1678
        %1680 = vmatmul.f32.gmra.mxu0 %v1206
        %v1681 = vpop.f32.mrf.mxu0
        %v1682 = vadd.f32 %v1557, %v1681
        %1683 = vmatmul.f32.gmra.mxu0 %v1215
        %v1684 = vpop.f32.mrf.mxu0
        %v1685 = vadd.f32 %v1560, %v1684
        %1686 = vmatmul.f32.gmra.mxu0 %v1224
        %v1687 = vpop.f32.mrf.mxu0
        %v1688 = vadd.f32 %v1563, %v1687
        %1689 = vmatmul.f32.gmra.mxu0 %v1233
        %v1690 = vpop.f32.mrf.mxu0
        %v1691 = vadd.f32 %v1566, %v1690
        %1692 = vmatmul.f32.gmra.mxu0 %v1242
        %v1693 = vpop.f32.mrf.mxu0
        %v1694 = vadd.f32 %v1569, %v1693
        %1695 = vmatmul.f32.gmra.mxu0 %v1251
        %v1696 = vpop.f32.mrf.mxu0
        %v1697 = vadd.f32 %v1572, %v1696
        %1698 = vmatmul.f32.gmra.mxu0 %v1260
        %v1699 = vpop.f32.mrf.mxu0
        %v1700 = vadd.f32 %v1575, %v1699
        %1701 = vmatmul.f32.gmra.mxu0 %v1269
        %v1702 = vpop.f32.mrf.mxu0
        %v1703 = vadd.f32 %v1578, %v1702
        %1704 = vmatmul.f32.gmra.mxu0 %v1278
        %v1705 = vpop.f32.mrf.mxu0
        %v1706 = vadd.f32 %v1581, %v1705
        %1707 = vmatmul.f32.gmra.mxu0 %v1287
        %v1708 = vpop.f32.mrf.mxu0
        %v1709 = vadd.f32 %v1584, %v1708
        %1710 = vmatmul.f32.gmra.mxu0 %v1296
        %v1711 = vpop.f32.mrf.mxu0
        %v1712 = vadd.f32 %v1587, %v1711
        %1713 = vmatmul.f32.gmra.mxu0 %v1305
        %v1714 = vpop.f32.mrf.mxu0
        %v1715 = vadd.f32 %v1590, %v1714
        %1716 = vmatmul.f32.gmra.mxu0 %v1314
        %v1717 = vpop.f32.mrf.mxu0
        %v1718 = vadd.f32 %v1593, %v1717
        %1719 = vdwg.mxu0
        %1720 = vmatpush.msra.mxu0 %v1369
        %1721 = vmatpush.msra.mxu0 %v1368
        %1722 = vmatpush.msra.mxu0 %v1367
        %1723 = vmatpush.msra.mxu0 %v1366
        %1724 = vmatpush.msra.mxu0 %v1365
        %1725 = vmatpush.msra.mxu0 %v1364
        %1726 = vmatpush.msra.mxu0 %v1363
        %1727 = vmatpush.msra.mxu0 %v1362
        %1728 = vmatpush.msra.mxu0 %v1361
        %1729 = vmatpush.msra.mxu0 %v1360
        %1730 = vmatpush.msra.mxu0 %v1359
        %1731 = vmatpush.msra.mxu0 %v1358
        %1732 = vmatpush.msra.mxu0 %v1357
        %1733 = vmatpush.msra.mxu0 %v1356
        %1734 = vmatpush.msra.mxu0 %v1355
        %1735 = vmatpush.msra.mxu0 %v1354
        %1736 = vmatmul.f32.gmra.mxu0 %v1000
        %v1737 = vpop.f32.mrf.mxu0
        %v1738 = vadd.f32 %v1613, %v1737
        %1739 = vmatmul.f32.gmra.mxu0 %v1009
        %v1740 = vpop.f32.mrf.mxu0
        %v1741 = vadd.f32 %v1616, %v1740
        %1742 = vmatmul.f32.gmra.mxu0 %v1018
        %v1743 = vpop.f32.mrf.mxu0
        %v1744 = vadd.f32 %v1619, %v1743
        %1745 = vmatmul.f32.gmra.mxu0 %v1027
        %v1746 = vpop.f32.mrf.mxu0
        %v1747 = vadd.f32 %v1622, %v1746
        %1748 = vmatmul.f32.gmra.mxu0 %v1036
        %v1749 = vpop.f32.mrf.mxu0
        %v1750 = vadd.f32 %v1625, %v1749
        %1751 = vmatmul.f32.gmra.mxu0 %v1045
        %v1752 = vpop.f32.mrf.mxu0
        %v1753 = vadd.f32 %v1628, %v1752
        %1754 = vmatmul.f32.gmra.mxu0 %v1054
        %v1755 = vpop.f32.mrf.mxu0
        %v1756 = vadd.f32 %v1631, %v1755
        %1757 = vmatmul.f32.gmra.mxu0 %v1063
        %v1758 = vpop.f32.mrf.mxu0
        %v1759 = vadd.f32 %v1634, %v1758
        %1760 = vmatmul.f32.gmra.mxu0 %v1072
        %v1761 = vpop.f32.mrf.mxu0
        %v1762 = vadd.f32 %v1637, %v1761
        %1763 = vmatmul.f32.gmra.mxu0 %v1081
        %v1764 = vpop.f32.mrf.mxu0
        %v1765 = vadd.f32 %v1640, %v1764
        %1766 = vmatmul.f32.gmra.mxu0 %v1090
        %v1767 = vpop.f32.mrf.mxu0
        %v1768 = vadd.f32 %v1643, %v1767
        %1769 = vmatmul.f32.gmra.mxu0 %v1099
        %v1770 = vpop.f32.mrf.mxu0
        %v1771 = vadd.f32 %v1646, %v1770
        %1772 = vmatmul.f32.gmra.mxu0 %v1108
        %v1773 = vpop.f32.mrf.mxu0
        %v1774 = vadd.f32 %v1649, %v1773
        %1775 = vmatmul.f32.gmra.mxu0 %v1117
        %v1776 = vpop.f32.mrf.mxu0
        %v1777 = vadd.f32 %v1652, %v1776
        %1778 = vmatmul.f32.gmra.mxu0 %v1126
        %v1779 = vpop.f32.mrf.mxu0
        %v1780 = vadd.f32 %v1655, %v1779
        %1781 = vmatmul.f32.gmra.mxu0 %v1135
        %v1782 = vpop.f32.mrf.mxu0
        %v1783 = vadd.f32 %v1658, %v1782
        %1784 = vmatmul.f32.gmra.mxu0 %v1144
        %v1785 = vpop.f32.mrf.mxu0
        %v1786 = vadd.f32 %v1661, %v1785
        %1787 = vmatmul.f32.gmra.mxu0 %v1153
        %v1788 = vpop.f32.mrf.mxu0
        %v1789 = vadd.f32 %v1664, %v1788
        %1790 = vmatmul.f32.gmra.mxu0 %v1162
        %v1791 = vpop.f32.mrf.mxu0
        %v1792 = vadd.f32 %v1667, %v1791
        %1793 = vmatmul.f32.gmra.mxu0 %v1171
        %v1794 = vpop.f32.mrf.mxu0
        %v1795 = vadd.f32 %v1670, %v1794
        %1796 = vmatmul.f32.gmra.mxu0 %v1180
        %v1797 = vpop.f32.mrf.mxu0
        %v1798 = vadd.f32 %v1673, %v1797
        %1799 = vmatmul.f32.gmra.mxu0 %v1189
        %v1800 = vpop.f32.mrf.mxu0
        %v1801 = vadd.f32 %v1676, %v1800
        %1802 = vmatmul.f32.gmra.mxu0 %v1198
        %v1803 = vpop.f32.mrf.mxu0
        %v1804 = vadd.f32 %v1679, %v1803
        %1805 = vmatmul.f32.gmra.mxu0 %v1207
        %v1806 = vpop.f32.mrf.mxu0
        %v1807 = vadd.f32 %v1682, %v1806
        %1808 = vmatmul.f32.gmra.mxu0 %v1216
        %v1809 = vpop.f32.mrf.mxu0
        %v1810 = vadd.f32 %v1685, %v1809
        %1811 = vmatmul.f32.gmra.mxu0 %v1225
        %v1812 = vpop.f32.mrf.mxu0
        %v1813 = vadd.f32 %v1688, %v1812
        %1814 = vmatmul.f32.gmra.mxu0 %v1234
        %v1815 = vpop.f32.mrf.mxu0
        %v1816 = vadd.f32 %v1691, %v1815
        %1817 = vmatmul.f32.gmra.mxu0 %v1243
        %v1818 = vpop.f32.mrf.mxu0
        %v1819 = vadd.f32 %v1694, %v1818
        %1820 = vmatmul.f32.gmra.mxu0 %v1252
        %v1821 = vpop.f32.mrf.mxu0
        %v1822 = vadd.f32 %v1697, %v1821
        %1823 = vmatmul.f32.gmra.mxu0 %v1261
        %v1824 = vpop.f32.mrf.mxu0
        %v1825 = vadd.f32 %v1700, %v1824
        %1826 = vmatmul.f32.gmra.mxu0 %v1270
        %v1827 = vpop.f32.mrf.mxu0
        %v1828 = vadd.f32 %v1703, %v1827
        %1829 = vmatmul.f32.gmra.mxu0 %v1279
        %v1830 = vpop.f32.mrf.mxu0
        %v1831 = vadd.f32 %v1706, %v1830
        %1832 = vmatmul.f32.gmra.mxu0 %v1288
        %v1833 = vpop.f32.mrf.mxu0
        %v1834 = vadd.f32 %v1709, %v1833
        %1835 = vmatmul.f32.gmra.mxu0 %v1297
        %v1836 = vpop.f32.mrf.mxu0
        %v1837 = vadd.f32 %v1712, %v1836
        %1838 = vmatmul.f32.gmra.mxu0 %v1306
        %v1839 = vpop.f32.mrf.mxu0
        %v1840 = vadd.f32 %v1715, %v1839
        %1841 = vmatmul.f32.gmra.mxu0 %v1315
        %v1842 = vpop.f32.mrf.mxu0
        %v1843 = vadd.f32 %v1718, %v1842
        %1844 = vdwg.mxu0
        %1845 = vmatpush.msra.mxu0 %v1385
        %1846 = vmatpush.msra.mxu0 %v1384
        %1847 = vmatpush.msra.mxu0 %v1383
        %1848 = vmatpush.msra.mxu0 %v1382
        %1849 = vmatpush.msra.mxu0 %v1381
        %1850 = vmatpush.msra.mxu0 %v1380
        %1851 = vmatpush.msra.mxu0 %v1379
        %1852 = vmatpush.msra.mxu0 %v1378
        %1853 = vmatpush.msra.mxu0 %v1377
        %1854 = vmatpush.msra.mxu0 %v1376
        %1855 = vmatpush.msra.mxu0 %v1375
        %1856 = vmatpush.msra.mxu0 %v1374
        %1857 = vmatpush.msra.mxu0 %v1373
        %1858 = vmatpush.msra.mxu0 %v1372
        %1859 = vmatpush.msra.mxu0 %v1371
        %1860 = vmatpush.msra.mxu0 %v1370
        %1861 = vmatmul.f32.gmra.mxu0 %v1001
        %v1862 = vpop.f32.mrf.mxu0
        %v1863 = vadd.f32 %v1738, %v1862
        %1864 = vmatmul.f32.gmra.mxu0 %v1010
        %v1865 = vpop.f32.mrf.mxu0
        %v1866 = vadd.f32 %v1741, %v1865
        %1867 = vmatmul.f32.gmra.mxu0 %v1019
        %v1868 = vpop.f32.mrf.mxu0
        %v1869 = vadd.f32 %v1744, %v1868
        %1870 = vmatmul.f32.gmra.mxu0 %v1028
        %v1871 = vpop.f32.mrf.mxu0
        %v1872 = vadd.f32 %v1747, %v1871
        %1873 = vmatmul.f32.gmra.mxu0 %v1037
        %v1874 = vpop.f32.mrf.mxu0
        %v1875 = vadd.f32 %v1750, %v1874
        %1876 = vmatmul.f32.gmra.mxu0 %v1046
        %v1877 = vpop.f32.mrf.mxu0
        %v1878 = vadd.f32 %v1753, %v1877
        %1879 = vmatmul.f32.gmra.mxu0 %v1055
        %v1880 = vpop.f32.mrf.mxu0
        %v1881 = vadd.f32 %v1756, %v1880
        %1882 = vmatmul.f32.gmra.mxu0 %v1064
        %v1883 = vpop.f32.mrf.mxu0
        %v1884 = vadd.f32 %v1759, %v1883
        %1885 = vmatmul.f32.gmra.mxu0 %v1073
        %v1886 = vpop.f32.mrf.mxu0
        %v1887 = vadd.f32 %v1762, %v1886
        %1888 = vmatmul.f32.gmra.mxu0 %v1082
        %v1889 = vpop.f32.mrf.mxu0
        %v1890 = vadd.f32 %v1765, %v1889
        %1891 = vmatmul.f32.gmra.mxu0 %v1091
        %v1892 = vpop.f32.mrf.mxu0
        %v1893 = vadd.f32 %v1768, %v1892
        %1894 = vmatmul.f32.gmra.mxu0 %v1100
        %v1895 = vpop.f32.mrf.mxu0
        %v1896 = vadd.f32 %v1771, %v1895
        %1897 = vmatmul.f32.gmra.mxu0 %v1109
        %v1898 = vpop.f32.mrf.mxu0
        %v1899 = vadd.f32 %v1774, %v1898
        %1900 = vmatmul.f32.gmra.mxu0 %v1118
        %v1901 = vpop.f32.mrf.mxu0
        %v1902 = vadd.f32 %v1777, %v1901
        %1903 = vmatmul.f32.gmra.mxu0 %v1127
        %v1904 = vpop.f32.mrf.mxu0
        %v1905 = vadd.f32 %v1780, %v1904
        %1906 = vmatmul.f32.gmra.mxu0 %v1136
        %v1907 = vpop.f32.mrf.mxu0
        %v1908 = vadd.f32 %v1783, %v1907
        %1909 = vmatmul.f32.gmra.mxu0 %v1145
        %v1910 = vpop.f32.mrf.mxu0
        %v1911 = vadd.f32 %v1786, %v1910
        %1912 = vmatmul.f32.gmra.mxu0 %v1154
        %v1913 = vpop.f32.mrf.mxu0
        %v1914 = vadd.f32 %v1789, %v1913
        %1915 = vmatmul.f32.gmra.mxu0 %v1163
        %v1916 = vpop.f32.mrf.mxu0
        %v1917 = vadd.f32 %v1792, %v1916
        %1918 = vmatmul.f32.gmra.mxu0 %v1172
        %v1919 = vpop.f32.mrf.mxu0
        %v1920 = vadd.f32 %v1795, %v1919
        %1921 = vmatmul.f32.gmra.mxu0 %v1181
        %v1922 = vpop.f32.mrf.mxu0
        %v1923 = vadd.f32 %v1798, %v1922
        %1924 = vmatmul.f32.gmra.mxu0 %v1190
        %v1925 = vpop.f32.mrf.mxu0
        %v1926 = vadd.f32 %v1801, %v1925
        %1927 = vmatmul.f32.gmra.mxu0 %v1199
        %v1928 = vpop.f32.mrf.mxu0
        %v1929 = vadd.f32 %v1804, %v1928
        %1930 = vmatmul.f32.gmra.mxu0 %v1208
        %v1931 = vpop.f32.mrf.mxu0
        %v1932 = vadd.f32 %v1807, %v1931
        %1933 = vmatmul.f32.gmra.mxu0 %v1217
        %v1934 = vpop.f32.mrf.mxu0
        %v1935 = vadd.f32 %v1810, %v1934
        %1936 = vmatmul.f32.gmra.mxu0 %v1226
        %v1937 = vpop.f32.mrf.mxu0
        %v1938 = vadd.f32 %v1813, %v1937
        %1939 = vmatmul.f32.gmra.mxu0 %v1235
        %v1940 = vpop.f32.mrf.mxu0
        %v1941 = vadd.f32 %v1816, %v1940
        %1942 = vmatmul.f32.gmra.mxu0 %v1244
        %v1943 = vpop.f32.mrf.mxu0
        %v1944 = vadd.f32 %v1819, %v1943
        %1945 = vmatmul.f32.gmra.mxu0 %v1253
        %v1946 = vpop.f32.mrf.mxu0
        %v1947 = vadd.f32 %v1822, %v1946
        %1948 = vmatmul.f32.gmra.mxu0 %v1262
        %v1949 = vpop.f32.mrf.mxu0
        %v1950 = vadd.f32 %v1825, %v1949
        %1951 = vmatmul.f32.gmra.mxu0 %v1271
        %v1952 = vpop.f32.mrf.mxu0
        %v1953 = vadd.f32 %v1828, %v1952
        %1954 = vmatmul.f32.gmra.mxu0 %v1280
        %v1955 = vpop.f32.mrf.mxu0
        %v1956 = vadd.f32 %v1831, %v1955
        %1957 = vmatmul.f32.gmra.mxu0 %v1289
        %v1958 = vpop.f32.mrf.mxu0
        %v1959 = vadd.f32 %v1834, %v1958
        %1960 = vmatmul.f32.gmra.mxu0 %v1298
        %v1961 = vpop.f32.mrf.mxu0
        %v1962 = vadd.f32 %v1837, %v1961
        %1963 = vmatmul.f32.gmra.mxu0 %v1307
        %v1964 = vpop.f32.mrf.mxu0
        %v1965 = vadd.f32 %v1840, %v1964
        %1966 = vmatmul.f32.gmra.mxu0 %v1316
        %v1967 = vpop.f32.mrf.mxu0
        %v1968 = vadd.f32 %v1843, %v1967
        %1969 = vdwg.mxu0
        %1970 = vmatpush.msra.mxu0 %v1401
        %1971 = vmatpush.msra.mxu0 %v1400
        %1972 = vmatpush.msra.mxu0 %v1399
        %1973 = vmatpush.msra.mxu0 %v1398
        %1974 = vmatpush.msra.mxu0 %v1397
        %1975 = vmatpush.msra.mxu0 %v1396
        %1976 = vmatpush.msra.mxu0 %v1395
        %1977 = vmatpush.msra.mxu0 %v1394
        %1978 = vmatpush.msra.mxu0 %v1393
        %1979 = vmatpush.msra.mxu0 %v1392
        %1980 = vmatpush.msra.mxu0 %v1391
        %1981 = vmatpush.msra.mxu0 %v1390
        %1982 = vmatpush.msra.mxu0 %v1389
        %1983 = vmatpush.msra.mxu0 %v1388
        %1984 = vmatpush.msra.mxu0 %v1387
        %1985 = vmatpush.msra.mxu0 %v1386
        %1986 = vmatmul.f32.gmra.mxu0 %v1002
        %v1987 = vpop.f32.mrf.mxu0
        %v1988 = vadd.f32 %v1863, %v1987
        %1989 = vmatmul.f32.gmra.mxu0 %v1011
        %v1990 = vpop.f32.mrf.mxu0
        %v1991 = vadd.f32 %v1866, %v1990
        %1992 = vmatmul.f32.gmra.mxu0 %v1020
        %v1993 = vpop.f32.mrf.mxu0
        %v1994 = vadd.f32 %v1869, %v1993
        %1995 = vmatmul.f32.gmra.mxu0 %v1029
        %v1996 = vpop.f32.mrf.mxu0
        %v1997 = vadd.f32 %v1872, %v1996
        %1998 = vmatmul.f32.gmra.mxu0 %v1038
        %v1999 = vpop.f32.mrf.mxu0
        %v2000 = vadd.f32 %v1875, %v1999
        %2001 = vmatmul.f32.gmra.mxu0 %v1047
        %v2002 = vpop.f32.mrf.mxu0
        %v2003 = vadd.f32 %v1878, %v2002
        %2004 = vmatmul.f32.gmra.mxu0 %v1056
        %v2005 = vpop.f32.mrf.mxu0
        %v2006 = vadd.f32 %v1881, %v2005
        %2007 = vmatmul.f32.gmra.mxu0 %v1065
        %v2008 = vpop.f32.mrf.mxu0
        %v2009 = vadd.f32 %v1884, %v2008
        %2010 = vmatmul.f32.gmra.mxu0 %v1074
        %v2011 = vpop.f32.mrf.mxu0
        %v2012 = vadd.f32 %v1887, %v2011
        %2013 = vmatmul.f32.gmra.mxu0 %v1083
        %v2014 = vpop.f32.mrf.mxu0
        %v2015 = vadd.f32 %v1890, %v2014
        %2016 = vmatmul.f32.gmra.mxu0 %v1092
        %v2017 = vpop.f32.mrf.mxu0
        %v2018 = vadd.f32 %v1893, %v2017
        %2019 = vmatmul.f32.gmra.mxu0 %v1101
        %v2020 = vpop.f32.mrf.mxu0
        %v2021 = vadd.f32 %v1896, %v2020
        %2022 = vmatmul.f32.gmra.mxu0 %v1110
        %v2023 = vpop.f32.mrf.mxu0
        %v2024 = vadd.f32 %v1899, %v2023
        %2025 = vmatmul.f32.gmra.mxu0 %v1119
        %v2026 = vpop.f32.mrf.mxu0
        %v2027 = vadd.f32 %v1902, %v2026
        %2028 = vmatmul.f32.gmra.mxu0 %v1128
        %v2029 = vpop.f32.mrf.mxu0
        %v2030 = vadd.f32 %v1905, %v2029
        %2031 = vmatmul.f32.gmra.mxu0 %v1137
        %v2032 = vpop.f32.mrf.mxu0
        %v2033 = vadd.f32 %v1908, %v2032
        %2034 = vmatmul.f32.gmra.mxu0 %v1146
        %v2035 = vpop.f32.mrf.mxu0
        %v2036 = vadd.f32 %v1911, %v2035
        %2037 = vmatmul.f32.gmra.mxu0 %v1155
        %v2038 = vpop.f32.mrf.mxu0
        %v2039 = vadd.f32 %v1914, %v2038
        %2040 = vmatmul.f32.gmra.mxu0 %v1164
        %v2041 = vpop.f32.mrf.mxu0
        %v2042 = vadd.f32 %v1917, %v2041
        %2043 = vmatmul.f32.gmra.mxu0 %v1173
        %v2044 = vpop.f32.mrf.mxu0
        %v2045 = vadd.f32 %v1920, %v2044
        %2046 = vmatmul.f32.gmra.mxu0 %v1182
        %v2047 = vpop.f32.mrf.mxu0
        %v2048 = vadd.f32 %v1923, %v2047
        %2049 = vmatmul.f32.gmra.mxu0 %v1191
        %v2050 = vpop.f32.mrf.mxu0
        %v2051 = vadd.f32 %v1926, %v2050
        %2052 = vmatmul.f32.gmra.mxu0 %v1200
        %v2053 = vpop.f32.mrf.mxu0
        %v2054 = vadd.f32 %v1929, %v2053
        %2055 = vmatmul.f32.gmra.mxu0 %v1209
        %v2056 = vpop.f32.mrf.mxu0
        %v2057 = vadd.f32 %v1932, %v2056
        %2058 = vmatmul.f32.gmra.mxu0 %v1218
        %v2059 = vpop.f32.mrf.mxu0
        %v2060 = vadd.f32 %v1935, %v2059
        %2061 = vmatmul.f32.gmra.mxu0 %v1227
        %v2062 = vpop.f32.mrf.mxu0
        %v2063 = vadd.f32 %v1938, %v2062
        %2064 = vmatmul.f32.gmra.mxu0 %v1236
        %v2065 = vpop.f32.mrf.mxu0
        %v2066 = vadd.f32 %v1941, %v2065
        %2067 = vmatmul.f32.gmra.mxu0 %v1245
        %v2068 = vpop.f32.mrf.mxu0
        %v2069 = vadd.f32 %v1944, %v2068
        %2070 = vmatmul.f32.gmra.mxu0 %v1254
        %v2071 = vpop.f32.mrf.mxu0
        %v2072 = vadd.f32 %v1947, %v2071
        %2073 = vmatmul.f32.gmra.mxu0 %v1263
        %v2074 = vpop.f32.mrf.mxu0
        %v2075 = vadd.f32 %v1950, %v2074
        %2076 = vmatmul.f32.gmra.mxu0 %v1272
        %v2077 = vpop.f32.mrf.mxu0
        %v2078 = vadd.f32 %v1953, %v2077
        %2079 = vmatmul.f32.gmra.mxu0 %v1281
        %v2080 = vpop.f32.mrf.mxu0
        %v2081 = vadd.f32 %v1956, %v2080
        %2082 = vmatmul.f32.gmra.mxu0 %v1290
        %v2083 = vpop.f32.mrf.mxu0
        %v2084 = vadd.f32 %v1959, %v2083
        %2085 = vmatmul.f32.gmra.mxu0 %v1299
        %v2086 = vpop.f32.mrf.mxu0
        %v2087 = vadd.f32 %v1962, %v2086
        %2088 = vmatmul.f32.gmra.mxu0 %v1308
        %v2089 = vpop.f32.mrf.mxu0
        %v2090 = vadd.f32 %v1965, %v2089
        %2091 = vmatmul.f32.gmra.mxu0 %v1317
        %v2092 = vpop.f32.mrf.mxu0
        %v2093 = vadd.f32 %v1968, %v2092
        %2094 = vdwg.mxu0
        %2095 = vmatpush.msra.mxu0 %v1417
        %2096 = vmatpush.msra.mxu0 %v1416
        %2097 = vmatpush.msra.mxu0 %v1415
        %2098 = vmatpush.msra.mxu0 %v1414
        %2099 = vmatpush.msra.mxu0 %v1413
        %2100 = vmatpush.msra.mxu0 %v1412
        %2101 = vmatpush.msra.mxu0 %v1411
        %2102 = vmatpush.msra.mxu0 %v1410
        %2103 = vmatpush.msra.mxu0 %v1409
        %2104 = vmatpush.msra.mxu0 %v1408
        %2105 = vmatpush.msra.mxu0 %v1407
        %2106 = vmatpush.msra.mxu0 %v1406
        %2107 = vmatpush.msra.mxu0 %v1405
        %2108 = vmatpush.msra.mxu0 %v1404
        %2109 = vmatpush.msra.mxu0 %v1403
        %2110 = vmatpush.msra.mxu0 %v1402
        %2111 = vmatmul.f32.gmra.mxu0 %v1003
        %v2112 = vpop.f32.mrf.mxu0
        %v2113 = vadd.f32 %v1988, %v2112
        %2114 = vmatmul.f32.gmra.mxu0 %v1012
        %v2115 = vpop.f32.mrf.mxu0
        %v2116 = vadd.f32 %v1991, %v2115
        %2117 = vmatmul.f32.gmra.mxu0 %v1021
        %v2118 = vpop.f32.mrf.mxu0
        %v2119 = vadd.f32 %v1994, %v2118
        %2120 = vmatmul.f32.gmra.mxu0 %v1030
        %v2121 = vpop.f32.mrf.mxu0
        %v2122 = vadd.f32 %v1997, %v2121
        %2123 = vmatmul.f32.gmra.mxu0 %v1039
        %v2124 = vpop.f32.mrf.mxu0
        %v2125 = vadd.f32 %v2000, %v2124
        %2126 = vmatmul.f32.gmra.mxu0 %v1048
        %v2127 = vpop.f32.mrf.mxu0
        %v2128 = vadd.f32 %v2003, %v2127
        %2129 = vmatmul.f32.gmra.mxu0 %v1057
        %v2130 = vpop.f32.mrf.mxu0
        %v2131 = vadd.f32 %v2006, %v2130
        %2132 = vmatmul.f32.gmra.mxu0 %v1066
        %v2133 = vpop.f32.mrf.mxu0
        %v2134 = vadd.f32 %v2009, %v2133
        %2135 = vmatmul.f32.gmra.mxu0 %v1075
        %v2136 = vpop.f32.mrf.mxu0
        %v2137 = vadd.f32 %v2012, %v2136
        %2138 = vmatmul.f32.gmra.mxu0 %v1084
        %v2139 = vpop.f32.mrf.mxu0
        %v2140 = vadd.f32 %v2015, %v2139
        %2141 = vmatmul.f32.gmra.mxu0 %v1093
        %v2142 = vpop.f32.mrf.mxu0
        %v2143 = vadd.f32 %v2018, %v2142
        %2144 = vmatmul.f32.gmra.mxu0 %v1102
        %v2145 = vpop.f32.mrf.mxu0
        %v2146 = vadd.f32 %v2021, %v2145
        %2147 = vmatmul.f32.gmra.mxu0 %v1111
        %v2148 = vpop.f32.mrf.mxu0
        %v2149 = vadd.f32 %v2024, %v2148
        %2150 = vmatmul.f32.gmra.mxu0 %v1120
        %v2151 = vpop.f32.mrf.mxu0
        %v2152 = vadd.f32 %v2027, %v2151
        %2153 = vmatmul.f32.gmra.mxu0 %v1129
        %v2154 = vpop.f32.mrf.mxu0
        %v2155 = vadd.f32 %v2030, %v2154
        %2156 = vmatmul.f32.gmra.mxu0 %v1138
        %v2157 = vpop.f32.mrf.mxu0
        %v2158 = vadd.f32 %v2033, %v2157
        %2159 = vmatmul.f32.gmra.mxu0 %v1147
        %v2160 = vpop.f32.mrf.mxu0
        %v2161 = vadd.f32 %v2036, %v2160
        %2162 = vmatmul.f32.gmra.mxu0 %v1156
        %v2163 = vpop.f32.mrf.mxu0
        %v2164 = vadd.f32 %v2039, %v2163
        %2165 = vmatmul.f32.gmra.mxu0 %v1165
        %v2166 = vpop.f32.mrf.mxu0
        %v2167 = vadd.f32 %v2042, %v2166
        %2168 = vmatmul.f32.gmra.mxu0 %v1174
        %v2169 = vpop.f32.mrf.mxu0
        %v2170 = vadd.f32 %v2045, %v2169
        %2171 = vmatmul.f32.gmra.mxu0 %v1183
        %v2172 = vpop.f32.mrf.mxu0
        %v2173 = vadd.f32 %v2048, %v2172
        %2174 = vmatmul.f32.gmra.mxu0 %v1192
        %v2175 = vpop.f32.mrf.mxu0
        %v2176 = vadd.f32 %v2051, %v2175
        %2177 = vmatmul.f32.gmra.mxu0 %v1201
        %v2178 = vpop.f32.mrf.mxu0
        %v2179 = vadd.f32 %v2054, %v2178
        %2180 = vmatmul.f32.gmra.mxu0 %v1210
        %v2181 = vpop.f32.mrf.mxu0
        %v2182 = vadd.f32 %v2057, %v2181
        %2183 = vmatmul.f32.gmra.mxu0 %v1219
        %v2184 = vpop.f32.mrf.mxu0
        %v2185 = vadd.f32 %v2060, %v2184
        %2186 = vmatmul.f32.gmra.mxu0 %v1228
        %v2187 = vpop.f32.mrf.mxu0
        %v2188 = vadd.f32 %v2063, %v2187
        %2189 = vmatmul.f32.gmra.mxu0 %v1237
        %v2190 = vpop.f32.mrf.mxu0
        %v2191 = vadd.f32 %v2066, %v2190
        %2192 = vmatmul.f32.gmra.mxu0 %v1246
        %v2193 = vpop.f32.mrf.mxu0
        %v2194 = vadd.f32 %v2069, %v2193
        %2195 = vmatmul.f32.gmra.mxu0 %v1255
        %v2196 = vpop.f32.mrf.mxu0
        %v2197 = vadd.f32 %v2072, %v2196
        %2198 = vmatmul.f32.gmra.mxu0 %v1264
        %v2199 = vpop.f32.mrf.mxu0
        %v2200 = vadd.f32 %v2075, %v2199
        %2201 = vmatmul.f32.gmra.mxu0 %v1273
        %v2202 = vpop.f32.mrf.mxu0
        %v2203 = vadd.f32 %v2078, %v2202
        %2204 = vmatmul.f32.gmra.mxu0 %v1282
        %v2205 = vpop.f32.mrf.mxu0
        %v2206 = vadd.f32 %v2081, %v2205
        %2207 = vmatmul.f32.gmra.mxu0 %v1291
        %v2208 = vpop.f32.mrf.mxu0
        %v2209 = vadd.f32 %v2084, %v2208
        %2210 = vmatmul.f32.gmra.mxu0 %v1300
        %v2211 = vpop.f32.mrf.mxu0
        %v2212 = vadd.f32 %v2087, %v2211
        %2213 = vmatmul.f32.gmra.mxu0 %v1309
        %v2214 = vpop.f32.mrf.mxu0
        %v2215 = vadd.f32 %v2090, %v2214
        %2216 = vmatmul.f32.gmra.mxu0 %v1318
        %v2217 = vpop.f32.mrf.mxu0
        %v2218 = vadd.f32 %v2093, %v2217
        %2219 = vdwg.mxu0
        %2220 = vmatpush.msra.mxu0 %v1433
        %2221 = vmatpush.msra.mxu0 %v1432
        %2222 = vmatpush.msra.mxu0 %v1431
        %2223 = vmatpush.msra.mxu0 %v1430
        %2224 = vmatpush.msra.mxu0 %v1429
        %2225 = vmatpush.msra.mxu0 %v1428
        %2226 = vmatpush.msra.mxu0 %v1427
        %2227 = vmatpush.msra.mxu0 %v1426
        %2228 = vmatpush.msra.mxu0 %v1425
        %2229 = vmatpush.msra.mxu0 %v1424
        %2230 = vmatpush.msra.mxu0 %v1423
        %2231 = vmatpush.msra.mxu0 %v1422
        %2232 = vmatpush.msra.mxu0 %v1421
        %2233 = vmatpush.msra.mxu0 %v1420
        %2234 = vmatpush.msra.mxu0 %v1419
        %2235 = vmatpush.msra.mxu0 %v1418
        %2236 = vmatmul.f32.gmra.mxu0 %v1004
        %v2237 = vpop.f32.mrf.mxu0
        %v2238 = vadd.f32 %v2113, %v2237
        %2239 = vmatmul.f32.gmra.mxu0 %v1013
        %v2240 = vpop.f32.mrf.mxu0
        %v2241 = vadd.f32 %v2116, %v2240
        %2242 = vmatmul.f32.gmra.mxu0 %v1022
        %v2243 = vpop.f32.mrf.mxu0
        %v2244 = vadd.f32 %v2119, %v2243
        %2245 = vmatmul.f32.gmra.mxu0 %v1031
        %v2246 = vpop.f32.mrf.mxu0
        %v2247 = vadd.f32 %v2122, %v2246
        %2248 = vmatmul.f32.gmra.mxu0 %v1040
        %v2249 = vpop.f32.mrf.mxu0
        %v2250 = vadd.f32 %v2125, %v2249
        %2251 = vmatmul.f32.gmra.mxu0 %v1049
        %v2252 = vpop.f32.mrf.mxu0
        %v2253 = vadd.f32 %v2128, %v2252
        %2254 = vmatmul.f32.gmra.mxu0 %v1058
        %v2255 = vpop.f32.mrf.mxu0
        %v2256 = vadd.f32 %v2131, %v2255
        %2257 = vmatmul.f32.gmra.mxu0 %v1067
        %v2258 = vpop.f32.mrf.mxu0
        %v2259 = vadd.f32 %v2134, %v2258
        %2260 = vmatmul.f32.gmra.mxu0 %v1076
        %v2261 = vpop.f32.mrf.mxu0
        %v2262 = vadd.f32 %v2137, %v2261
        %2263 = vmatmul.f32.gmra.mxu0 %v1085
        %v2264 = vpop.f32.mrf.mxu0
        %v2265 = vadd.f32 %v2140, %v2264
        %2266 = vmatmul.f32.gmra.mxu0 %v1094
        %v2267 = vpop.f32.mrf.mxu0
        %v2268 = vadd.f32 %v2143, %v2267
        %2269 = vmatmul.f32.gmra.mxu0 %v1103
        %v2270 = vpop.f32.mrf.mxu0
        %v2271 = vadd.f32 %v2146, %v2270
        %2272 = vmatmul.f32.gmra.mxu0 %v1112
        %v2273 = vpop.f32.mrf.mxu0
        %v2274 = vadd.f32 %v2149, %v2273
        %2275 = vmatmul.f32.gmra.mxu0 %v1121
        %v2276 = vpop.f32.mrf.mxu0
        %v2277 = vadd.f32 %v2152, %v2276
        %2278 = vmatmul.f32.gmra.mxu0 %v1130
        %v2279 = vpop.f32.mrf.mxu0
        %v2280 = vadd.f32 %v2155, %v2279
        %2281 = vmatmul.f32.gmra.mxu0 %v1139
        %v2282 = vpop.f32.mrf.mxu0
        %v2283 = vadd.f32 %v2158, %v2282
        %2284 = vmatmul.f32.gmra.mxu0 %v1148
        %v2285 = vpop.f32.mrf.mxu0
        %v2286 = vadd.f32 %v2161, %v2285
        %2287 = vmatmul.f32.gmra.mxu0 %v1157
        %v2288 = vpop.f32.mrf.mxu0
        %v2289 = vadd.f32 %v2164, %v2288
        %2290 = vmatmul.f32.gmra.mxu0 %v1166
        %v2291 = vpop.f32.mrf.mxu0
        %v2292 = vadd.f32 %v2167, %v2291
        %2293 = vmatmul.f32.gmra.mxu0 %v1175
        %v2294 = vpop.f32.mrf.mxu0
        %v2295 = vadd.f32 %v2170, %v2294
        %2296 = vmatmul.f32.gmra.mxu0 %v1184
        %v2297 = vpop.f32.mrf.mxu0
        %v2298 = vadd.f32 %v2173, %v2297
        %2299 = vmatmul.f32.gmra.mxu0 %v1193
        %v2300 = vpop.f32.mrf.mxu0
        %v2301 = vadd.f32 %v2176, %v2300
        %2302 = vmatmul.f32.gmra.mxu0 %v1202
        %v2303 = vpop.f32.mrf.mxu0
        %v2304 = vadd.f32 %v2179, %v2303
        %2305 = vmatmul.f32.gmra.mxu0 %v1211
        %v2306 = vpop.f32.mrf.mxu0
        %v2307 = vadd.f32 %v2182, %v2306
        %2308 = vmatmul.f32.gmra.mxu0 %v1220
        %v2309 = vpop.f32.mrf.mxu0
        %v2310 = vadd.f32 %v2185, %v2309
        %2311 = vmatmul.f32.gmra.mxu0 %v1229
        %v2312 = vpop.f32.mrf.mxu0
        %v2313 = vadd.f32 %v2188, %v2312
        %2314 = vmatmul.f32.gmra.mxu0 %v1238
        %v2315 = vpop.f32.mrf.mxu0
        %v2316 = vadd.f32 %v2191, %v2315
        %2317 = vmatmul.f32.gmra.mxu0 %v1247
        %v2318 = vpop.f32.mrf.mxu0
        %v2319 = vadd.f32 %v2194, %v2318
        %2320 = vmatmul.f32.gmra.mxu0 %v1256
        %v2321 = vpop.f32.mrf.mxu0
        %v2322 = vadd.f32 %v2197, %v2321
        %2323 = vmatmul.f32.gmra.mxu0 %v1265
        %v2324 = vpop.f32.mrf.mxu0
        %v2325 = vadd.f32 %v2200, %v2324
        %2326 = vmatmul.f32.gmra.mxu0 %v1274
        %v2327 = vpop.f32.mrf.mxu0
        %v2328 = vadd.f32 %v2203, %v2327
        %2329 = vmatmul.f32.gmra.mxu0 %v1283
        %v2330 = vpop.f32.mrf.mxu0
        %v2331 = vadd.f32 %v2206, %v2330
        %2332 = vmatmul.f32.gmra.mxu0 %v1292
        %v2333 = vpop.f32.mrf.mxu0
        %v2334 = vadd.f32 %v2209, %v2333
        %2335 = vmatmul.f32.gmra.mxu0 %v1301
        %v2336 = vpop.f32.mrf.mxu0
        %v2337 = vadd.f32 %v2212, %v2336
        %2338 = vmatmul.f32.gmra.mxu0 %v1310
        %v2339 = vpop.f32.mrf.mxu0
        %v2340 = vadd.f32 %v2215, %v2339
        %2341 = vmatmul.f32.gmra.mxu0 %v1319
        %v2342 = vpop.f32.mrf.mxu0
        %v2343 = vadd.f32 %v2218, %v2342
        %2344 = vdwg.mxu0
        %2345 = vmatpush.msra.mxu0 %v1449
        %2346 = vmatpush.msra.mxu0 %v1448
        %2347 = vmatpush.msra.mxu0 %v1447
        %2348 = vmatpush.msra.mxu0 %v1446
        %2349 = vmatpush.msra.mxu0 %v1445
        %2350 = vmatpush.msra.mxu0 %v1444
        %2351 = vmatpush.msra.mxu0 %v1443
        %2352 = vmatpush.msra.mxu0 %v1442
        %2353 = vmatpush.msra.mxu0 %v1441
        %2354 = vmatpush.msra.mxu0 %v1440
        %2355 = vmatpush.msra.mxu0 %v1439
        %2356 = vmatpush.msra.mxu0 %v1438
        %2357 = vmatpush.msra.mxu0 %v1437
        %2358 = vmatpush.msra.mxu0 %v1436
        %2359 = vmatpush.msra.mxu0 %v1435
        %2360 = vmatpush.msra.mxu0 %v1434
        %2361 = vmatmul.f32.gmra.mxu0 %v1005
        %v2362 = vpop.f32.mrf.mxu0
        %v2363 = vadd.f32 %v2238, %v2362
        %2364 = vmatmul.f32.gmra.mxu0 %v1014
        %v2365 = vpop.f32.mrf.mxu0
        %v2366 = vadd.f32 %v2241, %v2365
        %2367 = vmatmul.f32.gmra.mxu0 %v1023
        %v2368 = vpop.f32.mrf.mxu0
        %v2369 = vadd.f32 %v2244, %v2368
        %2370 = vmatmul.f32.gmra.mxu0 %v1032
        %v2371 = vpop.f32.mrf.mxu0
        %v2372 = vadd.f32 %v2247, %v2371
        %2373 = vmatmul.f32.gmra.mxu0 %v1041
        %v2374 = vpop.f32.mrf.mxu0
        %v2375 = vadd.f32 %v2250, %v2374
        %2376 = vmatmul.f32.gmra.mxu0 %v1050
        %v2377 = vpop.f32.mrf.mxu0
        %v2378 = vadd.f32 %v2253, %v2377
        %2379 = vmatmul.f32.gmra.mxu0 %v1059
        %v2380 = vpop.f32.mrf.mxu0
        %v2381 = vadd.f32 %v2256, %v2380
        %2382 = vmatmul.f32.gmra.mxu0 %v1068
        %v2383 = vpop.f32.mrf.mxu0
        %v2384 = vadd.f32 %v2259, %v2383
        %2385 = vmatmul.f32.gmra.mxu0 %v1077
        %v2386 = vpop.f32.mrf.mxu0
        %v2387 = vadd.f32 %v2262, %v2386
        %2388 = vmatmul.f32.gmra.mxu0 %v1086
        %v2389 = vpop.f32.mrf.mxu0
        %v2390 = vadd.f32 %v2265, %v2389
        %2391 = vmatmul.f32.gmra.mxu0 %v1095
        %v2392 = vpop.f32.mrf.mxu0
        %v2393 = vadd.f32 %v2268, %v2392
        %2394 = vmatmul.f32.gmra.mxu0 %v1104
        %v2395 = vpop.f32.mrf.mxu0
        %v2396 = vadd.f32 %v2271, %v2395
        %2397 = vmatmul.f32.gmra.mxu0 %v1113
        %v2398 = vpop.f32.mrf.mxu0
        %v2399 = vadd.f32 %v2274, %v2398
        %2400 = vmatmul.f32.gmra.mxu0 %v1122
        %v2401 = vpop.f32.mrf.mxu0
        %v2402 = vadd.f32 %v2277, %v2401
        %2403 = vmatmul.f32.gmra.mxu0 %v1131
        %v2404 = vpop.f32.mrf.mxu0
        %v2405 = vadd.f32 %v2280, %v2404
        %2406 = vmatmul.f32.gmra.mxu0 %v1140
        %v2407 = vpop.f32.mrf.mxu0
        %v2408 = vadd.f32 %v2283, %v2407
        %2409 = vmatmul.f32.gmra.mxu0 %v1149
        %v2410 = vpop.f32.mrf.mxu0
        %v2411 = vadd.f32 %v2286, %v2410
        %2412 = vmatmul.f32.gmra.mxu0 %v1158
        %v2413 = vpop.f32.mrf.mxu0
        %v2414 = vadd.f32 %v2289, %v2413
        %2415 = vmatmul.f32.gmra.mxu0 %v1167
        %v2416 = vpop.f32.mrf.mxu0
        %v2417 = vadd.f32 %v2292, %v2416
        %2418 = vmatmul.f32.gmra.mxu0 %v1176
        %v2419 = vpop.f32.mrf.mxu0
        %v2420 = vadd.f32 %v2295, %v2419
        %2421 = vmatmul.f32.gmra.mxu0 %v1185
        %v2422 = vpop.f32.mrf.mxu0
        %v2423 = vadd.f32 %v2298, %v2422
        %2424 = vmatmul.f32.gmra.mxu0 %v1194
        %v2425 = vpop.f32.mrf.mxu0
        %v2426 = vadd.f32 %v2301, %v2425
        %2427 = vmatmul.f32.gmra.mxu0 %v1203
        %v2428 = vpop.f32.mrf.mxu0
        %v2429 = vadd.f32 %v2304, %v2428
        %2430 = vmatmul.f32.gmra.mxu0 %v1212
        %v2431 = vpop.f32.mrf.mxu0
        %v2432 = vadd.f32 %v2307, %v2431
        %2433 = vmatmul.f32.gmra.mxu0 %v1221
        %v2434 = vpop.f32.mrf.mxu0
        %v2435 = vadd.f32 %v2310, %v2434
        %2436 = vmatmul.f32.gmra.mxu0 %v1230
        %v2437 = vpop.f32.mrf.mxu0
        %v2438 = vadd.f32 %v2313, %v2437
        %2439 = vmatmul.f32.gmra.mxu0 %v1239
        %v2440 = vpop.f32.mrf.mxu0
        %v2441 = vadd.f32 %v2316, %v2440
        %2442 = vmatmul.f32.gmra.mxu0 %v1248
        %v2443 = vpop.f32.mrf.mxu0
        %v2444 = vadd.f32 %v2319, %v2443
        %2445 = vmatmul.f32.gmra.mxu0 %v1257
        %v2446 = vpop.f32.mrf.mxu0
        %v2447 = vadd.f32 %v2322, %v2446
        %2448 = vmatmul.f32.gmra.mxu0 %v1266
        %v2449 = vpop.f32.mrf.mxu0
        %v2450 = vadd.f32 %v2325, %v2449
        %2451 = vmatmul.f32.gmra.mxu0 %v1275
        %v2452 = vpop.f32.mrf.mxu0
        %v2453 = vadd.f32 %v2328, %v2452
        %2454 = vmatmul.f32.gmra.mxu0 %v1284
        %v2455 = vpop.f32.mrf.mxu0
        %v2456 = vadd.f32 %v2331, %v2455
        %2457 = vmatmul.f32.gmra.mxu0 %v1293
        %v2458 = vpop.f32.mrf.mxu0
        %v2459 = vadd.f32 %v2334, %v2458
        %2460 = vmatmul.f32.gmra.mxu0 %v1302
        %v2461 = vpop.f32.mrf.mxu0
        %v2462 = vadd.f32 %v2337, %v2461
        %2463 = vmatmul.f32.gmra.mxu0 %v1311
        %v2464 = vpop.f32.mrf.mxu0
        %v2465 = vadd.f32 %v2340, %v2464
        %2466 = vmatmul.f32.gmra.mxu0 %v1320
        %v2467 = vpop.f32.mrf.mxu0
        %v2468 = vadd.f32 %v2343, %v2467
        %2469 = vdwg.mxu0
        %2470 = vmatpush.msra.mxu0 %v1465
        %2471 = vmatpush.msra.mxu0 %v1464
        %2472 = vmatpush.msra.mxu0 %v1463
        %2473 = vmatpush.msra.mxu0 %v1462
        %2474 = vmatpush.msra.mxu0 %v1461
        %2475 = vmatpush.msra.mxu0 %v1460
        %2476 = vmatpush.msra.mxu0 %v1459
        %2477 = vmatpush.msra.mxu0 %v1458
        %2478 = vmatpush.msra.mxu0 %v1457
        %2479 = vmatpush.msra.mxu0 %v1456
        %2480 = vmatpush.msra.mxu0 %v1455
        %2481 = vmatpush.msra.mxu0 %v1454
        %2482 = vmatpush.msra.mxu0 %v1453
        %2483 = vmatpush.msra.mxu0 %v1452
        %2484 = vmatpush.msra.mxu0 %v1451
        %2485 = vmatpush.msra.mxu0 %v1450
        %2486 = vmatmul.f32.gmra.mxu0 %v1006
        %v2487 = vpop.f32.mrf.mxu0
        %v2488 = vadd.f32 %v2363, %v2487
        %2489 = vmatmul.f32.gmra.mxu0 %v1015
        %v2490 = vpop.f32.mrf.mxu0
        %v2491 = vadd.f32 %v2366, %v2490
        %2492 = vmatmul.f32.gmra.mxu0 %v1024
        %v2493 = vpop.f32.mrf.mxu0
        %v2494 = vadd.f32 %v2369, %v2493
        %2495 = vmatmul.f32.gmra.mxu0 %v1033
        %v2496 = vpop.f32.mrf.mxu0
        %v2497 = vadd.f32 %v2372, %v2496
        %2498 = vmatmul.f32.gmra.mxu0 %v1042
        %v2499 = vpop.f32.mrf.mxu0
        %v2500 = vadd.f32 %v2375, %v2499
        %2501 = vmatmul.f32.gmra.mxu0 %v1051
        %v2502 = vpop.f32.mrf.mxu0
        %v2503 = vadd.f32 %v2378, %v2502
        %2504 = vmatmul.f32.gmra.mxu0 %v1060
        %v2505 = vpop.f32.mrf.mxu0
        %v2506 = vadd.f32 %v2381, %v2505
        %2507 = vmatmul.f32.gmra.mxu0 %v1069
        %v2508 = vpop.f32.mrf.mxu0
        %v2509 = vadd.f32 %v2384, %v2508
        %2510 = vmatmul.f32.gmra.mxu0 %v1078
        %v2511 = vpop.f32.mrf.mxu0
        %v2512 = vadd.f32 %v2387, %v2511
        %2513 = vmatmul.f32.gmra.mxu0 %v1087
        %v2514 = vpop.f32.mrf.mxu0
        %v2515 = vadd.f32 %v2390, %v2514
        %2516 = vmatmul.f32.gmra.mxu0 %v1096
        %v2517 = vpop.f32.mrf.mxu0
        %v2518 = vadd.f32 %v2393, %v2517
        %2519 = vmatmul.f32.gmra.mxu0 %v1105
        %v2520 = vpop.f32.mrf.mxu0
        %v2521 = vadd.f32 %v2396, %v2520
        %2522 = vmatmul.f32.gmra.mxu0 %v1114
        %v2523 = vpop.f32.mrf.mxu0
        %v2524 = vadd.f32 %v2399, %v2523
        %2525 = vmatmul.f32.gmra.mxu0 %v1123
        %v2526 = vpop.f32.mrf.mxu0
        %v2527 = vadd.f32 %v2402, %v2526
        %2528 = vmatmul.f32.gmra.mxu0 %v1132
        %v2529 = vpop.f32.mrf.mxu0
        %v2530 = vadd.f32 %v2405, %v2529
        %2531 = vmatmul.f32.gmra.mxu0 %v1141
        %v2532 = vpop.f32.mrf.mxu0
        %v2533 = vadd.f32 %v2408, %v2532
        %2534 = vmatmul.f32.gmra.mxu0 %v1150
        %v2535 = vpop.f32.mrf.mxu0
        %v2536 = vadd.f32 %v2411, %v2535
        %2537 = vmatmul.f32.gmra.mxu0 %v1159
        %v2538 = vpop.f32.mrf.mxu0
        %v2539 = vadd.f32 %v2414, %v2538
        %2540 = vmatmul.f32.gmra.mxu0 %v1168
        %v2541 = vpop.f32.mrf.mxu0
        %v2542 = vadd.f32 %v2417, %v2541
        %2543 = vmatmul.f32.gmra.mxu0 %v1177
        %v2544 = vpop.f32.mrf.mxu0
        %v2545 = vadd.f32 %v2420, %v2544
        %2546 = vmatmul.f32.gmra.mxu0 %v1186
        %v2547 = vpop.f32.mrf.mxu0
        %v2548 = vadd.f32 %v2423, %v2547
        %2549 = vmatmul.f32.gmra.mxu0 %v1195
        %v2550 = vpop.f32.mrf.mxu0
        %v2551 = vadd.f32 %v2426, %v2550
        %2552 = vmatmul.f32.gmra.mxu0 %v1204
        %v2553 = vpop.f32.mrf.mxu0
        %v2554 = vadd.f32 %v2429, %v2553
        %2555 = vmatmul.f32.gmra.mxu0 %v1213
        %v2556 = vpop.f32.mrf.mxu0
        %v2557 = vadd.f32 %v2432, %v2556
        %2558 = vmatmul.f32.gmra.mxu0 %v1222
        %v2559 = vpop.f32.mrf.mxu0
        %v2560 = vadd.f32 %v2435, %v2559
        %2561 = vmatmul.f32.gmra.mxu0 %v1231
        %v2562 = vpop.f32.mrf.mxu0
        %v2563 = vadd.f32 %v2438, %v2562
        %2564 = vmatmul.f32.gmra.mxu0 %v1240
        %v2565 = vpop.f32.mrf.mxu0
        %v2566 = vadd.f32 %v2441, %v2565
        %2567 = vmatmul.f32.gmra.mxu0 %v1249
        %v2568 = vpop.f32.mrf.mxu0
        %v2569 = vadd.f32 %v2444, %v2568
        %2570 = vmatmul.f32.gmra.mxu0 %v1258
        %v2571 = vpop.f32.mrf.mxu0
        %v2572 = vadd.f32 %v2447, %v2571
        %2573 = vmatmul.f32.gmra.mxu0 %v1267
        %v2574 = vpop.f32.mrf.mxu0
        %v2575 = vadd.f32 %v2450, %v2574
        %2576 = vmatmul.f32.gmra.mxu0 %v1276
        %v2577 = vpop.f32.mrf.mxu0
        %v2578 = vadd.f32 %v2453, %v2577
        %2579 = vmatmul.f32.gmra.mxu0 %v1285
        %v2580 = vpop.f32.mrf.mxu0
        %v2581 = vadd.f32 %v2456, %v2580
        %2582 = vmatmul.f32.gmra.mxu0 %v1294
        %v2583 = vpop.f32.mrf.mxu0
        %v2584 = vadd.f32 %v2459, %v2583
        %2585 = vmatmul.f32.gmra.mxu0 %v1303
        %v2586 = vpop.f32.mrf.mxu0
        %v2587 = vadd.f32 %v2462, %v2586
        %2588 = vmatmul.f32.gmra.mxu0 %v1312
        %v2589 = vpop.f32.mrf.mxu0
        %v2590 = vadd.f32 %v2465, %v2589
        %2591 = vmatmul.f32.gmra.mxu0 %v1321
        %v2592 = vpop.f32.mrf.mxu0
        %v2593 = vadd.f32 %v2468, %v2592
        %2594 = vdwg.mxu0
        %v2595 = vmax.f32 %v2488, 0.0
        %v2596 = vmax.f32 %v2491, 0.0
        %v2597 = vmax.f32 %v2494, 0.0
        %v2598 = vmax.f32 %v2497, 0.0
        %v2599 = vmax.f32 %v2500, 0.0
        %v2600 = vmax.f32 %v2503, 0.0
        %v2601 = vmax.f32 %v2506, 0.0
        %v2602 = vmax.f32 %v2509, 0.0
        %v2603 = vmax.f32 %v2512, 0.0
        %v2604 = vmax.f32 %v2515, 0.0
        %v2605 = vmax.f32 %v2518, 0.0
        %v2606 = vmax.f32 %v2521, 0.0
        %v2607 = vmax.f32 %v2524, 0.0
        %v2608 = vmax.f32 %v2527, 0.0
        %v2609 = vmax.f32 %v2530, 0.0
        %v2610 = vmax.f32 %v2533, 0.0
        %v2611 = vmax.f32 %v2536, 0.0
        %v2612 = vmax.f32 %v2539, 0.0
        %v2613 = vmax.f32 %v2542, 0.0
        %v2614 = vmax.f32 %v2545, 0.0
        %v2615 = vmax.f32 %v2548, 0.0
        %v2616 = vmax.f32 %v2551, 0.0
        %v2617 = vmax.f32 %v2554, 0.0
        %v2618 = vmax.f32 %v2557, 0.0
        %v2619 = vmax.f32 %v2560, 0.0
        %v2620 = vmax.f32 %v2563, 0.0
        %v2621 = vmax.f32 %v2566, 0.0
        %v2622 = vmax.f32 %v2569, 0.0
        %v2623 = vmax.f32 %v2572, 0.0
        %v2624 = vmax.f32 %v2575, 0.0
        %v2625 = vmax.f32 %v2578, 0.0
        %v2626 = vmax.f32 %v2581, 0.0
        %v2627 = vmax.f32 %v2584, 0.0
        %v2628 = vmax.f32 %v2587, 0.0
        %v2629 = vmax.f32 %v2590, 0.0
        %v2630 = vmax.f32 %v2593, 0.0
        %v2631 = vld [vmem:[%s5] sm:$0xff]
        %v2632 = vld [vmem:[%s5 + $0x8] sm:$0xff]
        %v2633 = vld [vmem:[%s5 + $0x10] sm:$0xff]
        %v2634 = vld [vmem:[%s5 + $0x18] sm:$0xff]
        %v2635 = vld [vmem:[%s5 + $0x20] sm:$0xff]
        %v2636 = vld [vmem:[%s5 + $0x28] sm:$0xff]
        %v2637 = vld [vmem:[%s5 + $0x30] sm:$0xff]
        %v2638 = vld [vmem:[%s5 + $0x38] sm:$0xff]
        %v2639 = vld [vmem:[%s5 + $0x40] sm:$0xff]
        %v2640 = vld [vmem:[%s5 + $0x48] sm:$0xff]
        %v2641 = vld [vmem:[%s5 + $0x50] sm:$0xff]
        %v2642 = vld [vmem:[%s5 + $0x58] sm:$0xff]
        %v2643 = vld [vmem:[%s5 + $0x60] sm:$0xff]
        %v2644 = vld [vmem:[%s5 + $0x68] sm:$0xff]
        %v2645 = vld [vmem:[%s5 + $0x70] sm:$0xff]
        %v2646 = vld [vmem:[%s5 + $0x78] sm:$0xff]
        %v2647 = vld [vmem:[%s5 + $0x80] sm:$0xff]
        %v2648 = vld [vmem:[%s5 + $0x88] sm:$0xff]
        %v2649 = vld [vmem:[%s5 + $0x90] sm:$0xff]
        %v2650 = vld [vmem:[%s5 + $0x98] sm:$0xff]
        %v2651 = vld [vmem:[%s5 + $0xa0] sm:$0xff]
        %v2652 = vld [vmem:[%s5 + $0xa8] sm:$0xff]
        %v2653 = vld [vmem:[%s5 + $0xb0] sm:$0xff]
        %v2654 = vld [vmem:[%s5 + $0xb8] sm:$0xff]
        %v2655 = vld [vmem:[%s5 + $0xc0] sm:$0xff]
        %v2656 = vld [vmem:[%s5 + $0xc8] sm:$0xff]
        %v2657 = vld [vmem:[%s5 + $0xd0] sm:$0xff]
        %v2658 = vld [vmem:[%s5 + $0xd8] sm:$0xff]
        %v2659 = vld [vmem:[%s5 + $0xe0] sm:$0xff]
        %v2660 = vld [vmem:[%s5 + $0xe8] sm:$0xff]
        %v2661 = vld [vmem:[%s5 + $0xf0] sm:$0xff]
        %v2662 = vld [vmem:[%s5 + $0xf8] sm:$0xff]
        %v2663 = vld [vmem:[%s5 + $0x100] sm:$0xff]
        %v2664 = vld [vmem:[%s5 + $0x108] sm:$0xff]
        %v2665 = vld [vmem:[%s5 + $0x110] sm:$0xff]
        %v2666 = vld [vmem:[%s5 + $0x118] sm:$0xff]
        %2668 = vset.pattern.permute.xlu0 0
        %2669 = vperm.xlu0 %2668, %v2631
        %v2670 = vpop.permute.xlu0 %2669
        %2673 = vset.pattern.permute.xlu0 0
        %2674 = vperm.xlu0 %2673, %v2632
        %v2675 = vpop.permute.xlu0 %2674
        %2678 = vset.pattern.permute.xlu0 0
        %2679 = vperm.xlu0 %2678, %v2633
        %v2680 = vpop.permute.xlu0 %2679
        %2683 = vset.pattern.permute.xlu0 0
        %2684 = vperm.xlu0 %2683, %v2634
        %v2685 = vpop.permute.xlu0 %2684
        %2688 = vset.pattern.permute.xlu0 0
        %2689 = vperm.xlu0 %2688, %v2635
        %v2690 = vpop.permute.xlu0 %2689
        %2693 = vset.pattern.permute.xlu0 0
        %2694 = vperm.xlu0 %2693, %v2636
        %v2695 = vpop.permute.xlu0 %2694
        %2698 = vset.pattern.permute.xlu0 0
        %2699 = vperm.xlu0 %2698, %v2637
        %v2700 = vpop.permute.xlu0 %2699
        %2703 = vset.pattern.permute.xlu0 0
        %2704 = vperm.xlu0 %2703, %v2638
        %v2705 = vpop.permute.xlu0 %2704
        %2708 = vset.pattern.permute.xlu0 0
        %2709 = vperm.xlu0 %2708, %v2639
        %v2710 = vpop.permute.xlu0 %2709
        %2713 = vset.pattern.permute.xlu0 0
        %2714 = vperm.xlu0 %2713, %v2640
        %v2715 = vpop.permute.xlu0 %2714
        %2718 = vset.pattern.permute.xlu0 0
        %2719 = vperm.xlu0 %2718, %v2641
        %v2720 = vpop.permute.xlu0 %2719
        %2723 = vset.pattern.permute.xlu0 0
        %2724 = vperm.xlu0 %2723, %v2642
        %v2725 = vpop.permute.xlu0 %2724
        %2728 = vset.pattern.permute.xlu0 0
        %2729 = vperm.xlu0 %2728, %v2643
        %v2730 = vpop.permute.xlu0 %2729
        %2733 = vset.pattern.permute.xlu0 0
        %2734 = vperm.xlu0 %2733, %v2644
        %v2735 = vpop.permute.xlu0 %2734
        %2738 = vset.pattern.permute.xlu0 0
        %2739 = vperm.xlu0 %2738, %v2645
        %v2740 = vpop.permute.xlu0 %2739
        %2743 = vset.pattern.permute.xlu0 0
        %2744 = vperm.xlu0 %2743, %v2646
        %v2745 = vpop.permute.xlu0 %2744
        %2748 = vset.pattern.permute.xlu0 0
        %2749 = vperm.xlu0 %2748, %v2647
        %v2750 = vpop.permute.xlu0 %2749
        %2753 = vset.pattern.permute.xlu0 0
        %2754 = vperm.xlu0 %2753, %v2648
        %v2755 = vpop.permute.xlu0 %2754
        %2758 = vset.pattern.permute.xlu0 0
        %2759 = vperm.xlu0 %2758, %v2649
        %v2760 = vpop.permute.xlu0 %2759
        %2763 = vset.pattern.permute.xlu0 0
        %2764 = vperm.xlu0 %2763, %v2650
        %v2765 = vpop.permute.xlu0 %2764
        %2768 = vset.pattern.permute.xlu0 0
        %2769 = vperm.xlu0 %2768, %v2651
        %v2770 = vpop.permute.xlu0 %2769
        %2773 = vset.pattern.permute.xlu0 0
        %2774 = vperm.xlu0 %2773, %v2652
        %v2775 = vpop.permute.xlu0 %2774
        %2778 = vset.pattern.permute.xlu0 0
        %2779 = vperm.xlu0 %2778, %v2653
        %v2780 = vpop.permute.xlu0 %2779
        %2783 = vset.pattern.permute.xlu0 0
        %2784 = vperm.xlu0 %2783, %v2654
        %v2785 = vpop.permute.xlu0 %2784
        %2788 = vset.pattern.permute.xlu0 0
        %2789 = vperm.xlu0 %2788, %v2655
        %v2790 = vpop.permute.xlu0 %2789
        %2793 = vset.pattern.permute.xlu0 0
        %2794 = vperm.xlu0 %2793, %v2656
        %v2795 = vpop.permute.xlu0 %2794
        %2798 = vset.pattern.permute.xlu0 0
        %2799 = vperm.xlu0 %2798, %v2657
        %v2800 = vpop.permute.xlu0 %2799
        %2803 = vset.pattern.permute.xlu0 0
        %2804 = vperm.xlu0 %2803, %v2658
        %v2805 = vpop.permute.xlu0 %2804
        %2808 = vset.pattern.permute.xlu0 0
        %2809 = vperm.xlu0 %2808, %v2659
        %v2810 = vpop.permute.xlu0 %2809
        %2813 = vset.pattern.permute.xlu0 0
        %2814 = vperm.xlu0 %2813, %v2660
        %v2815 = vpop.permute.xlu0 %2814
        %2818 = vset.pattern.permute.xlu0 0
        %2819 = vperm.xlu0 %2818, %v2661
        %v2820 = vpop.permute.xlu0 %2819
        %2823 = vset.pattern.permute.xlu0 0
        %2824 = vperm.xlu0 %2823, %v2662
        %v2825 = vpop.permute.xlu0 %2824
        %2828 = vset.pattern.permute.xlu0 0
        %2829 = vperm.xlu0 %2828, %v2663
        %v2830 = vpop.permute.xlu0 %2829
        %2833 = vset.pattern.permute.xlu0 0
        %2834 = vperm.xlu0 %2833, %v2664
        %v2835 = vpop.permute.xlu0 %2834
        %2838 = vset.pattern.permute.xlu0 0
        %2839 = vperm.xlu0 %2838, %v2665
        %v2840 = vpop.permute.xlu0 %2839
        %2843 = vset.pattern.permute.xlu0 0
        %2844 = vperm.xlu0 %2843, %v2666
        %v2845 = vpop.permute.xlu0 %2844
        %v2847 = vmul.f32 %v2595, %v2670
        %v2848 = vmul.f32 %v2596, %v2675
        %v2849 = vmul.f32 %v2597, %v2680
        %v2850 = vmul.f32 %v2598, %v2685
        %v2851 = vmul.f32 %v2599, %v2690
        %v2852 = vmul.f32 %v2600, %v2695
        %v2853 = vmul.f32 %v2601, %v2700
        %v2854 = vmul.f32 %v2602, %v2705
        %v2855 = vmul.f32 %v2603, %v2710
        %v2856 = vmul.f32 %v2604, %v2715
        %v2857 = vmul.f32 %v2605, %v2720
        %v2858 = vmul.f32 %v2606, %v2725
        %v2859 = vmul.f32 %v2607, %v2730
        %v2860 = vmul.f32 %v2608, %v2735
        %v2861 = vmul.f32 %v2609, %v2740
        %v2862 = vmul.f32 %v2610, %v2745
        %v2863 = vmul.f32 %v2611, %v2750
        %v2864 = vmul.f32 %v2612, %v2755
        %v2865 = vmul.f32 %v2613, %v2760
        %v2866 = vmul.f32 %v2614, %v2765
        %v2867 = vmul.f32 %v2615, %v2770
        %v2868 = vmul.f32 %v2616, %v2775
        %v2869 = vmul.f32 %v2617, %v2780
        %v2870 = vmul.f32 %v2618, %v2785
        %v2871 = vmul.f32 %v2619, %v2790
        %v2872 = vmul.f32 %v2620, %v2795
        %v2873 = vmul.f32 %v2621, %v2800
        %v2874 = vmul.f32 %v2622, %v2805
        %v2875 = vmul.f32 %v2623, %v2810
        %v2876 = vmul.f32 %v2624, %v2815
        %v2877 = vmul.f32 %v2625, %v2820
        %v2878 = vmul.f32 %v2626, %v2825
        %v2879 = vmul.f32 %v2627, %v2830
        %v2880 = vmul.f32 %v2628, %v2835
        %v2881 = vmul.f32 %v2629, %v2840
        %v2882 = vmul.f32 %v2630, %v2845
        %2883 = vst [vmem:[#allocation3 + $0x13] sm:$0xff] %v2847
        %2884 = vst [vmem:[#allocation3 + $0x1b] sm:$0xff] %v2848
        %2885 = vst [vmem:[#allocation3 + $0x23] sm:$0xff] %v2849
        %2886 = vst [vmem:[#allocation3 + $0x2b] sm:$0xff] %v2850
        %2887 = vst [vmem:[#allocation3 + $0x33] sm:$0xff] %v2851
        %2888 = vst [vmem:[#allocation3 + $0x3b] sm:$0xff] %v2852
        %2889 = vst [vmem:[#allocation3 + $0x43] sm:$0xff] %v2853
        %2890 = vst [vmem:[#allocation3 + $0x4b] sm:$0xff] %v2854
        %2891 = vst [vmem:[#allocation3 + $0x53] sm:$0xff] %v2855
        %2892 = vst [vmem:[#allocation3 + $0x5b] sm:$0xff] %v2856
        %2893 = vst [vmem:[#allocation3 + $0x63] sm:$0xff] %v2857
        %2894 = vst [vmem:[#allocation3 + $0x6b] sm:$0xff] %v2858
        %2895 = vst [vmem:[#allocation3 + $0x73] sm:$0xff] %v2859
        %2896 = vst [vmem:[#allocation3 + $0x7b] sm:$0xff] %v2860
        %2897 = vst [vmem:[#allocation3 + $0x83] sm:$0xff] %v2861
        %2898 = vst [vmem:[#allocation3 + $0x8b] sm:$0xff] %v2862
        %2899 = vst [vmem:[#allocation3 + $0x93] sm:$0xff] %v2863
        %2900 = vst [vmem:[#allocation3 + $0x9b] sm:$0xff] %v2864
        %2901 = vst [vmem:[#allocation3 + $0xa3] sm:$0xff] %v2865
        %2902 = vst [vmem:[#allocation3 + $0xab] sm:$0xff] %v2866
        %2903 = vst [vmem:[#allocation3 + $0xb3] sm:$0xff] %v2867
        %2904 = vst [vmem:[#allocation3 + $0xbb] sm:$0xff] %v2868
        %2905 = vst [vmem:[#allocation3 + $0xc3] sm:$0xff] %v2869
        %2906 = vst [vmem:[#allocation3 + $0xcb] sm:$0xff] %v2870
        %2907 = vst [vmem:[#allocation3 + $0xd3] sm:$0xff] %v2871
        %2908 = vst [vmem:[#allocation3 + $0xdb] sm:$0xff] %v2872
        %2909 = vst [vmem:[#allocation3 + $0xe3] sm:$0xff] %v2873
        %2910 = vst [vmem:[#allocation3 + $0xeb] sm:$0xff] %v2874
        %2911 = vst [vmem:[#allocation3 + $0xf3] sm:$0xff] %v2875
        %2912 = vst [vmem:[#allocation3 + $0xfb] sm:$0xff] %v2876
        %2913 = vst [vmem:[#allocation3 + $0x103] sm:$0xff] %v2877
        %2914 = vst [vmem:[#allocation3 + $0x10b] sm:$0xff] %v2878
        %2915 = vst [vmem:[#allocation3 + $0x113] sm:$0xff] %v2879
        %2916 = vst [vmem:[#allocation3 + $0x11b] sm:$0xff] %v2880
        %2917 = vst [vmem:[#allocation3 + $0x123] sm:$0xff] %v2881
        %2918 = vst [vmem:[#allocation3 + $0x12b] sm:$0xff] %v2882
        %v2919 = vld [vmem:[#allocation3] sm:$0xff]
        %v2920 = vld [vmem:[#allocation3 + $0x8] sm:$0xff]
        %v2921 = vld [vmem:[#allocation3 + $0x10] sm:$0xff]
        %v2922 = vld [vmem:[#allocation3 + $0x18] sm:$0xff]
        %v2923 = vld [vmem:[#allocation3 + $0x20] sm:$0xff]
        %v2924 = vld [vmem:[#allocation3 + $0x28] sm:$0xff]
        %v2925 = vld [vmem:[#allocation3 + $0x30] sm:$0xff]
        %v2926 = vld [vmem:[#allocation3 + $0x38] sm:$0xff]
        %v2927 = vld [vmem:[#allocation3 + $0x40] sm:$0xff]
        %v2928 = vld [vmem:[#allocation3 + $0x48] sm:$0xff]
        %v2929 = vld [vmem:[#allocation3 + $0x50] sm:$0xff]
        %v2930 = vld [vmem:[#allocation3 + $0x58] sm:$0xff]
        %v2931 = vld [vmem:[#allocation3 + $0x60] sm:$0xff]
        %v2932 = vld [vmem:[#allocation3 + $0x68] sm:$0xff]
        %v2933 = vld [vmem:[#allocation3 + $0x70] sm:$0xff]
        %v2934 = vld [vmem:[#allocation3 + $0x78] sm:$0xff]
        %v2935 = vld [vmem:[#allocation3 + $0x80] sm:$0xff]
        %v2936 = vld [vmem:[#allocation3 + $0x88] sm:$0xff]
        %v2937 = vld [vmem:[#allocation3 + $0x90] sm:$0xff]
        %v2938 = vld [vmem:[#allocation3 + $0x98] sm:$0xff]
        %v2939 = vld [vmem:[#allocation3 + $0xa0] sm:$0xff]
        %v2940 = vld [vmem:[#allocation3 + $0xa8] sm:$0xff]
        %v2941 = vld [vmem:[#allocation3 + $0xb0] sm:$0xff]
        %v2942 = vld [vmem:[#allocation3 + $0xb8] sm:$0xff]
        %v2943 = vld [vmem:[#allocation3 + $0xc0] sm:$0xff]
        %v2944 = vld [vmem:[#allocation3 + $0xc8] sm:$0xff]
        %v2945 = vld [vmem:[#allocation3 + $0xd0] sm:$0xff]
        %v2946 = vld [vmem:[#allocation3 + $0xd8] sm:$0xff]
        %v2947 = vld [vmem:[#allocation3 + $0xe0] sm:$0xff]
        %v2948 = vld [vmem:[#allocation3 + $0xe8] sm:$0xff]
        %v2949 = vld [vmem:[#allocation3 + $0xf0] sm:$0xff]
        %v2950 = vld [vmem:[#allocation3 + $0xf8] sm:$0xff]
        %v2951 = vld [vmem:[#allocation3 + $0x100] sm:$0xff]
        %v2952 = vld [vmem:[#allocation3 + $0x108] sm:$0xff]
        %v2953 = vld [vmem:[#allocation3 + $0x110] sm:$0xff]
        %v2954 = vld [vmem:[#allocation3 + $0x118] sm:$0xff]
        %2955 = vst [vmem:[#allocation2] sm:$0xff] %v2919
        %2956 = vst [vmem:[#allocation2 + $0x48] sm:$0xff] %v2920
        %2957 = vst [vmem:[#allocation2 + $0x90] sm:$0xff] %v2921
        %2958 = vst [vmem:[#allocation2 + $0xd8] sm:$0xff] %v2922
        %2959 = vst [vmem:[#allocation2 + $0x120] sm:$0xff] %v2923
        %2960 = vst [vmem:[#allocation2 + $0x168] sm:$0xff] %v2924
        %2961 = vst [vmem:[#allocation2 + $0x1b0] sm:$0xff] %v2925
        %2962 = vst [vmem:[#allocation2 + $0x1f8] sm:$0xff] %v2926
        %2963 = vst [vmem:[#allocation2 + $0x240] sm:$0xff] %v2927
        %2964 = vst [vmem:[#allocation2 + $0x288] sm:$0xff] %v2928
        %2965 = vst [vmem:[#allocation2 + $0x2d0] sm:$0xff] %v2929
        %2966 = vst [vmem:[#allocation2 + $0x318] sm:$0xff] %v2930
        %2967 = vst [vmem:[#allocation2 + $0x360] sm:$0xff] %v2931
        %2968 = vst [vmem:[#allocation2 + $0x3a8] sm:$0xff] %v2932
        %2969 = vst [vmem:[#allocation2 + $0x3f0] sm:$0xff] %v2933
        %2970 = vst [vmem:[#allocation2 + $0x438] sm:$0xff] %v2934
        %2971 = vst [vmem:[#allocation2 + $0x480] sm:$0xff] %v2935
        %2972 = vst [vmem:[#allocation2 + $0x4c8] sm:$0xff] %v2936
        %2973 = vst [vmem:[#allocation2 + $0x510] sm:$0xff] %v2937
        %2974 = vst [vmem:[#allocation2 + $0x558] sm:$0xff] %v2938
        %2975 = vst [vmem:[#allocation2 + $0x5a0] sm:$0xff] %v2939
        %2976 = vst [vmem:[#allocation2 + $0x5e8] sm:$0xff] %v2940
        %2977 = vst [vmem:[#allocation2 + $0x630] sm:$0xff] %v2941
        %2978 = vst [vmem:[#allocation2 + $0x678] sm:$0xff] %v2942
        %2979 = vst [vmem:[#allocation2 + $0x6c0] sm:$0xff] %v2943
        %2980 = vst [vmem:[#allocation2 + $0x708] sm:$0xff] %v2944
        %2981 = vst [vmem:[#allocation2 + $0x750] sm:$0xff] %v2945
        %2982 = vst [vmem:[#allocation2 + $0x798] sm:$0xff] %v2946
        %2983 = vst [vmem:[#allocation2 + $0x7e0] sm:$0xff] %v2947
        %2984 = vst [vmem:[#allocation2 + $0x828] sm:$0xff] %v2948
        %2985 = vst [vmem:[#allocation2 + $0x870] sm:$0xff] %v2949
        %2986 = vst [vmem:[#allocation2 + $0x8b8] sm:$0xff] %v2950
        %2987 = vst [vmem:[#allocation2 + $0x900] sm:$0xff] %v2951
        %2988 = vst [vmem:[#allocation2 + $0x948] sm:$0xff] %v2952
        %2989 = vst [vmem:[#allocation2 + $0x990] sm:$0xff] %v2953
        %2990 = vst [vmem:[#allocation2 + $0x9d8] sm:$0xff] %v2954
        %v2991 = vld [vmem:[#allocation3 + $0x1] sm:$0xff]
        %v2992 = vld [vmem:[#allocation3 + $0x9] sm:$0xff]
        %v2993 = vld [vmem:[#allocation3 + $0x11] sm:$0xff]
        %v2994 = vld [vmem:[#allocation3 + $0x19] sm:$0xff]
        %v2995 = vld [vmem:[#allocation3 + $0x21] sm:$0xff]
        %v2996 = vld [vmem:[#allocation3 + $0x29] sm:$0xff]
        %v2997 = vld [vmem:[#allocation3 + $0x31] sm:$0xff]
        %v2998 = vld [vmem:[#allocation3 + $0x39] sm:$0xff]
        %v2999 = vld [vmem:[#allocation3 + $0x41] sm:$0xff]
        %v3000 = vld [vmem:[#allocation3 + $0x49] sm:$0xff]
        %v3001 = vld [vmem:[#allocation3 + $0x51] sm:$0xff]
        %v3002 = vld [vmem:[#allocation3 + $0x59] sm:$0xff]
        %v3003 = vld [vmem:[#allocation3 + $0x61] sm:$0xff]
        %v3004 = vld [vmem:[#allocation3 + $0x69] sm:$0xff]
        %v3005 = vld [vmem:[#allocation3 + $0x71] sm:$0xff]
        %v3006 = vld [vmem:[#allocation3 + $0x79] sm:$0xff]
        %v3007 = vld [vmem:[#allocation3 + $0x81] sm:$0xff]
        %v3008 = vld [vmem:[#allocation3 + $0x89] sm:$0xff]
        %v3009 = vld [vmem:[#allocation3 + $0x91] sm:$0xff]
        %v3010 = vld [vmem:[#allocation3 + $0x99] sm:$0xff]
        %v3011 = vld [vmem:[#allocation3 + $0xa1] sm:$0xff]
        %v3012 = vld [vmem:[#allocation3 + $0xa9] sm:$0xff]
        %v3013 = vld [vmem:[#allocation3 + $0xb1] sm:$0xff]
        %v3014 = vld [vmem:[#allocation3 + $0xb9] sm:$0xff]
        %v3015 = vld [vmem:[#allocation3 + $0xc1] sm:$0xff]
        %v3016 = vld [vmem:[#allocation3 + $0xc9] sm:$0xff]
        %v3017 = vld [vmem:[#allocation3 + $0xd1] sm:$0xff]
        %v3018 = vld [vmem:[#allocation3 + $0xd9] sm:$0xff]
        %v3019 = vld [vmem:[#allocation3 + $0xe1] sm:$0xff]
        %v3020 = vld [vmem:[#allocation3 + $0xe9] sm:$0xff]
        %v3021 = vld [vmem:[#allocation3 + $0xf1] sm:$0xff]
        %v3022 = vld [vmem:[#allocation3 + $0xf9] sm:$0xff]
        %v3023 = vld [vmem:[#allocation3 + $0x101] sm:$0xff]
        %v3024 = vld [vmem:[#allocation3 + $0x109] sm:$0xff]
        %v3025 = vld [vmem:[#allocation3 + $0x111] sm:$0xff]
        %v3026 = vld [vmem:[#allocation3 + $0x119] sm:$0xff]
        %3027 = vst [vmem:[#allocation2 + $0x8] sm:$0xff] %v2991
        %3028 = vst [vmem:[#allocation2 + $0x50] sm:$0xff] %v2992
        %3029 = vst [vmem:[#allocation2 + $0x98] sm:$0xff] %v2993
        %3030 = vst [vmem:[#allocation2 + $0xe0] sm:$0xff] %v2994
        %3031 = vst [vmem:[#allocation2 + $0x128] sm:$0xff] %v2995
        %3032 = vst [vmem:[#allocation2 + $0x170] sm:$0xff] %v2996
        %3033 = vst [vmem:[#allocation2 + $0x1b8] sm:$0xff] %v2997
        %3034 = vst [vmem:[#allocation2 + $0x200] sm:$0xff] %v2998
        %3035 = vst [vmem:[#allocation2 + $0x248] sm:$0xff] %v2999
        %3036 = vst [vmem:[#allocation2 + $0x290] sm:$0xff] %v3000
        %3037 = vst [vmem:[#allocation2 + $0x2d8] sm:$0xff] %v3001
        %3038 = vst [vmem:[#allocation2 + $0x320] sm:$0xff] %v3002
        %3039 = vst [vmem:[#allocation2 + $0x368] sm:$0xff] %v3003
        %3040 = vst [vmem:[#allocation2 + $0x3b0] sm:$0xff] %v3004
        %3041 = vst [vmem:[#allocation2 + $0x3f8] sm:$0xff] %v3005
        %3042 = vst [vmem:[#allocation2 + $0x440] sm:$0xff] %v3006
        %3043 = vst [vmem:[#allocation2 + $0x488] sm:$0xff] %v3007
        %3044 = vst [vmem:[#allocation2 + $0x4d0] sm:$0xff] %v3008
        %3045 = vst [vmem:[#allocation2 + $0x518] sm:$0xff] %v3009
        %3046 = vst [vmem:[#allocation2 + $0x560] sm:$0xff] %v3010
        %3047 = vst [vmem:[#allocation2 + $0x5a8] sm:$0xff] %v3011
        %3048 = vst [vmem:[#allocation2 + $0x5f0] sm:$0xff] %v3012
        %3049 = vst [vmem:[#allocation2 + $0x638] sm:$0xff] %v3013
        %3050 = vst [vmem:[#allocation2 + $0x680] sm:$0xff] %v3014
        %3051 = vst [vmem:[#allocation2 + $0x6c8] sm:$0xff] %v3015
        %3052 = vst [vmem:[#allocation2 + $0x710] sm:$0xff] %v3016
        %3053 = vst [vmem:[#allocation2 + $0x758] sm:$0xff] %v3017
        %3054 = vst [vmem:[#allocation2 + $0x7a0] sm:$0xff] %v3018
        %3055 = vst [vmem:[#allocation2 + $0x7e8] sm:$0xff] %v3019
        %3056 = vst [vmem:[#allocation2 + $0x830] sm:$0xff] %v3020
        %3057 = vst [vmem:[#allocation2 + $0x878] sm:$0xff] %v3021
        %3058 = vst [vmem:[#allocation2 + $0x8c0] sm:$0xff] %v3022
        %3059 = vst [vmem:[#allocation2 + $0x908] sm:$0xff] %v3023
        %3060 = vst [vmem:[#allocation2 + $0x950] sm:$0xff] %v3024
        %3061 = vst [vmem:[#allocation2 + $0x998] sm:$0xff] %v3025
        %3062 = vst [vmem:[#allocation2 + $0x9e0] sm:$0xff] %v3026
        %v3063 = vld [vmem:[#allocation3 + $0x2] sm:$0xff]
        %v3064 = vld [vmem:[#allocation3 + $0xa] sm:$0xff]
        %v3065 = vld [vmem:[#allocation3 + $0x12] sm:$0xff]
        %v3066 = vld [vmem:[#allocation3 + $0x1a] sm:$0xff]
        %v3067 = vld [vmem:[#allocation3 + $0x22] sm:$0xff]
        %v3068 = vld [vmem:[#allocation3 + $0x2a] sm:$0xff]
        %v3069 = vld [vmem:[#allocation3 + $0x32] sm:$0xff]
        %v3070 = vld [vmem:[#allocation3 + $0x3a] sm:$0xff]
        %v3071 = vld [vmem:[#allocation3 + $0x42] sm:$0xff]
        %v3072 = vld [vmem:[#allocation3 + $0x4a] sm:$0xff]
        %v3073 = vld [vmem:[#allocation3 + $0x52] sm:$0xff]
        %v3074 = vld [vmem:[#allocation3 + $0x5a] sm:$0xff]
        %v3075 = vld [vmem:[#allocation3 + $0x62] sm:$0xff]
        %v3076 = vld [vmem:[#allocation3 + $0x6a] sm:$0xff]
        %v3077 = vld [vmem:[#allocation3 + $0x72] sm:$0xff]
        %v3078 = vld [vmem:[#allocation3 + $0x7a] sm:$0xff]
        %v3079 = vld [vmem:[#allocation3 + $0x82] sm:$0xff]
        %v3080 = vld [vmem:[#allocation3 + $0x8a] sm:$0xff]
        %v3081 = vld [vmem:[#allocation3 + $0x92] sm:$0xff]
        %v3082 = vld [vmem:[#allocation3 + $0x9a] sm:$0xff]
        %v3083 = vld [vmem:[#allocation3 + $0xa2] sm:$0xff]
        %v3084 = vld [vmem:[#allocation3 + $0xaa] sm:$0xff]
        %v3085 = vld [vmem:[#allocation3 + $0xb2] sm:$0xff]
        %v3086 = vld [vmem:[#allocation3 + $0xba] sm:$0xff]
        %v3087 = vld [vmem:[#allocation3 + $0xc2] sm:$0xff]
        %v3088 = vld [vmem:[#allocation3 + $0xca] sm:$0xff]
        %v3089 = vld [vmem:[#allocation3 + $0xd2] sm:$0xff]
        %v3090 = vld [vmem:[#allocation3 + $0xda] sm:$0xff]
        %v3091 = vld [vmem:[#allocation3 + $0xe2] sm:$0xff]
        %v3092 = vld [vmem:[#allocation3 + $0xea] sm:$0xff]
        %v3093 = vld [vmem:[#allocation3 + $0xf2] sm:$0xff]
        %v3094 = vld [vmem:[#allocation3 + $0xfa] sm:$0xff]
        %v3095 = vld [vmem:[#allocation3 + $0x102] sm:$0xff]
        %v3096 = vld [vmem:[#allocation3 + $0x10a] sm:$0xff]
        %v3097 = vld [vmem:[#allocation3 + $0x112] sm:$0xff]
        %v3098 = vld [vmem:[#allocation3 + $0x11a] sm:$0xff]
        %3099 = vst [vmem:[#allocation2 + $0x10] sm:$0xff] %v3063
        %3100 = vst [vmem:[#allocation2 + $0x58] sm:$0xff] %v3064
        %3101 = vst [vmem:[#allocation2 + $0xa0] sm:$0xff] %v3065
        %3102 = vst [vmem:[#allocation2 + $0xe8] sm:$0xff] %v3066
        %3103 = vst [vmem:[#allocation2 + $0x130] sm:$0xff] %v3067
        %3104 = vst [vmem:[#allocation2 + $0x178] sm:$0xff] %v3068
        %3105 = vst [vmem:[#allocation2 + $0x1c0] sm:$0xff] %v3069
        %3106 = vst [vmem:[#allocation2 + $0x208] sm:$0xff] %v3070
        %3107 = vst [vmem:[#allocation2 + $0x250] sm:$0xff] %v3071
        %3108 = vst [vmem:[#allocation2 + $0x298] sm:$0xff] %v3072
        %3109 = vst [vmem:[#allocation2 + $0x2e0] sm:$0xff] %v3073
        %3110 = vst [vmem:[#allocation2 + $0x328] sm:$0xff] %v3074
        %3111 = vst [vmem:[#allocation2 + $0x370] sm:$0xff] %v3075
        %3112 = vst [vmem:[#allocation2 + $0x3b8] sm:$0xff] %v3076
        %3113 = vst [vmem:[#allocation2 + $0x400] sm:$0xff] %v3077
        %3114 = vst [vmem:[#allocation2 + $0x448] sm:$0xff] %v3078
        %3115 = vst [vmem:[#allocation2 + $0x490] sm:$0xff] %v3079
        %3116 = vst [vmem:[#allocation2 + $0x4d8] sm:$0xff] %v3080
        %3117 = vst [vmem:[#allocation2 + $0x520] sm:$0xff] %v3081
        %3118 = vst [vmem:[#allocation2 + $0x568] sm:$0xff] %v3082
        %3119 = vst [vmem:[#allocation2 + $0x5b0] sm:$0xff] %v3083
        %3120 = vst [vmem:[#allocation2 + $0x5f8] sm:$0xff] %v3084
        %3121 = vst [vmem:[#allocation2 + $0x640] sm:$0xff] %v3085
        %3122 = vst [vmem:[#allocation2 + $0x688] sm:$0xff] %v3086
        %3123 = vst [vmem:[#allocation2 + $0x6d0] sm:$0xff] %v3087
        %3124 = vst [vmem:[#allocation2 + $0x718] sm:$0xff] %v3088
        %3125 = vst [vmem:[#allocation2 + $0x760] sm:$0xff] %v3089
        %3126 = vst [vmem:[#allocation2 + $0x7a8] sm:$0xff] %v3090
        %3127 = vst [vmem:[#allocation2 + $0x7f0] sm:$0xff] %v3091
        %3128 = vst [vmem:[#allocation2 + $0x838] sm:$0xff] %v3092
        %3129 = vst [vmem:[#allocation2 + $0x880] sm:$0xff] %v3093
        %3130 = vst [vmem:[#allocation2 + $0x8c8] sm:$0xff] %v3094
        %3131 = vst [vmem:[#allocation2 + $0x910] sm:$0xff] %v3095
        %3132 = vst [vmem:[#allocation2 + $0x958] sm:$0xff] %v3096
        %3133 = vst [vmem:[#allocation2 + $0x9a0] sm:$0xff] %v3097
        %3134 = vst [vmem:[#allocation2 + $0x9e8] sm:$0xff] %v3098
        %v3135 = vld [vmem:[#allocation3 + $0x12] sm:$0xff]
        %v3136 = vld [vmem:[#allocation3 + $0x1a] sm:$0xff]
        %v3137 = vld [vmem:[#allocation3 + $0x22] sm:$0xff]
        %v3138 = vld [vmem:[#allocation3 + $0x2a] sm:$0xff]
        %v3139 = vld [vmem:[#allocation3 + $0x32] sm:$0xff]
        %v3140 = vld [vmem:[#allocation3 + $0x3a] sm:$0xff]
        %v3141 = vld [vmem:[#allocation3 + $0x42] sm:$0xff]
        %v3142 = vld [vmem:[#allocation3 + $0x4a] sm:$0xff]
        %v3143 = vld [vmem:[#allocation3 + $0x52] sm:$0xff]
        %v3144 = vld [vmem:[#allocation3 + $0x5a] sm:$0xff]
        %v3145 = vld [vmem:[#allocation3 + $0x62] sm:$0xff]
        %v3146 = vld [vmem:[#allocation3 + $0x6a] sm:$0xff]
        %v3147 = vld [vmem:[#allocation3 + $0x72] sm:$0xff]
        %v3148 = vld [vmem:[#allocation3 + $0x7a] sm:$0xff]
        %v3149 = vld [vmem:[#allocation3 + $0x82] sm:$0xff]
        %v3150 = vld [vmem:[#allocation3 + $0x8a] sm:$0xff]
        %v3151 = vld [vmem:[#allocation3 + $0x92] sm:$0xff]
        %v3152 = vld [vmem:[#allocation3 + $0x9a] sm:$0xff]
        %v3153 = vld [vmem:[#allocation3 + $0xa2] sm:$0xff]
        %v3154 = vld [vmem:[#allocation3 + $0xaa] sm:$0xff]
        %v3155 = vld [vmem:[#allocation3 + $0xb2] sm:$0xff]
        %v3156 = vld [vmem:[#allocation3 + $0xba] sm:$0xff]
        %v3157 = vld [vmem:[#allocation3 + $0xc2] sm:$0xff]
        %v3158 = vld [vmem:[#allocation3 + $0xca] sm:$0xff]
        %v3159 = vld [vmem:[#allocation3 + $0xd2] sm:$0xff]
        %v3160 = vld [vmem:[#allocation3 + $0xda] sm:$0xff]
        %v3161 = vld [vmem:[#allocation3 + $0xe2] sm:$0xff]
        %v3162 = vld [vmem:[#allocation3 + $0xea] sm:$0xff]
        %v3163 = vld [vmem:[#allocation3 + $0xf2] sm:$0xff]
        %v3164 = vld [vmem:[#allocation3 + $0xfa] sm:$0xff]
        %v3165 = vld [vmem:[#allocation3 + $0x102] sm:$0xff]
        %v3166 = vld [vmem:[#allocation3 + $0x10a] sm:$0xff]
        %v3167 = vld [vmem:[#allocation3 + $0x112] sm:$0xff]
        %v3168 = vld [vmem:[#allocation3 + $0x11a] sm:$0xff]
        %v3169 = vld [vmem:[#allocation3 + $0x122] sm:$0xff]
        %v3170 = vld [vmem:[#allocation3 + $0x12a] sm:$0xff]
        %3171 = vst [vmem:[#allocation2 + $0x18] sm:$0xff] %v3135
        %3172 = vst [vmem:[#allocation2 + $0x60] sm:$0xff] %v3136
        %3173 = vst [vmem:[#allocation2 + $0xa8] sm:$0xff] %v3137
        %3174 = vst [vmem:[#allocation2 + $0xf0] sm:$0xff] %v3138
        %3175 = vst [vmem:[#allocation2 + $0x138] sm:$0xff] %v3139
        %3176 = vst [vmem:[#allocation2 + $0x180] sm:$0xff] %v3140
        %3177 = vst [vmem:[#allocation2 + $0x1c8] sm:$0xff] %v3141
        %3178 = vst [vmem:[#allocation2 + $0x210] sm:$0xff] %v3142
        %3179 = vst [vmem:[#allocation2 + $0x258] sm:$0xff] %v3143
        %3180 = vst [vmem:[#allocation2 + $0x2a0] sm:$0xff] %v3144
        %3181 = vst [vmem:[#allocation2 + $0x2e8] sm:$0xff] %v3145
        %3182 = vst [vmem:[#allocation2 + $0x330] sm:$0xff] %v3146
        %3183 = vst [vmem:[#allocation2 + $0x378] sm:$0xff] %v3147
        %3184 = vst [vmem:[#allocation2 + $0x3c0] sm:$0xff] %v3148
        %3185 = vst [vmem:[#allocation2 + $0x408] sm:$0xff] %v3149
        %3186 = vst [vmem:[#allocation2 + $0x450] sm:$0xff] %v3150
        %3187 = vst [vmem:[#allocation2 + $0x498] sm:$0xff] %v3151
        %3188 = vst [vmem:[#allocation2 + $0x4e0] sm:$0xff] %v3152
        %3189 = vst [vmem:[#allocation2 + $0x528] sm:$0xff] %v3153
        %3190 = vst [vmem:[#allocation2 + $0x570] sm:$0xff] %v3154
        %3191 = vst [vmem:[#allocation2 + $0x5b8] sm:$0xff] %v3155
        %3192 = vst [vmem:[#allocation2 + $0x600] sm:$0xff] %v3156
        %3193 = vst [vmem:[#allocation2 + $0x648] sm:$0xff] %v3157
        %3194 = vst [vmem:[#allocation2 + $0x690] sm:$0xff] %v3158
        %3195 = vst [vmem:[#allocation2 + $0x6d8] sm:$0xff] %v3159
        %3196 = vst [vmem:[#allocation2 + $0x720] sm:$0xff] %v3160
        %3197 = vst [vmem:[#allocation2 + $0x768] sm:$0xff] %v3161
        %3198 = vst [vmem:[#allocation2 + $0x7b0] sm:$0xff] %v3162
        %3199 = vst [vmem:[#allocation2 + $0x7f8] sm:$0xff] %v3163
        %3200 = vst [vmem:[#allocation2 + $0x840] sm:$0xff] %v3164
        %3201 = vst [vmem:[#allocation2 + $0x888] sm:$0xff] %v3165
        %3202 = vst [vmem:[#allocation2 + $0x8d0] sm:$0xff] %v3166
        %3203 = vst [vmem:[#allocation2 + $0x918] sm:$0xff] %v3167
        %3204 = vst [vmem:[#allocation2 + $0x960] sm:$0xff] %v3168
        %3205 = vst [vmem:[#allocation2 + $0x9a8] sm:$0xff] %v3169
        %3206 = vst [vmem:[#allocation2 + $0x9f0] sm:$0xff] %v3170
        %v3207 = vld [vmem:[#allocation3 + $0x13] sm:$0xff]
        %v3208 = vld [vmem:[#allocation3 + $0x1b] sm:$0xff]
        %v3209 = vld [vmem:[#allocation3 + $0x23] sm:$0xff]
        %v3210 = vld [vmem:[#allocation3 + $0x2b] sm:$0xff]
        %v3211 = vld [vmem:[#allocation3 + $0x33] sm:$0xff]
        %v3212 = vld [vmem:[#allocation3 + $0x3b] sm:$0xff]
        %v3213 = vld [vmem:[#allocation3 + $0x43] sm:$0xff]
        %v3214 = vld [vmem:[#allocation3 + $0x4b] sm:$0xff]
        %v3215 = vld [vmem:[#allocation3 + $0x53] sm:$0xff]
        %v3216 = vld [vmem:[#allocation3 + $0x5b] sm:$0xff]
        %v3217 = vld [vmem:[#allocation3 + $0x63] sm:$0xff]
        %v3218 = vld [vmem:[#allocation3 + $0x6b] sm:$0xff]
        %v3219 = vld [vmem:[#allocation3 + $0x73] sm:$0xff]
        %v3220 = vld [vmem:[#allocation3 + $0x7b] sm:$0xff]
        %v3221 = vld [vmem:[#allocation3 + $0x83] sm:$0xff]
        %v3222 = vld [vmem:[#allocation3 + $0x8b] sm:$0xff]
        %v3223 = vld [vmem:[#allocation3 + $0x93] sm:$0xff]
        %v3224 = vld [vmem:[#allocation3 + $0x9b] sm:$0xff]
        %v3225 = vld [vmem:[#allocation3 + $0xa3] sm:$0xff]
        %v3226 = vld [vmem:[#allocation3 + $0xab] sm:$0xff]
        %v3227 = vld [vmem:[#allocation3 + $0xb3] sm:$0xff]
        %v3228 = vld [vmem:[#allocation3 + $0xbb] sm:$0xff]
        %v3229 = vld [vmem:[#allocation3 + $0xc3] sm:$0xff]
        %v3230 = vld [vmem:[#allocation3 + $0xcb] sm:$0xff]
        %v3231 = vld [vmem:[#allocation3 + $0xd3] sm:$0xff]
        %v3232 = vld [vmem:[#allocation3 + $0xdb] sm:$0xff]
        %v3233 = vld [vmem:[#allocation3 + $0xe3] sm:$0xff]
        %v3234 = vld [vmem:[#allocation3 + $0xeb] sm:$0xff]
        %v3235 = vld [vmem:[#allocation3 + $0xf3] sm:$0xff]
        %v3236 = vld [vmem:[#allocation3 + $0xfb] sm:$0xff]
        %v3237 = vld [vmem:[#allocation3 + $0x103] sm:$0xff]
        %v3238 = vld [vmem:[#allocation3 + $0x10b] sm:$0xff]
        %v3239 = vld [vmem:[#allocation3 + $0x113] sm:$0xff]
        %v3240 = vld [vmem:[#allocation3 + $0x11b] sm:$0xff]
        %v3241 = vld [vmem:[#allocation3 + $0x123] sm:$0xff]
        %v3242 = vld [vmem:[#allocation3 + $0x12b] sm:$0xff]
        %3243 = vst [vmem:[#allocation2 + $0x20] sm:$0xff] %v3207
        %3244 = vst [vmem:[#allocation2 + $0x68] sm:$0xff] %v3208
        %3245 = vst [vmem:[#allocation2 + $0xb0] sm:$0xff] %v3209
        %3246 = vst [vmem:[#allocation2 + $0xf8] sm:$0xff] %v3210
        %3247 = vst [vmem:[#allocation2 + $0x140] sm:$0xff] %v3211
        %3248 = vst [vmem:[#allocation2 + $0x188] sm:$0xff] %v3212
        %3249 = vst [vmem:[#allocation2 + $0x1d0] sm:$0xff] %v3213
        %3250 = vst [vmem:[#allocation2 + $0x218] sm:$0xff] %v3214
        %3251 = vst [vmem:[#allocation2 + $0x260] sm:$0xff] %v3215
        %3252 = vst [vmem:[#allocation2 + $0x2a8] sm:$0xff] %v3216
        %3253 = vst [vmem:[#allocation2 + $0x2f0] sm:$0xff] %v3217
        %3254 = vst [vmem:[#allocation2 + $0x338] sm:$0xff] %v3218
        %3255 = vst [vmem:[#allocation2 + $0x380] sm:$0xff] %v3219
        %3256 = vst [vmem:[#allocation2 + $0x3c8] sm:$0xff] %v3220
        %3257 = vst [vmem:[#allocation2 + $0x410] sm:$0xff] %v3221
        %3258 = vst [vmem:[#allocation2 + $0x458] sm:$0xff] %v3222
        %3259 = vst [vmem:[#allocation2 + $0x4a0] sm:$0xff] %v3223
        %3260 = vst [vmem:[#allocation2 + $0x4e8] sm:$0xff] %v3224
        %3261 = vst [vmem:[#allocation2 + $0x530] sm:$0xff] %v3225
        %3262 = vst [vmem:[#allocation2 + $0x578] sm:$0xff] %v3226
        %3263 = vst [vmem:[#allocation2 + $0x5c0] sm:$0xff] %v3227
        %3264 = vst [vmem:[#allocation2 + $0x608] sm:$0xff] %v3228
        %3265 = vst [vmem:[#allocation2 + $0x650] sm:$0xff] %v3229
        %3266 = vst [vmem:[#allocation2 + $0x698] sm:$0xff] %v3230
        %3267 = vst [vmem:[#allocation2 + $0x6e0] sm:$0xff] %v3231
        %3268 = vst [vmem:[#allocation2 + $0x728] sm:$0xff] %v3232
        %3269 = vst [vmem:[#allocation2 + $0x770] sm:$0xff] %v3233
        %3270 = vst [vmem:[#allocation2 + $0x7b8] sm:$0xff] %v3234
        %3271 = vst [vmem:[#allocation2 + $0x800] sm:$0xff] %v3235
        %3272 = vst [vmem:[#allocation2 + $0x848] sm:$0xff] %v3236
        %3273 = vst [vmem:[#allocation2 + $0x890] sm:$0xff] %v3237
        %3274 = vst [vmem:[#allocation2 + $0x8d8] sm:$0xff] %v3238
        %3275 = vst [vmem:[#allocation2 + $0x920] sm:$0xff] %v3239
        %3276 = vst [vmem:[#allocation2 + $0x968] sm:$0xff] %v3240
        %3277 = vst [vmem:[#allocation2 + $0x9b0] sm:$0xff] %v3241
        %3278 = vst [vmem:[#allocation2 + $0x9f8] sm:$0xff] %v3242
        %v3279 = vld [vmem:[#allocation3 + $0x14] sm:$0xff]
        %v3280 = vld [vmem:[#allocation3 + $0x1c] sm:$0xff]
        %v3281 = vld [vmem:[#allocation3 + $0x24] sm:$0xff]
        %v3282 = vld [vmem:[#allocation3 + $0x2c] sm:$0xff]
        %v3283 = vld [vmem:[#allocation3 + $0x34] sm:$0xff]
        %v3284 = vld [vmem:[#allocation3 + $0x3c] sm:$0xff]
        %v3285 = vld [vmem:[#allocation3 + $0x44] sm:$0xff]
        %v3286 = vld [vmem:[#allocation3 + $0x4c] sm:$0xff]
        %v3287 = vld [vmem:[#allocation3 + $0x54] sm:$0xff]
        %v3288 = vld [vmem:[#allocation3 + $0x5c] sm:$0xff]
        %v3289 = vld [vmem:[#allocation3 + $0x64] sm:$0xff]
        %v3290 = vld [vmem:[#allocation3 + $0x6c] sm:$0xff]
        %v3291 = vld [vmem:[#allocation3 + $0x74] sm:$0xff]
        %v3292 = vld [vmem:[#allocation3 + $0x7c] sm:$0xff]
        %v3293 = vld [vmem:[#allocation3 + $0x84] sm:$0xff]
        %v3294 = vld [vmem:[#allocation3 + $0x8c] sm:$0xff]
        %v3295 = vld [vmem:[#allocation3 + $0x94] sm:$0xff]
        %v3296 = vld [vmem:[#allocation3 + $0x9c] sm:$0xff]
        %v3297 = vld [vmem:[#allocation3 + $0xa4] sm:$0xff]
        %v3298 = vld [vmem:[#allocation3 + $0xac] sm:$0xff]
        %v3299 = vld [vmem:[#allocation3 + $0xb4] sm:$0xff]
        %v3300 = vld [vmem:[#allocation3 + $0xbc] sm:$0xff]
        %v3301 = vld [vmem:[#allocation3 + $0xc4] sm:$0xff]
        %v3302 = vld [vmem:[#allocation3 + $0xcc] sm:$0xff]
        %v3303 = vld [vmem:[#allocation3 + $0xd4] sm:$0xff]
        %v3304 = vld [vmem:[#allocation3 + $0xdc] sm:$0xff]
        %v3305 = vld [vmem:[#allocation3 + $0xe4] sm:$0xff]
        %v3306 = vld [vmem:[#allocation3 + $0xec] sm:$0xff]
        %v3307 = vld [vmem:[#allocation3 + $0xf4] sm:$0xff]
        %v3308 = vld [vmem:[#allocation3 + $0xfc] sm:$0xff]
        %v3309 = vld [vmem:[#allocation3 + $0x104] sm:$0xff]
        %v3310 = vld [vmem:[#allocation3 + $0x10c] sm:$0xff]
        %v3311 = vld [vmem:[#allocation3 + $0x114] sm:$0xff]
        %v3312 = vld [vmem:[#allocation3 + $0x11c] sm:$0xff]
        %v3313 = vld [vmem:[#allocation3 + $0x124] sm:$0xff]
        %v3314 = vld [vmem:[#allocation3 + $0x12c] sm:$0xff]
        %3315 = vst [vmem:[#allocation2 + $0x28] sm:$0xff] %v3279
        %3316 = vst [vmem:[#allocation2 + $0x70] sm:$0xff] %v3280
        %3317 = vst [vmem:[#allocation2 + $0xb8] sm:$0xff] %v3281
        %3318 = vst [vmem:[#allocation2 + $0x100] sm:$0xff] %v3282
        %3319 = vst [vmem:[#allocation2 + $0x148] sm:$0xff] %v3283
        %3320 = vst [vmem:[#allocation2 + $0x190] sm:$0xff] %v3284
        %3321 = vst [vmem:[#allocation2 + $0x1d8] sm:$0xff] %v3285
        %3322 = vst [vmem:[#allocation2 + $0x220] sm:$0xff] %v3286
        %3323 = vst [vmem:[#allocation2 + $0x268] sm:$0xff] %v3287
        %3324 = vst [vmem:[#allocation2 + $0x2b0] sm:$0xff] %v3288
        %3325 = vst [vmem:[#allocation2 + $0x2f8] sm:$0xff] %v3289
        %3326 = vst [vmem:[#allocation2 + $0x340] sm:$0xff] %v3290
        %3327 = vst [vmem:[#allocation2 + $0x388] sm:$0xff] %v3291
        %3328 = vst [vmem:[#allocation2 + $0x3d0] sm:$0xff] %v3292
        %3329 = vst [vmem:[#allocation2 + $0x418] sm:$0xff] %v3293
        %3330 = vst [vmem:[#allocation2 + $0x460] sm:$0xff] %v3294
        %3331 = vst [vmem:[#allocation2 + $0x4a8] sm:$0xff] %v3295
        %3332 = vst [vmem:[#allocation2 + $0x4f0] sm:$0xff] %v3296
        %3333 = vst [vmem:[#allocation2 + $0x538] sm:$0xff] %v3297
        %3334 = vst [vmem:[#allocation2 + $0x580] sm:$0xff] %v3298
        %3335 = vst [vmem:[#allocation2 + $0x5c8] sm:$0xff] %v3299
        %3336 = vst [vmem:[#allocation2 + $0x610] sm:$0xff] %v3300
        %3337 = vst [vmem:[#allocation2 + $0x658] sm:$0xff] %v3301
        %3338 = vst [vmem:[#allocation2 + $0x6a0] sm:$0xff] %v3302
        %3339 = vst [vmem:[#allocation2 + $0x6e8] sm:$0xff] %v3303
        %3340 = vst [vmem:[#allocation2 + $0x730] sm:$0xff] %v3304
        %3341 = vst [vmem:[#allocation2 + $0x778] sm:$0xff] %v3305
        %3342 = vst [vmem:[#allocation2 + $0x7c0] sm:$0xff] %v3306
        %3343 = vst [vmem:[#allocation2 + $0x808] sm:$0xff] %v3307
        %3344 = vst [vmem:[#allocation2 + $0x850] sm:$0xff] %v3308
        %3345 = vst [vmem:[#allocation2 + $0x898] sm:$0xff] %v3309
        %3346 = vst [vmem:[#allocation2 + $0x8e0] sm:$0xff] %v3310
        %3347 = vst [vmem:[#allocation2 + $0x928] sm:$0xff] %v3311
        %3348 = vst [vmem:[#allocation2 + $0x970] sm:$0xff] %v3312
        %3349 = vst [vmem:[#allocation2 + $0x9b8] sm:$0xff] %v3313
        %3350 = vst [vmem:[#allocation2 + $0xa00] sm:$0xff] %v3314
        %v3351 = vld [vmem:[#allocation3 + $0x24] sm:$0xff]
        %v3352 = vld [vmem:[#allocation3 + $0x2c] sm:$0xff]
        %v3353 = vld [vmem:[#allocation3 + $0x34] sm:$0xff]
        %v3354 = vld [vmem:[#allocation3 + $0x3c] sm:$0xff]
        %v3355 = vld [vmem:[#allocation3 + $0x44] sm:$0xff]
        %v3356 = vld [vmem:[#allocation3 + $0x4c] sm:$0xff]
        %v3357 = vld [vmem:[#allocation3 + $0x54] sm:$0xff]
        %v3358 = vld [vmem:[#allocation3 + $0x5c] sm:$0xff]
        %v3359 = vld [vmem:[#allocation3 + $0x64] sm:$0xff]
        %v3360 = vld [vmem:[#allocation3 + $0x6c] sm:$0xff]
        %v3361 = vld [vmem:[#allocation3 + $0x74] sm:$0xff]
        %v3362 = vld [vmem:[#allocation3 + $0x7c] sm:$0xff]
        %v3363 = vld [vmem:[#allocation3 + $0x84] sm:$0xff]
        %v3364 = vld [vmem:[#allocation3 + $0x8c] sm:$0xff]
        %v3365 = vld [vmem:[#allocation3 + $0x94] sm:$0xff]
        %v3366 = vld [vmem:[#allocation3 + $0x9c] sm:$0xff]
        %v3367 = vld [vmem:[#allocation3 + $0xa4] sm:$0xff]
        %v3368 = vld [vmem:[#allocation3 + $0xac] sm:$0xff]
        %v3369 = vld [vmem:[#allocation3 + $0xb4] sm:$0xff]
        %v3370 = vld [vmem:[#allocation3 + $0xbc] sm:$0xff]
        %v3371 = vld [vmem:[#allocation3 + $0xc4] sm:$0xff]
        %v3372 = vld [vmem:[#allocation3 + $0xcc] sm:$0xff]
        %v3373 = vld [vmem:[#allocation3 + $0xd4] sm:$0xff]
        %v3374 = vld [vmem:[#allocation3 + $0xdc] sm:$0xff]
        %v3375 = vld [vmem:[#allocation3 + $0xe4] sm:$0xff]
        %v3376 = vld [vmem:[#allocation3 + $0xec] sm:$0xff]
        %v3377 = vld [vmem:[#allocation3 + $0xf4] sm:$0xff]
        %v3378 = vld [vmem:[#allocation3 + $0xfc] sm:$0xff]
        %v3379 = vld [vmem:[#allocation3 + $0x104] sm:$0xff]
        %v3380 = vld [vmem:[#allocation3 + $0x10c] sm:$0xff]
        %v3381 = vld [vmem:[#allocation3 + $0x114] sm:$0xff]
        %v3382 = vld [vmem:[#allocation3 + $0x11c] sm:$0xff]
        %v3383 = vld [vmem:[#allocation3 + $0x124] sm:$0xff]
        %v3384 = vld [vmem:[#allocation3 + $0x12c] sm:$0xff]
        %v3385 = vld [vmem:[#allocation3 + $0x134] sm:$0xff]
        %v3386 = vld [vmem:[#allocation3 + $0x13c] sm:$0xff]
        %3387 = vst [vmem:[#allocation2 + $0x30] sm:$0xff] %v3351
        %3388 = vst [vmem:[#allocation2 + $0x78] sm:$0xff] %v3352
        %3389 = vst [vmem:[#allocation2 + $0xc0] sm:$0xff] %v3353
        %3390 = vst [vmem:[#allocation2 + $0x108] sm:$0xff] %v3354
        %3391 = vst [vmem:[#allocation2 + $0x150] sm:$0xff] %v3355
        %3392 = vst [vmem:[#allocation2 + $0x198] sm:$0xff] %v3356
        %3393 = vst [vmem:[#allocation2 + $0x1e0] sm:$0xff] %v3357
        %3394 = vst [vmem:[#allocation2 + $0x228] sm:$0xff] %v3358
        %3395 = vst [vmem:[#allocation2 + $0x270] sm:$0xff] %v3359
        %3396 = vst [vmem:[#allocation2 + $0x2b8] sm:$0xff] %v3360
        %3397 = vst [vmem:[#allocation2 + $0x300] sm:$0xff] %v3361
        %3398 = vst [vmem:[#allocation2 + $0x348] sm:$0xff] %v3362
        %3399 = vst [vmem:[#allocation2 + $0x390] sm:$0xff] %v3363
        %3400 = vst [vmem:[#allocation2 + $0x3d8] sm:$0xff] %v3364
        %3401 = vst [vmem:[#allocation2 + $0x420] sm:$0xff] %v3365
        %3402 = vst [vmem:[#allocation2 + $0x468] sm:$0xff] %v3366
        %3403 = vst [vmem:[#allocation2 + $0x4b0] sm:$0xff] %v3367
        %3404 = vst [vmem:[#allocation2 + $0x4f8] sm:$0xff] %v3368
        %3405 = vst [vmem:[#allocation2 + $0x540] sm:$0xff] %v3369
        %3406 = vst [vmem:[#allocation2 + $0x588] sm:$0xff] %v3370
        %3407 = vst [vmem:[#allocation2 + $0x5d0] sm:$0xff] %v3371
        %3408 = vst [vmem:[#allocation2 + $0x618] sm:$0xff] %v3372
        %3409 = vst [vmem:[#allocation2 + $0x660] sm:$0xff] %v3373
        %3410 = vst [vmem:[#allocation2 + $0x6a8] sm:$0xff] %v3374
        %3411 = vst [vmem:[#allocation2 + $0x6f0] sm:$0xff] %v3375
        %3412 = vst [vmem:[#allocation2 + $0x738] sm:$0xff] %v3376
        %3413 = vst [vmem:[#allocation2 + $0x780] sm:$0xff] %v3377
        %3414 = vst [vmem:[#allocation2 + $0x7c8] sm:$0xff] %v3378
        %3415 = vst [vmem:[#allocation2 + $0x810] sm:$0xff] %v3379
        %3416 = vst [vmem:[#allocation2 + $0x858] sm:$0xff] %v3380
        %3417 = vst [vmem:[#allocation2 + $0x8a0] sm:$0xff] %v3381
        %3418 = vst [vmem:[#allocation2 + $0x8e8] sm:$0xff] %v3382
        %3419 = vst [vmem:[#allocation2 + $0x930] sm:$0xff] %v3383
        %3420 = vst [vmem:[#allocation2 + $0x978] sm:$0xff] %v3384
        %3421 = vst [vmem:[#allocation2 + $0x9c0] sm:$0xff] %v3385
        %3422 = vst [vmem:[#allocation2 + $0xa08] sm:$0xff] %v3386
        %v3423 = vld [vmem:[#allocation3 + $0x25] sm:$0xff]
        %v3424 = vld [vmem:[#allocation3 + $0x2d] sm:$0xff]
        %v3425 = vld [vmem:[#allocation3 + $0x35] sm:$0xff]
        %v3426 = vld [vmem:[#allocation3 + $0x3d] sm:$0xff]
        %v3427 = vld [vmem:[#allocation3 + $0x45] sm:$0xff]
        %v3428 = vld [vmem:[#allocation3 + $0x4d] sm:$0xff]
        %v3429 = vld [vmem:[#allocation3 + $0x55] sm:$0xff]
        %v3430 = vld [vmem:[#allocation3 + $0x5d] sm:$0xff]
        %v3431 = vld [vmem:[#allocation3 + $0x65] sm:$0xff]
        %v3432 = vld [vmem:[#allocation3 + $0x6d] sm:$0xff]
        %v3433 = vld [vmem:[#allocation3 + $0x75] sm:$0xff]
        %v3434 = vld [vmem:[#allocation3 + $0x7d] sm:$0xff]
        %v3435 = vld [vmem:[#allocation3 + $0x85] sm:$0xff]
        %v3436 = vld [vmem:[#allocation3 + $0x8d] sm:$0xff]
        %v3437 = vld [vmem:[#allocation3 + $0x95] sm:$0xff]
        %v3438 = vld [vmem:[#allocation3 + $0x9d] sm:$0xff]
        %v3439 = vld [vmem:[#allocation3 + $0xa5] sm:$0xff]
        %v3440 = vld [vmem:[#allocation3 + $0xad] sm:$0xff]
        %v3441 = vld [vmem:[#allocation3 + $0xb5] sm:$0xff]
        %v3442 = vld [vmem:[#allocation3 + $0xbd] sm:$0xff]
        %v3443 = vld [vmem:[#allocation3 + $0xc5] sm:$0xff]
        %v3444 = vld [vmem:[#allocation3 + $0xcd] sm:$0xff]
        %v3445 = vld [vmem:[#allocation3 + $0xd5] sm:$0xff]
        %v3446 = vld [vmem:[#allocation3 + $0xdd] sm:$0xff]
        %v3447 = vld [vmem:[#allocation3 + $0xe5] sm:$0xff]
        %v3448 = vld [vmem:[#allocation3 + $0xed] sm:$0xff]
        %v3449 = vld [vmem:[#allocation3 + $0xf5] sm:$0xff]
        %v3450 = vld [vmem:[#allocation3 + $0xfd] sm:$0xff]
        %v3451 = vld [vmem:[#allocation3 + $0x105] sm:$0xff]
        %v3452 = vld [vmem:[#allocation3 + $0x10d] sm:$0xff]
        %v3453 = vld [vmem:[#allocation3 + $0x115] sm:$0xff]
        %v3454 = vld [vmem:[#allocation3 + $0x11d] sm:$0xff]
        %v3455 = vld [vmem:[#allocation3 + $0x125] sm:$0xff]
        %v3456 = vld [vmem:[#allocation3 + $0x12d] sm:$0xff]
        %v3457 = vld [vmem:[#allocation3 + $0x135] sm:$0xff]
        %v3458 = vld [vmem:[#allocation3 + $0x13d] sm:$0xff]
        %3459 = vst [vmem:[#allocation2 + $0x38] sm:$0xff] %v3423
        %3460 = vst [vmem:[#allocation2 + $0x80] sm:$0xff] %v3424
        %3461 = vst [vmem:[#allocation2 + $0xc8] sm:$0xff] %v3425
        %3462 = vst [vmem:[#allocation2 + $0x110] sm:$0xff] %v3426
        %3463 = vst [vmem:[#allocation2 + $0x158] sm:$0xff] %v3427
        %3464 = vst [vmem:[#allocation2 + $0x1a0] sm:$0xff] %v3428
        %3465 = vst [vmem:[#allocation2 + $0x1e8] sm:$0xff] %v3429
        %3466 = vst [vmem:[#allocation2 + $0x230] sm:$0xff] %v3430
        %3467 = vst [vmem:[#allocation2 + $0x278] sm:$0xff] %v3431
        %3468 = vst [vmem:[#allocation2 + $0x2c0] sm:$0xff] %v3432
        %3469 = vst [vmem:[#allocation2 + $0x308] sm:$0xff] %v3433
        %3470 = vst [vmem:[#allocation2 + $0x350] sm:$0xff] %v3434
        %3471 = vst [vmem:[#allocation2 + $0x398] sm:$0xff] %v3435
        %3472 = vst [vmem:[#allocation2 + $0x3e0] sm:$0xff] %v3436
        %3473 = vst [vmem:[#allocation2 + $0x428] sm:$0xff] %v3437
        %3474 = vst [vmem:[#allocation2 + $0x470] sm:$0xff] %v3438
        %3475 = vst [vmem:[#allocation2 + $0x4b8] sm:$0xff] %v3439
        %3476 = vst [vmem:[#allocation2 + $0x500] sm:$0xff] %v3440
        %3477 = vst [vmem:[#allocation2 + $0x548] sm:$0xff] %v3441
        %3478 = vst [vmem:[#allocation2 + $0x590] sm:$0xff] %v3442
        %3479 = vst [vmem:[#allocation2 + $0x5d8] sm:$0xff] %v3443
        %3480 = vst [vmem:[#allocation2 + $0x620] sm:$0xff] %v3444
        %3481 = vst [vmem:[#allocation2 + $0x668] sm:$0xff] %v3445
        %3482 = vst [vmem:[#allocation2 + $0x6b0] sm:$0xff] %v3446
        %3483 = vst [vmem:[#allocation2 + $0x6f8] sm:$0xff] %v3447
        %3484 = vst [vmem:[#allocation2 + $0x740] sm:$0xff] %v3448
        %3485 = vst [vmem:[#allocation2 + $0x788] sm:$0xff] %v3449
        %3486 = vst [vmem:[#allocation2 + $0x7d0] sm:$0xff] %v3450
        %3487 = vst [vmem:[#allocation2 + $0x818] sm:$0xff] %v3451
        %3488 = vst [vmem:[#allocation2 + $0x860] sm:$0xff] %v3452
        %3489 = vst [vmem:[#allocation2 + $0x8a8] sm:$0xff] %v3453
        %3490 = vst [vmem:[#allocation2 + $0x8f0] sm:$0xff] %v3454
        %3491 = vst [vmem:[#allocation2 + $0x938] sm:$0xff] %v3455
        %3492 = vst [vmem:[#allocation2 + $0x980] sm:$0xff] %v3456
        %3493 = vst [vmem:[#allocation2 + $0x9c8] sm:$0xff] %v3457
        %3494 = vst [vmem:[#allocation2 + $0xa10] sm:$0xff] %v3458
        %v3495 = vld [vmem:[#allocation3 + $0x26] sm:$0xff]
        %v3496 = vld [vmem:[#allocation3 + $0x2e] sm:$0xff]
        %v3497 = vld [vmem:[#allocation3 + $0x36] sm:$0xff]
        %v3498 = vld [vmem:[#allocation3 + $0x3e] sm:$0xff]
        %v3499 = vld [vmem:[#allocation3 + $0x46] sm:$0xff]
        %v3500 = vld [vmem:[#allocation3 + $0x4e] sm:$0xff]
        %v3501 = vld [vmem:[#allocation3 + $0x56] sm:$0xff]
        %v3502 = vld [vmem:[#allocation3 + $0x5e] sm:$0xff]
        %v3503 = vld [vmem:[#allocation3 + $0x66] sm:$0xff]
        %v3504 = vld [vmem:[#allocation3 + $0x6e] sm:$0xff]
        %v3505 = vld [vmem:[#allocation3 + $0x76] sm:$0xff]
        %v3506 = vld [vmem:[#allocation3 + $0x7e] sm:$0xff]
        %v3507 = vld [vmem:[#allocation3 + $0x86] sm:$0xff]
        %v3508 = vld [vmem:[#allocation3 + $0x8e] sm:$0xff]
        %v3509 = vld [vmem:[#allocation3 + $0x96] sm:$0xff]
        %v3510 = vld [vmem:[#allocation3 + $0x9e] sm:$0xff]
        %v3511 = vld [vmem:[#allocation3 + $0xa6] sm:$0xff]
        %v3512 = vld [vmem:[#allocation3 + $0xae] sm:$0xff]
        %v3513 = vld [vmem:[#allocation3 + $0xb6] sm:$0xff]
        %v3514 = vld [vmem:[#allocation3 + $0xbe] sm:$0xff]
        %v3515 = vld [vmem:[#allocation3 + $0xc6] sm:$0xff]
        %v3516 = vld [vmem:[#allocation3 + $0xce] sm:$0xff]
        %v3517 = vld [vmem:[#allocation3 + $0xd6] sm:$0xff]
        %v3518 = vld [vmem:[#allocation3 + $0xde] sm:$0xff]
        %v3519 = vld [vmem:[#allocation3 + $0xe6] sm:$0xff]
        %v3520 = vld [vmem:[#allocation3 + $0xee] sm:$0xff]
        %v3521 = vld [vmem:[#allocation3 + $0xf6] sm:$0xff]
        %v3522 = vld [vmem:[#allocation3 + $0xfe] sm:$0xff]
        %v3523 = vld [vmem:[#allocation3 + $0x106] sm:$0xff]
        %v3524 = vld [vmem:[#allocation3 + $0x10e] sm:$0xff]
        %v3525 = vld [vmem:[#allocation3 + $0x116] sm:$0xff]
        %v3526 = vld [vmem:[#allocation3 + $0x11e] sm:$0xff]
        %v3527 = vld [vmem:[#allocation3 + $0x126] sm:$0xff]
        %v3528 = vld [vmem:[#allocation3 + $0x12e] sm:$0xff]
        %v3529 = vld [vmem:[#allocation3 + $0x136] sm:$0xff]
        %v3530 = vld [vmem:[#allocation3 + $0x13e] sm:$0xff]
        %3531 = vst [vmem:[#allocation2 + $0x40] sm:$0xff] %v3495
        %3532 = vst [vmem:[#allocation2 + $0x88] sm:$0xff] %v3496
        %3533 = vst [vmem:[#allocation2 + $0xd0] sm:$0xff] %v3497
        %3534 = vst [vmem:[#allocation2 + $0x118] sm:$0xff] %v3498
        %3535 = vst [vmem:[#allocation2 + $0x160] sm:$0xff] %v3499
        %3536 = vst [vmem:[#allocation2 + $0x1a8] sm:$0xff] %v3500
        %3537 = vst [vmem:[#allocation2 + $0x1f0] sm:$0xff] %v3501
        %3538 = vst [vmem:[#allocation2 + $0x238] sm:$0xff] %v3502
        %3539 = vst [vmem:[#allocation2 + $0x280] sm:$0xff] %v3503
        %3540 = vst [vmem:[#allocation2 + $0x2c8] sm:$0xff] %v3504
        %3541 = vst [vmem:[#allocation2 + $0x310] sm:$0xff] %v3505
        %3542 = vst [vmem:[#allocation2 + $0x358] sm:$0xff] %v3506
        %3543 = vst [vmem:[#allocation2 + $0x3a0] sm:$0xff] %v3507
        %3544 = vst [vmem:[#allocation2 + $0x3e8] sm:$0xff] %v3508
        %3545 = vst [vmem:[#allocation2 + $0x430] sm:$0xff] %v3509
        %3546 = vst [vmem:[#allocation2 + $0x478] sm:$0xff] %v3510
        %3547 = vst [vmem:[#allocation2 + $0x4c0] sm:$0xff] %v3511
        %3548 = vst [vmem:[#allocation2 + $0x508] sm:$0xff] %v3512
        %3549 = vst [vmem:[#allocation2 + $0x550] sm:$0xff] %v3513
        %3550 = vst [vmem:[#allocation2 + $0x598] sm:$0xff] %v3514
        %3551 = vst [vmem:[#allocation2 + $0x5e0] sm:$0xff] %v3515
        %3552 = vst [vmem:[#allocation2 + $0x628] sm:$0xff] %v3516
        %3553 = vst [vmem:[#allocation2 + $0x670] sm:$0xff] %v3517
        %3554 = vst [vmem:[#allocation2 + $0x6b8] sm:$0xff] %v3518
        %3555 = vst [vmem:[#allocation2 + $0x700] sm:$0xff] %v3519
        %3556 = vst [vmem:[#allocation2 + $0x748] sm:$0xff] %v3520
        %3557 = vst [vmem:[#allocation2 + $0x790] sm:$0xff] %v3521
        %3558 = vst [vmem:[#allocation2 + $0x7d8] sm:$0xff] %v3522
        %3559 = vst [vmem:[#allocation2 + $0x820] sm:$0xff] %v3523
        %3560 = vst [vmem:[#allocation2 + $0x868] sm:$0xff] %v3524
        %3561 = vst [vmem:[#allocation2 + $0x8b0] sm:$0xff] %v3525
        %3562 = vst [vmem:[#allocation2 + $0x8f8] sm:$0xff] %v3526
        %3563 = vst [vmem:[#allocation2 + $0x940] sm:$0xff] %v3527
        %3564 = vst [vmem:[#allocation2 + $0x988] sm:$0xff] %v3528
        %3565 = vst [vmem:[#allocation2 + $0x9d0] sm:$0xff] %v3529
        %3566 = vst [vmem:[#allocation2 + $0xa18] sm:$0xff] %v3530
        %v3567 = vld [vmem:[#allocation2] sm:$0xff]
        %v3568 = vld [vmem:[#allocation2 + $0x8] sm:$0xff]
        %v3569 = vld [vmem:[#allocation2 + $0x10] sm:$0xff]
        %v3570 = vld [vmem:[#allocation2 + $0x18] sm:$0xff]
        %v3571 = vld [vmem:[#allocation2 + $0x20] sm:$0xff]
        %v3572 = vld [vmem:[#allocation2 + $0x28] sm:$0xff]
        %v3573 = vld [vmem:[#allocation2 + $0x30] sm:$0xff]
        %v3574 = vld [vmem:[#allocation2 + $0x38] sm:$0xff]
        %v3575 = vld [vmem:[#allocation2 + $0x40] sm:$0xff]
        %v3576 = vld [vmem:[#allocation2 + $0x48] sm:$0xff]
        %v3577 = vld [vmem:[#allocation2 + $0x50] sm:$0xff]
        %v3578 = vld [vmem:[#allocation2 + $0x58] sm:$0xff]
        %v3579 = vld [vmem:[#allocation2 + $0x60] sm:$0xff]
        %v3580 = vld [vmem:[#allocation2 + $0x68] sm:$0xff]
        %v3581 = vld [vmem:[#allocation2 + $0x70] sm:$0xff]
        %v3582 = vld [vmem:[#allocation2 + $0x78] sm:$0xff]
        %v3583 = vld [vmem:[#allocation2 + $0x80] sm:$0xff]
        %v3584 = vld [vmem:[#allocation2 + $0x88] sm:$0xff]
        %v3585 = vld [vmem:[#allocation2 + $0x90] sm:$0xff]
        %v3586 = vld [vmem:[#allocation2 + $0x98] sm:$0xff]
        %v3587 = vld [vmem:[#allocation2 + $0xa0] sm:$0xff]
        %v3588 = vld [vmem:[#allocation2 + $0xa8] sm:$0xff]
        %v3589 = vld [vmem:[#allocation2 + $0xb0] sm:$0xff]
        %v3590 = vld [vmem:[#allocation2 + $0xb8] sm:$0xff]
        %v3591 = vld [vmem:[#allocation2 + $0xc0] sm:$0xff]
        %v3592 = vld [vmem:[#allocation2 + $0xc8] sm:$0xff]
        %v3593 = vld [vmem:[#allocation2 + $0xd0] sm:$0xff]
        %v3594 = vld [vmem:[#allocation2 + $0xd8] sm:$0xff]
        %v3595 = vld [vmem:[#allocation2 + $0xe0] sm:$0xff]
        %v3596 = vld [vmem:[#allocation2 + $0xe8] sm:$0xff]
        %v3597 = vld [vmem:[#allocation2 + $0xf0] sm:$0xff]
        %v3598 = vld [vmem:[#allocation2 + $0xf8] sm:$0xff]
        %v3599 = vld [vmem:[#allocation2 + $0x100] sm:$0xff]
        %v3600 = vld [vmem:[#allocation2 + $0x108] sm:$0xff]
        %v3601 = vld [vmem:[#allocation2 + $0x110] sm:$0xff]
        %v3602 = vld [vmem:[#allocation2 + $0x118] sm:$0xff]
        %v3603 = vld [vmem:[#allocation2 + $0x120] sm:$0xff]
        %v3604 = vld [vmem:[#allocation2 + $0x128] sm:$0xff]
        %v3605 = vld [vmem:[#allocation2 + $0x130] sm:$0xff]
        %v3606 = vld [vmem:[#allocation2 + $0x138] sm:$0xff]
        %v3607 = vld [vmem:[#allocation2 + $0x140] sm:$0xff]
        %v3608 = vld [vmem:[#allocation2 + $0x148] sm:$0xff]
        %v3609 = vld [vmem:[#allocation2 + $0x150] sm:$0xff]
        %v3610 = vld [vmem:[#allocation2 + $0x158] sm:$0xff]
        %v3611 = vld [vmem:[#allocation2 + $0x160] sm:$0xff]
        %v3612 = vld [vmem:[#allocation2 + $0x168] sm:$0xff]
        %v3613 = vld [vmem:[#allocation2 + $0x170] sm:$0xff]
        %v3614 = vld [vmem:[#allocation2 + $0x178] sm:$0xff]
        %v3615 = vld [vmem:[#allocation2 + $0x180] sm:$0xff]
        %v3616 = vld [vmem:[#allocation2 + $0x188] sm:$0xff]
        %v3617 = vld [vmem:[#allocation2 + $0x190] sm:$0xff]
        %v3618 = vld [vmem:[#allocation2 + $0x198] sm:$0xff]
        %v3619 = vld [vmem:[#allocation2 + $0x1a0] sm:$0xff]
        %v3620 = vld [vmem:[#allocation2 + $0x1a8] sm:$0xff]
        %v3621 = vld [vmem:[#allocation2 + $0x1b0] sm:$0xff]
        %v3622 = vld [vmem:[#allocation2 + $0x1b8] sm:$0xff]
        %v3623 = vld [vmem:[#allocation2 + $0x1c0] sm:$0xff]
        %v3624 = vld [vmem:[#allocation2 + $0x1c8] sm:$0xff]
        %v3625 = vld [vmem:[#allocation2 + $0x1d0] sm:$0xff]
        %v3626 = vld [vmem:[#allocation2 + $0x1d8] sm:$0xff]
        %v3627 = vld [vmem:[#allocation2 + $0x1e0] sm:$0xff]
        %v3628 = vld [vmem:[#allocation2 + $0x1e8] sm:$0xff]
        %v3629 = vld [vmem:[#allocation2 + $0x1f0] sm:$0xff]
        %v3630 = vld [vmem:[#allocation2 + $0x1f8] sm:$0xff]
        %v3631 = vld [vmem:[#allocation2 + $0x200] sm:$0xff]
        %v3632 = vld [vmem:[#allocation2 + $0x208] sm:$0xff]
        %v3633 = vld [vmem:[#allocation2 + $0x210] sm:$0xff]
        %v3634 = vld [vmem:[#allocation2 + $0x218] sm:$0xff]
        %v3635 = vld [vmem:[#allocation2 + $0x220] sm:$0xff]
        %v3636 = vld [vmem:[#allocation2 + $0x228] sm:$0xff]
        %v3637 = vld [vmem:[#allocation2 + $0x230] sm:$0xff]
        %v3638 = vld [vmem:[#allocation2 + $0x238] sm:$0xff]
        %v3639 = vld [vmem:[#allocation2 + $0x240] sm:$0xff]
        %v3640 = vld [vmem:[#allocation2 + $0x248] sm:$0xff]
        %v3641 = vld [vmem:[#allocation2 + $0x250] sm:$0xff]
        %v3642 = vld [vmem:[#allocation2 + $0x258] sm:$0xff]
        %v3643 = vld [vmem:[#allocation2 + $0x260] sm:$0xff]
        %v3644 = vld [vmem:[#allocation2 + $0x268] sm:$0xff]
        %v3645 = vld [vmem:[#allocation2 + $0x270] sm:$0xff]
        %v3646 = vld [vmem:[#allocation2 + $0x278] sm:$0xff]
        %v3647 = vld [vmem:[#allocation2 + $0x280] sm:$0xff]
        %v3648 = vld [vmem:[#allocation2 + $0x288] sm:$0xff]
        %v3649 = vld [vmem:[#allocation2 + $0x290] sm:$0xff]
        %v3650 = vld [vmem:[#allocation2 + $0x298] sm:$0xff]
        %v3651 = vld [vmem:[#allocation2 + $0x2a0] sm:$0xff]
        %v3652 = vld [vmem:[#allocation2 + $0x2a8] sm:$0xff]
        %v3653 = vld [vmem:[#allocation2 + $0x2b0] sm:$0xff]
        %v3654 = vld [vmem:[#allocation2 + $0x2b8] sm:$0xff]
        %v3655 = vld [vmem:[#allocation2 + $0x2c0] sm:$0xff]
        %v3656 = vld [vmem:[#allocation2 + $0x2c8] sm:$0xff]
        %v3657 = vld [vmem:[#allocation2 + $0x2d0] sm:$0xff]
        %v3658 = vld [vmem:[#allocation2 + $0x2d8] sm:$0xff]
        %v3659 = vld [vmem:[#allocation2 + $0x2e0] sm:$0xff]
        %v3660 = vld [vmem:[#allocation2 + $0x2e8] sm:$0xff]
        %v3661 = vld [vmem:[#allocation2 + $0x2f0] sm:$0xff]
        %v3662 = vld [vmem:[#allocation2 + $0x2f8] sm:$0xff]
        %v3663 = vld [vmem:[#allocation2 + $0x300] sm:$0xff]
        %v3664 = vld [vmem:[#allocation2 + $0x308] sm:$0xff]
        %v3665 = vld [vmem:[#allocation2 + $0x310] sm:$0xff]
        %v3666 = vld [vmem:[#allocation2 + $0x318] sm:$0xff]
        %v3667 = vld [vmem:[#allocation2 + $0x320] sm:$0xff]
        %v3668 = vld [vmem:[#allocation2 + $0x328] sm:$0xff]
        %v3669 = vld [vmem:[#allocation2 + $0x330] sm:$0xff]
        %v3670 = vld [vmem:[#allocation2 + $0x338] sm:$0xff]
        %v3671 = vld [vmem:[#allocation2 + $0x340] sm:$0xff]
        %v3672 = vld [vmem:[#allocation2 + $0x348] sm:$0xff]
        %v3673 = vld [vmem:[#allocation2 + $0x350] sm:$0xff]
        %v3674 = vld [vmem:[#allocation2 + $0x358] sm:$0xff]
        %v3675 = vld [vmem:[#allocation2 + $0x360] sm:$0xff]
        %v3676 = vld [vmem:[#allocation2 + $0x368] sm:$0xff]
        %v3677 = vld [vmem:[#allocation2 + $0x370] sm:$0xff]
        %v3678 = vld [vmem:[#allocation2 + $0x378] sm:$0xff]
        %v3679 = vld [vmem:[#allocation2 + $0x380] sm:$0xff]
        %v3680 = vld [vmem:[#allocation2 + $0x388] sm:$0xff]
        %v3681 = vld [vmem:[#allocation2 + $0x390] sm:$0xff]
        %v3682 = vld [vmem:[#allocation2 + $0x398] sm:$0xff]
        %v3683 = vld [vmem:[#allocation2 + $0x3a0] sm:$0xff]
        %v3684 = vld [vmem:[#allocation2 + $0x3a8] sm:$0xff]
        %v3685 = vld [vmem:[#allocation2 + $0x3b0] sm:$0xff]
        %v3686 = vld [vmem:[#allocation2 + $0x3b8] sm:$0xff]
        %v3687 = vld [vmem:[#allocation2 + $0x3c0] sm:$0xff]
        %v3688 = vld [vmem:[#allocation2 + $0x3c8] sm:$0xff]
        %v3689 = vld [vmem:[#allocation2 + $0x3d0] sm:$0xff]
        %v3690 = vld [vmem:[#allocation2 + $0x3d8] sm:$0xff]
        %v3691 = vld [vmem:[#allocation2 + $0x3e0] sm:$0xff]
        %v3692 = vld [vmem:[#allocation2 + $0x3e8] sm:$0xff]
        %v3693 = vld [vmem:[#allocation2 + $0x3f0] sm:$0xff]
        %v3694 = vld [vmem:[#allocation2 + $0x3f8] sm:$0xff]
        %v3695 = vld [vmem:[#allocation2 + $0x400] sm:$0xff]
        %v3696 = vld [vmem:[#allocation2 + $0x408] sm:$0xff]
        %v3697 = vld [vmem:[#allocation2 + $0x410] sm:$0xff]
        %v3698 = vld [vmem:[#allocation2 + $0x418] sm:$0xff]
        %v3699 = vld [vmem:[#allocation2 + $0x420] sm:$0xff]
        %v3700 = vld [vmem:[#allocation2 + $0x428] sm:$0xff]
        %v3701 = vld [vmem:[#allocation2 + $0x430] sm:$0xff]
        %v3702 = vld [vmem:[#allocation2 + $0x438] sm:$0xff]
        %v3703 = vld [vmem:[#allocation2 + $0x440] sm:$0xff]
        %v3704 = vld [vmem:[#allocation2 + $0x448] sm:$0xff]
        %v3705 = vld [vmem:[#allocation2 + $0x450] sm:$0xff]
        %v3706 = vld [vmem:[#allocation2 + $0x458] sm:$0xff]
        %v3707 = vld [vmem:[#allocation2 + $0x460] sm:$0xff]
        %v3708 = vld [vmem:[#allocation2 + $0x468] sm:$0xff]
        %v3709 = vld [vmem:[#allocation2 + $0x470] sm:$0xff]
        %v3710 = vld [vmem:[#allocation2 + $0x478] sm:$0xff]
        %v3711 = vld [vmem:[#allocation2 + $0x480] sm:$0xff]
        %v3712 = vld [vmem:[#allocation2 + $0x488] sm:$0xff]
        %v3713 = vld [vmem:[#allocation2 + $0x490] sm:$0xff]
        %v3714 = vld [vmem:[#allocation2 + $0x498] sm:$0xff]
        %v3715 = vld [vmem:[#allocation2 + $0x4a0] sm:$0xff]
        %v3716 = vld [vmem:[#allocation2 + $0x4a8] sm:$0xff]
        %v3717 = vld [vmem:[#allocation2 + $0x4b0] sm:$0xff]
        %v3718 = vld [vmem:[#allocation2 + $0x4b8] sm:$0xff]
        %v3719 = vld [vmem:[#allocation2 + $0x4c0] sm:$0xff]
        %v3720 = vld [vmem:[#allocation2 + $0x4c8] sm:$0xff]
        %v3721 = vld [vmem:[#allocation2 + $0x4d0] sm:$0xff]
        %v3722 = vld [vmem:[#allocation2 + $0x4d8] sm:$0xff]
        %v3723 = vld [vmem:[#allocation2 + $0x4e0] sm:$0xff]
        %v3724 = vld [vmem:[#allocation2 + $0x4e8] sm:$0xff]
        %v3725 = vld [vmem:[#allocation2 + $0x4f0] sm:$0xff]
        %v3726 = vld [vmem:[#allocation2 + $0x4f8] sm:$0xff]
        %v3727 = vld [vmem:[#allocation2 + $0x500] sm:$0xff]
        %v3728 = vld [vmem:[#allocation2 + $0x508] sm:$0xff]
        %v3729 = vld [vmem:[#allocation2 + $0x510] sm:$0xff]
        %v3730 = vld [vmem:[#allocation2 + $0x518] sm:$0xff]
        %v3731 = vld [vmem:[#allocation2 + $0x520] sm:$0xff]
        %v3732 = vld [vmem:[#allocation2 + $0x528] sm:$0xff]
        %v3733 = vld [vmem:[#allocation2 + $0x530] sm:$0xff]
        %v3734 = vld [vmem:[#allocation2 + $0x538] sm:$0xff]
        %v3735 = vld [vmem:[#allocation2 + $0x540] sm:$0xff]
        %v3736 = vld [vmem:[#allocation2 + $0x548] sm:$0xff]
        %v3737 = vld [vmem:[#allocation2 + $0x550] sm:$0xff]
        %v3738 = vld [vmem:[#allocation2 + $0x558] sm:$0xff]
        %v3739 = vld [vmem:[#allocation2 + $0x560] sm:$0xff]
        %v3740 = vld [vmem:[#allocation2 + $0x568] sm:$0xff]
        %v3741 = vld [vmem:[#allocation2 + $0x570] sm:$0xff]
        %v3742 = vld [vmem:[#allocation2 + $0x578] sm:$0xff]
        %v3743 = vld [vmem:[#allocation2 + $0x580] sm:$0xff]
        %v3744 = vld [vmem:[#allocation2 + $0x588] sm:$0xff]
        %v3745 = vld [vmem:[#allocation2 + $0x590] sm:$0xff]
        %v3746 = vld [vmem:[#allocation2 + $0x598] sm:$0xff]
        %v3747 = vld [vmem:[#allocation2 + $0x5a0] sm:$0xff]
        %v3748 = vld [vmem:[#allocation2 + $0x5a8] sm:$0xff]
        %v3749 = vld [vmem:[#allocation2 + $0x5b0] sm:$0xff]
        %v3750 = vld [vmem:[#allocation2 + $0x5b8] sm:$0xff]
        %v3751 = vld [vmem:[#allocation2 + $0x5c0] sm:$0xff]
        %v3752 = vld [vmem:[#allocation2 + $0x5c8] sm:$0xff]
        %v3753 = vld [vmem:[#allocation2 + $0x5d0] sm:$0xff]
        %v3754 = vld [vmem:[#allocation2 + $0x5d8] sm:$0xff]
        %v3755 = vld [vmem:[#allocation2 + $0x5e0] sm:$0xff]
        %v3756 = vld [vmem:[#allocation2 + $0x5e8] sm:$0xff]
        %v3757 = vld [vmem:[#allocation2 + $0x5f0] sm:$0xff]
        %v3758 = vld [vmem:[#allocation2 + $0x5f8] sm:$0xff]
        %v3759 = vld [vmem:[#allocation2 + $0x600] sm:$0xff]
        %v3760 = vld [vmem:[#allocation2 + $0x608] sm:$0xff]
        %v3761 = vld [vmem:[#allocation2 + $0x610] sm:$0xff]
        %v3762 = vld [vmem:[#allocation2 + $0x618] sm:$0xff]
        %v3763 = vld [vmem:[#allocation2 + $0x620] sm:$0xff]
        %v3764 = vld [vmem:[#allocation2 + $0x628] sm:$0xff]
        %v3765 = vld [vmem:[#allocation2 + $0x630] sm:$0xff]
        %v3766 = vld [vmem:[#allocation2 + $0x638] sm:$0xff]
        %v3767 = vld [vmem:[#allocation2 + $0x640] sm:$0xff]
        %v3768 = vld [vmem:[#allocation2 + $0x648] sm:$0xff]
        %v3769 = vld [vmem:[#allocation2 + $0x650] sm:$0xff]
        %v3770 = vld [vmem:[#allocation2 + $0x658] sm:$0xff]
        %v3771 = vld [vmem:[#allocation2 + $0x660] sm:$0xff]
        %v3772 = vld [vmem:[#allocation2 + $0x668] sm:$0xff]
        %v3773 = vld [vmem:[#allocation2 + $0x670] sm:$0xff]
        %v3774 = vld [vmem:[#allocation2 + $0x678] sm:$0xff]
        %v3775 = vld [vmem:[#allocation2 + $0x680] sm:$0xff]
        %v3776 = vld [vmem:[#allocation2 + $0x688] sm:$0xff]
        %v3777 = vld [vmem:[#allocation2 + $0x690] sm:$0xff]
        %v3778 = vld [vmem:[#allocation2 + $0x698] sm:$0xff]
        %v3779 = vld [vmem:[#allocation2 + $0x6a0] sm:$0xff]
        %v3780 = vld [vmem:[#allocation2 + $0x6a8] sm:$0xff]
        %v3781 = vld [vmem:[#allocation2 + $0x6b0] sm:$0xff]
        %v3782 = vld [vmem:[#allocation2 + $0x6b8] sm:$0xff]
        %v3783 = vld [vmem:[#allocation2 + $0x6c0] sm:$0xff]
        %v3784 = vld [vmem:[#allocation2 + $0x6c8] sm:$0xff]
        %v3785 = vld [vmem:[#allocation2 + $0x6d0] sm:$0xff]
        %v3786 = vld [vmem:[#allocation2 + $0x6d8] sm:$0xff]
        %v3787 = vld [vmem:[#allocation2 + $0x6e0] sm:$0xff]
        %v3788 = vld [vmem:[#allocation2 + $0x6e8] sm:$0xff]
        %v3789 = vld [vmem:[#allocation2 + $0x6f0] sm:$0xff]
        %v3790 = vld [vmem:[#allocation2 + $0x6f8] sm:$0xff]
        %v3791 = vld [vmem:[#allocation2 + $0x700] sm:$0xff]
        %v3792 = vld [vmem:[#allocation2 + $0x708] sm:$0xff]
        %v3793 = vld [vmem:[#allocation2 + $0x710] sm:$0xff]
        %v3794 = vld [vmem:[#allocation2 + $0x718] sm:$0xff]
        %v3795 = vld [vmem:[#allocation2 + $0x720] sm:$0xff]
        %v3796 = vld [vmem:[#allocation2 + $0x728] sm:$0xff]
        %v3797 = vld [vmem:[#allocation2 + $0x730] sm:$0xff]
        %v3798 = vld [vmem:[#allocation2 + $0x738] sm:$0xff]
        %v3799 = vld [vmem:[#allocation2 + $0x740] sm:$0xff]
        %v3800 = vld [vmem:[#allocation2 + $0x748] sm:$0xff]
        %v3801 = vld [vmem:[#allocation2 + $0x750] sm:$0xff]
        %v3802 = vld [vmem:[#allocation2 + $0x758] sm:$0xff]
        %v3803 = vld [vmem:[#allocation2 + $0x760] sm:$0xff]
        %v3804 = vld [vmem:[#allocation2 + $0x768] sm:$0xff]
        %v3805 = vld [vmem:[#allocation2 + $0x770] sm:$0xff]
        %v3806 = vld [vmem:[#allocation2 + $0x778] sm:$0xff]
        %v3807 = vld [vmem:[#allocation2 + $0x780] sm:$0xff]
        %v3808 = vld [vmem:[#allocation2 + $0x788] sm:$0xff]
        %v3809 = vld [vmem:[#allocation2 + $0x790] sm:$0xff]
        %v3810 = vld [vmem:[#allocation2 + $0x798] sm:$0xff]
        %v3811 = vld [vmem:[#allocation2 + $0x7a0] sm:$0xff]
        %v3812 = vld [vmem:[#allocation2 + $0x7a8] sm:$0xff]
        %v3813 = vld [vmem:[#allocation2 + $0x7b0] sm:$0xff]
        %v3814 = vld [vmem:[#allocation2 + $0x7b8] sm:$0xff]
        %v3815 = vld [vmem:[#allocation2 + $0x7c0] sm:$0xff]
        %v3816 = vld [vmem:[#allocation2 + $0x7c8] sm:$0xff]
        %v3817 = vld [vmem:[#allocation2 + $0x7d0] sm:$0xff]
        %v3818 = vld [vmem:[#allocation2 + $0x7d8] sm:$0xff]
        %v3819 = vld [vmem:[#allocation2 + $0x7e0] sm:$0xff]
        %v3820 = vld [vmem:[#allocation2 + $0x7e8] sm:$0xff]
        %v3821 = vld [vmem:[#allocation2 + $0x7f0] sm:$0xff]
        %v3822 = vld [vmem:[#allocation2 + $0x7f8] sm:$0xff]
        %v3823 = vld [vmem:[#allocation2 + $0x800] sm:$0xff]
        %v3824 = vld [vmem:[#allocation2 + $0x808] sm:$0xff]
        %v3825 = vld [vmem:[#allocation2 + $0x810] sm:$0xff]
        %v3826 = vld [vmem:[#allocation2 + $0x818] sm:$0xff]
        %v3827 = vld [vmem:[#allocation2 + $0x820] sm:$0xff]
        %v3828 = vld [vmem:[#allocation2 + $0x828] sm:$0xff]
        %v3829 = vld [vmem:[#allocation2 + $0x830] sm:$0xff]
        %v3830 = vld [vmem:[#allocation2 + $0x838] sm:$0xff]
        %v3831 = vld [vmem:[#allocation2 + $0x840] sm:$0xff]
        %v3832 = vld [vmem:[#allocation2 + $0x848] sm:$0xff]
        %v3833 = vld [vmem:[#allocation2 + $0x850] sm:$0xff]
        %v3834 = vld [vmem:[#allocation2 + $0x858] sm:$0xff]
        %v3835 = vld [vmem:[#allocation2 + $0x860] sm:$0xff]
        %v3836 = vld [vmem:[#allocation2 + $0x868] sm:$0xff]
        %v3837 = vld [vmem:[#allocation2 + $0x870] sm:$0xff]
        %v3838 = vld [vmem:[#allocation2 + $0x878] sm:$0xff]
        %v3839 = vld [vmem:[#allocation2 + $0x880] sm:$0xff]
        %v3840 = vld [vmem:[#allocation2 + $0x888] sm:$0xff]
        %v3841 = vld [vmem:[#allocation2 + $0x890] sm:$0xff]
        %v3842 = vld [vmem:[#allocation2 + $0x898] sm:$0xff]
        %v3843 = vld [vmem:[#allocation2 + $0x8a0] sm:$0xff]
        %v3844 = vld [vmem:[#allocation2 + $0x8a8] sm:$0xff]
        %v3845 = vld [vmem:[#allocation2 + $0x8b0] sm:$0xff]
        %v3846 = vld [vmem:[#allocation2 + $0x8b8] sm:$0xff]
        %v3847 = vld [vmem:[#allocation2 + $0x8c0] sm:$0xff]
        %v3848 = vld [vmem:[#allocation2 + $0x8c8] sm:$0xff]
        %v3849 = vld [vmem:[#allocation2 + $0x8d0] sm:$0xff]
        %v3850 = vld [vmem:[#allocation2 + $0x8d8] sm:$0xff]
        %v3851 = vld [vmem:[#allocation2 + $0x8e0] sm:$0xff]
        %v3852 = vld [vmem:[#allocation2 + $0x8e8] sm:$0xff]
        %v3853 = vld [vmem:[#allocation2 + $0x8f0] sm:$0xff]
        %v3854 = vld [vmem:[#allocation2 + $0x8f8] sm:$0xff]
        %v3855 = vld [vmem:[#allocation2 + $0x900] sm:$0xff]
        %v3856 = vld [vmem:[#allocation2 + $0x908] sm:$0xff]
        %v3857 = vld [vmem:[#allocation2 + $0x910] sm:$0xff]
        %v3858 = vld [vmem:[#allocation2 + $0x918] sm:$0xff]
        %v3859 = vld [vmem:[#allocation2 + $0x920] sm:$0xff]
        %v3860 = vld [vmem:[#allocation2 + $0x928] sm:$0xff]
        %v3861 = vld [vmem:[#allocation2 + $0x930] sm:$0xff]
        %v3862 = vld [vmem:[#allocation2 + $0x938] sm:$0xff]
        %v3863 = vld [vmem:[#allocation2 + $0x940] sm:$0xff]
        %v3864 = vld [vmem:[#allocation2 + $0x948] sm:$0xff]
        %v3865 = vld [vmem:[#allocation2 + $0x950] sm:$0xff]
        %v3866 = vld [vmem:[#allocation2 + $0x958] sm:$0xff]
        %v3867 = vld [vmem:[#allocation2 + $0x960] sm:$0xff]
        %v3868 = vld [vmem:[#allocation2 + $0x968] sm:$0xff]
        %v3869 = vld [vmem:[#allocation2 + $0x970] sm:$0xff]
        %v3870 = vld [vmem:[#allocation2 + $0x978] sm:$0xff]
        %v3871 = vld [vmem:[#allocation2 + $0x980] sm:$0xff]
        %v3872 = vld [vmem:[#allocation2 + $0x988] sm:$0xff]
        %v3873 = vld [vmem:[#allocation2 + $0x990] sm:$0xff]
        %v3874 = vld [vmem:[#allocation2 + $0x998] sm:$0xff]
        %v3875 = vld [vmem:[#allocation2 + $0x9a0] sm:$0xff]
        %v3876 = vld [vmem:[#allocation2 + $0x9a8] sm:$0xff]
        %v3877 = vld [vmem:[#allocation2 + $0x9b0] sm:$0xff]
        %v3878 = vld [vmem:[#allocation2 + $0x9b8] sm:$0xff]
        %v3879 = vld [vmem:[#allocation2 + $0x9c0] sm:$0xff]
        %v3880 = vld [vmem:[#allocation2 + $0x9c8] sm:$0xff]
        %v3881 = vld [vmem:[#allocation2 + $0x9d0] sm:$0xff]
        %v3882 = vld [vmem:[#allocation2 + $0x9d8] sm:$0xff]
        %v3883 = vld [vmem:[#allocation2 + $0x9e0] sm:$0xff]
        %v3884 = vld [vmem:[#allocation2 + $0x9e8] sm:$0xff]
        %v3885 = vld [vmem:[#allocation2 + $0x9f0] sm:$0xff]
        %v3886 = vld [vmem:[#allocation2 + $0x9f8] sm:$0xff]
        %v3887 = vld [vmem:[#allocation2 + $0xa00] sm:$0xff]
        %v3888 = vld [vmem:[#allocation2 + $0xa08] sm:$0xff]
        %v3889 = vld [vmem:[#allocation2 + $0xa10] sm:$0xff]
        %v3890 = vld [vmem:[#allocation2 + $0xa18] sm:$0xff]
        %v3891 = vld [vmem:[#allocation9] sm:$0xff]
        %v3892 = vld [vmem:[#allocation9 + $0x8] sm:$0xff]
        %v3893 = vld [vmem:[#allocation9 + $0x10] sm:$0xff]
        %v3894 = vld [vmem:[#allocation9 + $0x18] sm:$0xff]
        %v3895 = vld [vmem:[#allocation9 + $0x20] sm:$0xff]
        %v3896 = vld [vmem:[#allocation9 + $0x28] sm:$0xff]
        %v3897 = vld [vmem:[#allocation9 + $0x30] sm:$0xff]
        %v3898 = vld [vmem:[#allocation9 + $0x38] sm:$0xff]
        %v3899 = vld [vmem:[#allocation9 + $0x40] sm:$0xff]
        %v3900 = vld [vmem:[#allocation9 + $0x48] sm:$0xff]
        %v3901 = vld [vmem:[#allocation9 + $0x50] sm:$0xff]
        %v3902 = vld [vmem:[#allocation9 + $0x58] sm:$0xff]
        %v3903 = vld [vmem:[#allocation9 + $0x60] sm:$0xff]
        %v3904 = vld [vmem:[#allocation9 + $0x68] sm:$0xff]
        %v3905 = vld [vmem:[#allocation9 + $0x70] sm:$0xff]
        %v3906 = vld [vmem:[#allocation9 + $0x78] sm:$0xff]
        %v3907 = vld [vmem:[#allocation9 + $0x80] sm:$0xff]
        %v3908 = vld [vmem:[#allocation9 + $0x88] sm:$0xff]
        %v3909 = vld [vmem:[#allocation9 + $0x90] sm:$0xff]
        %v3910 = vld [vmem:[#allocation9 + $0x98] sm:$0xff]
        %v3911 = vld [vmem:[#allocation9 + $0xa0] sm:$0xff]
        %v3912 = vld [vmem:[#allocation9 + $0xa8] sm:$0xff]
        %v3913 = vld [vmem:[#allocation9 + $0xb0] sm:$0xff]
        %v3914 = vld [vmem:[#allocation9 + $0xb8] sm:$0xff]
        %v3915 = vld [vmem:[#allocation9 + $0xc0] sm:$0xff]
        %v3916 = vld [vmem:[#allocation9 + $0xc8] sm:$0xff]
        %v3917 = vld [vmem:[#allocation9 + $0xd0] sm:$0xff]
        %v3918 = vld [vmem:[#allocation9 + $0xd8] sm:$0xff]
        %v3919 = vld [vmem:[#allocation9 + $0xe0] sm:$0xff]
        %v3920 = vld [vmem:[#allocation9 + $0xe8] sm:$0xff]
        %v3921 = vld [vmem:[#allocation9 + $0xf0] sm:$0xff]
        %v3922 = vld [vmem:[#allocation9 + $0xf8] sm:$0xff]
        %v3923 = vld [vmem:[#allocation9 + $0x100] sm:$0xff]
        %v3924 = vld [vmem:[#allocation9 + $0x108] sm:$0xff]
        %v3925 = vld [vmem:[#allocation9 + $0x110] sm:$0xff]
        %v3926 = vld [vmem:[#allocation9 + $0x118] sm:$0xff]
        %v3927 = vld [vmem:[#allocation9 + $0x120] sm:$0xff]
        %v3928 = vld [vmem:[#allocation9 + $0x128] sm:$0xff]
        %v3929 = vld [vmem:[#allocation9 + $0x130] sm:$0xff]
        %v3930 = vld [vmem:[#allocation9 + $0x138] sm:$0xff]
        %v3931 = vld [vmem:[#allocation9 + $0x140] sm:$0xff]
        %v3932 = vld [vmem:[#allocation9 + $0x148] sm:$0xff]
        %v3933 = vld [vmem:[#allocation9 + $0x150] sm:$0xff]
        %v3934 = vld [vmem:[#allocation9 + $0x158] sm:$0xff]
        %v3935 = vld [vmem:[#allocation9 + $0x160] sm:$0xff]
        %v3936 = vld [vmem:[#allocation9 + $0x168] sm:$0xff]
        %v3937 = vld [vmem:[#allocation9 + $0x170] sm:$0xff]
        %v3938 = vld [vmem:[#allocation9 + $0x178] sm:$0xff]
        %v3939 = vld [vmem:[#allocation9 + $0x180] sm:$0xff]
        %v3940 = vld [vmem:[#allocation9 + $0x188] sm:$0xff]
        %v3941 = vld [vmem:[#allocation9 + $0x190] sm:$0xff]
        %v3942 = vld [vmem:[#allocation9 + $0x198] sm:$0xff]
        %v3943 = vld [vmem:[#allocation9 + $0x1a0] sm:$0xff]
        %v3944 = vld [vmem:[#allocation9 + $0x1a8] sm:$0xff]
        %v3945 = vld [vmem:[#allocation9 + $0x1b0] sm:$0xff]
        %v3946 = vld [vmem:[#allocation9 + $0x1b8] sm:$0xff]
        %v3947 = vld [vmem:[#allocation9 + $0x1c0] sm:$0xff]
        %v3948 = vld [vmem:[#allocation9 + $0x1c8] sm:$0xff]
        %v3949 = vld [vmem:[#allocation9 + $0x1d0] sm:$0xff]
        %v3950 = vld [vmem:[#allocation9 + $0x1d8] sm:$0xff]
        %v3951 = vld [vmem:[#allocation9 + $0x1e0] sm:$0xff]
        %v3952 = vld [vmem:[#allocation9 + $0x1e8] sm:$0xff]
        %v3953 = vld [vmem:[#allocation9 + $0x1f0] sm:$0xff]
        %v3954 = vld [vmem:[#allocation9 + $0x1f8] sm:$0xff]
        %v3955 = vld [vmem:[#allocation9 + $0x200] sm:$0xff]
        %v3956 = vld [vmem:[#allocation9 + $0x208] sm:$0xff]
        %v3957 = vld [vmem:[#allocation9 + $0x210] sm:$0xff]
        %v3958 = vld [vmem:[#allocation9 + $0x218] sm:$0xff]
        %v3959 = vld [vmem:[#allocation9 + $0x220] sm:$0xff]
        %v3960 = vld [vmem:[#allocation9 + $0x228] sm:$0xff]
        %v3961 = vld [vmem:[#allocation9 + $0x230] sm:$0xff]
        %v3962 = vld [vmem:[#allocation9 + $0x238] sm:$0xff]
        %v3963 = vld [vmem:[#allocation9 + $0x240] sm:$0xff]
        %v3964 = vld [vmem:[#allocation9 + $0x248] sm:$0xff]
        %v3965 = vld [vmem:[#allocation9 + $0x250] sm:$0xff]
        %v3966 = vld [vmem:[#allocation9 + $0x258] sm:$0xff]
        %v3967 = vld [vmem:[#allocation9 + $0x260] sm:$0xff]
        %v3968 = vld [vmem:[#allocation9 + $0x268] sm:$0xff]
        %v3969 = vld [vmem:[#allocation9 + $0x270] sm:$0xff]
        %v3970 = vld [vmem:[#allocation9 + $0x278] sm:$0xff]
        %v3971 = vld [vmem:[#allocation9 + $0x280] sm:$0xff]
        %v3972 = vld [vmem:[#allocation9 + $0x288] sm:$0xff]
        %v3973 = vld [vmem:[#allocation9 + $0x290] sm:$0xff]
        %v3974 = vld [vmem:[#allocation9 + $0x298] sm:$0xff]
        %v3975 = vld [vmem:[#allocation9 + $0x2a0] sm:$0xff]
        %v3976 = vld [vmem:[#allocation9 + $0x2a8] sm:$0xff]
        %v3977 = vld [vmem:[#allocation9 + $0x2b0] sm:$0xff]
        %v3978 = vld [vmem:[#allocation9 + $0x2b8] sm:$0xff]
        %v3979 = vld [vmem:[#allocation9 + $0x2c0] sm:$0xff]
        %v3980 = vld [vmem:[#allocation9 + $0x2c8] sm:$0xff]
        %v3981 = vld [vmem:[#allocation9 + $0x2d0] sm:$0xff]
        %v3982 = vld [vmem:[#allocation9 + $0x2d8] sm:$0xff]
        %v3983 = vld [vmem:[#allocation9 + $0x2e0] sm:$0xff]
        %v3984 = vld [vmem:[#allocation9 + $0x2e8] sm:$0xff]
        %v3985 = vld [vmem:[#allocation9 + $0x2f0] sm:$0xff]
        %v3986 = vld [vmem:[#allocation9 + $0x2f8] sm:$0xff]
        %v3987 = vld [vmem:[#allocation9 + $0x300] sm:$0xff]
        %v3988 = vld [vmem:[#allocation9 + $0x308] sm:$0xff]
        %v3989 = vld [vmem:[#allocation9 + $0x310] sm:$0xff]
        %v3990 = vld [vmem:[#allocation9 + $0x318] sm:$0xff]
        %v3991 = vld [vmem:[#allocation9 + $0x320] sm:$0xff]
        %v3992 = vld [vmem:[#allocation9 + $0x328] sm:$0xff]
        %v3993 = vld [vmem:[#allocation9 + $0x330] sm:$0xff]
        %v3994 = vld [vmem:[#allocation9 + $0x338] sm:$0xff]
        %v3995 = vld [vmem:[#allocation9 + $0x340] sm:$0xff]
        %v3996 = vld [vmem:[#allocation9 + $0x348] sm:$0xff]
        %v3997 = vld [vmem:[#allocation9 + $0x350] sm:$0xff]
        %v3998 = vld [vmem:[#allocation9 + $0x358] sm:$0xff]
        %v3999 = vld [vmem:[#allocation9 + $0x360] sm:$0xff]
        %v4000 = vld [vmem:[#allocation9 + $0x368] sm:$0xff]
        %v4001 = vld [vmem:[#allocation9 + $0x370] sm:$0xff]
        %v4002 = vld [vmem:[#allocation9 + $0x378] sm:$0xff]
        %v4003 = vld [vmem:[#allocation9 + $0x380] sm:$0xff]
        %v4004 = vld [vmem:[#allocation9 + $0x388] sm:$0xff]
        %v4005 = vld [vmem:[#allocation9 + $0x390] sm:$0xff]
        %v4006 = vld [vmem:[#allocation9 + $0x398] sm:$0xff]
        %v4007 = vld [vmem:[#allocation9 + $0x3a0] sm:$0xff]
        %v4008 = vld [vmem:[#allocation9 + $0x3a8] sm:$0xff]
        %v4009 = vld [vmem:[#allocation9 + $0x3b0] sm:$0xff]
        %v4010 = vld [vmem:[#allocation9 + $0x3b8] sm:$0xff]
        %v4011 = vld [vmem:[#allocation9 + $0x3c0] sm:$0xff]
        %v4012 = vld [vmem:[#allocation9 + $0x3c8] sm:$0xff]
        %v4013 = vld [vmem:[#allocation9 + $0x3d0] sm:$0xff]
        %v4014 = vld [vmem:[#allocation9 + $0x3d8] sm:$0xff]
        %v4015 = vld [vmem:[#allocation9 + $0x3e0] sm:$0xff]
        %v4016 = vld [vmem:[#allocation9 + $0x3e8] sm:$0xff]
        %v4017 = vld [vmem:[#allocation9 + $0x3f0] sm:$0xff]
        %v4018 = vld [vmem:[#allocation9 + $0x3f8] sm:$0xff]
        %v4019 = vld [vmem:[#allocation9 + $0x400] sm:$0xff]
        %v4020 = vld [vmem:[#allocation9 + $0x408] sm:$0xff]
        %v4021 = vld [vmem:[#allocation9 + $0x410] sm:$0xff]
        %v4022 = vld [vmem:[#allocation9 + $0x418] sm:$0xff]
        %v4023 = vld [vmem:[#allocation9 + $0x420] sm:$0xff]
        %v4024 = vld [vmem:[#allocation9 + $0x428] sm:$0xff]
        %v4025 = vld [vmem:[#allocation9 + $0x430] sm:$0xff]
        %v4026 = vld [vmem:[#allocation9 + $0x438] sm:$0xff]
        %v4027 = vld [vmem:[#allocation9 + $0x440] sm:$0xff]
        %v4028 = vld [vmem:[#allocation9 + $0x448] sm:$0xff]
        %v4029 = vld [vmem:[#allocation9 + $0x450] sm:$0xff]
        %v4030 = vld [vmem:[#allocation9 + $0x458] sm:$0xff]
        %v4031 = vld [vmem:[#allocation9 + $0x460] sm:$0xff]
        %v4032 = vld [vmem:[#allocation9 + $0x468] sm:$0xff]
        %v4033 = vld [vmem:[#allocation9 + $0x470] sm:$0xff]
        %v4034 = vld [vmem:[#allocation9 + $0x478] sm:$0xff]
        %v4035 = vld [vmem:[%s4] sm:$0x1]
        %v4037 = vperm.slane %v4035, 0
        %4039 = vmatpush.msra.mxu0 %v3906
        %4040 = vmatpush.msra.mxu0 %v3905
        %4041 = vmatpush.msra.mxu0 %v3904
        %4042 = vmatpush.msra.mxu0 %v3903
        %4043 = vmatpush.msra.mxu0 %v3902
        %4044 = vmatpush.msra.mxu0 %v3901
        %4045 = vmatpush.msra.mxu0 %v3900
        %4046 = vmatpush.msra.mxu0 %v3899
        %4047 = vmatpush.msra.mxu0 %v3898
        %4048 = vmatpush.msra.mxu0 %v3897
        %4049 = vmatpush.msra.mxu0 %v3896
        %4050 = vmatpush.msra.mxu0 %v3895
        %4051 = vmatpush.msra.mxu0 %v3894
        %4052 = vmatpush.msra.mxu0 %v3893
        %4053 = vmatpush.msra.mxu0 %v3892
        %4054 = vmatpush.msra.mxu0 %v3891
        %4055 = vmatmul.f32.gmra.mxu0 %v3567
        %v4056 = vpop.f32.mrf.mxu0
        %v4057 = vadd.f32 %v4037, %v4056
        %4058 = vmatmul.f32.gmra.mxu0 %v3576
        %v4059 = vpop.f32.mrf.mxu0
        %v4060 = vadd.f32 %v4037, %v4059
        %4061 = vmatmul.f32.gmra.mxu0 %v3585
        %v4062 = vpop.f32.mrf.mxu0
        %v4063 = vadd.f32 %v4037, %v4062
        %4064 = vmatmul.f32.gmra.mxu0 %v3594
        %v4065 = vpop.f32.mrf.mxu0
        %v4066 = vadd.f32 %v4037, %v4065
        %4067 = vmatmul.f32.gmra.mxu0 %v3603
        %v4068 = vpop.f32.mrf.mxu0
        %v4069 = vadd.f32 %v4037, %v4068
        %4070 = vmatmul.f32.gmra.mxu0 %v3612
        %v4071 = vpop.f32.mrf.mxu0
        %v4072 = vadd.f32 %v4037, %v4071
        %4073 = vmatmul.f32.gmra.mxu0 %v3621
        %v4074 = vpop.f32.mrf.mxu0
        %v4075 = vadd.f32 %v4037, %v4074
        %4076 = vmatmul.f32.gmra.mxu0 %v3630
        %v4077 = vpop.f32.mrf.mxu0
        %v4078 = vadd.f32 %v4037, %v4077
        %4079 = vmatmul.f32.gmra.mxu0 %v3639
        %v4080 = vpop.f32.mrf.mxu0
        %v4081 = vadd.f32 %v4037, %v4080
        %4082 = vmatmul.f32.gmra.mxu0 %v3648
        %v4083 = vpop.f32.mrf.mxu0
        %v4084 = vadd.f32 %v4037, %v4083
        %4085 = vmatmul.f32.gmra.mxu0 %v3657
        %v4086 = vpop.f32.mrf.mxu0
        %v4087 = vadd.f32 %v4037, %v4086
        %4088 = vmatmul.f32.gmra.mxu0 %v3666
        %v4089 = vpop.f32.mrf.mxu0
        %v4090 = vadd.f32 %v4037, %v4089
        %4091 = vmatmul.f32.gmra.mxu0 %v3675
        %v4092 = vpop.f32.mrf.mxu0
        %v4093 = vadd.f32 %v4037, %v4092
        %4094 = vmatmul.f32.gmra.mxu0 %v3684
        %v4095 = vpop.f32.mrf.mxu0
        %v4096 = vadd.f32 %v4037, %v4095
        %4097 = vmatmul.f32.gmra.mxu0 %v3693
        %v4098 = vpop.f32.mrf.mxu0
        %v4099 = vadd.f32 %v4037, %v4098
        %4100 = vmatmul.f32.gmra.mxu0 %v3702
        %v4101 = vpop.f32.mrf.mxu0
        %v4102 = vadd.f32 %v4037, %v4101
        %4103 = vmatmul.f32.gmra.mxu0 %v3711
        %v4104 = vpop.f32.mrf.mxu0
        %v4105 = vadd.f32 %v4037, %v4104
        %4106 = vmatmul.f32.gmra.mxu0 %v3720
        %v4107 = vpop.f32.mrf.mxu0
        %v4108 = vadd.f32 %v4037, %v4107
        %4109 = vmatmul.f32.gmra.mxu0 %v3729
        %v4110 = vpop.f32.mrf.mxu0
        %v4111 = vadd.f32 %v4037, %v4110
        %4112 = vmatmul.f32.gmra.mxu0 %v3738
        %v4113 = vpop.f32.mrf.mxu0
        %v4114 = vadd.f32 %v4037, %v4113
        %4115 = vmatmul.f32.gmra.mxu0 %v3747
        %v4116 = vpop.f32.mrf.mxu0
        %v4117 = vadd.f32 %v4037, %v4116
        %4118 = vmatmul.f32.gmra.mxu0 %v3756
        %v4119 = vpop.f32.mrf.mxu0
        %v4120 = vadd.f32 %v4037, %v4119
        %4121 = vmatmul.f32.gmra.mxu0 %v3765
        %v4122 = vpop.f32.mrf.mxu0
        %v4123 = vadd.f32 %v4037, %v4122
        %4124 = vmatmul.f32.gmra.mxu0 %v3774
        %v4125 = vpop.f32.mrf.mxu0
        %v4126 = vadd.f32 %v4037, %v4125
        %4127 = vmatmul.f32.gmra.mxu0 %v3783
        %v4128 = vpop.f32.mrf.mxu0
        %v4129 = vadd.f32 %v4037, %v4128
        %4130 = vmatmul.f32.gmra.mxu0 %v3792
        %v4131 = vpop.f32.mrf.mxu0
        %v4132 = vadd.f32 %v4037, %v4131
        %4133 = vmatmul.f32.gmra.mxu0 %v3801
        %v4134 = vpop.f32.mrf.mxu0
        %v4135 = vadd.f32 %v4037, %v4134
        %4136 = vmatmul.f32.gmra.mxu0 %v3810
        %v4137 = vpop.f32.mrf.mxu0
        %v4138 = vadd.f32 %v4037, %v4137
        %4139 = vmatmul.f32.gmra.mxu0 %v3819
        %v4140 = vpop.f32.mrf.mxu0
        %v4141 = vadd.f32 %v4037, %v4140
        %4142 = vmatmul.f32.gmra.mxu0 %v3828
        %v4143 = vpop.f32.mrf.mxu0
        %v4144 = vadd.f32 %v4037, %v4143
        %4145 = vmatmul.f32.gmra.mxu0 %v3837
        %v4146 = vpop.f32.mrf.mxu0
        %v4147 = vadd.f32 %v4037, %v4146
        %4148 = vmatmul.f32.gmra.mxu0 %v3846
        %v4149 = vpop.f32.mrf.mxu0
        %v4150 = vadd.f32 %v4037, %v4149
        %4151 = vmatmul.f32.gmra.mxu0 %v3855
        %v4152 = vpop.f32.mrf.mxu0
        %v4153 = vadd.f32 %v4037, %v4152
        %4154 = vmatmul.f32.gmra.mxu0 %v3864
        %v4155 = vpop.f32.mrf.mxu0
        %v4156 = vadd.f32 %v4037, %v4155
        %4157 = vmatmul.f32.gmra.mxu0 %v3873
        %v4158 = vpop.f32.mrf.mxu0
        %v4159 = vadd.f32 %v4037, %v4158
        %4160 = vmatmul.f32.gmra.mxu0 %v3882
        %v4161 = vpop.f32.mrf.mxu0
        %v4162 = vadd.f32 %v4037, %v4161
        %4163 = vdwg.mxu0
        %4164 = vmatpush.msra.mxu0 %v3922
        %4165 = vmatpush.msra.mxu0 %v3921
        %4166 = vmatpush.msra.mxu0 %v3920
        %4167 = vmatpush.msra.mxu0 %v3919
        %4168 = vmatpush.msra.mxu0 %v3918
        %4169 = vmatpush.msra.mxu0 %v3917
        %4170 = vmatpush.msra.mxu0 %v3916
        %4171 = vmatpush.msra.mxu0 %v3915
        %4172 = vmatpush.msra.mxu0 %v3914
        %4173 = vmatpush.msra.mxu0 %v3913
        %4174 = vmatpush.msra.mxu0 %v3912
        %4175 = vmatpush.msra.mxu0 %v3911
        %4176 = vmatpush.msra.mxu0 %v3910
        %4177 = vmatpush.msra.mxu0 %v3909
        %4178 = vmatpush.msra.mxu0 %v3908
        %4179 = vmatpush.msra.mxu0 %v3907
        %4180 = vmatmul.f32.gmra.mxu0 %v3568
        %v4181 = vpop.f32.mrf.mxu0
        %v4182 = vadd.f32 %v4057, %v4181
        %4183 = vmatmul.f32.gmra.mxu0 %v3577
        %v4184 = vpop.f32.mrf.mxu0
        %v4185 = vadd.f32 %v4060, %v4184
        %4186 = vmatmul.f32.gmra.mxu0 %v3586
        %v4187 = vpop.f32.mrf.mxu0
        %v4188 = vadd.f32 %v4063, %v4187
        %4189 = vmatmul.f32.gmra.mxu0 %v3595
        %v4190 = vpop.f32.mrf.mxu0
        %v4191 = vadd.f32 %v4066, %v4190
        %4192 = vmatmul.f32.gmra.mxu0 %v3604
        %v4193 = vpop.f32.mrf.mxu0
        %v4194 = vadd.f32 %v4069, %v4193
        %4195 = vmatmul.f32.gmra.mxu0 %v3613
        %v4196 = vpop.f32.mrf.mxu0
        %v4197 = vadd.f32 %v4072, %v4196
        %4198 = vmatmul.f32.gmra.mxu0 %v3622
        %v4199 = vpop.f32.mrf.mxu0
        %v4200 = vadd.f32 %v4075, %v4199
        %4201 = vmatmul.f32.gmra.mxu0 %v3631
        %v4202 = vpop.f32.mrf.mxu0
        %v4203 = vadd.f32 %v4078, %v4202
        %4204 = vmatmul.f32.gmra.mxu0 %v3640
        %v4205 = vpop.f32.mrf.mxu0
        %v4206 = vadd.f32 %v4081, %v4205
        %4207 = vmatmul.f32.gmra.mxu0 %v3649
        %v4208 = vpop.f32.mrf.mxu0
        %v4209 = vadd.f32 %v4084, %v4208
        %4210 = vmatmul.f32.gmra.mxu0 %v3658
        %v4211 = vpop.f32.mrf.mxu0
        %v4212 = vadd.f32 %v4087, %v4211
        %4213 = vmatmul.f32.gmra.mxu0 %v3667
        %v4214 = vpop.f32.mrf.mxu0
        %v4215 = vadd.f32 %v4090, %v4214
        %4216 = vmatmul.f32.gmra.mxu0 %v3676
        %v4217 = vpop.f32.mrf.mxu0
        %v4218 = vadd.f32 %v4093, %v4217
        %4219 = vmatmul.f32.gmra.mxu0 %v3685
        %v4220 = vpop.f32.mrf.mxu0
        %v4221 = vadd.f32 %v4096, %v4220
        %4222 = vmatmul.f32.gmra.mxu0 %v3694
        %v4223 = vpop.f32.mrf.mxu0
        %v4224 = vadd.f32 %v4099, %v4223
        %4225 = vmatmul.f32.gmra.mxu0 %v3703
        %v4226 = vpop.f32.mrf.mxu0
        %v4227 = vadd.f32 %v4102, %v4226
        %4228 = vmatmul.f32.gmra.mxu0 %v3712
        %v4229 = vpop.f32.mrf.mxu0
        %v4230 = vadd.f32 %v4105, %v4229
        %4231 = vmatmul.f32.gmra.mxu0 %v3721
        %v4232 = vpop.f32.mrf.mxu0
        %v4233 = vadd.f32 %v4108, %v4232
        %4234 = vmatmul.f32.gmra.mxu0 %v3730
        %v4235 = vpop.f32.mrf.mxu0
        %v4236 = vadd.f32 %v4111, %v4235
        %4237 = vmatmul.f32.gmra.mxu0 %v3739
        %v4238 = vpop.f32.mrf.mxu0
        %v4239 = vadd.f32 %v4114, %v4238
        %4240 = vmatmul.f32.gmra.mxu0 %v3748
        %v4241 = vpop.f32.mrf.mxu0
        %v4242 = vadd.f32 %v4117, %v4241
        %4243 = vmatmul.f32.gmra.mxu0 %v3757
        %v4244 = vpop.f32.mrf.mxu0
        %v4245 = vadd.f32 %v4120, %v4244
        %4246 = vmatmul.f32.gmra.mxu0 %v3766
        %v4247 = vpop.f32.mrf.mxu0
        %v4248 = vadd.f32 %v4123, %v4247
        %4249 = vmatmul.f32.gmra.mxu0 %v3775
        %v4250 = vpop.f32.mrf.mxu0
        %v4251 = vadd.f32 %v4126, %v4250
        %4252 = vmatmul.f32.gmra.mxu0 %v3784
        %v4253 = vpop.f32.mrf.mxu0
        %v4254 = vadd.f32 %v4129, %v4253
        %4255 = vmatmul.f32.gmra.mxu0 %v3793
        %v4256 = vpop.f32.mrf.mxu0
        %v4257 = vadd.f32 %v4132, %v4256
        %4258 = vmatmul.f32.gmra.mxu0 %v3802
        %v4259 = vpop.f32.mrf.mxu0
        %v4260 = vadd.f32 %v4135, %v4259
        %4261 = vmatmul.f32.gmra.mxu0 %v3811
        %v4262 = vpop.f32.mrf.mxu0
        %v4263 = vadd.f32 %v4138, %v4262
        %4264 = vmatmul.f32.gmra.mxu0 %v3820
        %v4265 = vpop.f32.mrf.mxu0
        %v4266 = vadd.f32 %v4141, %v4265
        %4267 = vmatmul.f32.gmra.mxu0 %v3829
        %v4268 = vpop.f32.mrf.mxu0
        %v4269 = vadd.f32 %v4144, %v4268
        %4270 = vmatmul.f32.gmra.mxu0 %v3838
        %v4271 = vpop.f32.mrf.mxu0
        %v4272 = vadd.f32 %v4147, %v4271
        %4273 = vmatmul.f32.gmra.mxu0 %v3847
        %v4274 = vpop.f32.mrf.mxu0
        %v4275 = vadd.f32 %v4150, %v4274
        %4276 = vmatmul.f32.gmra.mxu0 %v3856
        %v4277 = vpop.f32.mrf.mxu0
        %v4278 = vadd.f32 %v4153, %v4277
        %4279 = vmatmul.f32.gmra.mxu0 %v3865
        %v4280 = vpop.f32.mrf.mxu0
        %v4281 = vadd.f32 %v4156, %v4280
        %4282 = vmatmul.f32.gmra.mxu0 %v3874
        %v4283 = vpop.f32.mrf.mxu0
        %v4284 = vadd.f32 %v4159, %v4283
        %4285 = vmatmul.f32.gmra.mxu0 %v3883
        %v4286 = vpop.f32.mrf.mxu0
        %v4287 = vadd.f32 %v4162, %v4286
        %4288 = vdwg.mxu0
        %4289 = vmatpush.msra.mxu0 %v3938
        %4290 = vmatpush.msra.mxu0 %v3937
        %4291 = vmatpush.msra.mxu0 %v3936
        %4292 = vmatpush.msra.mxu0 %v3935
        %4293 = vmatpush.msra.mxu0 %v3934
        %4294 = vmatpush.msra.mxu0 %v3933
        %4295 = vmatpush.msra.mxu0 %v3932
        %4296 = vmatpush.msra.mxu0 %v3931
        %4297 = vmatpush.msra.mxu0 %v3930
        %4298 = vmatpush.msra.mxu0 %v3929
        %4299 = vmatpush.msra.mxu0 %v3928
        %4300 = vmatpush.msra.mxu0 %v3927
        %4301 = vmatpush.msra.mxu0 %v3926
        %4302 = vmatpush.msra.mxu0 %v3925
        %4303 = vmatpush.msra.mxu0 %v3924
        %4304 = vmatpush.msra.mxu0 %v3923
        %4305 = vmatmul.f32.gmra.mxu0 %v3569
        %v4306 = vpop.f32.mrf.mxu0
        %v4307 = vadd.f32 %v4182, %v4306
        %4308 = vmatmul.f32.gmra.mxu0 %v3578
        %v4309 = vpop.f32.mrf.mxu0
        %v4310 = vadd.f32 %v4185, %v4309
        %4311 = vmatmul.f32.gmra.mxu0 %v3587
        %v4312 = vpop.f32.mrf.mxu0
        %v4313 = vadd.f32 %v4188, %v4312
        %4314 = vmatmul.f32.gmra.mxu0 %v3596
        %v4315 = vpop.f32.mrf.mxu0
        %v4316 = vadd.f32 %v4191, %v4315
        %4317 = vmatmul.f32.gmra.mxu0 %v3605
        %v4318 = vpop.f32.mrf.mxu0
        %v4319 = vadd.f32 %v4194, %v4318
        %4320 = vmatmul.f32.gmra.mxu0 %v3614
        %v4321 = vpop.f32.mrf.mxu0
        %v4322 = vadd.f32 %v4197, %v4321
        %4323 = vmatmul.f32.gmra.mxu0 %v3623
        %v4324 = vpop.f32.mrf.mxu0
        %v4325 = vadd.f32 %v4200, %v4324
        %4326 = vmatmul.f32.gmra.mxu0 %v3632
        %v4327 = vpop.f32.mrf.mxu0
        %v4328 = vadd.f32 %v4203, %v4327
        %4329 = vmatmul.f32.gmra.mxu0 %v3641
        %v4330 = vpop.f32.mrf.mxu0
        %v4331 = vadd.f32 %v4206, %v4330
        %4332 = vmatmul.f32.gmra.mxu0 %v3650
        %v4333 = vpop.f32.mrf.mxu0
        %v4334 = vadd.f32 %v4209, %v4333
        %4335 = vmatmul.f32.gmra.mxu0 %v3659
        %v4336 = vpop.f32.mrf.mxu0
        %v4337 = vadd.f32 %v4212, %v4336
        %4338 = vmatmul.f32.gmra.mxu0 %v3668
        %v4339 = vpop.f32.mrf.mxu0
        %v4340 = vadd.f32 %v4215, %v4339
        %4341 = vmatmul.f32.gmra.mxu0 %v3677
        %v4342 = vpop.f32.mrf.mxu0
        %v4343 = vadd.f32 %v4218, %v4342
        %4344 = vmatmul.f32.gmra.mxu0 %v3686
        %v4345 = vpop.f32.mrf.mxu0
        %v4346 = vadd.f32 %v4221, %v4345
        %4347 = vmatmul.f32.gmra.mxu0 %v3695
        %v4348 = vpop.f32.mrf.mxu0
        %v4349 = vadd.f32 %v4224, %v4348
        %4350 = vmatmul.f32.gmra.mxu0 %v3704
        %v4351 = vpop.f32.mrf.mxu0
        %v4352 = vadd.f32 %v4227, %v4351
        %4353 = vmatmul.f32.gmra.mxu0 %v3713
        %v4354 = vpop.f32.mrf.mxu0
        %v4355 = vadd.f32 %v4230, %v4354
        %4356 = vmatmul.f32.gmra.mxu0 %v3722
        %v4357 = vpop.f32.mrf.mxu0
        %v4358 = vadd.f32 %v4233, %v4357
        %4359 = vmatmul.f32.gmra.mxu0 %v3731
        %v4360 = vpop.f32.mrf.mxu0
        %v4361 = vadd.f32 %v4236, %v4360
        %4362 = vmatmul.f32.gmra.mxu0 %v3740
        %v4363 = vpop.f32.mrf.mxu0
        %v4364 = vadd.f32 %v4239, %v4363
        %4365 = vmatmul.f32.gmra.mxu0 %v3749
        %v4366 = vpop.f32.mrf.mxu0
        %v4367 = vadd.f32 %v4242, %v4366
        %4368 = vmatmul.f32.gmra.mxu0 %v3758
        %v4369 = vpop.f32.mrf.mxu0
        %v4370 = vadd.f32 %v4245, %v4369
        %4371 = vmatmul.f32.gmra.mxu0 %v3767
        %v4372 = vpop.f32.mrf.mxu0
        %v4373 = vadd.f32 %v4248, %v4372
        %4374 = vmatmul.f32.gmra.mxu0 %v3776
        %v4375 = vpop.f32.mrf.mxu0
        %v4376 = vadd.f32 %v4251, %v4375
        %4377 = vmatmul.f32.gmra.mxu0 %v3785
        %v4378 = vpop.f32.mrf.mxu0
        %v4379 = vadd.f32 %v4254, %v4378
        %4380 = vmatmul.f32.gmra.mxu0 %v3794
        %v4381 = vpop.f32.mrf.mxu0
        %v4382 = vadd.f32 %v4257, %v4381
        %4383 = vmatmul.f32.gmra.mxu0 %v3803
        %v4384 = vpop.f32.mrf.mxu0
        %v4385 = vadd.f32 %v4260, %v4384
        %4386 = vmatmul.f32.gmra.mxu0 %v3812
        %v4387 = vpop.f32.mrf.mxu0
        %v4388 = vadd.f32 %v4263, %v4387
        %4389 = vmatmul.f32.gmra.mxu0 %v3821
        %v4390 = vpop.f32.mrf.mxu0
        %v4391 = vadd.f32 %v4266, %v4390
        %4392 = vmatmul.f32.gmra.mxu0 %v3830
        %v4393 = vpop.f32.mrf.mxu0
        %v4394 = vadd.f32 %v4269, %v4393
        %4395 = vmatmul.f32.gmra.mxu0 %v3839
        %v4396 = vpop.f32.mrf.mxu0
        %v4397 = vadd.f32 %v4272, %v4396
        %4398 = vmatmul.f32.gmra.mxu0 %v3848
        %v4399 = vpop.f32.mrf.mxu0
        %v4400 = vadd.f32 %v4275, %v4399
        %4401 = vmatmul.f32.gmra.mxu0 %v3857
        %v4402 = vpop.f32.mrf.mxu0
        %v4403 = vadd.f32 %v4278, %v4402
        %4404 = vmatmul.f32.gmra.mxu0 %v3866
        %v4405 = vpop.f32.mrf.mxu0
        %v4406 = vadd.f32 %v4281, %v4405
        %4407 = vmatmul.f32.gmra.mxu0 %v3875
        %v4408 = vpop.f32.mrf.mxu0
        %v4409 = vadd.f32 %v4284, %v4408
        %4410 = vmatmul.f32.gmra.mxu0 %v3884
        %v4411 = vpop.f32.mrf.mxu0
        %v4412 = vadd.f32 %v4287, %v4411
        %4413 = vdwg.mxu0
        %4414 = vmatpush.msra.mxu0 %v3954
        %4415 = vmatpush.msra.mxu0 %v3953
        %4416 = vmatpush.msra.mxu0 %v3952
        %4417 = vmatpush.msra.mxu0 %v3951
        %4418 = vmatpush.msra.mxu0 %v3950
        %4419 = vmatpush.msra.mxu0 %v3949
        %4420 = vmatpush.msra.mxu0 %v3948
        %4421 = vmatpush.msra.mxu0 %v3947
        %4422 = vmatpush.msra.mxu0 %v3946
        %4423 = vmatpush.msra.mxu0 %v3945
        %4424 = vmatpush.msra.mxu0 %v3944
        %4425 = vmatpush.msra.mxu0 %v3943
        %4426 = vmatpush.msra.mxu0 %v3942
        %4427 = vmatpush.msra.mxu0 %v3941
        %4428 = vmatpush.msra.mxu0 %v3940
        %4429 = vmatpush.msra.mxu0 %v3939
        %4430 = vmatmul.f32.gmra.mxu0 %v3570
        %v4431 = vpop.f32.mrf.mxu0
        %v4432 = vadd.f32 %v4307, %v4431
        %4433 = vmatmul.f32.gmra.mxu0 %v3579
        %v4434 = vpop.f32.mrf.mxu0
        %v4435 = vadd.f32 %v4310, %v4434
        %4436 = vmatmul.f32.gmra.mxu0 %v3588
        %v4437 = vpop.f32.mrf.mxu0
        %v4438 = vadd.f32 %v4313, %v4437
        %4439 = vmatmul.f32.gmra.mxu0 %v3597
        %v4440 = vpop.f32.mrf.mxu0
        %v4441 = vadd.f32 %v4316, %v4440
        %4442 = vmatmul.f32.gmra.mxu0 %v3606
        %v4443 = vpop.f32.mrf.mxu0
        %v4444 = vadd.f32 %v4319, %v4443
        %4445 = vmatmul.f32.gmra.mxu0 %v3615
        %v4446 = vpop.f32.mrf.mxu0
        %v4447 = vadd.f32 %v4322, %v4446
        %4448 = vmatmul.f32.gmra.mxu0 %v3624
        %v4449 = vpop.f32.mrf.mxu0
        %v4450 = vadd.f32 %v4325, %v4449
        %4451 = vmatmul.f32.gmra.mxu0 %v3633
        %v4452 = vpop.f32.mrf.mxu0
        %v4453 = vadd.f32 %v4328, %v4452
        %4454 = vmatmul.f32.gmra.mxu0 %v3642
        %v4455 = vpop.f32.mrf.mxu0
        %v4456 = vadd.f32 %v4331, %v4455
        %4457 = vmatmul.f32.gmra.mxu0 %v3651
        %v4458 = vpop.f32.mrf.mxu0
        %v4459 = vadd.f32 %v4334, %v4458
        %4460 = vmatmul.f32.gmra.mxu0 %v3660
        %v4461 = vpop.f32.mrf.mxu0
        %v4462 = vadd.f32 %v4337, %v4461
        %4463 = vmatmul.f32.gmra.mxu0 %v3669
        %v4464 = vpop.f32.mrf.mxu0
        %v4465 = vadd.f32 %v4340, %v4464
        %4466 = vmatmul.f32.gmra.mxu0 %v3678
        %v4467 = vpop.f32.mrf.mxu0
        %v4468 = vadd.f32 %v4343, %v4467
        %4469 = vmatmul.f32.gmra.mxu0 %v3687
        %v4470 = vpop.f32.mrf.mxu0
        %v4471 = vadd.f32 %v4346, %v4470
        %4472 = vmatmul.f32.gmra.mxu0 %v3696
        %v4473 = vpop.f32.mrf.mxu0
        %v4474 = vadd.f32 %v4349, %v4473
        %4475 = vmatmul.f32.gmra.mxu0 %v3705
        %v4476 = vpop.f32.mrf.mxu0
        %v4477 = vadd.f32 %v4352, %v4476
        %4478 = vmatmul.f32.gmra.mxu0 %v3714
        %v4479 = vpop.f32.mrf.mxu0
        %v4480 = vadd.f32 %v4355, %v4479
        %4481 = vmatmul.f32.gmra.mxu0 %v3723
        %v4482 = vpop.f32.mrf.mxu0
        %v4483 = vadd.f32 %v4358, %v4482
        %4484 = vmatmul.f32.gmra.mxu0 %v3732
        %v4485 = vpop.f32.mrf.mxu0
        %v4486 = vadd.f32 %v4361, %v4485
        %4487 = vmatmul.f32.gmra.mxu0 %v3741
        %v4488 = vpop.f32.mrf.mxu0
        %v4489 = vadd.f32 %v4364, %v4488
        %4490 = vmatmul.f32.gmra.mxu0 %v3750
        %v4491 = vpop.f32.mrf.mxu0
        %v4492 = vadd.f32 %v4367, %v4491
        %4493 = vmatmul.f32.gmra.mxu0 %v3759
        %v4494 = vpop.f32.mrf.mxu0
        %v4495 = vadd.f32 %v4370, %v4494
        %4496 = vmatmul.f32.gmra.mxu0 %v3768
        %v4497 = vpop.f32.mrf.mxu0
        %v4498 = vadd.f32 %v4373, %v4497
        %4499 = vmatmul.f32.gmra.mxu0 %v3777
        %v4500 = vpop.f32.mrf.mxu0
        %v4501 = vadd.f32 %v4376, %v4500
        %4502 = vmatmul.f32.gmra.mxu0 %v3786
        %v4503 = vpop.f32.mrf.mxu0
        %v4504 = vadd.f32 %v4379, %v4503
        %4505 = vmatmul.f32.gmra.mxu0 %v3795
        %v4506 = vpop.f32.mrf.mxu0
        %v4507 = vadd.f32 %v4382, %v4506
        %4508 = vmatmul.f32.gmra.mxu0 %v3804
        %v4509 = vpop.f32.mrf.mxu0
        %v4510 = vadd.f32 %v4385, %v4509
        %4511 = vmatmul.f32.gmra.mxu0 %v3813
        %v4512 = vpop.f32.mrf.mxu0
        %v4513 = vadd.f32 %v4388, %v4512
        %4514 = vmatmul.f32.gmra.mxu0 %v3822
        %v4515 = vpop.f32.mrf.mxu0
        %v4516 = vadd.f32 %v4391, %v4515
        %4517 = vmatmul.f32.gmra.mxu0 %v3831
        %v4518 = vpop.f32.mrf.mxu0
        %v4519 = vadd.f32 %v4394, %v4518
        %4520 = vmatmul.f32.gmra.mxu0 %v3840
        %v4521 = vpop.f32.mrf.mxu0
        %v4522 = vadd.f32 %v4397, %v4521
        %4523 = vmatmul.f32.gmra.mxu0 %v3849
        %v4524 = vpop.f32.mrf.mxu0
        %v4525 = vadd.f32 %v4400, %v4524
        %4526 = vmatmul.f32.gmra.mxu0 %v3858
        %v4527 = vpop.f32.mrf.mxu0
        %v4528 = vadd.f32 %v4403, %v4527
        %4529 = vmatmul.f32.gmra.mxu0 %v3867
        %v4530 = vpop.f32.mrf.mxu0
        %v4531 = vadd.f32 %v4406, %v4530
        %4532 = vmatmul.f32.gmra.mxu0 %v3876
        %v4533 = vpop.f32.mrf.mxu0
        %v4534 = vadd.f32 %v4409, %v4533
        %4535 = vmatmul.f32.gmra.mxu0 %v3885
        %v4536 = vpop.f32.mrf.mxu0
        %v4537 = vadd.f32 %v4412, %v4536
        %4538 = vdwg.mxu0
        %4539 = vmatpush.msra.mxu0 %v3970
        %4540 = vmatpush.msra.mxu0 %v3969
        %4541 = vmatpush.msra.mxu0 %v3968
        %4542 = vmatpush.msra.mxu0 %v3967
        %4543 = vmatpush.msra.mxu0 %v3966
        %4544 = vmatpush.msra.mxu0 %v3965
        %4545 = vmatpush.msra.mxu0 %v3964
        %4546 = vmatpush.msra.mxu0 %v3963
        %4547 = vmatpush.msra.mxu0 %v3962
        %4548 = vmatpush.msra.mxu0 %v3961
        %4549 = vmatpush.msra.mxu0 %v3960
        %4550 = vmatpush.msra.mxu0 %v3959
        %4551 = vmatpush.msra.mxu0 %v3958
        %4552 = vmatpush.msra.mxu0 %v3957
        %4553 = vmatpush.msra.mxu0 %v3956
        %4554 = vmatpush.msra.mxu0 %v3955
        %4555 = vmatmul.f32.gmra.mxu0 %v3571
        %v4556 = vpop.f32.mrf.mxu0
        %v4557 = vadd.f32 %v4432, %v4556
        %4558 = vmatmul.f32.gmra.mxu0 %v3580
        %v4559 = vpop.f32.mrf.mxu0
        %v4560 = vadd.f32 %v4435, %v4559
        %4561 = vmatmul.f32.gmra.mxu0 %v3589
        %v4562 = vpop.f32.mrf.mxu0
        %v4563 = vadd.f32 %v4438, %v4562
        %4564 = vmatmul.f32.gmra.mxu0 %v3598
        %v4565 = vpop.f32.mrf.mxu0
        %v4566 = vadd.f32 %v4441, %v4565
        %4567 = vmatmul.f32.gmra.mxu0 %v3607
        %v4568 = vpop.f32.mrf.mxu0
        %v4569 = vadd.f32 %v4444, %v4568
        %4570 = vmatmul.f32.gmra.mxu0 %v3616
        %v4571 = vpop.f32.mrf.mxu0
        %v4572 = vadd.f32 %v4447, %v4571
        %4573 = vmatmul.f32.gmra.mxu0 %v3625
        %v4574 = vpop.f32.mrf.mxu0
        %v4575 = vadd.f32 %v4450, %v4574
        %4576 = vmatmul.f32.gmra.mxu0 %v3634
        %v4577 = vpop.f32.mrf.mxu0
        %v4578 = vadd.f32 %v4453, %v4577
        %4579 = vmatmul.f32.gmra.mxu0 %v3643
        %v4580 = vpop.f32.mrf.mxu0
        %v4581 = vadd.f32 %v4456, %v4580
        %4582 = vmatmul.f32.gmra.mxu0 %v3652
        %v4583 = vpop.f32.mrf.mxu0
        %v4584 = vadd.f32 %v4459, %v4583
        %4585 = vmatmul.f32.gmra.mxu0 %v3661
        %v4586 = vpop.f32.mrf.mxu0
        %v4587 = vadd.f32 %v4462, %v4586
        %4588 = vmatmul.f32.gmra.mxu0 %v3670
        %v4589 = vpop.f32.mrf.mxu0
        %v4590 = vadd.f32 %v4465, %v4589
        %4591 = vmatmul.f32.gmra.mxu0 %v3679
        %v4592 = vpop.f32.mrf.mxu0
        %v4593 = vadd.f32 %v4468, %v4592
        %4594 = vmatmul.f32.gmra.mxu0 %v3688
        %v4595 = vpop.f32.mrf.mxu0
        %v4596 = vadd.f32 %v4471, %v4595
        %4597 = vmatmul.f32.gmra.mxu0 %v3697
        %v4598 = vpop.f32.mrf.mxu0
        %v4599 = vadd.f32 %v4474, %v4598
        %4600 = vmatmul.f32.gmra.mxu0 %v3706
        %v4601 = vpop.f32.mrf.mxu0
        %v4602 = vadd.f32 %v4477, %v4601
        %4603 = vmatmul.f32.gmra.mxu0 %v3715
        %v4604 = vpop.f32.mrf.mxu0
        %v4605 = vadd.f32 %v4480, %v4604
        %4606 = vmatmul.f32.gmra.mxu0 %v3724
        %v4607 = vpop.f32.mrf.mxu0
        %v4608 = vadd.f32 %v4483, %v4607
        %4609 = vmatmul.f32.gmra.mxu0 %v3733
        %v4610 = vpop.f32.mrf.mxu0
        %v4611 = vadd.f32 %v4486, %v4610
        %4612 = vmatmul.f32.gmra.mxu0 %v3742
        %v4613 = vpop.f32.mrf.mxu0
        %v4614 = vadd.f32 %v4489, %v4613
        %4615 = vmatmul.f32.gmra.mxu0 %v3751
        %v4616 = vpop.f32.mrf.mxu0
        %v4617 = vadd.f32 %v4492, %v4616
        %4618 = vmatmul.f32.gmra.mxu0 %v3760
        %v4619 = vpop.f32.mrf.mxu0
        %v4620 = vadd.f32 %v4495, %v4619
        %4621 = vmatmul.f32.gmra.mxu0 %v3769
        %v4622 = vpop.f32.mrf.mxu0
        %v4623 = vadd.f32 %v4498, %v4622
        %4624 = vmatmul.f32.gmra.mxu0 %v3778
        %v4625 = vpop.f32.mrf.mxu0
        %v4626 = vadd.f32 %v4501, %v4625
        %4627 = vmatmul.f32.gmra.mxu0 %v3787
        %v4628 = vpop.f32.mrf.mxu0
        %v4629 = vadd.f32 %v4504, %v4628
        %4630 = vmatmul.f32.gmra.mxu0 %v3796
        %v4631 = vpop.f32.mrf.mxu0
        %v4632 = vadd.f32 %v4507, %v4631
        %4633 = vmatmul.f32.gmra.mxu0 %v3805
        %v4634 = vpop.f32.mrf.mxu0
        %v4635 = vadd.f32 %v4510, %v4634
        %4636 = vmatmul.f32.gmra.mxu0 %v3814
        %v4637 = vpop.f32.mrf.mxu0
        %v4638 = vadd.f32 %v4513, %v4637
        %4639 = vmatmul.f32.gmra.mxu0 %v3823
        %v4640 = vpop.f32.mrf.mxu0
        %v4641 = vadd.f32 %v4516, %v4640
        %4642 = vmatmul.f32.gmra.mxu0 %v3832
        %v4643 = vpop.f32.mrf.mxu0
        %v4644 = vadd.f32 %v4519, %v4643
        %4645 = vmatmul.f32.gmra.mxu0 %v3841
        %v4646 = vpop.f32.mrf.mxu0
        %v4647 = vadd.f32 %v4522, %v4646
        %4648 = vmatmul.f32.gmra.mxu0 %v3850
        %v4649 = vpop.f32.mrf.mxu0
        %v4650 = vadd.f32 %v4525, %v4649
        %4651 = vmatmul.f32.gmra.mxu0 %v3859
        %v4652 = vpop.f32.mrf.mxu0
        %v4653 = vadd.f32 %v4528, %v4652
        %4654 = vmatmul.f32.gmra.mxu0 %v3868
        %v4655 = vpop.f32.mrf.mxu0
        %v4656 = vadd.f32 %v4531, %v4655
        %4657 = vmatmul.f32.gmra.mxu0 %v3877
        %v4658 = vpop.f32.mrf.mxu0
        %v4659 = vadd.f32 %v4534, %v4658
        %4660 = vmatmul.f32.gmra.mxu0 %v3886
        %v4661 = vpop.f32.mrf.mxu0
        %v4662 = vadd.f32 %v4537, %v4661
        %4663 = vdwg.mxu0
        %4664 = vmatpush.msra.mxu0 %v3986
        %4665 = vmatpush.msra.mxu0 %v3985
        %4666 = vmatpush.msra.mxu0 %v3984
        %4667 = vmatpush.msra.mxu0 %v3983
        %4668 = vmatpush.msra.mxu0 %v3982
        %4669 = vmatpush.msra.mxu0 %v3981
        %4670 = vmatpush.msra.mxu0 %v3980
        %4671 = vmatpush.msra.mxu0 %v3979
        %4672 = vmatpush.msra.mxu0 %v3978
        %4673 = vmatpush.msra.mxu0 %v3977
        %4674 = vmatpush.msra.mxu0 %v3976
        %4675 = vmatpush.msra.mxu0 %v3975
        %4676 = vmatpush.msra.mxu0 %v3974
        %4677 = vmatpush.msra.mxu0 %v3973
        %4678 = vmatpush.msra.mxu0 %v3972
        %4679 = vmatpush.msra.mxu0 %v3971
        %4680 = vmatmul.f32.gmra.mxu0 %v3572
        %v4681 = vpop.f32.mrf.mxu0
        %v4682 = vadd.f32 %v4557, %v4681
        %4683 = vmatmul.f32.gmra.mxu0 %v3581
        %v4684 = vpop.f32.mrf.mxu0
        %v4685 = vadd.f32 %v4560, %v4684
        %4686 = vmatmul.f32.gmra.mxu0 %v3590
        %v4687 = vpop.f32.mrf.mxu0
        %v4688 = vadd.f32 %v4563, %v4687
        %4689 = vmatmul.f32.gmra.mxu0 %v3599
        %v4690 = vpop.f32.mrf.mxu0
        %v4691 = vadd.f32 %v4566, %v4690
        %4692 = vmatmul.f32.gmra.mxu0 %v3608
        %v4693 = vpop.f32.mrf.mxu0
        %v4694 = vadd.f32 %v4569, %v4693
        %4695 = vmatmul.f32.gmra.mxu0 %v3617
        %v4696 = vpop.f32.mrf.mxu0
        %v4697 = vadd.f32 %v4572, %v4696
        %4698 = vmatmul.f32.gmra.mxu0 %v3626
        %v4699 = vpop.f32.mrf.mxu0
        %v4700 = vadd.f32 %v4575, %v4699
        %4701 = vmatmul.f32.gmra.mxu0 %v3635
        %v4702 = vpop.f32.mrf.mxu0
        %v4703 = vadd.f32 %v4578, %v4702
        %4704 = vmatmul.f32.gmra.mxu0 %v3644
        %v4705 = vpop.f32.mrf.mxu0
        %v4706 = vadd.f32 %v4581, %v4705
        %4707 = vmatmul.f32.gmra.mxu0 %v3653
        %v4708 = vpop.f32.mrf.mxu0
        %v4709 = vadd.f32 %v4584, %v4708
        %4710 = vmatmul.f32.gmra.mxu0 %v3662
        %v4711 = vpop.f32.mrf.mxu0
        %v4712 = vadd.f32 %v4587, %v4711
        %4713 = vmatmul.f32.gmra.mxu0 %v3671
        %v4714 = vpop.f32.mrf.mxu0
        %v4715 = vadd.f32 %v4590, %v4714
        %4716 = vmatmul.f32.gmra.mxu0 %v3680
        %v4717 = vpop.f32.mrf.mxu0
        %v4718 = vadd.f32 %v4593, %v4717
        %4719 = vmatmul.f32.gmra.mxu0 %v3689
        %v4720 = vpop.f32.mrf.mxu0
        %v4721 = vadd.f32 %v4596, %v4720
        %4722 = vmatmul.f32.gmra.mxu0 %v3698
        %v4723 = vpop.f32.mrf.mxu0
        %v4724 = vadd.f32 %v4599, %v4723
        %4725 = vmatmul.f32.gmra.mxu0 %v3707
        %v4726 = vpop.f32.mrf.mxu0
        %v4727 = vadd.f32 %v4602, %v4726
        %4728 = vmatmul.f32.gmra.mxu0 %v3716
        %v4729 = vpop.f32.mrf.mxu0
        %v4730 = vadd.f32 %v4605, %v4729
        %4731 = vmatmul.f32.gmra.mxu0 %v3725
        %v4732 = vpop.f32.mrf.mxu0
        %v4733 = vadd.f32 %v4608, %v4732
        %4734 = vmatmul.f32.gmra.mxu0 %v3734
        %v4735 = vpop.f32.mrf.mxu0
        %v4736 = vadd.f32 %v4611, %v4735
        %4737 = vmatmul.f32.gmra.mxu0 %v3743
        %v4738 = vpop.f32.mrf.mxu0
        %v4739 = vadd.f32 %v4614, %v4738
        %4740 = vmatmul.f32.gmra.mxu0 %v3752
        %v4741 = vpop.f32.mrf.mxu0
        %v4742 = vadd.f32 %v4617, %v4741
        %4743 = vmatmul.f32.gmra.mxu0 %v3761
        %v4744 = vpop.f32.mrf.mxu0
        %v4745 = vadd.f32 %v4620, %v4744
        %4746 = vmatmul.f32.gmra.mxu0 %v3770
        %v4747 = vpop.f32.mrf.mxu0
        %v4748 = vadd.f32 %v4623, %v4747
        %4749 = vmatmul.f32.gmra.mxu0 %v3779
        %v4750 = vpop.f32.mrf.mxu0
        %v4751 = vadd.f32 %v4626, %v4750
        %4752 = vmatmul.f32.gmra.mxu0 %v3788
        %v4753 = vpop.f32.mrf.mxu0
        %v4754 = vadd.f32 %v4629, %v4753
        %4755 = vmatmul.f32.gmra.mxu0 %v3797
        %v4756 = vpop.f32.mrf.mxu0
        %v4757 = vadd.f32 %v4632, %v4756
        %4758 = vmatmul.f32.gmra.mxu0 %v3806
        %v4759 = vpop.f32.mrf.mxu0
        %v4760 = vadd.f32 %v4635, %v4759
        %4761 = vmatmul.f32.gmra.mxu0 %v3815
        %v4762 = vpop.f32.mrf.mxu0
        %v4763 = vadd.f32 %v4638, %v4762
        %4764 = vmatmul.f32.gmra.mxu0 %v3824
        %v4765 = vpop.f32.mrf.mxu0
        %v4766 = vadd.f32 %v4641, %v4765
        %4767 = vmatmul.f32.gmra.mxu0 %v3833
        %v4768 = vpop.f32.mrf.mxu0
        %v4769 = vadd.f32 %v4644, %v4768
        %4770 = vmatmul.f32.gmra.mxu0 %v3842
        %v4771 = vpop.f32.mrf.mxu0
        %v4772 = vadd.f32 %v4647, %v4771
        %4773 = vmatmul.f32.gmra.mxu0 %v3851
        %v4774 = vpop.f32.mrf.mxu0
        %v4775 = vadd.f32 %v4650, %v4774
        %4776 = vmatmul.f32.gmra.mxu0 %v3860
        %v4777 = vpop.f32.mrf.mxu0
        %v4778 = vadd.f32 %v4653, %v4777
        %4779 = vmatmul.f32.gmra.mxu0 %v3869
        %v4780 = vpop.f32.mrf.mxu0
        %v4781 = vadd.f32 %v4656, %v4780
        %4782 = vmatmul.f32.gmra.mxu0 %v3878
        %v4783 = vpop.f32.mrf.mxu0
        %v4784 = vadd.f32 %v4659, %v4783
        %4785 = vmatmul.f32.gmra.mxu0 %v3887
        %v4786 = vpop.f32.mrf.mxu0
        %v4787 = vadd.f32 %v4662, %v4786
        %4788 = vdwg.mxu0
        %4789 = vmatpush.msra.mxu0 %v4002
        %4790 = vmatpush.msra.mxu0 %v4001
        %4791 = vmatpush.msra.mxu0 %v4000
        %4792 = vmatpush.msra.mxu0 %v3999
        %4793 = vmatpush.msra.mxu0 %v3998
        %4794 = vmatpush.msra.mxu0 %v3997
        %4795 = vmatpush.msra.mxu0 %v3996
        %4796 = vmatpush.msra.mxu0 %v3995
        %4797 = vmatpush.msra.mxu0 %v3994
        %4798 = vmatpush.msra.mxu0 %v3993
        %4799 = vmatpush.msra.mxu0 %v3992
        %4800 = vmatpush.msra.mxu0 %v3991
        %4801 = vmatpush.msra.mxu0 %v3990
        %4802 = vmatpush.msra.mxu0 %v3989
        %4803 = vmatpush.msra.mxu0 %v3988
        %4804 = vmatpush.msra.mxu0 %v3987
        %4805 = vmatmul.f32.gmra.mxu0 %v3573
        %v4806 = vpop.f32.mrf.mxu0
        %v4807 = vadd.f32 %v4682, %v4806
        %4808 = vmatmul.f32.gmra.mxu0 %v3582
        %v4809 = vpop.f32.mrf.mxu0
        %v4810 = vadd.f32 %v4685, %v4809
        %4811 = vmatmul.f32.gmra.mxu0 %v3591
        %v4812 = vpop.f32.mrf.mxu0
        %v4813 = vadd.f32 %v4688, %v4812
        %4814 = vmatmul.f32.gmra.mxu0 %v3600
        %v4815 = vpop.f32.mrf.mxu0
        %v4816 = vadd.f32 %v4691, %v4815
        %4817 = vmatmul.f32.gmra.mxu0 %v3609
        %v4818 = vpop.f32.mrf.mxu0
        %v4819 = vadd.f32 %v4694, %v4818
        %4820 = vmatmul.f32.gmra.mxu0 %v3618
        %v4821 = vpop.f32.mrf.mxu0
        %v4822 = vadd.f32 %v4697, %v4821
        %4823 = vmatmul.f32.gmra.mxu0 %v3627
        %v4824 = vpop.f32.mrf.mxu0
        %v4825 = vadd.f32 %v4700, %v4824
        %4826 = vmatmul.f32.gmra.mxu0 %v3636
        %v4827 = vpop.f32.mrf.mxu0
        %v4828 = vadd.f32 %v4703, %v4827
        %4829 = vmatmul.f32.gmra.mxu0 %v3645
        %v4830 = vpop.f32.mrf.mxu0
        %v4831 = vadd.f32 %v4706, %v4830
        %4832 = vmatmul.f32.gmra.mxu0 %v3654
        %v4833 = vpop.f32.mrf.mxu0
        %v4834 = vadd.f32 %v4709, %v4833
        %4835 = vmatmul.f32.gmra.mxu0 %v3663
        %v4836 = vpop.f32.mrf.mxu0
        %v4837 = vadd.f32 %v4712, %v4836
        %4838 = vmatmul.f32.gmra.mxu0 %v3672
        %v4839 = vpop.f32.mrf.mxu0
        %v4840 = vadd.f32 %v4715, %v4839
        %4841 = vmatmul.f32.gmra.mxu0 %v3681
        %v4842 = vpop.f32.mrf.mxu0
        %v4843 = vadd.f32 %v4718, %v4842
        %4844 = vmatmul.f32.gmra.mxu0 %v3690
        %v4845 = vpop.f32.mrf.mxu0
        %v4846 = vadd.f32 %v4721, %v4845
        %4847 = vmatmul.f32.gmra.mxu0 %v3699
        %v4848 = vpop.f32.mrf.mxu0
        %v4849 = vadd.f32 %v4724, %v4848
        %4850 = vmatmul.f32.gmra.mxu0 %v3708
        %v4851 = vpop.f32.mrf.mxu0
        %v4852 = vadd.f32 %v4727, %v4851
        %4853 = vmatmul.f32.gmra.mxu0 %v3717
        %v4854 = vpop.f32.mrf.mxu0
        %v4855 = vadd.f32 %v4730, %v4854
        %4856 = vmatmul.f32.gmra.mxu0 %v3726
        %v4857 = vpop.f32.mrf.mxu0
        %v4858 = vadd.f32 %v4733, %v4857
        %4859 = vmatmul.f32.gmra.mxu0 %v3735
        %v4860 = vpop.f32.mrf.mxu0
        %v4861 = vadd.f32 %v4736, %v4860
        %4862 = vmatmul.f32.gmra.mxu0 %v3744
        %v4863 = vpop.f32.mrf.mxu0
        %v4864 = vadd.f32 %v4739, %v4863
        %4865 = vmatmul.f32.gmra.mxu0 %v3753
        %v4866 = vpop.f32.mrf.mxu0
        %v4867 = vadd.f32 %v4742, %v4866
        %4868 = vmatmul.f32.gmra.mxu0 %v3762
        %v4869 = vpop.f32.mrf.mxu0
        %v4870 = vadd.f32 %v4745, %v4869
        %4871 = vmatmul.f32.gmra.mxu0 %v3771
        %v4872 = vpop.f32.mrf.mxu0
        %v4873 = vadd.f32 %v4748, %v4872
        %4874 = vmatmul.f32.gmra.mxu0 %v3780
        %v4875 = vpop.f32.mrf.mxu0
        %v4876 = vadd.f32 %v4751, %v4875
        %4877 = vmatmul.f32.gmra.mxu0 %v3789
        %v4878 = vpop.f32.mrf.mxu0
        %v4879 = vadd.f32 %v4754, %v4878
        %4880 = vmatmul.f32.gmra.mxu0 %v3798
        %v4881 = vpop.f32.mrf.mxu0
        %v4882 = vadd.f32 %v4757, %v4881
        %4883 = vmatmul.f32.gmra.mxu0 %v3807
        %v4884 = vpop.f32.mrf.mxu0
        %v4885 = vadd.f32 %v4760, %v4884
        %4886 = vmatmul.f32.gmra.mxu0 %v3816
        %v4887 = vpop.f32.mrf.mxu0
        %v4888 = vadd.f32 %v4763, %v4887
        %4889 = vmatmul.f32.gmra.mxu0 %v3825
        %v4890 = vpop.f32.mrf.mxu0
        %v4891 = vadd.f32 %v4766, %v4890
        %4892 = vmatmul.f32.gmra.mxu0 %v3834
        %v4893 = vpop.f32.mrf.mxu0
        %v4894 = vadd.f32 %v4769, %v4893
        %4895 = vmatmul.f32.gmra.mxu0 %v3843
        %v4896 = vpop.f32.mrf.mxu0
        %v4897 = vadd.f32 %v4772, %v4896
        %4898 = vmatmul.f32.gmra.mxu0 %v3852
        %v4899 = vpop.f32.mrf.mxu0
        %v4900 = vadd.f32 %v4775, %v4899
        %4901 = vmatmul.f32.gmra.mxu0 %v3861
        %v4902 = vpop.f32.mrf.mxu0
        %v4903 = vadd.f32 %v4778, %v4902
        %4904 = vmatmul.f32.gmra.mxu0 %v3870
        %v4905 = vpop.f32.mrf.mxu0
        %v4906 = vadd.f32 %v4781, %v4905
        %4907 = vmatmul.f32.gmra.mxu0 %v3879
        %v4908 = vpop.f32.mrf.mxu0
        %v4909 = vadd.f32 %v4784, %v4908
        %4910 = vmatmul.f32.gmra.mxu0 %v3888
        %v4911 = vpop.f32.mrf.mxu0
        %v4912 = vadd.f32 %v4787, %v4911
        %4913 = vdwg.mxu0
        %4914 = vmatpush.msra.mxu0 %v4018
        %4915 = vmatpush.msra.mxu0 %v4017
        %4916 = vmatpush.msra.mxu0 %v4016
        %4917 = vmatpush.msra.mxu0 %v4015
        %4918 = vmatpush.msra.mxu0 %v4014
        %4919 = vmatpush.msra.mxu0 %v4013
        %4920 = vmatpush.msra.mxu0 %v4012
        %4921 = vmatpush.msra.mxu0 %v4011
        %4922 = vmatpush.msra.mxu0 %v4010
        %4923 = vmatpush.msra.mxu0 %v4009
        %4924 = vmatpush.msra.mxu0 %v4008
        %4925 = vmatpush.msra.mxu0 %v4007
        %4926 = vmatpush.msra.mxu0 %v4006
        %4927 = vmatpush.msra.mxu0 %v4005
        %4928 = vmatpush.msra.mxu0 %v4004
        %4929 = vmatpush.msra.mxu0 %v4003
        %4930 = vmatmul.f32.gmra.mxu0 %v3574
        %v4931 = vpop.f32.mrf.mxu0
        %v4932 = vadd.f32 %v4807, %v4931
        %4933 = vmatmul.f32.gmra.mxu0 %v3583
        %v4934 = vpop.f32.mrf.mxu0
        %v4935 = vadd.f32 %v4810, %v4934
        %4936 = vmatmul.f32.gmra.mxu0 %v3592
        %v4937 = vpop.f32.mrf.mxu0
        %v4938 = vadd.f32 %v4813, %v4937
        %4939 = vmatmul.f32.gmra.mxu0 %v3601
        %v4940 = vpop.f32.mrf.mxu0
        %v4941 = vadd.f32 %v4816, %v4940
        %4942 = vmatmul.f32.gmra.mxu0 %v3610
        %v4943 = vpop.f32.mrf.mxu0
        %v4944 = vadd.f32 %v4819, %v4943
        %4945 = vmatmul.f32.gmra.mxu0 %v3619
        %v4946 = vpop.f32.mrf.mxu0
        %v4947 = vadd.f32 %v4822, %v4946
        %4948 = vmatmul.f32.gmra.mxu0 %v3628
        %v4949 = vpop.f32.mrf.mxu0
        %v4950 = vadd.f32 %v4825, %v4949
        %4951 = vmatmul.f32.gmra.mxu0 %v3637
        %v4952 = vpop.f32.mrf.mxu0
        %v4953 = vadd.f32 %v4828, %v4952
        %4954 = vmatmul.f32.gmra.mxu0 %v3646
        %v4955 = vpop.f32.mrf.mxu0
        %v4956 = vadd.f32 %v4831, %v4955
        %4957 = vmatmul.f32.gmra.mxu0 %v3655
        %v4958 = vpop.f32.mrf.mxu0
        %v4959 = vadd.f32 %v4834, %v4958
        %4960 = vmatmul.f32.gmra.mxu0 %v3664
        %v4961 = vpop.f32.mrf.mxu0
        %v4962 = vadd.f32 %v4837, %v4961
        %4963 = vmatmul.f32.gmra.mxu0 %v3673
        %v4964 = vpop.f32.mrf.mxu0
        %v4965 = vadd.f32 %v4840, %v4964
        %4966 = vmatmul.f32.gmra.mxu0 %v3682
        %v4967 = vpop.f32.mrf.mxu0
        %v4968 = vadd.f32 %v4843, %v4967
        %4969 = vmatmul.f32.gmra.mxu0 %v3691
        %v4970 = vpop.f32.mrf.mxu0
        %v4971 = vadd.f32 %v4846, %v4970
        %4972 = vmatmul.f32.gmra.mxu0 %v3700
        %v4973 = vpop.f32.mrf.mxu0
        %v4974 = vadd.f32 %v4849, %v4973
        %4975 = vmatmul.f32.gmra.mxu0 %v3709
        %v4976 = vpop.f32.mrf.mxu0
        %v4977 = vadd.f32 %v4852, %v4976
        %4978 = vmatmul.f32.gmra.mxu0 %v3718
        %v4979 = vpop.f32.mrf.mxu0
        %v4980 = vadd.f32 %v4855, %v4979
        %4981 = vmatmul.f32.gmra.mxu0 %v3727
        %v4982 = vpop.f32.mrf.mxu0
        %v4983 = vadd.f32 %v4858, %v4982
        %4984 = vmatmul.f32.gmra.mxu0 %v3736
        %v4985 = vpop.f32.mrf.mxu0
        %v4986 = vadd.f32 %v4861, %v4985
        %4987 = vmatmul.f32.gmra.mxu0 %v3745
        %v4988 = vpop.f32.mrf.mxu0
        %v4989 = vadd.f32 %v4864, %v4988
        %4990 = vmatmul.f32.gmra.mxu0 %v3754
        %v4991 = vpop.f32.mrf.mxu0
        %v4992 = vadd.f32 %v4867, %v4991
        %4993 = vmatmul.f32.gmra.mxu0 %v3763
        %v4994 = vpop.f32.mrf.mxu0
        %v4995 = vadd.f32 %v4870, %v4994
        %4996 = vmatmul.f32.gmra.mxu0 %v3772
        %v4997 = vpop.f32.mrf.mxu0
        %v4998 = vadd.f32 %v4873, %v4997
        %4999 = vmatmul.f32.gmra.mxu0 %v3781
        %v5000 = vpop.f32.mrf.mxu0
        %v5001 = vadd.f32 %v4876, %v5000
        %5002 = vmatmul.f32.gmra.mxu0 %v3790
        %v5003 = vpop.f32.mrf.mxu0
        %v5004 = vadd.f32 %v4879, %v5003
        %5005 = vmatmul.f32.gmra.mxu0 %v3799
        %v5006 = vpop.f32.mrf.mxu0
        %v5007 = vadd.f32 %v4882, %v5006
        %5008 = vmatmul.f32.gmra.mxu0 %v3808
        %v5009 = vpop.f32.mrf.mxu0
        %v5010 = vadd.f32 %v4885, %v5009
        %5011 = vmatmul.f32.gmra.mxu0 %v3817
        %v5012 = vpop.f32.mrf.mxu0
        %v5013 = vadd.f32 %v4888, %v5012
        %5014 = vmatmul.f32.gmra.mxu0 %v3826
        %v5015 = vpop.f32.mrf.mxu0
        %v5016 = vadd.f32 %v4891, %v5015
        %5017 = vmatmul.f32.gmra.mxu0 %v3835
        %v5018 = vpop.f32.mrf.mxu0
        %v5019 = vadd.f32 %v4894, %v5018
        %5020 = vmatmul.f32.gmra.mxu0 %v3844
        %v5021 = vpop.f32.mrf.mxu0
        %v5022 = vadd.f32 %v4897, %v5021
        %5023 = vmatmul.f32.gmra.mxu0 %v3853
        %v5024 = vpop.f32.mrf.mxu0
        %v5025 = vadd.f32 %v4900, %v5024
        %5026 = vmatmul.f32.gmra.mxu0 %v3862
        %v5027 = vpop.f32.mrf.mxu0
        %v5028 = vadd.f32 %v4903, %v5027
        %5029 = vmatmul.f32.gmra.mxu0 %v3871
        %v5030 = vpop.f32.mrf.mxu0
        %v5031 = vadd.f32 %v4906, %v5030
        %5032 = vmatmul.f32.gmra.mxu0 %v3880
        %v5033 = vpop.f32.mrf.mxu0
        %v5034 = vadd.f32 %v4909, %v5033
        %5035 = vmatmul.f32.gmra.mxu0 %v3889
        %v5036 = vpop.f32.mrf.mxu0
        %v5037 = vadd.f32 %v4912, %v5036
        %5038 = vdwg.mxu0
        %5039 = vmatpush.msra.mxu0 %v4034
        %5040 = vmatpush.msra.mxu0 %v4033
        %5041 = vmatpush.msra.mxu0 %v4032
        %5042 = vmatpush.msra.mxu0 %v4031
        %5043 = vmatpush.msra.mxu0 %v4030
        %5044 = vmatpush.msra.mxu0 %v4029
        %5045 = vmatpush.msra.mxu0 %v4028
        %5046 = vmatpush.msra.mxu0 %v4027
        %5047 = vmatpush.msra.mxu0 %v4026
        %5048 = vmatpush.msra.mxu0 %v4025
        %5049 = vmatpush.msra.mxu0 %v4024
        %5050 = vmatpush.msra.mxu0 %v4023
        %5051 = vmatpush.msra.mxu0 %v4022
        %5052 = vmatpush.msra.mxu0 %v4021
        %5053 = vmatpush.msra.mxu0 %v4020
        %5054 = vmatpush.msra.mxu0 %v4019
        %5055 = vmatmul.f32.gmra.mxu0 %v3575
        %v5056 = vpop.f32.mrf.mxu0
        %v5057 = vadd.f32 %v4932, %v5056
        %5058 = vmatmul.f32.gmra.mxu0 %v3584
        %v5059 = vpop.f32.mrf.mxu0
        %v5060 = vadd.f32 %v4935, %v5059
        %5061 = vmatmul.f32.gmra.mxu0 %v3593
        %v5062 = vpop.f32.mrf.mxu0
        %v5063 = vadd.f32 %v4938, %v5062
        %5064 = vmatmul.f32.gmra.mxu0 %v3602
        %v5065 = vpop.f32.mrf.mxu0
        %v5066 = vadd.f32 %v4941, %v5065
        %5067 = vmatmul.f32.gmra.mxu0 %v3611
        %v5068 = vpop.f32.mrf.mxu0
        %v5069 = vadd.f32 %v4944, %v5068
        %5070 = vmatmul.f32.gmra.mxu0 %v3620
        %v5071 = vpop.f32.mrf.mxu0
        %v5072 = vadd.f32 %v4947, %v5071
        %5073 = vmatmul.f32.gmra.mxu0 %v3629
        %v5074 = vpop.f32.mrf.mxu0
        %v5075 = vadd.f32 %v4950, %v5074
        %5076 = vmatmul.f32.gmra.mxu0 %v3638
        %v5077 = vpop.f32.mrf.mxu0
        %v5078 = vadd.f32 %v4953, %v5077
        %5079 = vmatmul.f32.gmra.mxu0 %v3647
        %v5080 = vpop.f32.mrf.mxu0
        %v5081 = vadd.f32 %v4956, %v5080
        %5082 = vmatmul.f32.gmra.mxu0 %v3656
        %v5083 = vpop.f32.mrf.mxu0
        %v5084 = vadd.f32 %v4959, %v5083
        %5085 = vmatmul.f32.gmra.mxu0 %v3665
        %v5086 = vpop.f32.mrf.mxu0
        %v5087 = vadd.f32 %v4962, %v5086
        %5088 = vmatmul.f32.gmra.mxu0 %v3674
        %v5089 = vpop.f32.mrf.mxu0
        %v5090 = vadd.f32 %v4965, %v5089
        %5091 = vmatmul.f32.gmra.mxu0 %v3683
        %v5092 = vpop.f32.mrf.mxu0
        %v5093 = vadd.f32 %v4968, %v5092
        %5094 = vmatmul.f32.gmra.mxu0 %v3692
        %v5095 = vpop.f32.mrf.mxu0
        %v5096 = vadd.f32 %v4971, %v5095
        %5097 = vmatmul.f32.gmra.mxu0 %v3701
        %v5098 = vpop.f32.mrf.mxu0
        %v5099 = vadd.f32 %v4974, %v5098
        %5100 = vmatmul.f32.gmra.mxu0 %v3710
        %v5101 = vpop.f32.mrf.mxu0
        %v5102 = vadd.f32 %v4977, %v5101
        %5103 = vmatmul.f32.gmra.mxu0 %v3719
        %v5104 = vpop.f32.mrf.mxu0
        %v5105 = vadd.f32 %v4980, %v5104
        %5106 = vmatmul.f32.gmra.mxu0 %v3728
        %v5107 = vpop.f32.mrf.mxu0
        %v5108 = vadd.f32 %v4983, %v5107
        %5109 = vmatmul.f32.gmra.mxu0 %v3737
        %v5110 = vpop.f32.mrf.mxu0
        %v5111 = vadd.f32 %v4986, %v5110
        %5112 = vmatmul.f32.gmra.mxu0 %v3746
        %v5113 = vpop.f32.mrf.mxu0
        %v5114 = vadd.f32 %v4989, %v5113
        %5115 = vmatmul.f32.gmra.mxu0 %v3755
        %v5116 = vpop.f32.mrf.mxu0
        %v5117 = vadd.f32 %v4992, %v5116
        %5118 = vmatmul.f32.gmra.mxu0 %v3764
        %v5119 = vpop.f32.mrf.mxu0
        %v5120 = vadd.f32 %v4995, %v5119
        %5121 = vmatmul.f32.gmra.mxu0 %v3773
        %v5122 = vpop.f32.mrf.mxu0
        %v5123 = vadd.f32 %v4998, %v5122
        %5124 = vmatmul.f32.gmra.mxu0 %v3782
        %v5125 = vpop.f32.mrf.mxu0
        %v5126 = vadd.f32 %v5001, %v5125
        %5127 = vmatmul.f32.gmra.mxu0 %v3791
        %v5128 = vpop.f32.mrf.mxu0
        %v5129 = vadd.f32 %v5004, %v5128
        %5130 = vmatmul.f32.gmra.mxu0 %v3800
        %v5131 = vpop.f32.mrf.mxu0
        %v5132 = vadd.f32 %v5007, %v5131
        %5133 = vmatmul.f32.gmra.mxu0 %v3809
        %v5134 = vpop.f32.mrf.mxu0
        %v5135 = vadd.f32 %v5010, %v5134
        %5136 = vmatmul.f32.gmra.mxu0 %v3818
        %v5137 = vpop.f32.mrf.mxu0
        %v5138 = vadd.f32 %v5013, %v5137
        %5139 = vmatmul.f32.gmra.mxu0 %v3827
        %v5140 = vpop.f32.mrf.mxu0
        %v5141 = vadd.f32 %v5016, %v5140
        %5142 = vmatmul.f32.gmra.mxu0 %v3836
        %v5143 = vpop.f32.mrf.mxu0
        %v5144 = vadd.f32 %v5019, %v5143
        %5145 = vmatmul.f32.gmra.mxu0 %v3845
        %v5146 = vpop.f32.mrf.mxu0
        %v5147 = vadd.f32 %v5022, %v5146
        %5148 = vmatmul.f32.gmra.mxu0 %v3854
        %v5149 = vpop.f32.mrf.mxu0
        %v5150 = vadd.f32 %v5025, %v5149
        %5151 = vmatmul.f32.gmra.mxu0 %v3863
        %v5152 = vpop.f32.mrf.mxu0
        %v5153 = vadd.f32 %v5028, %v5152
        %5154 = vmatmul.f32.gmra.mxu0 %v3872
        %v5155 = vpop.f32.mrf.mxu0
        %v5156 = vadd.f32 %v5031, %v5155
        %5157 = vmatmul.f32.gmra.mxu0 %v3881
        %v5158 = vpop.f32.mrf.mxu0
        %v5159 = vadd.f32 %v5034, %v5158
        %5160 = vmatmul.f32.gmra.mxu0 %v3890
        %v5161 = vpop.f32.mrf.mxu0
        %v5162 = vadd.f32 %v5037, %v5161
        %5163 = vdwg.mxu0
        %v5164 = vld [vmem:[%s265 + $0x13] sm:$0xff]
        %v5165 = vld [vmem:[%s265 + $0x1b] sm:$0xff]
        %v5166 = vld [vmem:[%s265 + $0x23] sm:$0xff]
        %v5167 = vld [vmem:[%s265 + $0x2b] sm:$0xff]
        %v5168 = vld [vmem:[%s265 + $0x33] sm:$0xff]
        %v5169 = vld [vmem:[%s265 + $0x3b] sm:$0xff]
        %v5170 = vld [vmem:[%s265 + $0x43] sm:$0xff]
        %v5171 = vld [vmem:[%s265 + $0x4b] sm:$0xff]
        %v5172 = vld [vmem:[%s265 + $0x53] sm:$0xff]
        %v5173 = vld [vmem:[%s265 + $0x5b] sm:$0xff]
        %v5174 = vld [vmem:[%s265 + $0x63] sm:$0xff]
        %v5175 = vld [vmem:[%s265 + $0x6b] sm:$0xff]
        %v5176 = vld [vmem:[%s265 + $0x73] sm:$0xff]
        %v5177 = vld [vmem:[%s265 + $0x7b] sm:$0xff]
        %v5178 = vld [vmem:[%s265 + $0x83] sm:$0xff]
        %v5179 = vld [vmem:[%s265 + $0x8b] sm:$0xff]
        %v5180 = vld [vmem:[%s265 + $0x93] sm:$0xff]
        %v5181 = vld [vmem:[%s265 + $0x9b] sm:$0xff]
        %v5182 = vld [vmem:[%s265 + $0xa3] sm:$0xff]
        %v5183 = vld [vmem:[%s265 + $0xab] sm:$0xff]
        %v5184 = vld [vmem:[%s265 + $0xb3] sm:$0xff]
        %v5185 = vld [vmem:[%s265 + $0xbb] sm:$0xff]
        %v5186 = vld [vmem:[%s265 + $0xc3] sm:$0xff]
        %v5187 = vld [vmem:[%s265 + $0xcb] sm:$0xff]
        %v5188 = vld [vmem:[%s265 + $0xd3] sm:$0xff]
        %v5189 = vld [vmem:[%s265 + $0xdb] sm:$0xff]
        %v5190 = vld [vmem:[%s265 + $0xe3] sm:$0xff]
        %v5191 = vld [vmem:[%s265 + $0xeb] sm:$0xff]
        %v5192 = vld [vmem:[%s265 + $0xf3] sm:$0xff]
        %v5193 = vld [vmem:[%s265 + $0xfb] sm:$0xff]
        %v5194 = vld [vmem:[%s265 + $0x103] sm:$0xff]
        %v5195 = vld [vmem:[%s265 + $0x10b] sm:$0xff]
        %v5196 = vld [vmem:[%s265 + $0x113] sm:$0xff]
        %v5197 = vld [vmem:[%s265 + $0x11b] sm:$0xff]
        %v5198 = vld [vmem:[%s265 + $0x123] sm:$0xff]
        %v5199 = vld [vmem:[%s265 + $0x12b] sm:$0xff]
        %v5200 = vadd.f32 %v5057, %v5164
        %v5201 = vadd.f32 %v5060, %v5165
        %v5202 = vadd.f32 %v5063, %v5166
        %v5203 = vadd.f32 %v5066, %v5167
        %v5204 = vadd.f32 %v5069, %v5168
        %v5205 = vadd.f32 %v5072, %v5169
        %v5206 = vadd.f32 %v5075, %v5170
        %v5207 = vadd.f32 %v5078, %v5171
        %v5208 = vadd.f32 %v5081, %v5172
        %v5209 = vadd.f32 %v5084, %v5173
        %v5210 = vadd.f32 %v5087, %v5174
        %v5211 = vadd.f32 %v5090, %v5175
        %v5212 = vadd.f32 %v5093, %v5176
        %v5213 = vadd.f32 %v5096, %v5177
        %v5214 = vadd.f32 %v5099, %v5178
        %v5215 = vadd.f32 %v5102, %v5179
        %v5216 = vadd.f32 %v5105, %v5180
        %v5217 = vadd.f32 %v5108, %v5181
        %v5218 = vadd.f32 %v5111, %v5182
        %v5219 = vadd.f32 %v5114, %v5183
        %v5220 = vadd.f32 %v5117, %v5184
        %v5221 = vadd.f32 %v5120, %v5185
        %v5222 = vadd.f32 %v5123, %v5186
        %v5223 = vadd.f32 %v5126, %v5187
        %v5224 = vadd.f32 %v5129, %v5188
        %v5225 = vadd.f32 %v5132, %v5189
        %v5226 = vadd.f32 %v5135, %v5190
        %v5227 = vadd.f32 %v5138, %v5191
        %v5228 = vadd.f32 %v5141, %v5192
        %v5229 = vadd.f32 %v5144, %v5193
        %v5230 = vadd.f32 %v5147, %v5194
        %v5231 = vadd.f32 %v5150, %v5195
        %v5232 = vadd.f32 %v5153, %v5196
        %v5233 = vadd.f32 %v5156, %v5197
        %v5234 = vadd.f32 %v5159, %v5198
        %v5235 = vadd.f32 %v5162, %v5199
        %v5236 = vmax.f32 %v5200, 0.0
        %v5237 = vmax.f32 %v5201, 0.0
        %v5238 = vmax.f32 %v5202, 0.0
        %v5239 = vmax.f32 %v5203, 0.0
        %v5240 = vmax.f32 %v5204, 0.0
        %v5241 = vmax.f32 %v5205, 0.0
        %v5242 = vmax.f32 %v5206, 0.0
        %v5243 = vmax.f32 %v5207, 0.0
        %v5244 = vmax.f32 %v5208, 0.0
        %v5245 = vmax.f32 %v5209, 0.0
        %v5246 = vmax.f32 %v5210, 0.0
        %v5247 = vmax.f32 %v5211, 0.0
        %v5248 = vmax.f32 %v5212, 0.0
        %v5249 = vmax.f32 %v5213, 0.0
        %v5250 = vmax.f32 %v5214, 0.0
        %v5251 = vmax.f32 %v5215, 0.0
        %v5252 = vmax.f32 %v5216, 0.0
        %v5253 = vmax.f32 %v5217, 0.0
        %v5254 = vmax.f32 %v5218, 0.0
        %v5255 = vmax.f32 %v5219, 0.0
        %v5256 = vmax.f32 %v5220, 0.0
        %v5257 = vmax.f32 %v5221, 0.0
        %v5258 = vmax.f32 %v5222, 0.0
        %v5259 = vmax.f32 %v5223, 0.0
        %v5260 = vmax.f32 %v5224, 0.0
        %v5261 = vmax.f32 %v5225, 0.0
        %v5262 = vmax.f32 %v5226, 0.0
        %v5263 = vmax.f32 %v5227, 0.0
        %v5264 = vmax.f32 %v5228, 0.0
        %v5265 = vmax.f32 %v5229, 0.0
        %v5266 = vmax.f32 %v5230, 0.0
        %v5267 = vmax.f32 %v5231, 0.0
        %v5268 = vmax.f32 %v5232, 0.0
        %v5269 = vmax.f32 %v5233, 0.0
        %v5270 = vmax.f32 %v5234, 0.0
        %v5271 = vmax.f32 %v5235, 0.0
        %5272 = vst [vmem:[%s304] sm:$0xff] %v5236
        %5273 = vst [vmem:[%s304 + $0x8] sm:$0xff] %v5237
        %5274 = vst [vmem:[%s304 + $0x10] sm:$0xff] %v5238
        %5275 = vst [vmem:[%s304 + $0x18] sm:$0xff] %v5239
        %5276 = vst [vmem:[%s304 + $0x20] sm:$0xff] %v5240
        %5277 = vst [vmem:[%s304 + $0x28] sm:$0xff] %v5241
        %5278 = vst [vmem:[%s304 + $0x30] sm:$0xff] %v5242
        %5279 = vst [vmem:[%s304 + $0x38] sm:$0xff] %v5243
        %5280 = vst [vmem:[%s304 + $0x40] sm:$0xff] %v5244
        %5281 = vst [vmem:[%s304 + $0x48] sm:$0xff] %v5245
        %5282 = vst [vmem:[%s304 + $0x50] sm:$0xff] %v5246
        %5283 = vst [vmem:[%s304 + $0x58] sm:$0xff] %v5247
        %5284 = vst [vmem:[%s304 + $0x60] sm:$0xff] %v5248
        %5285 = vst [vmem:[%s304 + $0x68] sm:$0xff] %v5249
        %5286 = vst [vmem:[%s304 + $0x70] sm:$0xff] %v5250
        %5287 = vst [vmem:[%s304 + $0x78] sm:$0xff] %v5251
        %5288 = vst [vmem:[%s304 + $0x80] sm:$0xff] %v5252
        %5289 = vst [vmem:[%s304 + $0x88] sm:$0xff] %v5253
        %5290 = vst [vmem:[%s304 + $0x90] sm:$0xff] %v5254
        %5291 = vst [vmem:[%s304 + $0x98] sm:$0xff] %v5255
        %5292 = vst [vmem:[%s304 + $0xa0] sm:$0xff] %v5256
        %5293 = vst [vmem:[%s304 + $0xa8] sm:$0xff] %v5257
        %5294 = vst [vmem:[%s304 + $0xb0] sm:$0xff] %v5258
        %5295 = vst [vmem:[%s304 + $0xb8] sm:$0xff] %v5259
        %5296 = vst [vmem:[%s304 + $0xc0] sm:$0xff] %v5260
        %5297 = vst [vmem:[%s304 + $0xc8] sm:$0xff] %v5261
        %5298 = vst [vmem:[%s304 + $0xd0] sm:$0xff] %v5262
        %5299 = vst [vmem:[%s304 + $0xd8] sm:$0xff] %v5263
        %5300 = vst [vmem:[%s304 + $0xe0] sm:$0xff] %v5264
        %5301 = vst [vmem:[%s304 + $0xe8] sm:$0xff] %v5265
        %5302 = vst [vmem:[%s304 + $0xf0] sm:$0xff] %v5266
        %5303 = vst [vmem:[%s304 + $0xf8] sm:$0xff] %v5267
        %5304 = vst [vmem:[%s304 + $0x100] sm:$0xff] %v5268
        %5305 = vst [vmem:[%s304 + $0x108] sm:$0xff] %v5269
        %5306 = vst [vmem:[%s304 + $0x110] sm:$0xff] %v5270
        %5307 = vst [vmem:[%s304 + $0x118] sm:$0xff] %v5271
        %s5308 = sand.u32 %s163, 1
        %s5309 = scalar_lea.sflag [#allocation6], %s5308
        %s5310 = sand.u32 %s163, 1
        %s5311 = smul.addr %s5310, 288
        %s5312 = scalar_lea.vmem [#allocation10], %s5311
        // Predicated region
        $region61: #{tpu_custom_call.1} parent=43 // pred_check
          %p5313 = pneg %p173
        $region62: #{tpu_custom_call.1} parent=43 // pred_check_branch
          %5315 = sbr.rel (%p5313) target = $region64
        $region63: #{tpu_custom_call.1} parent=43 // pred_region
          %5317 = vsyncadd %s5309, 0
          %s5318 = smul.addr %s24, 36
          %s5319 = smul.addr %s5318, 8
          %s5320 = scalar_lea.hbm %s6, %s5319
          %s5321 = sshll.u32 %s5312, 4
          %s5322 = int_to_ptr.vmem [resolvable:$true] %s5321
          %s5323 = sshll.u32 %s5320, 4
          %s5324 = int_to_ptr.hbm [resolvable:$true] %s5323
          %5329 = dma.vmem_to_hbm [thread:$0]  %s5322, 4608, %s5324, %s5309, 128, 128, 8
        $region64: #{tpu_custom_call.1} parent=43 // pred_fallthru
          _
      $region44: #{tpu_custom_call.1} parent=5 // pred_fallthru
        _
      %p5330 = scmp.le.s32.totalorder 2, %s19
      // Predicated region
      $region65: #{tpu_custom_call.1} parent=5 // pred_check
        %p5331 = pneg %p5330
      $region66: #{tpu_custom_call.1} parent=5 // pred_check_branch
        %5333 = sbr.rel (%p5331) target = $region68
      $region67: #{tpu_custom_call.1} parent=5 // pred_region
        %s5334 = ssub.s32 %s19, 2
        // Predicated region
        $region69: #{tpu_custom_call.1} parent=67 // pred_check
          %p5335 = pneg %p179
        $region70: #{tpu_custom_call.1} parent=67 // pred_check_branch
          %5337 = sbr.rel (%p5335) target = $region72
        $region71: #{tpu_custom_call.1} parent=67 // pred_region
          %s5338 = sand.u32 %s164, 1
          %s5339 = scalar_lea.sflag [#allocation6], %s5338
          %s5340 = sand.u32 %s164, 1
          %s5341 = smul.addr %s5340, 288
          %s5342 = scalar_lea.vmem [#allocation10], %s5341
          %5344 = dma.done %s5339, 4608
        $region72: #{tpu_custom_call.1} parent=67 // pred_fallthru
          _
      $region68: #{tpu_custom_call.1} parent=5 // pred_fallthru
        _
    $region6: #{tpu_custom_call.1} parent=1 // loop_footer
      %s23 = sadd.s32 1, %s19
    $region7: #{tpu_custom_call.1} parent=1 // loop_footer_branch
      %18 = sbr.rel target = $region3
    $region8: #{tpu_custom_call.1} parent=1 // loop_exit
      _
    %5345 = vsyncpa [#allocation5], 1
    %s5346 = scalar_lea.sflag [#allocation5], 1
    %5347 = vsyncpa %s5346, 1
    %5348 = vsyncpa [#allocation8], 1
    %5349 = vsyncpa [#allocation6], 1
    %s5350 = scalar_lea.sflag [#allocation6], 1
    %5351 = vsyncpa %s5350, 1

</llo_original>
